<compile_context>
chip_gen: v7x
topology: tpu7x:2x2x1
jax: 0.10.0
libtpu: 0.0.40
codegen_flags: <defaults>
</compile_context>

<pallas_src>
import jax
import jax.numpy as jnp
from jax.experimental import pallas as pl
from jax.experimental.pallas import tpu as pltpu


def _round_up(x, m):
    return ((x + m - 1) // m) * m


# ---------------------------------------------------------------------------
# Encoder kernel: multi-layer bidirectional LSTM with length masking
# (pack -> nn.LSTM(bidirectional=True) -> unpack semantics).
# ---------------------------------------------------------------------------
def _make_encoder_kernel(S, Bp, L, Hd):
    G = 4 * Hd
    H = 2 * Hd

    def kernel(x_ref, mask_ref, wih_ref, whh_ref, b_ref,
               mem_ref, h_ref, c_ref, proj_ref):
        for l in range(L):
            # Hoisted input projection for BOTH directions and ALL timesteps:
            # one (S*Bp, H) x (H, 8*Hd) bf16 matmul, f32 accumulate, bias folded.
            src = x_ref if l == 0 else mem_ref          # no full-buffer copy
            x2d = src[...].reshape(S * Bp, H).astype(jnp.bfloat16)
            proj_ref[...] = (
                jnp.dot(x2d, wih_ref[l], preferred_element_type=jnp.float32)
                + b_ref[l])

            whh_l = whh_ref[l]                           # (2, Hd, 4Hd) bf16
            h = jnp.zeros((2, Bp, Hd), jnp.float32)
            c = jnp.zeros((2, Bp, Hd), jnp.float32)
            # Fused fwd/bwd time loop: forward at t, backward at S-1-t.
            for t in range(S):
                tb = S - 1 - t
                rf, rb = t * Bp, tb * Bp
                xp = jnp.stack([proj_ref[rf:rf + Bp, :G],
                                proj_ref[rb:rb + Bp, G:]], axis=0)   # (2,Bp,G)
                m = jnp.stack([mask_ref[t], mask_ref[tb]], axis=0)   # (2,Bp,1)
                gates = xp + jnp.einsum(
                    'dbh,dhg->dbg', h.astype(jnp.bfloat16), whh_l,
                    preferred_element_type=jnp.float32)
                # gate order [i, f, o, g] (host reorder): one fused sigmoid.
                act = jax.nn.sigmoid(gates[..., :3 * Hd])
                g = jnp.tanh(gates[..., 3 * Hd:])
                c_new = act[..., Hd:2 * Hd] * c + act[..., :Hd] * g
                h_new = act[..., 2 * Hd:3 * Hd] * jnp.tanh(c_new)
                h_out = m * h_new                         # 0 at padded steps
                c = m * c_new + (1.0 - m) * c             # freeze at pad
                h = h_out + (1.0 - m) * h
                mem_ref[t, :, :Hd] = h_out[0]             # fwd half at t
                mem_ref[tb, :, Hd:] = h_out[1]            # bwd half at S-1-t
            h_ref[l, :, :Hd] = h[0]
            h_ref[l, :, Hd:] = h[1]
            c_ref[l, :, :Hd] = c[0]
            c_ref[l, :, Hd:] = c[1]

    return kernel


def encoder_forward(x_sbh, mask_sb1, wih, whh, b):
    S, Bp, H = x_sbh.shape
    Hd = H // 2
    L = wih.shape[0]
    kernel = _make_encoder_kernel(S, Bp, L, Hd)
    return pl.pallas_call(
        kernel,
        out_shape=(
            jax.ShapeDtypeStruct((S, Bp, H), jnp.float32),   # memory bank
            jax.ShapeDtypeStruct((L, Bp, H), jnp.float32),   # h (fwd|bwd per layer)
            jax.ShapeDtypeStruct((L, Bp, H), jnp.float32),   # c
        ),
        scratch_shapes=[pltpu.VMEM((S * Bp, 8 * Hd), jnp.float32)],
        input_output_aliases={0: 0},                          # x aliases memory bank
        compiler_params=pltpu.CompilerParams(vmem_limit_bytes=64 * 1024 * 1024),
    )(x_sbh, mask_sb1, wih, whh, b)


# ---------------------------------------------------------------------------
# Decoder step kernel: grid over T, recurrent state carried in VMEM scratch.
# Emits per-step decoder output + attention context; the vocab projection is a
# separate tiled matmul kernel.
# ---------------------------------------------------------------------------
def _make_decoder_kernel(L, H):
    def kernel(emb_ref, mem_ref, mask_ref, h0_ref, c0_ref,
               wih_ref, whh_ref, b_ref,
               dec_ref, ctx_out_ref, h_s, c_s, ctx_s):
        t = pl.program_id(0)

        @pl.when(t == 0)
        def _init():
            h_s[...] = h0_ref[...]
            c_s[...] = c0_ref[...]
            ctx_s[...] = jnp.zeros_like(ctx_s)      # prev_context is None at step 0

        x = emb_ref[0] + ctx_s[...]                 # input feeding
        for l in range(L):
            gates = (jnp.dot(x.astype(jnp.bfloat16), wih_ref[l],
                             preferred_element_type=jnp.float32)
                     + jnp.dot(h_s[l].astype(jnp.bfloat16), whh_ref[l],
                               preferred_element_type=jnp.float32)
                     + b_ref[l])
            act = jax.nn.sigmoid(gates[:, :3 * H])  # [i, f, o] fused
            g = jnp.tanh(gates[:, 3 * H:])
            c_new = act[:, H:2 * H] * c_s[l] + act[:, :H] * g
            h_new = act[:, 2 * H:3 * H] * jnp.tanh(c_new)
            h_s[l] = h_new
            c_s[l] = c_new
            x = h_new
        dec_out = x                                 # (Bp, H)

        # q_len == 1 dot-product attention as VPU multiply + XLU reduce
        # (no per-batch 1-row MXU matmuls); mem is bf16, math in f32.
        mem = mem_ref[...]                          # (Bp, S, H) bf16
        scores = jnp.sum(dec_out[:, None, :] * mem, axis=-1)          # (Bp, S)
        scores = jnp.where(mask_ref[...] > 0.5, scores, -1e30)        # finite fill
        scores = scores - jnp.max(scores, axis=-1, keepdims=True)
        e = jnp.exp(scores)
        attn = e * pl.reciprocal(jnp.sum(e, axis=-1, keepdims=True), approx=True)
        ctx = jnp.sum(attn[:, :, None] * mem, axis=1)                 # (Bp, H) f32

        ctx_s[...] = ctx
        dec_ref[0] = dec_out
        ctx_out_ref[0] = ctx

    return kernel


def decoder_forward(emb_tbh, mem_bsh_bf16, mask_bs, h0, c0, wih, whh, b):
    T, Bp, H = emb_tbh.shape
    S = mem_bsh_bf16.shape[1]
    L = wih.shape[0]
    kernel = _make_decoder_kernel(L, H)
    return pl.pallas_call(
        kernel,
        grid=(T,),
        in_specs=[
            pl.BlockSpec((1, Bp, H), lambda t: (t, 0, 0)),       # tgt emb (per step)
            pl.BlockSpec((Bp, S, H), lambda t: (0, 0, 0)),       # memory bank (resident)
            pl.BlockSpec((Bp, S), lambda t: (0, 0)),             # src mask (resident)
            pl.BlockSpec((L, Bp, H), lambda t: (0, 0, 0)),       # h0
            pl.BlockSpec((L, Bp, H), lambda t: (0, 0, 0)),       # c0
            pl.BlockSpec((L, H, 4 * H), lambda t: (0, 0, 0)),    # W_ih
            pl.BlockSpec((L, H, 4 * H), lambda t: (0, 0, 0)),    # W_hh
            pl.BlockSpec((L, 1, 4 * H), lambda t: (0, 0, 0)),    # bias
        ],
        out_specs=[
            pl.BlockSpec((1, Bp, H), lambda t: (t, 0, 0)),       # decoder output
            pl.BlockSpec((1, Bp, H), lambda t: (t, 0, 0)),       # context vector
        ],
        out_shape=(
            jax.ShapeDtypeStruct((T, Bp, H), jnp.float32),
            jax.ShapeDtypeStruct((T, Bp, H), jnp.float32),
        ),
        scratch_shapes=[
            pltpu.VMEM((L, Bp, H), jnp.float32),   # carried h
            pltpu.VMEM((L, Bp, H), jnp.float32),   # carried c
            pltpu.VMEM((Bp, H), jnp.float32),      # carried context
        ],
        compiler_params=pltpu.CompilerParams(
            dimension_semantics=("arbitrary",),
            vmem_limit_bytes=64 * 1024 * 1024),
    )(emb_tbh, mem_bsh_bf16, mask_bs, h0, c0, wih, whh, b)


# ---------------------------------------------------------------------------
# Output projection kernel: one tiled bf16 matmul over all (T*Bp) rows.
# hidden2output split: cat(dec, ctx) @ W == dec @ W[:H] + ctx @ W[H:].
# ---------------------------------------------------------------------------
def _proj_kernel(dec_ref, ctx_ref, wd_ref, wc_ref, b_ref, out_ref):
    out_ref[...] = (
        jnp.dot(dec_ref[...].astype(jnp.bfloat16), wd_ref[...],
                preferred_element_type=jnp.float32)
        + jnp.dot(ctx_ref[...].astype(jnp.bfloat16), wc_ref[...],
                  preferred_element_type=jnp.float32)
        + b_ref[...])


def output_projection(dec_flat, ctx_flat, w_dec, w_ctx, b_out):
    M, H = dec_flat.shape
    Vp = w_dec.shape[1]
    tm = 256 if M % 256 == 0 else M
    tn = 512 if Vp % 512 == 0 else 128
    # TODO(synk): also tile K (=H) with an f32 accumulator at realistic hidden sizes.
    return pl.pallas_call(
        _proj_kernel,
        grid=(M // tm, Vp // tn),
        in_specs=[
            pl.BlockSpec((tm, H), lambda i, j: (i, 0)),
            pl.BlockSpec((tm, H), lambda i, j: (i, 0)),
            pl.BlockSpec((H, tn), lambda i, j: (0, j)),
            pl.BlockSpec((H, tn), lambda i, j: (0, j)),
            pl.BlockSpec((1, tn), lambda i, j: (0, j)),
        ],
        out_specs=pl.BlockSpec((tm, tn), lambda i, j: (i, j)),
        out_shape=jax.ShapeDtypeStruct((M, Vp), jnp.float32),
        compiler_params=pltpu.CompilerParams(
            dimension_semantics=("parallel", "parallel"),
            vmem_limit_bytes=64 * 1024 * 1024),
    )(dec_flat, ctx_flat, w_dec, w_ctx, b_out)


# ---------------------------------------------------------------------------
# Host-side weight prep: gate reorder [i,f,g,o]->[i,f,o,g], transpose to
# (in, 4*out), direction packing, vocab padding, bf16 cast.
# ---------------------------------------------------------------------------
def _reorder_gates(w, axis):
    i, f, g, o = jnp.split(w, 4, axis=axis)
    return jnp.concatenate([i, f, o, g], axis=axis)


def prepare_kernel_params(params, v_pad):
    H = params["emb_src"].shape[1]
    L = params["enc_w_ih"].shape[0]
    V = params["w_out"].shape[1]
    wdt = jnp.bfloat16

    enc_wih, enc_whh, enc_b = [], [], []
    for l in range(L):
        ih_dirs, hh_dirs, b_dirs = [], [], []
        for d in range(2):
            ih_dirs.append(_reorder_gates(params["enc_w_ih"][l, d], 0).T)   # (H, 4Hd)
            hh_dirs.append(_reorder_gates(params["enc_w_hh"][l, d], 0).T)   # (Hd, 4Hd)
            b_dirs.append(_reorder_gates(params["enc_b"][l, d], 1))         # (1, 4Hd)
        enc_wih.append(jnp.concatenate(ih_dirs, axis=1))                    # (H, 8Hd)
        enc_whh.append(jnp.stack(hh_dirs, axis=0))                          # (2, Hd, 4Hd)
        enc_b.append(jnp.concatenate(b_dirs, axis=1))                       # (1, 8Hd)

    dec_wih = jnp.stack([_reorder_gates(params["dec_w_ih"][l], 0).T for l in range(L)])
    dec_whh = jnp.stack([_reorder_gates(params["dec_w_hh"][l], 0).T for l in range(L)])
    dec_b = jnp.stack([_reorder_gates(params["dec_b"][l], 1) for l in range(L)])

    pad = v_pad - V
    w_out = params["w_out"]                                                  # (2H, V)
    w_out_dec = jnp.pad(w_out[:H], ((0, 0), (0, pad)))
    w_out_ctx = jnp.pad(w_out[H:], ((0, 0), (0, pad)))
    b_out = jnp.pad(params["b_out"], ((0, 0), (0, pad)))

    return dict(
        enc_wih=jnp.stack(enc_wih).astype(wdt),        # (L, H, 8Hd) bf16
        enc_whh=jnp.stack(enc_whh).astype(wdt),        # (L, 2, Hd, 4Hd) bf16
        enc_b=jnp.stack(enc_b).astype(jnp.float32),    # (L, 1, 8Hd) f32
        dec_wih=dec_wih.astype(wdt),                   # (L, H, 4H) bf16
        dec_whh=dec_whh.astype(wdt),                   # (L, H, 4H) bf16
        dec_b=dec_b.astype(jnp.float32),               # (L, 1, 4H) f32
        w_out_dec=w_out_dec.astype(wdt),               # (H, Vp) bf16
        w_out_ctx=w_out_ctx.astype(wdt),               # (H, Vp) bf16
        b_out=b_out.astype(jnp.float32),               # (1, Vp) f32
    )


# ---------------------------------------------------------------------------
# Full forward: embedding gathers + layout plumbing (pad B to a sublane
# multiple, time-major layouts) in plain JAX, then the three kernels.
# ---------------------------------------------------------------------------
def attn_encoder_decoder_forward(params, src, src_lengths, tgt_in, pad_id_src):
    B, S = src.shape
    T = tgt_in.shape[1]
    H = params["emb_src"].shape[1]
    V = params["w_out"].shape[1]
    Vp = _round_up(V, 128)
    Bp = _round_up(B, 8)
    pad_b = Bp - B
    kp = prepare_kernel_params(params, Vp)

    # Encoder inputs: time-major (S, Bp, H), batch padded for aligned tiles.
    src_emb = jnp.take(params["emb_src"], src, axis=0).astype(jnp.float32)   # (B,S,H)
    x_sbh = jnp.pad(jnp.transpose(src_emb, (1, 0, 2)),
                    ((0, 0), (0, pad_b), (0, 0)))
    len_mask = (jnp.arange(S)[None, :] < src_lengths[:, None]).astype(jnp.float32)
    mask_sb1 = jnp.pad(jnp.transpose(len_mask, (1, 0)), ((0, 0), (0, pad_b)))[..., None]

    mem_sbh, h_enc, c_enc = encoder_forward(
        x_sbh, mask_sb1, kp["enc_wih"], kp["enc_whh"], kp["enc_b"])
    mem_bsh = jnp.transpose(mem_sbh, (1, 0, 2)).astype(jnp.bfloat16)         # (Bp,S,H)

    tgt_emb = jnp.take(params["emb_tgt"], tgt_in, axis=0).astype(jnp.float32)  # (B,T,H)
    emb_tbh = jnp.pad(jnp.transpose(tgt_emb, (1, 0, 2)),
                      ((0, 0), (0, pad_b), (0, 0)))                            # (T,Bp,H)
    src_mask = jnp.pad((src != pad_id_src).astype(jnp.float32),
                       ((0, pad_b), (0, 0)))                                   # (Bp,S)

    dec_out, ctx_out = decoder_forward(
        emb_tbh, mem_bsh, src_mask, h_enc, c_enc,
        kp["dec_wih"], kp["dec_whh"], kp["dec_b"])                             # (T,Bp,H) x2

    logits_flat = output_projection(
        dec_out.reshape(T * Bp, H), ctx_out.reshape(T * Bp, H),
        kp["w_out_dec"], kp["w_out_ctx"], kp["b_out"])                         # (T*Bp, Vp)

    logits = logits_flat.reshape(T, Bp, Vp)[:, :B, :V]
    # torch.stack of per-step (B, 1, V) logits at dim=1 -> (B, T, 1, V)
    return jnp.transpose(logits, (1, 0, 2))[:, :, None, :]


# ---------------------------------------------------------------------------
# Deterministic synthetic parameters (PyTorch layout (4*H_out, H_in), gate
# order [i, f, g, o], b_ih + b_hh folded into one bias).
# ---------------------------------------------------------------------------
def init_params(key, V_src, V_tgt, H, L):
    Hd = H // 2
    ks = jax.random.split(key, 10)

    def rnd(k, shape, scale=0.1):
        return (scale * jax.random.normal(k, shape)).astype(jnp.float32)

    return dict(
        emb_src=rnd(ks[0], (V_src, H)),
        emb_tgt=rnd(ks[1], (V_tgt, H)),
        enc_w_ih=rnd(ks[2], (L, 2, 4 * Hd, H)),
        enc_w_hh=rnd(ks[3], (L, 2, 4 * Hd, Hd)),
        enc_b=rnd(ks[4], (L, 2, 1, 4 * Hd)),
        dec_w_ih=rnd(ks[5], (L, 4 * H, H)),
        dec_w_hh=rnd(ks[6], (L, 4 * H, H)),
        dec_b=rnd(ks[7], (L, 1, 4 * H)),
        w_out=rnd(ks[8], (2 * H, V_tgt)),
        b_out=rnd(ks[9], (1, V_tgt)),
    )


# ---------------------------------------------------------------------------
# Pure-JAX f32 reference (same math, no Pallas) used only as a correctness check.
# ---------------------------------------------------------------------------
def _cell_ref(x, h, c, w_ih, w_hh, b, hd):
    gates = (jnp.dot(x, w_ih.T, precision="highest")
             + jnp.dot(h, w_hh.T, precision="highest") + b)
    i = jax.nn.sigmoid(gates[:, :hd])
    f = jax.nn.sigmoid(gates[:, hd:2 * hd])
    g = jnp.tanh(gates[:, 2 * hd:3 * hd])
    o = jax.nn.sigmoid(gates[:, 3 * hd:4 * hd])
    c2 = f * c + i * g
    return o * jnp.tanh(c2), c2


def reference_forward(params, src, src_lengths, tgt_in, pad_id_src):
    B, S = src.shape
    T = tgt_in.shape[1]
    H = params["emb_src"].shape[1]
    Hd = H // 2
    L = params["enc_w_ih"].shape[0]

    x = params["emb_src"][src]
    len_mask = (jnp.arange(S)[None, :] < src_lengths[:, None]).astype(jnp.float32)
    cur = x
    h_layers, c_layers = [], []
    for l in range(L):
        outs, finals = [], []
        for d in range(2):
            w_ih = params["enc_w_ih"][l, d]
            w_hh = params["enc_w_hh"][l, d]
            b = params["enc_b"][l, d]
            h = jnp.zeros((B, Hd)); c = jnp.zeros((B, Hd))
            out = jnp.zeros((B, S, Hd))
            ts = range(S) if d == 0 else range(S - 1, -1, -1)
            for t in ts:
                m = len_mask[:, t:t + 1]
                h2, c2 = _cell_ref(cur[:, t, :], h, c, w_ih, w_hh, b, Hd)
                h = m * h2 + (1 - m) * h
                c = m * c2 + (1 - m) * c
                out = out.at[:, t, :].set(m * h)
            outs.append(out); finals.append((h, c))
        h_layers.append(jnp.concatenate([finals[0][0], finals[1][0]], -1))
        c_layers.append(jnp.concatenate([finals[0][1], finals[1][1]], -1))
        cur = jnp.concatenate([outs[0], outs[1]], -1)
    mem = cur

    src_mask = src != pad_id_src
    h_s, c_s = list(h_layers), list(c_layers)
    ctx = jnp.zeros((B, H))
    tgt_emb = params["emb_tgt"][tgt_in]
    all_logits = []
    for t in range(T):
        x_t = tgt_emb[:, t, :] + ctx
        for l in range(L):
            h2, c2 = _cell_ref(x_t, h_s[l], c_s[l],
                               params["dec_w_ih"][l], params["dec_w_hh"][l],
                               params["dec_b"][l], H)
            h_s[l], c_s[l] = h2, c2
            x_t = h2
        dec_out = x_t
        scores = jnp.einsum("bh,bsh->bs", dec_out, mem, precision="highest")
        scores = jnp.where(src_mask, scores, -jnp.inf)
        a = jax.nn.softmax(scores, axis=-1)
        ctx = jnp.einsum("bs,bsh->bh", a, mem, precision="highest")
        logits = (jnp.dot(jnp.concatenate([dec_out, ctx], -1), params["w_out"],
                          precision="highest") + params["b_out"])
        all_logits.append(logits)
    return jnp.stack(all_logits, axis=1)[:, :, None, :]


if __name__ == "__main__":
    B, S, T = 2, 8, 6
    H, L = 32, 3                 # hidden_size=32, layers=3 (module default layers)
    V_src, V_tgt = 48, 64
    pad_id = 0

    key = jax.random.PRNGKey(0)
    pkey, skey, tkey = jax.random.split(key, 3)
    params = init_params(pkey, V_src, V_tgt, H, L)

    src_lengths = jnp.array([8, 5], dtype=jnp.int32)
    src_body = jax.random.randint(skey, (B, S), 1, V_src)
    src = jnp.where(jnp.arange(S)[None, :] < src_lengths[:, None],
                    src_body, pad_id).astype(jnp.int32)
    tgt_in = jax.random.randint(tkey, (B, T), 1, V_tgt).astype(jnp.int32)

    logits = attn_encoder_decoder_forward(params, src, src_lengths, tgt_in, pad_id)
    logits = jax.block_until_ready(logits)
    assert logits.shape == (B, T, 1, V_tgt), logits.shape

    ref = reference_forward(params, src, src_lengths, tgt_in, pad_id)
    # Looser tolerance: kernel matmuls / attention use bf16 operands (f32
    # accumulate), reference is f32-highest.
    if bool(jnp.allclose(logits, ref, atol=2e-2, rtol=2e-2)):
        print("KERNEL_OK")
    else:
        print("MISMATCH max_abs_err=", float(jnp.max(jnp.abs(logits - ref))))
</pallas_src>

<mosaic_0001>
module attributes {stable_mosaic.version = 11 : i64} {
  func.func @kernel(%arg0: memref<8x8x32xf32, #tpu.memory_space<vmem>>, %arg1: memref<8x8x1xf32, #tpu.memory_space<vmem>>, %arg2: memref<3x32x128xbf16, #tpu.memory_space<vmem>>, %arg3: memref<3x2x16x64xbf16, #tpu.memory_space<vmem>>, %arg4: memref<3x1x128xf32, #tpu.memory_space<vmem>>, %arg5: memref<8x8x32xf32, #tpu.memory_space<vmem>>, %arg6: memref<3x8x32xf32, #tpu.memory_space<vmem>>, %arg7: memref<3x8x32xf32, #tpu.memory_space<vmem>>, %arg8: memref<64x128xf32, #tpu.memory_space<vmem>>) attributes {dimension_semantics = [], scalar_prefetch = 0 : i64, scratch_operands = 1 : i64, tpu.core_type = #tpu.core_type<tc>} {
    %c0 = arith.constant 0 : index
    %c0_0 = arith.constant 0 : index
    %c0_1 = arith.constant 0 : index
    %0 = vector.load %arg0[%c0, %c0_0, %c0_1] : memref<8x8x32xf32, #tpu.memory_space<vmem>>, vector<8x8x32xf32>
    %1 = vector.shape_cast %0 : vector<8x8x32xf32> to vector<64x32xf32>
    %2 = arith.truncf %1 : vector<64x32xf32> to vector<64x32xbf16>
    %c0_2 = arith.constant 0 : index
    %c0_3 = arith.constant 0 : index
    %c0_4 = arith.constant 0 : index
    %3 = vector.load %arg2[%c0_2, %c0_3, %c0_4] : memref<3x32x128xbf16, #tpu.memory_space<vmem>>, vector<1x32x128xbf16>
    %4 = vector.shape_cast %3 : vector<1x32x128xbf16> to vector<32x128xbf16>
    %cst = arith.constant dense<0.000000e+00> : vector<64x128xf32>
    %5 = tpu.matmul %2, %4, %cst {dimension_numbers = #tpu.dot_dimension_numbers<[1], [0], [0], [1], [0, 0, 1, 1], [], []>} : vector<64x32xbf16>, vector<32x128xbf16>, vector<64x128xf32> -> vector<64x128xf32>
    %c0_5 = arith.constant 0 : index
    %c0_6 = arith.constant 0 : index
    %c0_7 = arith.constant 0 : index
    %6 = vector.load %arg4[%c0_5, %c0_6, %c0_7] : memref<3x1x128xf32, #tpu.memory_space<vmem>>, vector<1x1x128xf32>
    %7 = vector.shape_cast %6 : vector<1x1x128xf32> to vector<1x128xf32>
    %8 = vector.broadcast %7 : vector<1x128xf32> to vector<64x128xf32>
    %9 = arith.addf %5, %8 : vector<64x128xf32>
    %c0_8 = arith.constant 0 : index
    %c0_9 = arith.constant 0 : index
    %10 = vector.load %arg8[%c0_8, %c0_9] : memref<64x128xf32, #tpu.memory_space<vmem>>, vector<64x128xf32>
    tpu.vector_store %arg8[%c0_8, %c0_9], %9 {strides = array<i32>} : memref<64x128xf32, #tpu.memory_space<vmem>>, vector<64x128xf32>,
    %c0_10 = arith.constant 0 : index
    %c0_11 = arith.constant 0 : index
    %c0_12 = arith.constant 0 : index
    %c0_13 = arith.constant 0 : index
    %11 = vector.load %arg3[%c0_10, %c0_11, %c0_12, %c0_13] : memref<3x2x16x64xbf16, #tpu.memory_space<vmem>>, vector<1x2x16x64xbf16>
    %12 = vector.shape_cast %11 : vector<1x2x16x64xbf16> to vector<2x16x64xbf16>
    %cst_14 = arith.constant 0.000000e+00 : f32
    %13 = vector.broadcast %cst_14 : f32 to vector<2x8x16xf32>
    %cst_15 = arith.constant 0.000000e+00 : f32
    %14 = vector.broadcast %cst_15 : f32 to vector<2x8x16xf32>
    %c0_16 = arith.constant 0 : index
    %c0_17 = arith.constant 0 : index
    %15 = vector.load %arg8[%c0_16, %c0_17] : memref<64x128xf32, #tpu.memory_space<vmem>>, vector<8x64xf32>
    %c56 = arith.constant 56 : index
    %c64 = arith.constant 64 : index
    %16 = vector.load %arg8[%c56, %c64] : memref<64x128xf32, #tpu.memory_space<vmem>>, vector<8x64xf32>
    %17 = vector.shape_cast %15 : vector<8x64xf32> to vector<1x8x64xf32>
    %18 = vector.shape_cast %16 : vector<8x64xf32> to vector<1x8x64xf32>
    %19 = tpu.concatenate %17, %18 in 0 : vector<1x8x64xf32>, vector<1x8x64xf32> -> vector<2x8x64xf32>
    %c0_18 = arith.constant 0 : index
    %c0_19 = arith.constant 0 : index
    %c0_20 = arith.constant 0 : index
    %20 = vector.load %arg1[%c0_18, %c0_19, %c0_20] : memref<8x8x1xf32, #tpu.memory_space<vmem>>, vector<1x8x1xf32>
    %21 = vector.shape_cast %20 : vector<1x8x1xf32> to vector<8x1xf32>
    %c7 = arith.constant 7 : index
    %c0_21 = arith.constant 0 : index
    %c0_22 = arith.constant 0 : index
    %22 = vector.load %arg1[%c7, %c0_21, %c0_22] : memref<8x8x1xf32, #tpu.memory_space<vmem>>, vector<1x8x1xf32>
    %23 = vector.shape_cast %22 : vector<1x8x1xf32> to vector<8x1xf32>
    %24 = vector.shape_cast %21 : vector<8x1xf32> to vector<1x8x1xf32>
    %25 = vector.shape_cast %23 : vector<8x1xf32> to vector<1x8x1xf32>
    %26 = tpu.concatenate %24, %25 in 0 : vector<1x8x1xf32>, vector<1x8x1xf32> -> vector<2x8x1xf32>
    %27 = arith.truncf %13 : vector<2x8x16xf32> to vector<2x8x16xbf16>
    "tpu.trace_start"() <{level = 10 : i32, message = "dbh,dhg->dbg"}> : () -> ()
    %cst_23 = arith.constant dense<0.000000e+00> : vector<2x8x64xf32>
    %28 = tpu.matmul %27, %12, %cst_23 {dimension_numbers = #tpu.dot_dimension_numbers<[2], [1], [1], [2], [0, 0, 0, 1, 1, 2], [0], [0]>} : vector<2x8x16xbf16>, vector<2x16x64xbf16>, vector<2x8x64xf32> -> vector<2x8x64xf32>
    "tpu.trace_stop"() : () -> ()
    %29 = arith.addf %19, %28 : vector<2x8x64xf32>
    %30 = vector.extract_strided_slice %29 {offsets = [0, 0, 0], sizes = [2, 8, 48], strides = [1, 1, 1]} : vector<2x8x64xf32> to vector<2x8x48xf32>
    %31 = arith.negf %30 : vector<2x8x48xf32>
    %32 = math.exp %31 : vector<2x8x48xf32>
    %cst_24 = arith.constant 1.000000e+00 : f32
    %33 = vector.broadcast %cst_24 : f32 to vector<2x8x48xf32>
    %34 = arith.addf %33, %32 : vector<2x8x48xf32>
    %35 = arith.divf %33, %34 : vector<2x8x48xf32>
    %36 = vector.extract_strided_slice %29 {offsets = [0, 0, 48], sizes = [2, 8, 16], strides = [1, 1, 1]} : vector<2x8x64xf32> to vector<2x8x16xf32>
    %37 = math.tanh %36 : vector<2x8x16xf32>
    %38 = vector.extract_strided_slice %35 {offsets = [0, 0, 16], sizes = [2, 8, 16], strides = [1, 1, 1]} : vector<2x8x48xf32> to vector<2x8x16xf32>
    %39 = arith.mulf %38, %14 : vector<2x8x16xf32>
    %40 = vector.extract_strided_slice %35 {offsets = [0, 0, 0], sizes = [2, 8, 16], strides = [1, 1, 1]} : vector<2x8x48xf32> to vector<2x8x16xf32>
    %41 = arith.mulf %40, %37 : vector<2x8x16xf32>
    %42 = arith.addf %39, %41 : vector<2x8x16xf32>
    %43 = vector.extract_strided_slice %35 {offsets = [0, 0, 32], sizes = [2, 8, 16], strides = [1, 1, 1]} : vector<2x8x48xf32> to vector<2x8x16xf32>
    %44 = math.tanh %42 : vector<2x8x16xf32>
    %45 = arith.mulf %43, %44 : vector<2x8x16xf32>
    %46 = vector.broadcast %26 : vector<2x8x1xf32> to vector<2x8x16xf32>
    %47 = arith.mulf %46, %45 : vector<2x8x16xf32>
    %48 = vector.broadcast %26 : vector<2x8x1xf32> to vector<2x8x16xf32>
    %49 = arith.mulf %48, %42 : vector<2x8x16xf32>
    %cst_25 = arith.constant 1.000000e+00 : f32
    %50 = vector.broadcast %cst_25 : f32 to vector<2x8x1xf32>
    %51 = arith.subf %50, %26 : vector<2x8x1xf32>
    %52 = vector.broadcast %51 : vector<2x8x1xf32> to vector<2x8x16xf32>
    %53 = arith.mulf %52, %14 : vector<2x8x16xf32>
    %54 = arith.addf %49, %53 : vector<2x8x16xf32>
    %cst_26 = arith.constant 1.000000e+00 : f32
    %55 = vector.broadcast %cst_26 : f32 to vector<2x8x1xf32>
    %56 = arith.subf %55, %26 : vector<2x8x1xf32>
    %57 = vector.broadcast %56 : vector<2x8x1xf32> to vector<2x8x16xf32>
    %58 = arith.mulf %57, %13 : vector<2x8x16xf32>
    %59 = arith.addf %47, %58 : vector<2x8x16xf32>
    %60 = vector.extract_strided_slice %47 {offsets = [0, 0, 0], sizes = [1, 8, 16], strides = [1, 1, 1]} : vector<2x8x16xf32> to vector<1x8x16xf32>
    %61 = vector.shape_cast %60 : vector<1x8x16xf32> to vector<8x16xf32>
    %c0_27 = arith.constant 0 : index
    %c0_28 = arith.constant 0 : index
    %c0_29 = arith.constant 0 : index
    %62 = vector.load %arg5[%c0_27, %c0_28, %c0_29] : memref<8x8x32xf32, #tpu.memory_space<vmem>>, vector<1x8x16xf32>
    %63 = vector.shape_cast %62 : vector<1x8x16xf32> to vector<8x16xf32>
    %64 = vector.shape_cast %61 : vector<8x16xf32> to vector<1x8x16xf32>
    tpu.vector_store %arg5[%c0_27, %c0_28, %c0_29], %64 {strides = array<i32>} : memref<8x8x32xf32, #tpu.memory_space<vmem>>, vector<1x8x16xf32>,
    %65 = vector.extract_strided_slice %47 {offsets = [1, 0, 0], sizes = [1, 8, 16], strides = [1, 1, 1]} : vector<2x8x16xf32> to vector<1x8x16xf32>
    %66 = vector.shape_cast %65 : vector<1x8x16xf32> to vector<8x16xf32>
    %c7_30 = arith.constant 7 : index
    %c0_31 = arith.constant 0 : index
    %c16 = arith.constant 16 : index
    %67 = vector.load %arg5[%c7_30, %c0_31, %c16] : memref<8x8x32xf32, #tpu.memory_space<vmem>>, vector<1x8x16xf32>
    %68 = vector.shape_cast %67 : vector<1x8x16xf32> to vector<8x16xf32>
    %69 = vector.shape_cast %66 : vector<8x16xf32> to vector<1x8x16xf32>
    tpu.vector_store %arg5[%c7_30, %c0_31, %c16], %69 {strides = array<i32>} : memref<8x8x32xf32, #tpu.memory_space<vmem>>, vector<1x8x16xf32>,
    %c8 = arith.constant 8 : index
    %c0_32 = arith.constant 0 : index
    %70 = vector.load %arg8[%c8, %c0_32] : memref<64x128xf32, #tpu.memory_space<vmem>>, vector<8x64xf32>
    %c48 = arith.constant 48 : index
    %c64_33 = arith.constant 64 : index
    %71 = vector.load %arg8[%c48, %c64_33] : memref<64x128xf32, #tpu.memory_space<vmem>>, vector<8x64xf32>
    %72 = vector.shape_cast %70 : vector<8x64xf32> to vector<1x8x64xf32>
    %73 = vector.shape_cast %71 : vector<8x64xf32> to vector<1x8x64xf32>
    %74 = tpu.concatenate %72, %73 in 0 : vector<1x8x64xf32>, vector<1x8x64xf32> -> vector<2x8x64xf32>
    %c1 = arith.constant 1 : index
    %c0_34 = arith.constant 0 : index
    %c0_35 = arith.constant 0 : index
    %75 = vector.load %arg1[%c1, %c0_34, %c0_35] : memref<8x8x1xf32, #tpu.memory_space<vmem>>, vector<1x8x1xf32>
    %76 = vector.shape_cast %75 : vector<1x8x1xf32> to vector<8x1xf32>
    %c6 = arith.constant 6 : index
    %c0_36 = arith.constant 0 : index
    %c0_37 = arith.constant 0 : index
    %77 = vector.load %arg1[%c6, %c0_36, %c0_37] : memref<8x8x1xf32, #tpu.memory_space<vmem>>, vector<1x8x1xf32>
    %78 = vector.shape_cast %77 : vector<1x8x1xf32> to vector<8x1xf32>
    %79 = vector.shape_cast %76 : vector<8x1xf32> to vector<1x8x1xf32>
    %80 = vector.shape_cast %78 : vector<8x1xf32> to vector<1x8x1xf32>
    %81 = tpu.concatenate %79, %80 in 0 : vector<1x8x1xf32>, vector<1x8x1xf32> -> vector<2x8x1xf32>
    %82 = arith.truncf %59 : vector<2x8x16xf32> to vector<2x8x16xbf16>
    "tpu.trace_start"() <{level = 10 : i32, message = "dbh,dhg->dbg"}> : () -> ()
    %cst_38 = arith.constant dense<0.000000e+00> : vector<2x8x64xf32>
    %83 = tpu.matmul %82, %12, %cst_38 {dimension_numbers = #tpu.dot_dimension_numbers<[2], [1], [1], [2], [0, 0, 0, 1, 1, 2], [0], [0]>} : vector<2x8x16xbf16>, vector<2x16x64xbf16>, vector<2x8x64xf32> -> vector<2x8x64xf32>
    "tpu.trace_stop"() : () -> ()
    %84 = arith.addf %74, %83 : vector<2x8x64xf32>
    %85 = vector.extract_strided_slice %84 {offsets = [0, 0, 0], sizes = [2, 8, 48], strides = [1, 1, 1]} : vector<2x8x64xf32> to vector<2x8x48xf32>
    %86 = arith.negf %85 : vector<2x8x48xf32>
    %87 = math.exp %86 : vector<2x8x48xf32>
    %cst_39 = arith.constant 1.000000e+00 : f32
    %88 = vector.broadcast %cst_39 : f32 to vector<2x8x48xf32>
    %89 = arith.addf %88, %87 : vector<2x8x48xf32>
    %90 = arith.divf %88, %89 : vector<2x8x48xf32>
    %91 = vector.extract_strided_slice %84 {offsets = [0, 0, 48], sizes = [2, 8, 16], strides = [1, 1, 1]} : vector<2x8x64xf32> to vector<2x8x16xf32>
    %92 = math.tanh %91 : vector<2x8x16xf32>
    %93 = vector.extract_strided_slice %90 {offsets = [0, 0, 16], sizes = [2, 8, 16], strides = [1, 1, 1]} : vector<2x8x48xf32> to vector<2x8x16xf32>
    %94 = arith.mulf %93, %54 : vector<2x8x16xf32>
    %95 = vector.extract_strided_slice %90 {offsets = [0, 0, 0], sizes = [2, 8, 16], strides = [1, 1, 1]} : vector<2x8x48xf32> to vector<2x8x16xf32>
    %96 = arith.mulf %95, %92 : vector<2x8x16xf32>
    %97 = arith.addf %94, %96 : vector<2x8x16xf32>
    %98 = vector.extract_strided_slice %90 {offsets = [0, 0, 32], sizes = [2, 8, 16], strides = [1, 1, 1]} : vector<2x8x48xf32> to vector<2x8x16xf32>
    %99 = math.tanh %97 : vector<2x8x16xf32>
    %100 = arith.mulf %98, %99 : vector<2x8x16xf32>
    %101 = vector.broadcast %81 : vector<2x8x1xf32> to vector<2x8x16xf32>
    %102 = arith.mulf %101, %100 : vector<2x8x16xf32>
    %103 = vector.broadcast %81 : vector<2x8x1xf32> to vector<2x8x16xf32>
    %104 = arith.mulf %103, %97 : vector<2x8x16xf32>
    %cst_40 = arith.constant 1.000000e+00 : f32
    %105 = vector.broadcast %cst_40 : f32 to vector<2x8x1xf32>
    %106 = arith.subf %105, %81 : vector<2x8x1xf32>
    %107 = vector.broadcast %106 : vector<2x8x1xf32> to vector<2x8x16xf32>
    %108 = arith.mulf %107, %54 : vector<2x8x16xf32>
    %109 = arith.addf %104, %108 : vector<2x8x16xf32>
    %cst_41 = arith.constant 1.000000e+00 : f32
    %110 = vector.broadcast %cst_41 : f32 to vector<2x8x1xf32>
    %111 = arith.subf %110, %81 : vector<2x8x1xf32>
    %112 = vector.broadcast %111 : vector<2x8x1xf32> to vector<2x8x16xf32>
    %113 = arith.mulf %112, %59 : vector<2x8x16xf32>
    %114 = arith.addf %102, %113 : vector<2x8x16xf32>
    %115 = vector.extract_strided_slice %102 {offsets = [0, 0, 0], sizes = [1, 8, 16], strides = [1, 1, 1]} : vector<2x8x16xf32> to vector<1x8x16xf32>
    %116 = vector.shape_cast %115 : vector<1x8x16xf32> to vector<8x16xf32>
    %c1_42 = arith.constant 1 : index
    %c0_43 = arith.constant 0 : index
    %c0_44 = arith.constant 0 : index
    %117 = vector.load %arg5[%c1_42, %c0_43, %c0_44] : memref<8x8x32xf32, #tpu.memory_space<vmem>>, vector<1x8x16xf32>
    %118 = vector.shape_cast %117 : vector<1x8x16xf32> to vector<8x16xf32>
    %119 = vector.shape_cast %116 : vector<8x16xf32> to vector<1x8x16xf32>
    tpu.vector_store %arg5[%c1_42, %c0_43, %c0_44], %119 {strides = array<i32>} : memref<8x8x32xf32, #tpu.memory_space<vmem>>, vector<1x8x16xf32>,
    %120 = vector.extract_strided_slice %102 {offsets = [1, 0, 0], sizes = [1, 8, 16], strides = [1, 1, 1]} : vector<2x8x16xf32> to vector<1x8x16xf32>
    %121 = vector.shape_cast %120 : vector<1x8x16xf32> to vector<8x16xf32>
    %c6_45 = arith.constant 6 : index
    %c0_46 = arith.constant 0 : index
    %c16_47 = arith.constant 16 : index
    %122 = vector.load %arg5[%c6_45, %c0_46, %c16_47] : memref<8x8x32xf32, #tpu.memory_space<vmem>>, vector<1x8x16xf32>
    %123 = vector.shape_cast %122 : vector<1x8x16xf32> to vector<8x16xf32>
    %124 = vector.shape_cast %121 : vector<8x16xf32> to vector<1x8x16xf32>
    tpu.vector_store %arg5[%c6_45, %c0_46, %c16_47], %124 {strides = array<i32>} : memref<8x8x32xf32, #tpu.memory_space<vmem>>, vector<1x8x16xf32>,
    %c16_48 = arith.constant 16 : index
    %c0_49 = arith.constant 0 : index
    %125 = vector.load %arg8[%c16_48, %c0_49] : memref<64x128xf32, #tpu.memory_space<vmem>>, vector<8x64xf32>
    %c40 = arith.constant 40 : index
    %c64_50 = arith.constant 64 : index
    %126 = vector.load %arg8[%c40, %c64_50] : memref<64x128xf32, #tpu.memory_space<vmem>>, vector<8x64xf32>
    %127 = vector.shape_cast %125 : vector<8x64xf32> to vector<1x8x64xf32>
    %128 = vector.shape_cast %126 : vector<8x64xf32> to vector<1x8x64xf32>
    %129 = tpu.concatenate %127, %128 in 0 : vector<1x8x64xf32>, vector<1x8x64xf32> -> vector<2x8x64xf32>
    %c2 = arith.constant 2 : index
    %c0_51 = arith.constant 0 : index
    %c0_52 = arith.constant 0 : index
    %130 = vector.load %arg1[%c2, %c0_51, %c0_52] : memref<8x8x1xf32, #tpu.memory_space<vmem>>, vector<1x8x1xf32>
    %131 = vector.shape_cast %130 : vector<1x8x1xf32> to vector<8x1xf32>
    %c5 = arith.constant 5 : index
    %c0_53 = arith.constant 0 : index
    %c0_54 = arith.constant 0 : index
    %132 = vector.load %arg1[%c5, %c0_53, %c0_54] : memref<8x8x1xf32, #tpu.memory_space<vmem>>, vector<1x8x1xf32>
    %133 = vector.shape_cast %132 : vector<1x8x1xf32> to vector<8x1xf32>
    %134 = vector.shape_cast %131 : vector<8x1xf32> to vector<1x8x1xf32>
    %135 = vector.shape_cast %133 : vector<8x1xf32> to vector<1x8x1xf32>
    %136 = tpu.concatenate %134, %135 in 0 : vector<1x8x1xf32>, vector<1x8x1xf32> -> vector<2x8x1xf32>
    %137 = arith.truncf %114 : vector<2x8x16xf32> to vector<2x8x16xbf16>
    "tpu.trace_start"() <{level = 10 : i32, message = "dbh,dhg->dbg"}> : () -> ()
    %cst_55 = arith.constant dense<0.000000e+00> : vector<2x8x64xf32>
    %138 = tpu.matmul %137, %12, %cst_55 {dimension_numbers = #tpu.dot_dimension_numbers<[2], [1], [1], [2], [0, 0, 0, 1, 1, 2], [0], [0]>} : vector<2x8x16xbf16>, vector<2x16x64xbf16>, vector<2x8x64xf32> -> vector<2x8x64xf32>
    "tpu.trace_stop"() : () -> ()
    %139 = arith.addf %129, %138 : vector<2x8x64xf32>
    %140 = vector.extract_strided_slice %139 {offsets = [0, 0, 0], sizes = [2, 8, 48], strides = [1, 1, 1]} : vector<2x8x64xf32> to vector<2x8x48xf32>
    %141 = arith.negf %140 : vector<2x8x48xf32>
    %142 = math.exp %141 : vector<2x8x48xf32>
    %cst_56 = arith.constant 1.000000e+00 : f32
    %143 = vector.broadcast %cst_56 : f32 to vector<2x8x48xf32>
    %144 = arith.addf %143, %142 : vector<2x8x48xf32>
    %145 = arith.divf %143, %144 : vector<2x8x48xf32>
    %146 = vector.extract_strided_slice %139 {offsets = [0, 0, 48], sizes = [2, 8, 16], strides = [1, 1, 1]} : vector<2x8x64xf32> to vector<2x8x16xf32>
    %147 = math.tanh %146 : vector<2x8x16xf32>
    %148 = vector.extract_strided_slice %145 {offsets = [0, 0, 16], sizes = [2, 8, 16], strides = [1, 1, 1]} : vector<2x8x48xf32> to vector<2x8x16xf32>
    %149 = arith.mulf %148, %109 : vector<2x8x16xf32>
    %150 = vector.extract_strided_slice %145 {offsets = [0, 0, 0], sizes = [2, 8, 16], strides = [1, 1, 1]} : vector<2x8x48xf32> to vector<2x8x16xf32>
    %151 = arith.mulf %150, %147 : vector<2x8x16xf32>
    %152 = arith.addf %149, %151 : vector<2x8x16xf32>
    %153 = vector.extract_strided_slice %145 {offsets = [0, 0, 32], sizes = [2, 8, 16], strides = [1, 1, 1]} : vector<2x8x48xf32> to vector<2x8x16xf32>
    %154 = math.tanh %152 : vector<2x8x16xf32>
    %155 = arith.mulf %153, %154 : vector<2x8x16xf32>
    %156 = vector.broadcast %136 : vector<2x8x1xf32> to vector<2x8x16xf32>
    %157 = arith.mulf %156, %155 : vector<2x8x16xf32>
    %158 = vector.broadcast %136 : vector<2x8x1xf32> to vector<2x8x16xf32>
    %159 = arith.mulf %158, %152 : vector<2x8x16xf32>
    %cst_57 = arith.constant 1.000000e+00 : f32
    %160 = vector.broadcast %cst_57 : f32 to vector<2x8x1xf32>
    %161 = arith.subf %160, %136 : vector<2x8x1xf32>
    %162 = vector.broadcast %161 : vector<2x8x1xf32> to vector<2x8x16xf32>
    %163 = arith.mulf %162, %109 : vector<2x8x16xf32>
    %164 = arith.addf %159, %163 : vector<2x8x16xf32>
    %cst_58 = arith.constant 1.000000e+00 : f32
    %165 = vector.broadcast %cst_58 : f32 to vector<2x8x1xf32>
    %166 = arith.subf %165, %136 : vector<2x8x1xf32>
    %167 = vector.broadcast %166 : vector<2x8x1xf32> to vector<2x8x16xf32>
    %168 = arith.mulf %167, %114 : vector<2x8x16xf32>
    %169 = arith.addf %157, %168 : vector<2x8x16xf32>
    %170 = vector.extract_strided_slice %157 {offsets = [0, 0, 0], sizes = [1, 8, 16], strides = [1, 1, 1]} : vector<2x8x16xf32> to vector<1x8x16xf32>
    %171 = vector.shape_cast %170 : vector<1x8x16xf32> to vector<8x16xf32>
    %c2_59 = arith.constant 2 : index
    %c0_60 = arith.constant 0 : index
    %c0_61 = arith.constant 0 : index
    %172 = vector.load %arg5[%c2_59, %c0_60, %c0_61] : memref<8x8x32xf32, #tpu.memory_space<vmem>>, vector<1x8x16xf32>
    %173 = vector.shape_cast %172 : vector<1x8x16xf32> to vector<8x16xf32>
    %174 = vector.shape_cast %171 : vector<8x16xf32> to vector<1x8x16xf32>
    tpu.vector_store %arg5[%c2_59, %c0_60, %c0_61], %174 {strides = array<i32>} : memref<8x8x32xf32, #tpu.memory_space<vmem>>, vector<1x8x16xf32>,
    %175 = vector.extract_strided_slice %157 {offsets = [1, 0, 0], sizes = [1, 8, 16], strides = [1, 1, 1]} : vector<2x8x16xf32> to vector<1x8x16xf32>
    %176 = vector.shape_cast %175 : vector<1x8x16xf32> to vector<8x16xf32>
    %c5_62 = arith.constant 5 : index
    %c0_63 = arith.constant 0 : index
    %c16_64 = arith.constant 16 : index
    %177 = vector.load %arg5[%c5_62, %c0_63, %c16_64] : memref<8x8x32xf32, #tpu.memory_space<vmem>>, vector<1x8x16xf32>
    %178 = vector.shape_cast %177 : vector<1x8x16xf32> to vector<8x16xf32>
    %179 = vector.shape_cast %176 : vector<8x16xf32> to vector<1x8x16xf32>
    tpu.vector_store %arg5[%c5_62, %c0_63, %c16_64], %179 {strides = array<i32>} : memref<8x8x32xf32, #tpu.memory_space<vmem>>, vector<1x8x16xf32>,
    %c24 = arith.constant 24 : index
    %c0_65 = arith.constant 0 : index
    %180 = vector.load %arg8[%c24, %c0_65] : memref<64x128xf32, #tpu.memory_space<vmem>>, vector<8x64xf32>
    %c32 = arith.constant 32 : index
    %c64_66 = arith.constant 64 : index
    %181 = vector.load %arg8[%c32, %c64_66] : memref<64x128xf32, #tpu.memory_space<vmem>>, vector<8x64xf32>
    %182 = vector.shape_cast %180 : vector<8x64xf32> to vector<1x8x64xf32>
    %183 = vector.shape_cast %181 : vector<8x64xf32> to vector<1x8x64xf32>
    %184 = tpu.concatenate %182, %183 in 0 : vector<1x8x64xf32>, vector<1x8x64xf32> -> vector<2x8x64xf32>
    %c3 = arith.constant 3 : index
    %c0_67 = arith.constant 0 : index
    %c0_68 = arith.constant 0 : index
    %185 = vector.load %arg1[%c3, %c0_67, %c0_68] : memref<8x8x1xf32, #tpu.memory_space<vmem>>, vector<1x8x1xf32>
    %186 = vector.shape_cast %185 : vector<1x8x1xf32> to vector<8x1xf32>
    %c4 = arith.constant 4 : index
    %c0_69 = arith.constant 0 : index
    %c0_70 = arith.constant 0 : index
    %187 = vector.load %arg1[%c4, %c0_69, %c0_70] : memref<8x8x1xf32, #tpu.memory_space<vmem>>, vector<1x8x1xf32>
    %188 = vector.shape_cast %187 : vector<1x8x1xf32> to vector<8x1xf32>
    %189 = vector.shape_cast %186 : vector<8x1xf32> to vector<1x8x1xf32>
    %190 = vector.shape_cast %188 : vector<8x1xf32> to vector<1x8x1xf32>
    %191 = tpu.concatenate %189, %190 in 0 : vector<1x8x1xf32>, vector<1x8x1xf32> -> vector<2x8x1xf32>
    %192 = arith.truncf %169 : vector<2x8x16xf32> to vector<2x8x16xbf16>
    "tpu.trace_start"() <{level = 10 : i32, message = "dbh,dhg->dbg"}> : () -> ()
    %cst_71 = arith.constant dense<0.000000e+00> : vector<2x8x64xf32>
    %193 = tpu.matmul %192, %12, %cst_71 {dimension_numbers = #tpu.dot_dimension_numbers<[2], [1], [1], [2], [0, 0, 0, 1, 1, 2], [0], [0]>} : vector<2x8x16xbf16>, vector<2x16x64xbf16>, vector<2x8x64xf32> -> vector<2x8x64xf32>
    "tpu.trace_stop"() : () -> ()
    %194 = arith.addf %184, %193 : vector<2x8x64xf32>
    %195 = vector.extract_strided_slice %194 {offsets = [0, 0, 0], sizes = [2, 8, 48], strides = [1, 1, 1]} : vector<2x8x64xf32> to vector<2x8x48xf32>
    %196 = arith.negf %195 : vector<2x8x48xf32>
    %197 = math.exp %196 : vector<2x8x48xf32>
    %cst_72 = arith.constant 1.000000e+00 : f32
    %198 = vector.broadcast %cst_72 : f32 to vector<2x8x48xf32>
    %199 = arith.addf %198, %197 : vector<2x8x48xf32>
    %200 = arith.divf %198, %199 : vector<2x8x48xf32>
    %201 = vector.extract_strided_slice %194 {offsets = [0, 0, 48], sizes = [2, 8, 16], strides = [1, 1, 1]} : vector<2x8x64xf32> to vector<2x8x16xf32>
    %202 = math.tanh %201 : vector<2x8x16xf32>
    %203 = vector.extract_strided_slice %200 {offsets = [0, 0, 16], sizes = [2, 8, 16], strides = [1, 1, 1]} : vector<2x8x48xf32> to vector<2x8x16xf32>
    %204 = arith.mulf %203, %164 : vector<2x8x16xf32>
    %205 = vector.extract_strided_slice %200 {offsets = [0, 0, 0], sizes = [2, 8, 16], strides = [1, 1, 1]} : vector<2x8x48xf32> to vector<2x8x16xf32>
    %206 = arith.mulf %205, %202 : vector<2x8x16xf32>
    %207 = arith.addf %204, %206 : vector<2x8x16xf32>
    %208 = vector.extract_strided_slice %200 {offsets = [0, 0, 32], sizes = [2, 8, 16], strides = [1, 1, 1]} : vector<2x8x48xf32> to vector<2x8x16xf32>
    %209 = math.tanh %207 : vector<2x8x16xf32>
    %210 = arith.mulf %208, %209 : vector<2x8x16xf32>
    %211 = vector.broadcast %191 : vector<2x8x1xf32> to vector<2x8x16xf32>
    %212 = arith.mulf %211, %210 : vector<2x8x16xf32>
    %213 = vector.broadcast %191 : vector<2x8x1xf32> to vector<2x8x16xf32>
    %214 = arith.mulf %213, %207 : vector<2x8x16xf32>
    %cst_73 = arith.constant 1.000000e+00 : f32
    %215 = vector.broadcast %cst_73 : f32 to vector<2x8x1xf32>
    %216 = arith.subf %215, %191 : vector<2x8x1xf32>
    %217 = vector.broadcast %216 : vector<2x8x1xf32> to vector<2x8x16xf32>
    %218 = arith.mulf %217, %164 : vector<2x8x16xf32>
    %219 = arith.addf %214, %218 : vector<2x8x16xf32>
    %cst_74 = arith.constant 1.000000e+00 : f32
    %220 = vector.broadcast %cst_74 : f32 to vector<2x8x1xf32>
    %221 = arith.subf %220, %191 : vector<2x8x1xf32>
    %222 = vector.broadcast %221 : vector<2x8x1xf32> to vector<2x8x16xf32>
    %223 = arith.mulf %222, %169 : vector<2x8x16xf32>
    %224 = arith.addf %212, %223 : vector<2x8x16xf32>
    %225 = vector.extract_strided_slice %212 {offsets = [0, 0, 0], sizes = [1, 8, 16], strides = [1, 1, 1]} : vector<2x8x16xf32> to vector<1x8x16xf32>
    %226 = vector.shape_cast %225 : vector<1x8x16xf32> to vector<8x16xf32>
    %c3_75 = arith.constant 3 : index
    %c0_76 = arith.constant 0 : index
    %c0_77 = arith.constant 0 : index
    %227 = vector.load %arg5[%c3_75, %c0_76, %c0_77] : memref<8x8x32xf32, #tpu.memory_space<vmem>>, vector<1x8x16xf32>
    %228 = vector.shape_cast %227 : vector<1x8x16xf32> to vector<8x16xf32>
    %229 = vector.shape_cast %226 : vector<8x16xf32> to vector<1x8x16xf32>
    tpu.vector_store %arg5[%c3_75, %c0_76, %c0_77], %229 {strides = array<i32>} : memref<8x8x32xf32, #tpu.memory_space<vmem>>, vector<1x8x16xf32>,
    %230 = vector.extract_strided_slice %212 {offsets = [1, 0, 0], sizes = [1, 8, 16], strides = [1, 1, 1]} : vector<2x8x16xf32> to vector<1x8x16xf32>
    %231 = vector.shape_cast %230 : vector<1x8x16xf32> to vector<8x16xf32>
    %c4_78 = arith.constant 4 : index
    %c0_79 = arith.constant 0 : index
    %c16_80 = arith.constant 16 : index
    %232 = vector.load %arg5[%c4_78, %c0_79, %c16_80] : memref<8x8x32xf32, #tpu.memory_space<vmem>>, vector<1x8x16xf32>
    %233 = vector.shape_cast %232 : vector<1x8x16xf32> to vector<8x16xf32>
    %234 = vector.shape_cast %231 : vector<8x16xf32> to vector<1x8x16xf32>
    tpu.vector_store %arg5[%c4_78, %c0_79, %c16_80], %234 {strides = array<i32>} : memref<8x8x32xf32, #tpu.memory_space<vmem>>, vector<1x8x16xf32>,
    %c32_81 = arith.constant 32 : index
    %c0_82 = arith.constant 0 : index
    %235 = vector.load %arg8[%c32_81, %c0_82] : memref<64x128xf32, #tpu.memory_space<vmem>>, vector<8x64xf32>
    %c24_83 = arith.constant 24 : index
    %c64_84 = arith.constant 64 : index
    %236 = vector.load %arg8[%c24_83, %c64_84] : memref<64x128xf32, #tpu.memory_space<vmem>>, vector<8x64xf32>
    %237 = vector.shape_cast %235 : vector<8x64xf32> to vector<1x8x64xf32>
    %238 = vector.shape_cast %236 : vector<8x64xf32> to vector<1x8x64xf32>
    %239 = tpu.concatenate %237, %238 in 0 : vector<1x8x64xf32>, vector<1x8x64xf32> -> vector<2x8x64xf32>
    %c4_85 = arith.constant 4 : index
    %c0_86 = arith.constant 0 : index
    %c0_87 = arith.constant 0 : index
    %240 = vector.load %arg1[%c4_85, %c0_86, %c0_87] : memref<8x8x1xf32, #tpu.memory_space<vmem>>, vector<1x8x1xf32>
    %241 = vector.shape_cast %240 : vector<1x8x1xf32> to vector<8x1xf32>
    %c3_88 = arith.constant 3 : index
    %c0_89 = arith.constant 0 : index
    %c0_90 = arith.constant 0 : index
    %242 = vector.load %arg1[%c3_88, %c0_89, %c0_90] : memref<8x8x1xf32, #tpu.memory_space<vmem>>, vector<1x8x1xf32>
    %243 = vector.shape_cast %242 : vector<1x8x1xf32> to vector<8x1xf32>
    %244 = vector.shape_cast %241 : vector<8x1xf32> to vector<1x8x1xf32>
    %245 = vector.shape_cast %243 : vector<8x1xf32> to vector<1x8x1xf32>
    %246 = tpu.concatenate %244, %245 in 0 : vector<1x8x1xf32>, vector<1x8x1xf32> -> vector<2x8x1xf32>
    %247 = arith.truncf %224 : vector<2x8x16xf32> to vector<2x8x16xbf16>
    "tpu.trace_start"() <{level = 10 : i32, message = "dbh,dhg->dbg"}> : () -> ()
    %cst_91 = arith.constant dense<0.000000e+00> : vector<2x8x64xf32>
    %248 = tpu.matmul %247, %12, %cst_91 {dimension_numbers = #tpu.dot_dimension_numbers<[2], [1], [1], [2], [0, 0, 0, 1, 1, 2], [0], [0]>} : vector<2x8x16xbf16>, vector<2x16x64xbf16>, vector<2x8x64xf32> -> vector<2x8x64xf32>
    "tpu.trace_stop"() : () -> ()
    %249 = arith.addf %239, %248 : vector<2x8x64xf32>
    %250 = vector.extract_strided_slice %249 {offsets = [0, 0, 0], sizes = [2, 8, 48], strides = [1, 1, 1]} : vector<2x8x64xf32> to vector<2x8x48xf32>
    %251 = arith.negf %250 : vector<2x8x48xf32>
    %252 = math.exp %251 : vector<2x8x48xf32>
    %cst_92 = arith.constant 1.000000e+00 : f32
    %253 = vector.broadcast %cst_92 : f32 to vector<2x8x48xf32>
    %254 = arith.addf %253, %252 : vector<2x8x48xf32>
    %255 = arith.divf %253, %254 : vector<2x8x48xf32>
    %256 = vector.extract_strided_slice %249 {offsets = [0, 0, 48], sizes = [2, 8, 16], strides = [1, 1, 1]} : vector<2x8x64xf32> to vector<2x8x16xf32>
    %257 = math.tanh %256 : vector<2x8x16xf32>
    %258 = vector.extract_strided_slice %255 {offsets = [0, 0, 16], sizes = [2, 8, 16], strides = [1, 1, 1]} : vector<2x8x48xf32> to vector<2x8x16xf32>
    %259 = arith.mulf %258, %219 : vector<2x8x16xf32>
    %260 = vector.extract_strided_slice %255 {offsets = [0, 0, 0], sizes = [2, 8, 16], strides = [1, 1, 1]} : vector<2x8x48xf32> to vector<2x8x16xf32>
    %261 = arith.mulf %260, %257 : vector<2x8x16xf32>
    %262 = arith.addf %259, %261 : vector<2x8x16xf32>
    %263 = vector.extract_strided_slice %255 {offsets = [0, 0, 32], sizes = [2, 8, 16], strides = [1, 1, 1]} : vector<2x8x48xf32> to vector<2x8x16xf32>
    %264 = math.tanh %262 : vector<2x8x16xf32>
    %265 = arith.mulf %263, %264 : vector<2x8x16xf32>
    %266 = vector.broadcast %246 : vector<2x8x1xf32> to vector<2x8x16xf32>
    %267 = arith.mulf %266, %265 : vector<2x8x16xf32>
    %268 = vector.broadcast %246 : vector<2x8x1xf32> to vector<2x8x16xf32>
    %269 = arith.mulf %268, %262 : vector<2x8x16xf32>
    %cst_93 = arith.constant 1.000000e+00 : f32
    %270 = vector.broadcast %cst_93 : f32 to vector<2x8x1xf32>
    %271 = arith.subf %270, %246 : vector<2x8x1xf32>
    %272 = vector.broadcast %271 : vector<2x8x1xf32> to vector<2x8x16xf32>
    %273 = arith.mulf %272, %219 : vector<2x8x16xf32>
    %274 = arith.addf %269, %273 : vector<2x8x16xf32>
    %cst_94 = arith.constant 1.000000e+00 : f32
    %275 = vector.broadcast %cst_94 : f32 to vector<2x8x1xf32>
    %276 = arith.subf %275, %246 : vector<2x8x1xf32>
    %277 = vector.broadcast %276 : vector<2x8x1xf32> to vector<2x8x16xf32>
    %278 = arith.mulf %277, %224 : vector<2x8x16xf32>
    %279 = arith.addf %267, %278 : vector<2x8x16xf32>
    %280 = vector.extract_strided_slice %267 {offsets = [0, 0, 0], sizes = [1, 8, 16], strides = [1, 1, 1]} : vector<2x8x16xf32> to vector<1x8x16xf32>
    %281 = vector.shape_cast %280 : vector<1x8x16xf32> to vector<8x16xf32>
    %c4_95 = arith.constant 4 : index
    %c0_96 = arith.constant 0 : index
    %c0_97 = arith.constant 0 : index
    %282 = vector.load %arg5[%c4_95, %c0_96, %c0_97] : memref<8x8x32xf32, #tpu.memory_space<vmem>>, vector<1x8x16xf32>
    %283 = vector.shape_cast %282 : vector<1x8x16xf32> to vector<8x16xf32>
    %284 = vector.shape_cast %281 : vector<8x16xf32> to vector<1x8x16xf32>
    tpu.vector_store %arg5[%c4_95, %c0_96, %c0_97], %284 {strides = array<i32>} : memref<8x8x32xf32, #tpu.memory_space<vmem>>, vector<1x8x16xf32>,
    %285 = vector.extract_strided_slice %267 {offsets = [1, 0, 0], sizes = [1, 8, 16], strides = [1, 1, 1]} : vector<2x8x16xf32> to vector<1x8x16xf32>
    %286 = vector.shape_cast %285 : vector<1x8x16xf32> to vector<8x16xf32>
    %c3_98 = arith.constant 3 : index
    %c0_99 = arith.constant 0 : index
    %c16_100 = arith.constant 16 : index
    %287 = vector.load %arg5[%c3_98, %c0_99, %c16_100] : memref<8x8x32xf32, #tpu.memory_space<vmem>>, vector<1x8x16xf32>
    %288 = vector.shape_cast %287 : vector<1x8x16xf32> to vector<8x16xf32>
    %289 = vector.shape_cast %286 : vector<8x16xf32> to vector<1x8x16xf32>
    tpu.vector_store %arg5[%c3_98, %c0_99, %c16_100], %289 {strides = array<i32>} : memref<8x8x32xf32, #tpu.memory_space<vmem>>, vector<1x8x16xf32>,
    %c40_101 = arith.constant 40 : index
    %c0_102 = arith.constant 0 : index
    %290 = vector.load %arg8[%c40_101, %c0_102] : memref<64x128xf32, #tpu.memory_space<vmem>>, vector<8x64xf32>
    %c16_103 = arith.constant 16 : index
    %c64_104 = arith.constant 64 : index
    %291 = vector.load %arg8[%c16_103, %c64_104] : memref<64x128xf32, #tpu.memory_space<vmem>>, vector<8x64xf32>
    %292 = vector.shape_cast %290 : vector<8x64xf32> to vector<1x8x64xf32>
    %293 = vector.shape_cast %291 : vector<8x64xf32> to vector<1x8x64xf32>
    %294 = tpu.concatenate %292, %293 in 0 : vector<1x8x64xf32>, vector<1x8x64xf32> -> vector<2x8x64xf32>
    %c5_105 = arith.constant 5 : index
    %c0_106 = arith.constant 0 : index
    %c0_107 = arith.constant 0 : index
    %295 = vector.load %arg1[%c5_105, %c0_106, %c0_107] : memref<8x8x1xf32, #tpu.memory_space<vmem>>, vector<1x8x1xf32>
    %296 = vector.shape_cast %295 : vector<1x8x1xf32> to vector<8x1xf32>
    %c2_108 = arith.constant 2 : index
    %c0_109 = arith.constant 0 : index
    %c0_110 = arith.constant 0 : index
    %297 = vector.load %arg1[%c2_108, %c0_109, %c0_110] : memref<8x8x1xf32, #tpu.memory_space<vmem>>, vector<1x8x1xf32>
    %298 = vector.shape_cast %297 : vector<1x8x1xf32> to vector<8x1xf32>
    %299 = vector.shape_cast %296 : vector<8x1xf32> to vector<1x8x1xf32>
    %300 = vector.shape_cast %298 : vector<8x1xf32> to vector<1x8x1xf32>
    %301 = tpu.concatenate %299, %300 in 0 : vector<1x8x1xf32>, vector<1x8x1xf32> -> vector<2x8x1xf32>
    %302 = arith.truncf %279 : vector<2x8x16xf32> to vector<2x8x16xbf16>
    "tpu.trace_start"() <{level = 10 : i32, message = "dbh,dhg->dbg"}> : () -> ()
    %cst_111 = arith.constant dense<0.000000e+00> : vector<2x8x64xf32>
    %303 = tpu.matmul %302, %12, %cst_111 {dimension_numbers = #tpu.dot_dimension_numbers<[2], [1], [1], [2], [0, 0, 0, 1, 1, 2], [0], [0]>} : vector<2x8x16xbf16>, vector<2x16x64xbf16>, vector<2x8x64xf32> -> vector<2x8x64xf32>
    "tpu.trace_stop"() : () -> ()
    %304 = arith.addf %294, %303 : vector<2x8x64xf32>
    %305 = vector.extract_strided_slice %304 {offsets = [0, 0, 0], sizes = [2, 8, 48], strides = [1, 1, 1]} : vector<2x8x64xf32> to vector<2x8x48xf32>
    %306 = arith.negf %305 : vector<2x8x48xf32>
    %307 = math.exp %306 : vector<2x8x48xf32>
    %cst_112 = arith.constant 1.000000e+00 : f32
    %308 = vector.broadcast %cst_112 : f32 to vector<2x8x48xf32>
    %309 = arith.addf %308, %307 : vector<2x8x48xf32>
    %310 = arith.divf %308, %309 : vector<2x8x48xf32>
    %311 = vector.extract_strided_slice %304 {offsets = [0, 0, 48], sizes = [2, 8, 16], strides = [1, 1, 1]} : vector<2x8x64xf32> to vector<2x8x16xf32>
    %312 = math.tanh %311 : vector<2x8x16xf32>
    %313 = vector.extract_strided_slice %310 {offsets = [0, 0, 16], sizes = [2, 8, 16], strides = [1, 1, 1]} : vector<2x8x48xf32> to vector<2x8x16xf32>
    %314 = arith.mulf %313, %274 : vector<2x8x16xf32>
    %315 = vector.extract_strided_slice %310 {offsets = [0, 0, 0], sizes = [2, 8, 16], strides = [1, 1, 1]} : vector<2x8x48xf32> to vector<2x8x16xf32>
    %316 = arith.mulf %315, %312 : vector<2x8x16xf32>
    %317 = arith.addf %314, %316 : vector<2x8x16xf32>
    %318 = vector.extract_strided_slice %310 {offsets = [0, 0, 32], sizes = [2, 8, 16], strides = [1, 1, 1]} : vector<2x8x48xf32> to vector<2x8x16xf32>
    %319 = math.tanh %317 : vector<2x8x16xf32>
    %320 = arith.mulf %318, %319 : vector<2x8x16xf32>
    %321 = vector.broadcast %301 : vector<2x8x1xf32> to vector<2x8x16xf32>
    %322 = arith.mulf %321, %320 : vector<2x8x16xf32>
    %323 = vector.broadcast %301 : vector<2x8x1xf32> to vector<2x8x16xf32>
    %324 = arith.mulf %323, %317 : vector<2x8x16xf32>
    %cst_113 = arith.constant 1.000000e+00 : f32
    %325 = vector.broadcast %cst_113 : f32 to vector<2x8x1xf32>
    %326 = arith.subf %325, %301 : vector<2x8x1xf32>
    %327 = vector.broadcast %326 : vector<2x8x1xf32> to vector<2x8x16xf32>
    %328 = arith.mulf %327, %274 : vector<2x8x16xf32>
    %329 = arith.addf %324, %328 : vector<2x8x16xf32>
    %cst_114 = arith.constant 1.000000e+00 : f32
    %330 = vector.broadcast %cst_114 : f32 to vector<2x8x1xf32>
    %331 = arith.subf %330, %301 : vector<2x8x1xf32>
    %332 = vector.broadcast %331 : vector<2x8x1xf32> to vector<2x8x16xf32>
    %333 = arith.mulf %332, %279 : vector<2x8x16xf32>
    %334 = arith.addf %322, %333 : vector<2x8x16xf32>
    %335 = vector.extract_strided_slice %322 {offsets = [0, 0, 0], sizes = [1, 8, 16], strides = [1, 1, 1]} : vector<2x8x16xf32> to vector<1x8x16xf32>
    %336 = vector.shape_cast %335 : vector<1x8x16xf32> to vector<8x16xf32>
    %c5_115 = arith.constant 5 : index
    %c0_116 = arith.constant 0 : index
    %c0_117 = arith.constant 0 : index
    %337 = vector.load %arg5[%c5_115, %c0_116, %c0_117] : memref<8x8x32xf32, #tpu.memory_space<vmem>>, vector<1x8x16xf32>
    %338 = vector.shape_cast %337 : vector<1x8x16xf32> to vector<8x16xf32>
    %339 = vector.shape_cast %336 : vector<8x16xf32> to vector<1x8x16xf32>
    tpu.vector_store %arg5[%c5_115, %c0_116, %c0_117], %339 {strides = array<i32>} : memref<8x8x32xf32, #tpu.memory_space<vmem>>, vector<1x8x16xf32>,
    %340 = vector.extract_strided_slice %322 {offsets = [1, 0, 0], sizes = [1, 8, 16], strides = [1, 1, 1]} : vector<2x8x16xf32> to vector<1x8x16xf32>
    %341 = vector.shape_cast %340 : vector<1x8x16xf32> to vector<8x16xf32>
    %c2_118 = arith.constant 2 : index
    %c0_119 = arith.constant 0 : index
    %c16_120 = arith.constant 16 : index
    %342 = vector.load %arg5[%c2_118, %c0_119, %c16_120] : memref<8x8x32xf32, #tpu.memory_space<vmem>>, vector<1x8x16xf32>
    %343 = vector.shape_cast %342 : vector<1x8x16xf32> to vector<8x16xf32>
    %344 = vector.shape_cast %341 : vector<8x16xf32> to vector<1x8x16xf32>
    tpu.vector_store %arg5[%c2_118, %c0_119, %c16_120], %344 {strides = array<i32>} : memref<8x8x32xf32, #tpu.memory_space<vmem>>, vector<1x8x16xf32>,
    %c48_121 = arith.constant 48 : index
    %c0_122 = arith.constant 0 : index
    %345 = vector.load %arg8[%c48_121, %c0_122] : memref<64x128xf32, #tpu.memory_space<vmem>>, vector<8x64xf32>
    %c8_123 = arith.constant 8 : index
    %c64_124 = arith.constant 64 : index
    %346 = vector.load %arg8[%c8_123, %c64_124] : memref<64x128xf32, #tpu.memory_space<vmem>>, vector<8x64xf32>
    %347 = vector.shape_cast %345 : vector<8x64xf32> to vector<1x8x64xf32>
    %348 = vector.shape_cast %346 : vector<8x64xf32> to vector<1x8x64xf32>
    %349 = tpu.concatenate %347, %348 in 0 : vector<1x8x64xf32>, vector<1x8x64xf32> -> vector<2x8x64xf32>
    %c6_125 = arith.constant 6 : index
    %c0_126 = arith.constant 0 : index
    %c0_127 = arith.constant 0 : index
    %350 = vector.load %arg1[%c6_125, %c0_126, %c0_127] : memref<8x8x1xf32, #tpu.memory_space<vmem>>, vector<1x8x1xf32>
    %351 = vector.shape_cast %350 : vector<1x8x1xf32> to vector<8x1xf32>
    %c1_128 = arith.constant 1 : index
    %c0_129 = arith.constant 0 : index
    %c0_130 = arith.constant 0 : index
    %352 = vector.load %arg1[%c1_128, %c0_129, %c0_130] : memref<8x8x1xf32, #tpu.memory_space<vmem>>, vector<1x8x1xf32>
    %353 = vector.shape_cast %352 : vector<1x8x1xf32> to vector<8x1xf32>
    %354 = vector.shape_cast %351 : vector<8x1xf32> to vector<1x8x1xf32>
    %355 = vector.shape_cast %353 : vector<8x1xf32> to vector<1x8x1xf32>
    %356 = tpu.concatenate %354, %355 in 0 : vector<1x8x1xf32>, vector<1x8x1xf32> -> vector<2x8x1xf32>
    %357 = arith.truncf %334 : vector<2x8x16xf32> to vector<2x8x16xbf16>
    "tpu.trace_start"() <{level = 10 : i32, message = "dbh,dhg->dbg"}> : () -> ()
    %cst_131 = arith.constant dense<0.000000e+00> : vector<2x8x64xf32>
    %358 = tpu.matmul %357, %12, %cst_131 {dimension_numbers = #tpu.dot_dimension_numbers<[2], [1], [1], [2], [0, 0, 0, 1, 1, 2], [0], [0]>} : vector<2x8x16xbf16>, vector<2x16x64xbf16>, vector<2x8x64xf32> -> vector<2x8x64xf32>
    "tpu.trace_stop"() : () -> ()
    %359 = arith.addf %349, %358 : vector<2x8x64xf32>
    %360 = vector.extract_strided_slice %359 {offsets = [0, 0, 0], sizes = [2, 8, 48], strides = [1, 1, 1]} : vector<2x8x64xf32> to vector<2x8x48xf32>
    %361 = arith.negf %360 : vector<2x8x48xf32>
    %362 = math.exp %361 : vector<2x8x48xf32>
    %cst_132 = arith.constant 1.000000e+00 : f32
    %363 = vector.broadcast %cst_132 : f32 to vector<2x8x48xf32>
    %364 = arith.addf %363, %362 : vector<2x8x48xf32>
    %365 = arith.divf %363, %364 : vector<2x8x48xf32>
    %366 = vector.extract_strided_slice %359 {offsets = [0, 0, 48], sizes = [2, 8, 16], strides = [1, 1, 1]} : vector<2x8x64xf32> to vector<2x8x16xf32>
    %367 = math.tanh %366 : vector<2x8x16xf32>
    %368 = vector.extract_strided_slice %365 {offsets = [0, 0, 16], sizes = [2, 8, 16], strides = [1, 1, 1]} : vector<2x8x48xf32> to vector<2x8x16xf32>
    %369 = arith.mulf %368, %329 : vector<2x8x16xf32>
    %370 = vector.extract_strided_slice %365 {offsets = [0, 0, 0], sizes = [2, 8, 16], strides = [1, 1, 1]} : vector<2x8x48xf32> to vector<2x8x16xf32>
    %371 = arith.mulf %370, %367 : vector<2x8x16xf32>
    %372 = arith.addf %369, %371 : vector<2x8x16xf32>
    %373 = vector.extract_strided_slice %365 {offsets = [0, 0, 32], sizes = [2, 8, 16], strides = [1, 1, 1]} : vector<2x8x48xf32> to vector<2x8x16xf32>
    %374 = math.tanh %372 : vector<2x8x16xf32>
    %375 = arith.mulf %373, %374 : vector<2x8x16xf32>
    %376 = vector.broadcast %356 : vector<2x8x1xf32> to vector<2x8x16xf32>
    %377 = arith.mulf %376, %375 : vector<2x8x16xf32>
    %378 = vector.broadcast %356 : vector<2x8x1xf32> to vector<2x8x16xf32>
    %379 = arith.mulf %378, %372 : vector<2x8x16xf32>
    %cst_133 = arith.constant 1.000000e+00 : f32
    %380 = vector.broadcast %cst_133 : f32 to vector<2x8x1xf32>
    %381 = arith.subf %380, %356 : vector<2x8x1xf32>
    %382 = vector.broadcast %381 : vector<2x8x1xf32> to vector<2x8x16xf32>
    %383 = arith.mulf %382, %329 : vector<2x8x16xf32>
    %384 = arith.addf %379, %383 : vector<2x8x16xf32>
    %cst_134 = arith.constant 1.000000e+00 : f32
    %385 = vector.broadcast %cst_134 : f32 to vector<2x8x1xf32>
    %386 = arith.subf %385, %356 : vector<2x8x1xf32>
    %387 = vector.broadcast %386 : vector<2x8x1xf32> to vector<2x8x16xf32>
    %388 = arith.mulf %387, %334 : vector<2x8x16xf32>
    %389 = arith.addf %377, %388 : vector<2x8x16xf32>
    %390 = vector.extract_strided_slice %377 {offsets = [0, 0, 0], sizes = [1, 8, 16], strides = [1, 1, 1]} : vector<2x8x16xf32> to vector<1x8x16xf32>
    %391 = vector.shape_cast %390 : vector<1x8x16xf32> to vector<8x16xf32>
    %c6_135 = arith.constant 6 : index
    %c0_136 = arith.constant 0 : index
    %c0_137 = arith.constant 0 : index
    %392 = vector.load %arg5[%c6_135, %c0_136, %c0_137] : memref<8x8x32xf32, #tpu.memory_space<vmem>>, vector<1x8x16xf32>
    %393 = vector.shape_cast %392 : vector<1x8x16xf32> to vector<8x16xf32>
    %394 = vector.shape_cast %391 : vector<8x16xf32> to vector<1x8x16xf32>
    tpu.vector_store %arg5[%c6_135, %c0_136, %c0_137], %394 {strides = array<i32>} : memref<8x8x32xf32, #tpu.memory_space<vmem>>, vector<1x8x16xf32>,
    %395 = vector.extract_strided_slice %377 {offsets = [1, 0, 0], sizes = [1, 8, 16], strides = [1, 1, 1]} : vector<2x8x16xf32> to vector<1x8x16xf32>
    %396 = vector.shape_cast %395 : vector<1x8x16xf32> to vector<8x16xf32>
    %c1_138 = arith.constant 1 : index
    %c0_139 = arith.constant 0 : index
    %c16_140 = arith.constant 16 : index
    %397 = vector.load %arg5[%c1_138, %c0_139, %c16_140] : memref<8x8x32xf32, #tpu.memory_space<vmem>>, vector<1x8x16xf32>
    %398 = vector.shape_cast %397 : vector<1x8x16xf32> to vector<8x16xf32>
    %399 = vector.shape_cast %396 : vector<8x16xf32> to vector<1x8x16xf32>
    tpu.vector_store %arg5[%c1_138, %c0_139, %c16_140], %399 {strides = array<i32>} : memref<8x8x32xf32, #tpu.memory_space<vmem>>, vector<1x8x16xf32>,
    %c56_141 = arith.constant 56 : index
    %c0_142 = arith.constant 0 : index
    %400 = vector.load %arg8[%c56_141, %c0_142] : memref<64x128xf32, #tpu.memory_space<vmem>>, vector<8x64xf32>
    %c0_143 = arith.constant 0 : index
    %c64_144 = arith.constant 64 : index
    %401 = vector.load %arg8[%c0_143, %c64_144] : memref<64x128xf32, #tpu.memory_space<vmem>>, vector<8x64xf32>
    %402 = vector.shape_cast %400 : vector<8x64xf32> to vector<1x8x64xf32>
    %403 = vector.shape_cast %401 : vector<8x64xf32> to vector<1x8x64xf32>
    %404 = tpu.concatenate %402, %403 in 0 : vector<1x8x64xf32>, vector<1x8x64xf32> -> vector<2x8x64xf32>
    %c7_145 = arith.constant 7 : index
    %c0_146 = arith.constant 0 : index
    %c0_147 = arith.constant 0 : index
    %405 = vector.load %arg1[%c7_145, %c0_146, %c0_147] : memref<8x8x1xf32, #tpu.memory_space<vmem>>, vector<1x8x1xf32>
    %406 = vector.shape_cast %405 : vector<1x8x1xf32> to vector<8x1xf32>
    %c0_148 = arith.constant 0 : index
    %c0_149 = arith.constant 0 : index
    %c0_150 = arith.constant 0 : index
    %407 = vector.load %arg1[%c0_148, %c0_149, %c0_150] : memref<8x8x1xf32, #tpu.memory_space<vmem>>, vector<1x8x1xf32>
    %408 = vector.shape_cast %407 : vector<1x8x1xf32> to vector<8x1xf32>
    %409 = vector.shape_cast %406 : vector<8x1xf32> to vector<1x8x1xf32>
    %410 = vector.shape_cast %408 : vector<8x1xf32> to vector<1x8x1xf32>
    %411 = tpu.concatenate %409, %410 in 0 : vector<1x8x1xf32>, vector<1x8x1xf32> -> vector<2x8x1xf32>
    %412 = arith.truncf %389 : vector<2x8x16xf32> to vector<2x8x16xbf16>
    "tpu.trace_start"() <{level = 10 : i32, message = "dbh,dhg->dbg"}> : () -> ()
    %cst_151 = arith.constant dense<0.000000e+00> : vector<2x8x64xf32>
    %413 = tpu.matmul %412, %12, %cst_151 {dimension_numbers = #tpu.dot_dimension_numbers<[2], [1], [1], [2], [0, 0, 0, 1, 1, 2], [0], [0]>} : vector<2x8x16xbf16>, vector<2x16x64xbf16>, vector<2x8x64xf32> -> vector<2x8x64xf32>
    "tpu.trace_stop"() : () -> ()
    %414 = arith.addf %404, %413 : vector<2x8x64xf32>
    %415 = vector.extract_strided_slice %414 {offsets = [0, 0, 0], sizes = [2, 8, 48], strides = [1, 1, 1]} : vector<2x8x64xf32> to vector<2x8x48xf32>
    %416 = arith.negf %415 : vector<2x8x48xf32>
    %417 = math.exp %416 : vector<2x8x48xf32>
    %cst_152 = arith.constant 1.000000e+00 : f32
    %418 = vector.broadcast %cst_152 : f32 to vector<2x8x48xf32>
    %419 = arith.addf %418, %417 : vector<2x8x48xf32>
    %420 = arith.divf %418, %419 : vector<2x8x48xf32>
    %421 = vector.extract_strided_slice %414 {offsets = [0, 0, 48], sizes = [2, 8, 16], strides = [1, 1, 1]} : vector<2x8x64xf32> to vector<2x8x16xf32>
    %422 = math.tanh %421 : vector<2x8x16xf32>
    %423 = vector.extract_strided_slice %420 {offsets = [0, 0, 16], sizes = [2, 8, 16], strides = [1, 1, 1]} : vector<2x8x48xf32> to vector<2x8x16xf32>
    %424 = arith.mulf %423, %384 : vector<2x8x16xf32>
    %425 = vector.extract_strided_slice %420 {offsets = [0, 0, 0], sizes = [2, 8, 16], strides = [1, 1, 1]} : vector<2x8x48xf32> to vector<2x8x16xf32>
    %426 = arith.mulf %425, %422 : vector<2x8x16xf32>
    %427 = arith.addf %424, %426 : vector<2x8x16xf32>
    %428 = vector.extract_strided_slice %420 {offsets = [0, 0, 32], sizes = [2, 8, 16], strides = [1, 1, 1]} : vector<2x8x48xf32> to vector<2x8x16xf32>
    %429 = math.tanh %427 : vector<2x8x16xf32>
    %430 = arith.mulf %428, %429 : vector<2x8x16xf32>
    %431 = vector.broadcast %411 : vector<2x8x1xf32> to vector<2x8x16xf32>
    %432 = arith.mulf %431, %430 : vector<2x8x16xf32>
    %433 = vector.broadcast %411 : vector<2x8x1xf32> to vector<2x8x16xf32>
    %434 = arith.mulf %433, %427 : vector<2x8x16xf32>
    %cst_153 = arith.constant 1.000000e+00 : f32
    %435 = vector.broadcast %cst_153 : f32 to vector<2x8x1xf32>
    %436 = arith.subf %435, %411 : vector<2x8x1xf32>
    %437 = vector.broadcast %436 : vector<2x8x1xf32> to vector<2x8x16xf32>
    %438 = arith.mulf %437, %384 : vector<2x8x16xf32>
    %439 = arith.addf %434, %438 : vector<2x8x16xf32>
    %cst_154 = arith.constant 1.000000e+00 : f32
    %440 = vector.broadcast %cst_154 : f32 to vector<2x8x1xf32>
    %441 = arith.subf %440, %411 : vector<2x8x1xf32>
    %442 = vector.broadcast %441 : vector<2x8x1xf32> to vector<2x8x16xf32>
    %443 = arith.mulf %442, %389 : vector<2x8x16xf32>
    %444 = arith.addf %432, %443 : vector<2x8x16xf32>
    %445 = vector.extract_strided_slice %432 {offsets = [0, 0, 0], sizes = [1, 8, 16], strides = [1, 1, 1]} : vector<2x8x16xf32> to vector<1x8x16xf32>
    %446 = vector.shape_cast %445 : vector<1x8x16xf32> to vector<8x16xf32>
    %c7_155 = arith.constant 7 : index
    %c0_156 = arith.constant 0 : index
    %c0_157 = arith.constant 0 : index
    %447 = vector.load %arg5[%c7_155, %c0_156, %c0_157] : memref<8x8x32xf32, #tpu.memory_space<vmem>>, vector<1x8x16xf32>
    %448 = vector.shape_cast %447 : vector<1x8x16xf32> to vector<8x16xf32>
    %449 = vector.shape_cast %446 : vector<8x16xf32> to vector<1x8x16xf32>
    tpu.vector_store %arg5[%c7_155, %c0_156, %c0_157], %449 {strides = array<i32>} : memref<8x8x32xf32, #tpu.memory_space<vmem>>, vector<1x8x16xf32>,
    %450 = vector.extract_strided_slice %432 {offsets = [1, 0, 0], sizes = [1, 8, 16], strides = [1, 1, 1]} : vector<2x8x16xf32> to vector<1x8x16xf32>
    %451 = vector.shape_cast %450 : vector<1x8x16xf32> to vector<8x16xf32>
    %c0_158 = arith.constant 0 : index
    %c0_159 = arith.constant 0 : index
    %c16_160 = arith.constant 16 : index
    %452 = vector.load %arg5[%c0_158, %c0_159, %c16_160] : memref<8x8x32xf32, #tpu.memory_space<vmem>>, vector<1x8x16xf32>
    %453 = vector.shape_cast %452 : vector<1x8x16xf32> to vector<8x16xf32>
    %454 = vector.shape_cast %451 : vector<8x16xf32> to vector<1x8x16xf32>
    tpu.vector_store %arg5[%c0_158, %c0_159, %c16_160], %454 {strides = array<i32>} : memref<8x8x32xf32, #tpu.memory_space<vmem>>, vector<1x8x16xf32>,
    %455 = vector.extract_strided_slice %444 {offsets = [0, 0, 0], sizes = [1, 8, 16], strides = [1, 1, 1]} : vector<2x8x16xf32> to vector<1x8x16xf32>
    %456 = vector.shape_cast %455 : vector<1x8x16xf32> to vector<8x16xf32>
    %c0_161 = arith.constant 0 : index
    %c0_162 = arith.constant 0 : index
    %c0_163 = arith.constant 0 : index
    %457 = vector.load %arg6[%c0_161, %c0_162, %c0_163] : memref<3x8x32xf32, #tpu.memory_space<vmem>>, vector<1x8x16xf32>
    %458 = vector.shape_cast %457 : vector<1x8x16xf32> to vector<8x16xf32>
    %459 = vector.shape_cast %456 : vector<8x16xf32> to vector<1x8x16xf32>
    tpu.vector_store %arg6[%c0_161, %c0_162, %c0_163], %459 {strides = array<i32>} : memref<3x8x32xf32, #tpu.memory_space<vmem>>, vector<1x8x16xf32>,
    %460 = vector.extract_strided_slice %444 {offsets = [1, 0, 0], sizes = [1, 8, 16], strides = [1, 1, 1]} : vector<2x8x16xf32> to vector<1x8x16xf32>
    %461 = vector.shape_cast %460 : vector<1x8x16xf32> to vector<8x16xf32>
    %c0_164 = arith.constant 0 : index
    %c0_165 = arith.constant 0 : index
    %c16_166 = arith.constant 16 : index
    %462 = vector.load %arg6[%c0_164, %c0_165, %c16_166] : memref<3x8x32xf32, #tpu.memory_space<vmem>>, vector<1x8x16xf32>
    %463 = vector.shape_cast %462 : vector<1x8x16xf32> to vector<8x16xf32>
    %464 = vector.shape_cast %461 : vector<8x16xf32> to vector<1x8x16xf32>
    tpu.vector_store %arg6[%c0_164, %c0_165, %c16_166], %464 {strides = array<i32>} : memref<3x8x32xf32, #tpu.memory_space<vmem>>, vector<1x8x16xf32>,
    %465 = vector.extract_strided_slice %439 {offsets = [0, 0, 0], sizes = [1, 8, 16], strides = [1, 1, 1]} : vector<2x8x16xf32> to vector<1x8x16xf32>
    %466 = vector.shape_cast %465 : vector<1x8x16xf32> to vector<8x16xf32>
    %c0_167 = arith.constant 0 : index
    %c0_168 = arith.constant 0 : index
    %c0_169 = arith.constant 0 : index
    %467 = vector.load %arg7[%c0_167, %c0_168, %c0_169] : memref<3x8x32xf32, #tpu.memory_space<vmem>>, vector<1x8x16xf32>
    %468 = vector.shape_cast %467 : vector<1x8x16xf32> to vector<8x16xf32>
    %469 = vector.shape_cast %466 : vector<8x16xf32> to vector<1x8x16xf32>
    tpu.vector_store %arg7[%c0_167, %c0_168, %c0_169], %469 {strides = array<i32>} : memref<3x8x32xf32, #tpu.memory_space<vmem>>, vector<1x8x16xf32>,
    %470 = vector.extract_strided_slice %439 {offsets = [1, 0, 0], sizes = [1, 8, 16], strides = [1, 1, 1]} : vector<2x8x16xf32> to vector<1x8x16xf32>
    %471 = vector.shape_cast %470 : vector<1x8x16xf32> to vector<8x16xf32>
    %c0_170 = arith.constant 0 : index
    %c0_171 = arith.constant 0 : index
    %c16_172 = arith.constant 16 : index
    %472 = vector.load %arg7[%c0_170, %c0_171, %c16_172] : memref<3x8x32xf32, #tpu.memory_space<vmem>>, vector<1x8x16xf32>
    %473 = vector.shape_cast %472 : vector<1x8x16xf32> to vector<8x16xf32>
    %474 = vector.shape_cast %471 : vector<8x16xf32> to vector<1x8x16xf32>
    tpu.vector_store %arg7[%c0_170, %c0_171, %c16_172], %474 {strides = array<i32>} : memref<3x8x32xf32, #tpu.memory_space<vmem>>, vector<1x8x16xf32>,
    %c0_173 = arith.constant 0 : index
    %c0_174 = arith.constant 0 : index
    %c0_175 = arith.constant 0 : index
    %475 = vector.load %arg5[%c0_173, %c0_174, %c0_175] : memref<8x8x32xf32, #tpu.memory_space<vmem>>, vector<8x8x32xf32>
    %476 = vector.shape_cast %475 : vector<8x8x32xf32> to vector<64x32xf32>
    %477 = arith.truncf %476 : vector<64x32xf32> to vector<64x32xbf16>
    %c1_176 = arith.constant 1 : index
    %c0_177 = arith.constant 0 : index
    %c0_178 = arith.constant 0 : index
    %478 = vector.load %arg2[%c1_176, %c0_177, %c0_178] : memref<3x32x128xbf16, #tpu.memory_space<vmem>>, vector<1x32x128xbf16>
    %479 = vector.shape_cast %478 : vector<1x32x128xbf16> to vector<32x128xbf16>
    %cst_179 = arith.constant dense<0.000000e+00> : vector<64x128xf32>
    %480 = tpu.matmul %477, %479, %cst_179 {dimension_numbers = #tpu.dot_dimension_numbers<[1], [0], [0], [1], [0, 0, 1, 1], [], []>} : vector<64x32xbf16>, vector<32x128xbf16>, vector<64x128xf32> -> vector<64x128xf32>
    %c1_180 = arith.constant 1 : index
    %c0_181 = arith.constant 0 : index
    %c0_182 = arith.constant 0 : index
    %481 = vector.load %arg4[%c1_180, %c0_181, %c0_182] : memref<3x1x128xf32, #tpu.memory_space<vmem>>, vector<1x1x128xf32>
    %482 = vector.shape_cast %481 : vector<1x1x128xf32> to vector<1x128xf32>
    %483 = vector.broadcast %482 : vector<1x128xf32> to vector<64x128xf32>
    %484 = arith.addf %480, %483 : vector<64x128xf32>
    %c0_183 = arith.constant 0 : index
    %c0_184 = arith.constant 0 : index
    %485 = vector.load %arg8[%c0_183, %c0_184] : memref<64x128xf32, #tpu.memory_space<vmem>>, vector<64x128xf32>
    tpu.vector_store %arg8[%c0_183, %c0_184], %484 {strides = array<i32>} : memref<64x128xf32, #tpu.memory_space<vmem>>, vector<64x128xf32>,
    %c1_185 = arith.constant 1 : index
    %c0_186 = arith.constant 0 : index
    %c0_187 = arith.constant 0 : index
    %c0_188 = arith.constant 0 : index
    %486 = vector.load %arg3[%c1_185, %c0_186, %c0_187, %c0_188] : memref<3x2x16x64xbf16, #tpu.memory_space<vmem>>, vector<1x2x16x64xbf16>
    %487 = vector.shape_cast %486 : vector<1x2x16x64xbf16> to vector<2x16x64xbf16>
    %cst_189 = arith.constant 0.000000e+00 : f32
    %488 = vector.broadcast %cst_189 : f32 to vector<2x8x16xf32>
    %cst_190 = arith.constant 0.000000e+00 : f32
    %489 = vector.broadcast %cst_190 : f32 to vector<2x8x16xf32>
    %c0_191 = arith.constant 0 : index
    %c0_192 = arith.constant 0 : index
    %490 = vector.load %arg8[%c0_191, %c0_192] : memref<64x128xf32, #tpu.memory_space<vmem>>, vector<8x64xf32>
    %c56_193 = arith.constant 56 : index
    %c64_194 = arith.constant 64 : index
    %491 = vector.load %arg8[%c56_193, %c64_194] : memref<64x128xf32, #tpu.memory_space<vmem>>, vector<8x64xf32>
    %492 = vector.shape_cast %490 : vector<8x64xf32> to vector<1x8x64xf32>
    %493 = vector.shape_cast %491 : vector<8x64xf32> to vector<1x8x64xf32>
    %494 = tpu.concatenate %492, %493 in 0 : vector<1x8x64xf32>, vector<1x8x64xf32> -> vector<2x8x64xf32>
    %c0_195 = arith.constant 0 : index
    %c0_196 = arith.constant 0 : index
    %c0_197 = arith.constant 0 : index
    %495 = vector.load %arg1[%c0_195, %c0_196, %c0_197] : memref<8x8x1xf32, #tpu.memory_space<vmem>>, vector<1x8x1xf32>
    %496 = vector.shape_cast %495 : vector<1x8x1xf32> to vector<8x1xf32>
    %c7_198 = arith.constant 7 : index
    %c0_199 = arith.constant 0 : index
    %c0_200 = arith.constant 0 : index
    %497 = vector.load %arg1[%c7_198, %c0_199, %c0_200] : memref<8x8x1xf32, #tpu.memory_space<vmem>>, vector<1x8x1xf32>
    %498 = vector.shape_cast %497 : vector<1x8x1xf32> to vector<8x1xf32>
    %499 = vector.shape_cast %496 : vector<8x1xf32> to vector<1x8x1xf32>
    %500 = vector.shape_cast %498 : vector<8x1xf32> to vector<1x8x1xf32>
    %501 = tpu.concatenate %499, %500 in 0 : vector<1x8x1xf32>, vector<1x8x1xf32> -> vector<2x8x1xf32>
    %502 = arith.truncf %488 : vector<2x8x16xf32> to vector<2x8x16xbf16>
    "tpu.trace_start"() <{level = 10 : i32, message = "dbh,dhg->dbg"}> : () -> ()
    %cst_201 = arith.constant dense<0.000000e+00> : vector<2x8x64xf32>
    %503 = tpu.matmul %502, %487, %cst_201 {dimension_numbers = #tpu.dot_dimension_numbers<[2], [1], [1], [2], [0, 0, 0, 1, 1, 2], [0], [0]>} : vector<2x8x16xbf16>, vector<2x16x64xbf16>, vector<2x8x64xf32> -> vector<2x8x64xf32>
    "tpu.trace_stop"() : () -> ()
    %504 = arith.addf %494, %503 : vector<2x8x64xf32>
    %505 = vector.extract_strided_slice %504 {offsets = [0, 0, 0], sizes = [2, 8, 48], strides = [1, 1, 1]} : vector<2x8x64xf32> to vector<2x8x48xf32>
    %506 = arith.negf %505 : vector<2x8x48xf32>
    %507 = math.exp %506 : vector<2x8x48xf32>
    %cst_202 = arith.constant 1.000000e+00 : f32
    %508 = vector.broadcast %cst_202 : f32 to vector<2x8x48xf32>
    %509 = arith.addf %508, %507 : vector<2x8x48xf32>
    %510 = arith.divf %508, %509 : vector<2x8x48xf32>
    %511 = vector.extract_strided_slice %504 {offsets = [0, 0, 48], sizes = [2, 8, 16], strides = [1, 1, 1]} : vector<2x8x64xf32> to vector<2x8x16xf32>
    %512 = math.tanh %511 : vector<2x8x16xf32>
    %513 = vector.extract_strided_slice %510 {offsets = [0, 0, 16], sizes = [2, 8, 16], strides = [1, 1, 1]} : vector<2x8x48xf32> to vector<2x8x16xf32>
    %514 = arith.mulf %513, %489 : vector<2x8x16xf32>
    %515 = vector.extract_strided_slice %510 {offsets = [0, 0, 0], sizes = [2, 8, 16], strides = [1, 1, 1]} : vector<2x8x48xf32> to vector<2x8x16xf32>
    %516 = arith.mulf %515, %512 : vector<2x8x16xf32>
    %517 = arith.addf %514, %516 : vector<2x8x16xf32>
    %518 = vector.extract_strided_slice %510 {offsets = [0, 0, 32], sizes = [2, 8, 16], strides = [1, 1, 1]} : vector<2x8x48xf32> to vector<2x8x16xf32>
    %519 = math.tanh %517 : vector<2x8x16xf32>
    %520 = arith.mulf %518, %519 : vector<2x8x16xf32>
    %521 = vector.broadcast %501 : vector<2x8x1xf32> to vector<2x8x16xf32>
    %522 = arith.mulf %521, %520 : vector<2x8x16xf32>
    %523 = vector.broadcast %501 : vector<2x8x1xf32> to vector<2x8x16xf32>
    %524 = arith.mulf %523, %517 : vector<2x8x16xf32>
    %cst_203 = arith.constant 1.000000e+00 : f32
    %525 = vector.broadcast %cst_203 : f32 to vector<2x8x1xf32>
    %526 = arith.subf %525, %501 : vector<2x8x1xf32>
    %527 = vector.broadcast %526 : vector<2x8x1xf32> to vector<2x8x16xf32>
    %528 = arith.mulf %527, %489 : vector<2x8x16xf32>
    %529 = arith.addf %524, %528 : vector<2x8x16xf32>
    %cst_204 = arith.constant 1.000000e+00 : f32
    %530 = vector.broadcast %cst_204 : f32 to vector<2x8x1xf32>
    %531 = arith.subf %530, %501 : vector<2x8x1xf32>
    %532 = vector.broadcast %531 : vector<2x8x1xf32> to vector<2x8x16xf32>
    %533 = arith.mulf %532, %488 : vector<2x8x16xf32>
    %534 = arith.addf %522, %533 : vector<2x8x16xf32>
    %535 = vector.extract_strided_slice %522 {offsets = [0, 0, 0], sizes = [1, 8, 16], strides = [1, 1, 1]} : vector<2x8x16xf32> to vector<1x8x16xf32>
    %536 = vector.shape_cast %535 : vector<1x8x16xf32> to vector<8x16xf32>
    %c0_205 = arith.constant 0 : index
    %c0_206 = arith.constant 0 : index
    %c0_207 = arith.constant 0 : index
    %537 = vector.load %arg5[%c0_205, %c0_206, %c0_207] : memref<8x8x32xf32, #tpu.memory_space<vmem>>, vector<1x8x16xf32>
    %538 = vector.shape_cast %537 : vector<1x8x16xf32> to vector<8x16xf32>
    %539 = vector.shape_cast %536 : vector<8x16xf32> to vector<1x8x16xf32>
    tpu.vector_store %arg5[%c0_205, %c0_206, %c0_207], %539 {strides = array<i32>} : memref<8x8x32xf32, #tpu.memory_space<vmem>>, vector<1x8x16xf32>,
    %540 = vector.extract_strided_slice %522 {offsets = [1, 0, 0], sizes = [1, 8, 16], strides = [1, 1, 1]} : vector<2x8x16xf32> to vector<1x8x16xf32>
    %541 = vector.shape_cast %540 : vector<1x8x16xf32> to vector<8x16xf32>
    %c7_208 = arith.constant 7 : index
    %c0_209 = arith.constant 0 : index
    %c16_210 = arith.constant 16 : index
    %542 = vector.load %arg5[%c7_208, %c0_209, %c16_210] : memref<8x8x32xf32, #tpu.memory_space<vmem>>, vector<1x8x16xf32>
    %543 = vector.shape_cast %542 : vector<1x8x16xf32> to vector<8x16xf32>
    %544 = vector.shape_cast %541 : vector<8x16xf32> to vector<1x8x16xf32>
    tpu.vector_store %arg5[%c7_208, %c0_209, %c16_210], %544 {strides = array<i32>} : memref<8x8x32xf32, #tpu.memory_space<vmem>>, vector<1x8x16xf32>,
    %c8_211 = arith.constant 8 : index
    %c0_212 = arith.constant 0 : index
    %545 = vector.load %arg8[%c8_211, %c0_212] : memref<64x128xf32, #tpu.memory_space<vmem>>, vector<8x64xf32>
    %c48_213 = arith.constant 48 : index
    %c64_214 = arith.constant 64 : index
    %546 = vector.load %arg8[%c48_213, %c64_214] : memref<64x128xf32, #tpu.memory_space<vmem>>, vector<8x64xf32>
    %547 = vector.shape_cast %545 : vector<8x64xf32> to vector<1x8x64xf32>
    %548 = vector.shape_cast %546 : vector<8x64xf32> to vector<1x8x64xf32>
    %549 = tpu.concatenate %547, %548 in 0 : vector<1x8x64xf32>, vector<1x8x64xf32> -> vector<2x8x64xf32>
    %c1_215 = arith.constant 1 : index
    %c0_216 = arith.constant 0 : index
    %c0_217 = arith.constant 0 : index
    %550 = vector.load %arg1[%c1_215, %c0_216, %c0_217] : memref<8x8x1xf32, #tpu.memory_space<vmem>>, vector<1x8x1xf32>
    %551 = vector.shape_cast %550 : vector<1x8x1xf32> to vector<8x1xf32>
    %c6_218 = arith.constant 6 : index
    %c0_219 = arith.constant 0 : index
    %c0_220 = arith.constant 0 : index
    %552 = vector.load %arg1[%c6_218, %c0_219, %c0_220] : memref<8x8x1xf32, #tpu.memory_space<vmem>>, vector<1x8x1xf32>
    %553 = vector.shape_cast %552 : vector<1x8x1xf32> to vector<8x1xf32>
    %554 = vector.shape_cast %551 : vector<8x1xf32> to vector<1x8x1xf32>
    %555 = vector.shape_cast %553 : vector<8x1xf32> to vector<1x8x1xf32>
    %556 = tpu.concatenate %554, %555 in 0 : vector<1x8x1xf32>, vector<1x8x1xf32> -> vector<2x8x1xf32>
    %557 = arith.truncf %534 : vector<2x8x16xf32> to vector<2x8x16xbf16>
    "tpu.trace_start"() <{level = 10 : i32, message = "dbh,dhg->dbg"}> : () -> ()
    %cst_221 = arith.constant dense<0.000000e+00> : vector<2x8x64xf32>
    %558 = tpu.matmul %557, %487, %cst_221 {dimension_numbers = #tpu.dot_dimension_numbers<[2], [1], [1], [2], [0, 0, 0, 1, 1, 2], [0], [0]>} : vector<2x8x16xbf16>, vector<2x16x64xbf16>, vector<2x8x64xf32> -> vector<2x8x64xf32>
    "tpu.trace_stop"() : () -> ()
    %559 = arith.addf %549, %558 : vector<2x8x64xf32>
    %560 = vector.extract_strided_slice %559 {offsets = [0, 0, 0], sizes = [2, 8, 48], strides = [1, 1, 1]} : vector<2x8x64xf32> to vector<2x8x48xf32>
    %561 = arith.negf %560 : vector<2x8x48xf32>
    %562 = math.exp %561 : vector<2x8x48xf32>
    %cst_222 = arith.constant 1.000000e+00 : f32
    %563 = vector.broadcast %cst_222 : f32 to vector<2x8x48xf32>
    %564 = arith.addf %563, %562 : vector<2x8x48xf32>
    %565 = arith.divf %563, %564 : vector<2x8x48xf32>
    %566 = vector.extract_strided_slice %559 {offsets = [0, 0, 48], sizes = [2, 8, 16], strides = [1, 1, 1]} : vector<2x8x64xf32> to vector<2x8x16xf32>
    %567 = math.tanh %566 : vector<2x8x16xf32>
    %568 = vector.extract_strided_slice %565 {offsets = [0, 0, 16], sizes = [2, 8, 16], strides = [1, 1, 1]} : vector<2x8x48xf32> to vector<2x8x16xf32>
    %569 = arith.mulf %568, %529 : vector<2x8x16xf32>
    %570 = vector.extract_strided_slice %565 {offsets = [0, 0, 0], sizes = [2, 8, 16], strides = [1, 1, 1]} : vector<2x8x48xf32> to vector<2x8x16xf32>
    %571 = arith.mulf %570, %567 : vector<2x8x16xf32>
    %572 = arith.addf %569, %571 : vector<2x8x16xf32>
    %573 = vector.extract_strided_slice %565 {offsets = [0, 0, 32], sizes = [2, 8, 16], strides = [1, 1, 1]} : vector<2x8x48xf32> to vector<2x8x16xf32>
    %574 = math.tanh %572 : vector<2x8x16xf32>
    %575 = arith.mulf %573, %574 : vector<2x8x16xf32>
    %576 = vector.broadcast %556 : vector<2x8x1xf32> to vector<2x8x16xf32>
    %577 = arith.mulf %576, %575 : vector<2x8x16xf32>
    %578 = vector.broadcast %556 : vector<2x8x1xf32> to vector<2x8x16xf32>
    %579 = arith.mulf %578, %572 : vector<2x8x16xf32>
    %cst_223 = arith.constant 1.000000e+00 : f32
    %580 = vector.broadcast %cst_223 : f32 to vector<2x8x1xf32>
    %581 = arith.subf %580, %556 : vector<2x8x1xf32>
    %582 = vector.broadcast %581 : vector<2x8x1xf32> to vector<2x8x16xf32>
    %583 = arith.mulf %582, %529 : vector<2x8x16xf32>
    %584 = arith.addf %579, %583 : vector<2x8x16xf32>
    %cst_224 = arith.constant 1.000000e+00 : f32
    %585 = vector.broadcast %cst_224 : f32 to vector<2x8x1xf32>
    %586 = arith.subf %585, %556 : vector<2x8x1xf32>
    %587 = vector.broadcast %586 : vector<2x8x1xf32> to vector<2x8x16xf32>
    %588 = arith.mulf %587, %534 : vector<2x8x16xf32>
    %589 = arith.addf %577, %588 : vector<2x8x16xf32>
    %590 = vector.extract_strided_slice %577 {offsets = [0, 0, 0], sizes = [1, 8, 16], strides = [1, 1, 1]} : vector<2x8x16xf32> to vector<1x8x16xf32>
    %591 = vector.shape_cast %590 : vector<1x8x16xf32> to vector<8x16xf32>
    %c1_225 = arith.constant 1 : index
    %c0_226 = arith.constant 0 : index
    %c0_227 = arith.constant 0 : index
    %592 = vector.load %arg5[%c1_225, %c0_226, %c0_227] : memref<8x8x32xf32, #tpu.memory_space<vmem>>, vector<1x8x16xf32>
    %593 = vector.shape_cast %592 : vector<1x8x16xf32> to vector<8x16xf32>
    %594 = vector.shape_cast %591 : vector<8x16xf32> to vector<1x8x16xf32>
    tpu.vector_store %arg5[%c1_225, %c0_226, %c0_227], %594 {strides = array<i32>} : memref<8x8x32xf32, #tpu.memory_space<vmem>>, vector<1x8x16xf32>,
    %595 = vector.extract_strided_slice %577 {offsets = [1, 0, 0], sizes = [1, 8, 16], strides = [1, 1, 1]} : vector<2x8x16xf32> to vector<1x8x16xf32>
    %596 = vector.shape_cast %595 : vector<1x8x16xf32> to vector<8x16xf32>
    %c6_228 = arith.constant 6 : index
    %c0_229 = arith.constant 0 : index
    %c16_230 = arith.constant 16 : index
    %597 = vector.load %arg5[%c6_228, %c0_229, %c16_230] : memref<8x8x32xf32, #tpu.memory_space<vmem>>, vector<1x8x16xf32>
    %598 = vector.shape_cast %597 : vector<1x8x16xf32> to vector<8x16xf32>
    %599 = vector.shape_cast %596 : vector<8x16xf32> to vector<1x8x16xf32>
    tpu.vector_store %arg5[%c6_228, %c0_229, %c16_230], %599 {strides = array<i32>} : memref<8x8x32xf32, #tpu.memory_space<vmem>>, vector<1x8x16xf32>,
    %c16_231 = arith.constant 16 : index
    %c0_232 = arith.constant 0 : index
    %600 = vector.load %arg8[%c16_231, %c0_232] : memref<64x128xf32, #tpu.memory_space<vmem>>, vector<8x64xf32>
    %c40_233 = arith.constant 40 : index
    %c64_234 = arith.constant 64 : index
    %601 = vector.load %arg8[%c40_233, %c64_234] : memref<64x128xf32, #tpu.memory_space<vmem>>, vector<8x64xf32>
    %602 = vector.shape_cast %600 : vector<8x64xf32> to vector<1x8x64xf32>
    %603 = vector.shape_cast %601 : vector<8x64xf32> to vector<1x8x64xf32>
    %604 = tpu.concatenate %602, %603 in 0 : vector<1x8x64xf32>, vector<1x8x64xf32> -> vector<2x8x64xf32>
    %c2_235 = arith.constant 2 : index
    %c0_236 = arith.constant 0 : index
    %c0_237 = arith.constant 0 : index
    %605 = vector.load %arg1[%c2_235, %c0_236, %c0_237] : memref<8x8x1xf32, #tpu.memory_space<vmem>>, vector<1x8x1xf32>
    %606 = vector.shape_cast %605 : vector<1x8x1xf32> to vector<8x1xf32>
    %c5_238 = arith.constant 5 : index
    %c0_239 = arith.constant 0 : index
    %c0_240 = arith.constant 0 : index
    %607 = vector.load %arg1[%c5_238, %c0_239, %c0_240] : memref<8x8x1xf32, #tpu.memory_space<vmem>>, vector<1x8x1xf32>
    %608 = vector.shape_cast %607 : vector<1x8x1xf32> to vector<8x1xf32>
    %609 = vector.shape_cast %606 : vector<8x1xf32> to vector<1x8x1xf32>
    %610 = vector.shape_cast %608 : vector<8x1xf32> to vector<1x8x1xf32>
    %611 = tpu.concatenate %609, %610 in 0 : vector<1x8x1xf32>, vector<1x8x1xf32> -> vector<2x8x1xf32>
    %612 = arith.truncf %589 : vector<2x8x16xf32> to vector<2x8x16xbf16>
    "tpu.trace_start"() <{level = 10 : i32, message = "dbh,dhg->dbg"}> : () -> ()
    %cst_241 = arith.constant dense<0.000000e+00> : vector<2x8x64xf32>
    %613 = tpu.matmul %612, %487, %cst_241 {dimension_numbers = #tpu.dot_dimension_numbers<[2], [1], [1], [2], [0, 0, 0, 1, 1, 2], [0], [0]>} : vector<2x8x16xbf16>, vector<2x16x64xbf16>, vector<2x8x64xf32> -> vector<2x8x64xf32>
    "tpu.trace_stop"() : () -> ()
    %614 = arith.addf %604, %613 : vector<2x8x64xf32>
    %615 = vector.extract_strided_slice %614 {offsets = [0, 0, 0], sizes = [2, 8, 48], strides = [1, 1, 1]} : vector<2x8x64xf32> to vector<2x8x48xf32>
    %616 = arith.negf %615 : vector<2x8x48xf32>
    %617 = math.exp %616 : vector<2x8x48xf32>
    %cst_242 = arith.constant 1.000000e+00 : f32
    %618 = vector.broadcast %cst_242 : f32 to vector<2x8x48xf32>
    %619 = arith.addf %618, %617 : vector<2x8x48xf32>
    %620 = arith.divf %618, %619 : vector<2x8x48xf32>
    %621 = vector.extract_strided_slice %614 {offsets = [0, 0, 48], sizes = [2, 8, 16], strides = [1, 1, 1]} : vector<2x8x64xf32> to vector<2x8x16xf32>
    %622 = math.tanh %621 : vector<2x8x16xf32>
    %623 = vector.extract_strided_slice %620 {offsets = [0, 0, 16], sizes = [2, 8, 16], strides = [1, 1, 1]} : vector<2x8x48xf32> to vector<2x8x16xf32>
    %624 = arith.mulf %623, %584 : vector<2x8x16xf32>
    %625 = vector.extract_strided_slice %620 {offsets = [0, 0, 0], sizes = [2, 8, 16], strides = [1, 1, 1]} : vector<2x8x48xf32> to vector<2x8x16xf32>
    %626 = arith.mulf %625, %622 : vector<2x8x16xf32>
    %627 = arith.addf %624, %626 : vector<2x8x16xf32>
    %628 = vector.extract_strided_slice %620 {offsets = [0, 0, 32], sizes = [2, 8, 16], strides = [1, 1, 1]} : vector<2x8x48xf32> to vector<2x8x16xf32>
    %629 = math.tanh %627 : vector<2x8x16xf32>
    %630 = arith.mulf %628, %629 : vector<2x8x16xf32>
    %631 = vector.broadcast %611 : vector<2x8x1xf32> to vector<2x8x16xf32>
    %632 = arith.mulf %631, %630 : vector<2x8x16xf32>
    %633 = vector.broadcast %611 : vector<2x8x1xf32> to vector<2x8x16xf32>
    %634 = arith.mulf %633, %627 : vector<2x8x16xf32>
    %cst_243 = arith.constant 1.000000e+00 : f32
    %635 = vector.broadcast %cst_243 : f32 to vector<2x8x1xf32>
    %636 = arith.subf %635, %611 : vector<2x8x1xf32>
    %637 = vector.broadcast %636 : vector<2x8x1xf32> to vector<2x8x16xf32>
    %638 = arith.mulf %637, %584 : vector<2x8x16xf32>
    %639 = arith.addf %634, %638 : vector<2x8x16xf32>
    %cst_244 = arith.constant 1.000000e+00 : f32
    %640 = vector.broadcast %cst_244 : f32 to vector<2x8x1xf32>
    %641 = arith.subf %640, %611 : vector<2x8x1xf32>
    %642 = vector.broadcast %641 : vector<2x8x1xf32> to vector<2x8x16xf32>
    %643 = arith.mulf %642, %589 : vector<2x8x16xf32>
    %644 = arith.addf %632, %643 : vector<2x8x16xf32>
    %645 = vector.extract_strided_slice %632 {offsets = [0, 0, 0], sizes = [1, 8, 16], strides = [1, 1, 1]} : vector<2x8x16xf32> to vector<1x8x16xf32>
    %646 = vector.shape_cast %645 : vector<1x8x16xf32> to vector<8x16xf32>
    %c2_245 = arith.constant 2 : index
    %c0_246 = arith.constant 0 : index
    %c0_247 = arith.constant 0 : index
    %647 = vector.load %arg5[%c2_245, %c0_246, %c0_247] : memref<8x8x32xf32, #tpu.memory_space<vmem>>, vector<1x8x16xf32>
    %648 = vector.shape_cast %647 : vector<1x8x16xf32> to vector<8x16xf32>
    %649 = vector.shape_cast %646 : vector<8x16xf32> to vector<1x8x16xf32>
    tpu.vector_store %arg5[%c2_245, %c0_246, %c0_247], %649 {strides = array<i32>} : memref<8x8x32xf32, #tpu.memory_space<vmem>>, vector<1x8x16xf32>,
    %650 = vector.extract_strided_slice %632 {offsets = [1, 0, 0], sizes = [1, 8, 16], strides = [1, 1, 1]} : vector<2x8x16xf32> to vector<1x8x16xf32>
    %651 = vector.shape_cast %650 : vector<1x8x16xf32> to vector<8x16xf32>
    %c5_248 = arith.constant 5 : index
    %c0_249 = arith.constant 0 : index
    %c16_250 = arith.constant 16 : index
    %652 = vector.load %arg5[%c5_248, %c0_249, %c16_250] : memref<8x8x32xf32, #tpu.memory_space<vmem>>, vector<1x8x16xf32>
    %653 = vector.shape_cast %652 : vector<1x8x16xf32> to vector<8x16xf32>
    %654 = vector.shape_cast %651 : vector<8x16xf32> to vector<1x8x16xf32>
    tpu.vector_store %arg5[%c5_248, %c0_249, %c16_250], %654 {strides = array<i32>} : memref<8x8x32xf32, #tpu.memory_space<vmem>>, vector<1x8x16xf32>,
    %c24_251 = arith.constant 24 : index
    %c0_252 = arith.constant 0 : index
    %655 = vector.load %arg8[%c24_251, %c0_252] : memref<64x128xf32, #tpu.memory_space<vmem>>, vector<8x64xf32>
    %c32_253 = arith.constant 32 : index
    %c64_254 = arith.constant 64 : index
    %656 = vector.load %arg8[%c32_253, %c64_254] : memref<64x128xf32, #tpu.memory_space<vmem>>, vector<8x64xf32>
    %657 = vector.shape_cast %655 : vector<8x64xf32> to vector<1x8x64xf32>
    %658 = vector.shape_cast %656 : vector<8x64xf32> to vector<1x8x64xf32>
    %659 = tpu.concatenate %657, %658 in 0 : vector<1x8x64xf32>, vector<1x8x64xf32> -> vector<2x8x64xf32>
    %c3_255 = arith.constant 3 : index
    %c0_256 = arith.constant 0 : index
    %c0_257 = arith.constant 0 : index
    %660 = vector.load %arg1[%c3_255, %c0_256, %c0_257] : memref<8x8x1xf32, #tpu.memory_space<vmem>>, vector<1x8x1xf32>
    %661 = vector.shape_cast %660 : vector<1x8x1xf32> to vector<8x1xf32>
    %c4_258 = arith.constant 4 : index
    %c0_259 = arith.constant 0 : index
    %c0_260 = arith.constant 0 : index
    %662 = vector.load %arg1[%c4_258, %c0_259, %c0_260] : memref<8x8x1xf32, #tpu.memory_space<vmem>>, vector<1x8x1xf32>
    %663 = vector.shape_cast %662 : vector<1x8x1xf32> to vector<8x1xf32>
    %664 = vector.shape_cast %661 : vector<8x1xf32> to vector<1x8x1xf32>
    %665 = vector.shape_cast %663 : vector<8x1xf32> to vector<1x8x1xf32>
    %666 = tpu.concatenate %664, %665 in 0 : vector<1x8x1xf32>, vector<1x8x1xf32> -> vector<2x8x1xf32>
    %667 = arith.truncf %644 : vector<2x8x16xf32> to vector<2x8x16xbf16>
    "tpu.trace_start"() <{level = 10 : i32, message = "dbh,dhg->dbg"}> : () -> ()
    %cst_261 = arith.constant dense<0.000000e+00> : vector<2x8x64xf32>
    %668 = tpu.matmul %667, %487, %cst_261 {dimension_numbers = #tpu.dot_dimension_numbers<[2], [1], [1], [2], [0, 0, 0, 1, 1, 2], [0], [0]>} : vector<2x8x16xbf16>, vector<2x16x64xbf16>, vector<2x8x64xf32> -> vector<2x8x64xf32>
    "tpu.trace_stop"() : () -> ()
    %669 = arith.addf %659, %668 : vector<2x8x64xf32>
    %670 = vector.extract_strided_slice %669 {offsets = [0, 0, 0], sizes = [2, 8, 48], strides = [1, 1, 1]} : vector<2x8x64xf32> to vector<2x8x48xf32>
    %671 = arith.negf %670 : vector<2x8x48xf32>
    %672 = math.exp %671 : vector<2x8x48xf32>
    %cst_262 = arith.constant 1.000000e+00 : f32
    %673 = vector.broadcast %cst_262 : f32 to vector<2x8x48xf32>
    %674 = arith.addf %673, %672 : vector<2x8x48xf32>
    %675 = arith.divf %673, %674 : vector<2x8x48xf32>
    %676 = vector.extract_strided_slice %669 {offsets = [0, 0, 48], sizes = [2, 8, 16], strides = [1, 1, 1]} : vector<2x8x64xf32> to vector<2x8x16xf32>
    %677 = math.tanh %676 : vector<2x8x16xf32>
    %678 = vector.extract_strided_slice %675 {offsets = [0, 0, 16], sizes = [2, 8, 16], strides = [1, 1, 1]} : vector<2x8x48xf32> to vector<2x8x16xf32>
    %679 = arith.mulf %678, %639 : vector<2x8x16xf32>
    %680 = vector.extract_strided_slice %675 {offsets = [0, 0, 0], sizes = [2, 8, 16], strides = [1, 1, 1]} : vector<2x8x48xf32> to vector<2x8x16xf32>
    %681 = arith.mulf %680, %677 : vector<2x8x16xf32>
    %682 = arith.addf %679, %681 : vector<2x8x16xf32>
    %683 = vector.extract_strided_slice %675 {offsets = [0, 0, 32], sizes = [2, 8, 16], strides = [1, 1, 1]} : vector<2x8x48xf32> to vector<2x8x16xf32>
    %684 = math.tanh %682 : vector<2x8x16xf32>
    %685 = arith.mulf %683, %684 : vector<2x8x16xf32>
    %686 = vector.broadcast %666 : vector<2x8x1xf32> to vector<2x8x16xf32>
    %687 = arith.mulf %686, %685 : vector<2x8x16xf32>
    %688 = vector.broadcast %666 : vector<2x8x1xf32> to vector<2x8x16xf32>
    %689 = arith.mulf %688, %682 : vector<2x8x16xf32>
    %cst_263 = arith.constant 1.000000e+00 : f32
    %690 = vector.broadcast %cst_263 : f32 to vector<2x8x1xf32>
    %691 = arith.subf %690, %666 : vector<2x8x1xf32>
    %692 = vector.broadcast %691 : vector<2x8x1xf32> to vector<2x8x16xf32>
    %693 = arith.mulf %692, %639 : vector<2x8x16xf32>
    %694 = arith.addf %689, %693 : vector<2x8x16xf32>
    %cst_264 = arith.constant 1.000000e+00 : f32
    %695 = vector.broadcast %cst_264 : f32 to vector<2x8x1xf32>
    %696 = arith.subf %695, %666 : vector<2x8x1xf32>
    %697 = vector.broadcast %696 : vector<2x8x1xf32> to vector<2x8x16xf32>
    %698 = arith.mulf %697, %644 : vector<2x8x16xf32>
    %699 = arith.addf %687, %698 : vector<2x8x16xf32>
    %700 = vector.extract_strided_slice %687 {offsets = [0, 0, 0], sizes = [1, 8, 16], strides = [1, 1, 1]} : vector<2x8x16xf32> to vector<1x8x16xf32>
    %701 = vector.shape_cast %700 : vector<1x8x16xf32> to vector<8x16xf32>
    %c3_265 = arith.constant 3 : index
    %c0_266 = arith.constant 0 : index
    %c0_267 = arith.constant 0 : index
    %702 = vector.load %arg5[%c3_265, %c0_266, %c0_267] : memref<8x8x32xf32, #tpu.memory_space<vmem>>, vector<1x8x16xf32>
    %703 = vector.shape_cast %702 : vector<1x8x16xf32> to vector<8x16xf32>
    %704 = vector.shape_cast %701 : vector<8x16xf32> to vector<1x8x16xf32>
    tpu.vector_store %arg5[%c3_265, %c0_266, %c0_267], %704 {strides = array<i32>} : memref<8x8x32xf32, #tpu.memory_space<vmem>>, vector<1x8x16xf32>,
    %705 = vector.extract_strided_slice %687 {offsets = [1, 0, 0], sizes = [1, 8, 16], strides = [1, 1, 1]} : vector<2x8x16xf32> to vector<1x8x16xf32>
    %706 = vector.shape_cast %705 : vector<1x8x16xf32> to vector<8x16xf32>
    %c4_268 = arith.constant 4 : index
    %c0_269 = arith.constant 0 : index
    %c16_270 = arith.constant 16 : index
    %707 = vector.load %arg5[%c4_268, %c0_269, %c16_270] : memref<8x8x32xf32, #tpu.memory_space<vmem>>, vector<1x8x16xf32>
    %708 = vector.shape_cast %707 : vector<1x8x16xf32> to vector<8x16xf32>
    %709 = vector.shape_cast %706 : vector<8x16xf32> to vector<1x8x16xf32>
    tpu.vector_store %arg5[%c4_268, %c0_269, %c16_270], %709 {strides = array<i32>} : memref<8x8x32xf32, #tpu.memory_space<vmem>>, vector<1x8x16xf32>,
    %c32_271 = arith.constant 32 : index
    %c0_272 = arith.constant 0 : index
    %710 = vector.load %arg8[%c32_271, %c0_272] : memref<64x128xf32, #tpu.memory_space<vmem>>, vector<8x64xf32>
    %c24_273 = arith.constant 24 : index
    %c64_274 = arith.constant 64 : index
    %711 = vector.load %arg8[%c24_273, %c64_274] : memref<64x128xf32, #tpu.memory_space<vmem>>, vector<8x64xf32>
    %712 = vector.shape_cast %710 : vector<8x64xf32> to vector<1x8x64xf32>
    %713 = vector.shape_cast %711 : vector<8x64xf32> to vector<1x8x64xf32>
    %714 = tpu.concatenate %712, %713 in 0 : vector<1x8x64xf32>, vector<1x8x64xf32> -> vector<2x8x64xf32>
    %c4_275 = arith.constant 4 : index
    %c0_276 = arith.constant 0 : index
    %c0_277 = arith.constant 0 : index
    %715 = vector.load %arg1[%c4_275, %c0_276, %c0_277] : memref<8x8x1xf32, #tpu.memory_space<vmem>>, vector<1x8x1xf32>
    %716 = vector.shape_cast %715 : vector<1x8x1xf32> to vector<8x1xf32>
    %c3_278 = arith.constant 3 : index
    %c0_279 = arith.constant 0 : index
    %c0_280 = arith.constant 0 : index
    %717 = vector.load %arg1[%c3_278, %c0_279, %c0_280] : memref<8x8x1xf32, #tpu.memory_space<vmem>>, vector<1x8x1xf32>
    %718 = vector.shape_cast %717 : vector<1x8x1xf32> to vector<8x1xf32>
    %719 = vector.shape_cast %716 : vector<8x1xf32> to vector<1x8x1xf32>
    %720 = vector.shape_cast %718 : vector<8x1xf32> to vector<1x8x1xf32>
    %721 = tpu.concatenate %719, %720 in 0 : vector<1x8x1xf32>, vector<1x8x1xf32> -> vector<2x8x1xf32>
    %722 = arith.truncf %699 : vector<2x8x16xf32> to vector<2x8x16xbf16>
    "tpu.trace_start"() <{level = 10 : i32, message = "dbh,dhg->dbg"}> : () -> ()
    %cst_281 = arith.constant dense<0.000000e+00> : vector<2x8x64xf32>
    %723 = tpu.matmul %722, %487, %cst_281 {dimension_numbers = #tpu.dot_dimension_numbers<[2], [1], [1], [2], [0, 0, 0, 1, 1, 2], [0], [0]>} : vector<2x8x16xbf16>, vector<2x16x64xbf16>, vector<2x8x64xf32> -> vector<2x8x64xf32>
    "tpu.trace_stop"() : () -> ()
    %724 = arith.addf %714, %723 : vector<2x8x64xf32>
    %725 = vector.extract_strided_slice %724 {offsets = [0, 0, 0], sizes = [2, 8, 48], strides = [1, 1, 1]} : vector<2x8x64xf32> to vector<2x8x48xf32>
    %726 = arith.negf %725 : vector<2x8x48xf32>
    %727 = math.exp %726 : vector<2x8x48xf32>
    %cst_282 = arith.constant 1.000000e+00 : f32
    %728 = vector.broadcast %cst_282 : f32 to vector<2x8x48xf32>
    %729 = arith.addf %728, %727 : vector<2x8x48xf32>
    %730 = arith.divf %728, %729 : vector<2x8x48xf32>
    %731 = vector.extract_strided_slice %724 {offsets = [0, 0, 48], sizes = [2, 8, 16], strides = [1, 1, 1]} : vector<2x8x64xf32> to vector<2x8x16xf32>
    %732 = math.tanh %731 : vector<2x8x16xf32>
    %733 = vector.extract_strided_slice %730 {offsets = [0, 0, 16], sizes = [2, 8, 16], strides = [1, 1, 1]} : vector<2x8x48xf32> to vector<2x8x16xf32>
    %734 = arith.mulf %733, %694 : vector<2x8x16xf32>
    %735 = vector.extract_strided_slice %730 {offsets = [0, 0, 0], sizes = [2, 8, 16], strides = [1, 1, 1]} : vector<2x8x48xf32> to vector<2x8x16xf32>
    %736 = arith.mulf %735, %732 : vector<2x8x16xf32>
    %737 = arith.addf %734, %736 : vector<2x8x16xf32>
    %738 = vector.extract_strided_slice %730 {offsets = [0, 0, 32], sizes = [2, 8, 16], strides = [1, 1, 1]} : vector<2x8x48xf32> to vector<2x8x16xf32>
    %739 = math.tanh %737 : vector<2x8x16xf32>
    %740 = arith.mulf %738, %739 : vector<2x8x16xf32>
    %741 = vector.broadcast %721 : vector<2x8x1xf32> to vector<2x8x16xf32>
    %742 = arith.mulf %741, %740 : vector<2x8x16xf32>
    %743 = vector.broadcast %721 : vector<2x8x1xf32> to vector<2x8x16xf32>
    %744 = arith.mulf %743, %737 : vector<2x8x16xf32>
    %cst_283 = arith.constant 1.000000e+00 : f32
    %745 = vector.broadcast %cst_283 : f32 to vector<2x8x1xf32>
    %746 = arith.subf %745, %721 : vector<2x8x1xf32>
    %747 = vector.broadcast %746 : vector<2x8x1xf32> to vector<2x8x16xf32>
    %748 = arith.mulf %747, %694 : vector<2x8x16xf32>
    %749 = arith.addf %744, %748 : vector<2x8x16xf32>
    %cst_284 = arith.constant 1.000000e+00 : f32
    %750 = vector.broadcast %cst_284 : f32 to vector<2x8x1xf32>
    %751 = arith.subf %750, %721 : vector<2x8x1xf32>
    %752 = vector.broadcast %751 : vector<2x8x1xf32> to vector<2x8x16xf32>
    %753 = arith.mulf %752, %699 : vector<2x8x16xf32>
    %754 = arith.addf %742, %753 : vector<2x8x16xf32>
    %755 = vector.extract_strided_slice %742 {offsets = [0, 0, 0], sizes = [1, 8, 16], strides = [1, 1, 1]} : vector<2x8x16xf32> to vector<1x8x16xf32>
    %756 = vector.shape_cast %755 : vector<1x8x16xf32> to vector<8x16xf32>
    %c4_285 = arith.constant 4 : index
    %c0_286 = arith.constant 0 : index
    %c0_287 = arith.constant 0 : index
    %757 = vector.load %arg5[%c4_285, %c0_286, %c0_287] : memref<8x8x32xf32, #tpu.memory_space<vmem>>, vector<1x8x16xf32>
    %758 = vector.shape_cast %757 : vector<1x8x16xf32> to vector<8x16xf32>
    %759 = vector.shape_cast %756 : vector<8x16xf32> to vector<1x8x16xf32>
    tpu.vector_store %arg5[%c4_285, %c0_286, %c0_287], %759 {strides = array<i32>} : memref<8x8x32xf32, #tpu.memory_space<vmem>>, vector<1x8x16xf32>,
    %760 = vector.extract_strided_slice %742 {offsets = [1, 0, 0], sizes = [1, 8, 16], strides = [1, 1, 1]} : vector<2x8x16xf32> to vector<1x8x16xf32>
    %761 = vector.shape_cast %760 : vector<1x8x16xf32> to vector<8x16xf32>
    %c3_288 = arith.constant 3 : index
    %c0_289 = arith.constant 0 : index
    %c16_290 = arith.constant 16 : index
    %762 = vector.load %arg5[%c3_288, %c0_289, %c16_290] : memref<8x8x32xf32, #tpu.memory_space<vmem>>, vector<1x8x16xf32>
    %763 = vector.shape_cast %762 : vector<1x8x16xf32> to vector<8x16xf32>
    %764 = vector.shape_cast %761 : vector<8x16xf32> to vector<1x8x16xf32>
    tpu.vector_store %arg5[%c3_288, %c0_289, %c16_290], %764 {strides = array<i32>} : memref<8x8x32xf32, #tpu.memory_space<vmem>>, vector<1x8x16xf32>,
    %c40_291 = arith.constant 40 : index
    %c0_292 = arith.constant 0 : index
    %765 = vector.load %arg8[%c40_291, %c0_292] : memref<64x128xf32, #tpu.memory_space<vmem>>, vector<8x64xf32>
    %c16_293 = arith.constant 16 : index
    %c64_294 = arith.constant 64 : index
    %766 = vector.load %arg8[%c16_293, %c64_294] : memref<64x128xf32, #tpu.memory_space<vmem>>, vector<8x64xf32>
    %767 = vector.shape_cast %765 : vector<8x64xf32> to vector<1x8x64xf32>
    %768 = vector.shape_cast %766 : vector<8x64xf32> to vector<1x8x64xf32>
    %769 = tpu.concatenate %767, %768 in 0 : vector<1x8x64xf32>, vector<1x8x64xf32> -> vector<2x8x64xf32>
    %c5_295 = arith.constant 5 : index
    %c0_296 = arith.constant 0 : index
    %c0_297 = arith.constant 0 : index
    %770 = vector.load %arg1[%c5_295, %c0_296, %c0_297] : memref<8x8x1xf32, #tpu.memory_space<vmem>>, vector<1x8x1xf32>
    %771 = vector.shape_cast %770 : vector<1x8x1xf32> to vector<8x1xf32>
    %c2_298 = arith.constant 2 : index
    %c0_299 = arith.constant 0 : index
    %c0_300 = arith.constant 0 : index
    %772 = vector.load %arg1[%c2_298, %c0_299, %c0_300] : memref<8x8x1xf32, #tpu.memory_space<vmem>>, vector<1x8x1xf32>
    %773 = vector.shape_cast %772 : vector<1x8x1xf32> to vector<8x1xf32>
    %774 = vector.shape_cast %771 : vector<8x1xf32> to vector<1x8x1xf32>
    %775 = vector.shape_cast %773 : vector<8x1xf32> to vector<1x8x1xf32>
    %776 = tpu.concatenate %774, %775 in 0 : vector<1x8x1xf32>, vector<1x8x1xf32> -> vector<2x8x1xf32>
    %777 = arith.truncf %754 : vector<2x8x16xf32> to vector<2x8x16xbf16>
    "tpu.trace_start"() <{level = 10 : i32, message = "dbh,dhg->dbg"}> : () -> ()
    %cst_301 = arith.constant dense<0.000000e+00> : vector<2x8x64xf32>
    %778 = tpu.matmul %777, %487, %cst_301 {dimension_numbers = #tpu.dot_dimension_numbers<[2], [1], [1], [2], [0, 0, 0, 1, 1, 2], [0], [0]>} : vector<2x8x16xbf16>, vector<2x16x64xbf16>, vector<2x8x64xf32> -> vector<2x8x64xf32>
    "tpu.trace_stop"() : () -> ()
    %779 = arith.addf %769, %778 : vector<2x8x64xf32>
    %780 = vector.extract_strided_slice %779 {offsets = [0, 0, 0], sizes = [2, 8, 48], strides = [1, 1, 1]} : vector<2x8x64xf32> to vector<2x8x48xf32>
    %781 = arith.negf %780 : vector<2x8x48xf32>
    %782 = math.exp %781 : vector<2x8x48xf32>
    %cst_302 = arith.constant 1.000000e+00 : f32
    %783 = vector.broadcast %cst_302 : f32 to vector<2x8x48xf32>
    %784 = arith.addf %783, %782 : vector<2x8x48xf32>
    %785 = arith.divf %783, %784 : vector<2x8x48xf32>
    %786 = vector.extract_strided_slice %779 {offsets = [0, 0, 48], sizes = [2, 8, 16], strides = [1, 1, 1]} : vector<2x8x64xf32> to vector<2x8x16xf32>
    %787 = math.tanh %786 : vector<2x8x16xf32>
    %788 = vector.extract_strided_slice %785 {offsets = [0, 0, 16], sizes = [2, 8, 16], strides = [1, 1, 1]} : vector<2x8x48xf32> to vector<2x8x16xf32>
    %789 = arith.mulf %788, %749 : vector<2x8x16xf32>
    %790 = vector.extract_strided_slice %785 {offsets = [0, 0, 0], sizes = [2, 8, 16], strides = [1, 1, 1]} : vector<2x8x48xf32> to vector<2x8x16xf32>
    %791 = arith.mulf %790, %787 : vector<2x8x16xf32>
    %792 = arith.addf %789, %791 : vector<2x8x16xf32>
    %793 = vector.extract_strided_slice %785 {offsets = [0, 0, 32], sizes = [2, 8, 16], strides = [1, 1, 1]} : vector<2x8x48xf32> to vector<2x8x16xf32>
    %794 = math.tanh %792 : vector<2x8x16xf32>
    %795 = arith.mulf %793, %794 : vector<2x8x16xf32>
    %796 = vector.broadcast %776 : vector<2x8x1xf32> to vector<2x8x16xf32>
    %797 = arith.mulf %796, %795 : vector<2x8x16xf32>
    %798 = vector.broadcast %776 : vector<2x8x1xf32> to vector<2x8x16xf32>
    %799 = arith.mulf %798, %792 : vector<2x8x16xf32>
    %cst_303 = arith.constant 1.000000e+00 : f32
    %800 = vector.broadcast %cst_303 : f32 to vector<2x8x1xf32>
    %801 = arith.subf %800, %776 : vector<2x8x1xf32>
    %802 = vector.broadcast %801 : vector<2x8x1xf32> to vector<2x8x16xf32>
    %803 = arith.mulf %802, %749 : vector<2x8x16xf32>
    %804 = arith.addf %799, %803 : vector<2x8x16xf32>
    %cst_304 = arith.constant 1.000000e+00 : f32
    %805 = vector.broadcast %cst_304 : f32 to vector<2x8x1xf32>
    %806 = arith.subf %805, %776 : vector<2x8x1xf32>
    %807 = vector.broadcast %806 : vector<2x8x1xf32> to vector<2x8x16xf32>
    %808 = arith.mulf %807, %754 : vector<2x8x16xf32>
    %809 = arith.addf %797, %808 : vector<2x8x16xf32>
    %810 = vector.extract_strided_slice %797 {offsets = [0, 0, 0], sizes = [1, 8, 16], strides = [1, 1, 1]} : vector<2x8x16xf32> to vector<1x8x16xf32>
    %811 = vector.shape_cast %810 : vector<1x8x16xf32> to vector<8x16xf32>
    %c5_305 = arith.constant 5 : index
    %c0_306 = arith.constant 0 : index
    %c0_307 = arith.constant 0 : index
    %812 = vector.load %arg5[%c5_305, %c0_306, %c0_307] : memref<8x8x32xf32, #tpu.memory_space<vmem>>, vector<1x8x16xf32>
    %813 = vector.shape_cast %812 : vector<1x8x16xf32> to vector<8x16xf32>
    %814 = vector.shape_cast %811 : vector<8x16xf32> to vector<1x8x16xf32>
    tpu.vector_store %arg5[%c5_305, %c0_306, %c0_307], %814 {strides = array<i32>} : memref<8x8x32xf32, #tpu.memory_space<vmem>>, vector<1x8x16xf32>,
    %815 = vector.extract_strided_slice %797 {offsets = [1, 0, 0], sizes = [1, 8, 16], strides = [1, 1, 1]} : vector<2x8x16xf32> to vector<1x8x16xf32>
    %816 = vector.shape_cast %815 : vector<1x8x16xf32> to vector<8x16xf32>
    %c2_308 = arith.constant 2 : index
    %c0_309 = arith.constant 0 : index
    %c16_310 = arith.constant 16 : index
    %817 = vector.load %arg5[%c2_308, %c0_309, %c16_310] : memref<8x8x32xf32, #tpu.memory_space<vmem>>, vector<1x8x16xf32>
    %818 = vector.shape_cast %817 : vector<1x8x16xf32> to vector<8x16xf32>
    %819 = vector.shape_cast %816 : vector<8x16xf32> to vector<1x8x16xf32>
    tpu.vector_store %arg5[%c2_308, %c0_309, %c16_310], %819 {strides = array<i32>} : memref<8x8x32xf32, #tpu.memory_space<vmem>>, vector<1x8x16xf32>,
    %c48_311 = arith.constant 48 : index
    %c0_312 = arith.constant 0 : index
    %820 = vector.load %arg8[%c48_311, %c0_312] : memref<64x128xf32, #tpu.memory_space<vmem>>, vector<8x64xf32>
    %c8_313 = arith.constant 8 : index
    %c64_314 = arith.constant 64 : index
    %821 = vector.load %arg8[%c8_313, %c64_314] : memref<64x128xf32, #tpu.memory_space<vmem>>, vector<8x64xf32>
    %822 = vector.shape_cast %820 : vector<8x64xf32> to vector<1x8x64xf32>
    %823 = vector.shape_cast %821 : vector<8x64xf32> to vector<1x8x64xf32>
    %824 = tpu.concatenate %822, %823 in 0 : vector<1x8x64xf32>, vector<1x8x64xf32> -> vector<2x8x64xf32>
    %c6_315 = arith.constant 6 : index
    %c0_316 = arith.constant 0 : index
    %c0_317 = arith.constant 0 : index
    %825 = vector.load %arg1[%c6_315, %c0_316, %c0_317] : memref<8x8x1xf32, #tpu.memory_space<vmem>>, vector<1x8x1xf32>
    %826 = vector.shape_cast %825 : vector<1x8x1xf32> to vector<8x1xf32>
    %c1_318 = arith.constant 1 : index
    %c0_319 = arith.constant 0 : index
    %c0_320 = arith.constant 0 : index
    %827 = vector.load %arg1[%c1_318, %c0_319, %c0_320] : memref<8x8x1xf32, #tpu.memory_space<vmem>>, vector<1x8x1xf32>
    %828 = vector.shape_cast %827 : vector<1x8x1xf32> to vector<8x1xf32>
    %829 = vector.shape_cast %826 : vector<8x1xf32> to vector<1x8x1xf32>
    %830 = vector.shape_cast %828 : vector<8x1xf32> to vector<1x8x1xf32>
    %831 = tpu.concatenate %829, %830 in 0 : vector<1x8x1xf32>, vector<1x8x1xf32> -> vector<2x8x1xf32>
    %832 = arith.truncf %809 : vector<2x8x16xf32> to vector<2x8x16xbf16>
    "tpu.trace_start"() <{level = 10 : i32, message = "dbh,dhg->dbg"}> : () -> ()
    %cst_321 = arith.constant dense<0.000000e+00> : vector<2x8x64xf32>
    %833 = tpu.matmul %832, %487, %cst_321 {dimension_numbers = #tpu.dot_dimension_numbers<[2], [1], [1], [2], [0, 0, 0, 1, 1, 2], [0], [0]>} : vector<2x8x16xbf16>, vector<2x16x64xbf16>, vector<2x8x64xf32> -> vector<2x8x64xf32>
    "tpu.trace_stop"() : () -> ()
    %834 = arith.addf %824, %833 : vector<2x8x64xf32>
    %835 = vector.extract_strided_slice %834 {offsets = [0, 0, 0], sizes = [2, 8, 48], strides = [1, 1, 1]} : vector<2x8x64xf32> to vector<2x8x48xf32>
    %836 = arith.negf %835 : vector<2x8x48xf32>
    %837 = math.exp %836 : vector<2x8x48xf32>
    %cst_322 = arith.constant 1.000000e+00 : f32
    %838 = vector.broadcast %cst_322 : f32 to vector<2x8x48xf32>
    %839 = arith.addf %838, %837 : vector<2x8x48xf32>
    %840 = arith.divf %838, %839 : vector<2x8x48xf32>
    %841 = vector.extract_strided_slice %834 {offsets = [0, 0, 48], sizes = [2, 8, 16], strides = [1, 1, 1]} : vector<2x8x64xf32> to vector<2x8x16xf32>
    %842 = math.tanh %841 : vector<2x8x16xf32>
    %843 = vector.extract_strided_slice %840 {offsets = [0, 0, 16], sizes = [2, 8, 16], strides = [1, 1, 1]} : vector<2x8x48xf32> to vector<2x8x16xf32>
    %844 = arith.mulf %843, %804 : vector<2x8x16xf32>
    %845 = vector.extract_strided_slice %840 {offsets = [0, 0, 0], sizes = [2, 8, 16], strides = [1, 1, 1]} : vector<2x8x48xf32> to vector<2x8x16xf32>
    %846 = arith.mulf %845, %842 : vector<2x8x16xf32>
    %847 = arith.addf %844, %846 : vector<2x8x16xf32>
    %848 = vector.extract_strided_slice %840 {offsets = [0, 0, 32], sizes = [2, 8, 16], strides = [1, 1, 1]} : vector<2x8x48xf32> to vector<2x8x16xf32>
    %849 = math.tanh %847 : vector<2x8x16xf32>
    %850 = arith.mulf %848, %849 : vector<2x8x16xf32>
    %851 = vector.broadcast %831 : vector<2x8x1xf32> to vector<2x8x16xf32>
    %852 = arith.mulf %851, %850 : vector<2x8x16xf32>
    %853 = vector.broadcast %831 : vector<2x8x1xf32> to vector<2x8x16xf32>
    %854 = arith.mulf %853, %847 : vector<2x8x16xf32>
    %cst_323 = arith.constant 1.000000e+00 : f32
    %855 = vector.broadcast %cst_323 : f32 to vector<2x8x1xf32>
    %856 = arith.subf %855, %831 : vector<2x8x1xf32>
    %857 = vector.broadcast %856 : vector<2x8x1xf32> to vector<2x8x16xf32>
    %858 = arith.mulf %857, %804 : vector<2x8x16xf32>
    %859 = arith.addf %854, %858 : vector<2x8x16xf32>
    %cst_324 = arith.constant 1.000000e+00 : f32
    %860 = vector.broadcast %cst_324 : f32 to vector<2x8x1xf32>
    %861 = arith.subf %860, %831 : vector<2x8x1xf32>
    %862 = vector.broadcast %861 : vector<2x8x1xf32> to vector<2x8x16xf32>
    %863 = arith.mulf %862, %809 : vector<2x8x16xf32>
    %864 = arith.addf %852, %863 : vector<2x8x16xf32>
    %865 = vector.extract_strided_slice %852 {offsets = [0, 0, 0], sizes = [1, 8, 16], strides = [1, 1, 1]} : vector<2x8x16xf32> to vector<1x8x16xf32>
    %866 = vector.shape_cast %865 : vector<1x8x16xf32> to vector<8x16xf32>
    %c6_325 = arith.constant 6 : index
    %c0_326 = arith.constant 0 : index
    %c0_327 = arith.constant 0 : index
    %867 = vector.load %arg5[%c6_325, %c0_326, %c0_327] : memref<8x8x32xf32, #tpu.memory_space<vmem>>, vector<1x8x16xf32>
    %868 = vector.shape_cast %867 : vector<1x8x16xf32> to vector<8x16xf32>
    %869 = vector.shape_cast %866 : vector<8x16xf32> to vector<1x8x16xf32>
    tpu.vector_store %arg5[%c6_325, %c0_326, %c0_327], %869 {strides = array<i32>} : memref<8x8x32xf32, #tpu.memory_space<vmem>>, vector<1x8x16xf32>,
    %870 = vector.extract_strided_slice %852 {offsets = [1, 0, 0], sizes = [1, 8, 16], strides = [1, 1, 1]} : vector<2x8x16xf32> to vector<1x8x16xf32>
    %871 = vector.shape_cast %870 : vector<1x8x16xf32> to vector<8x16xf32>
    %c1_328 = arith.constant 1 : index
    %c0_329 = arith.constant 0 : index
    %c16_330 = arith.constant 16 : index
    %872 = vector.load %arg5[%c1_328, %c0_329, %c16_330] : memref<8x8x32xf32, #tpu.memory_space<vmem>>, vector<1x8x16xf32>
    %873 = vector.shape_cast %872 : vector<1x8x16xf32> to vector<8x16xf32>
    %874 = vector.shape_cast %871 : vector<8x16xf32> to vector<1x8x16xf32>
    tpu.vector_store %arg5[%c1_328, %c0_329, %c16_330], %874 {strides = array<i32>} : memref<8x8x32xf32, #tpu.memory_space<vmem>>, vector<1x8x16xf32>,
    %c56_331 = arith.constant 56 : index
    %c0_332 = arith.constant 0 : index
    %875 = vector.load %arg8[%c56_331, %c0_332] : memref<64x128xf32, #tpu.memory_space<vmem>>, vector<8x64xf32>
    %c0_333 = arith.constant 0 : index
    %c64_334 = arith.constant 64 : index
    %876 = vector.load %arg8[%c0_333, %c64_334] : memref<64x128xf32, #tpu.memory_space<vmem>>, vector<8x64xf32>
    %877 = vector.shape_cast %875 : vector<8x64xf32> to vector<1x8x64xf32>
    %878 = vector.shape_cast %876 : vector<8x64xf32> to vector<1x8x64xf32>
    %879 = tpu.concatenate %877, %878 in 0 : vector<1x8x64xf32>, vector<1x8x64xf32> -> vector<2x8x64xf32>
    %c7_335 = arith.constant 7 : index
    %c0_336 = arith.constant 0 : index
    %c0_337 = arith.constant 0 : index
    %880 = vector.load %arg1[%c7_335, %c0_336, %c0_337] : memref<8x8x1xf32, #tpu.memory_space<vmem>>, vector<1x8x1xf32>
    %881 = vector.shape_cast %880 : vector<1x8x1xf32> to vector<8x1xf32>
    %c0_338 = arith.constant 0 : index
    %c0_339 = arith.constant 0 : index
    %c0_340 = arith.constant 0 : index
    %882 = vector.load %arg1[%c0_338, %c0_339, %c0_340] : memref<8x8x1xf32, #tpu.memory_space<vmem>>, vector<1x8x1xf32>
    %883 = vector.shape_cast %882 : vector<1x8x1xf32> to vector<8x1xf32>
    %884 = vector.shape_cast %881 : vector<8x1xf32> to vector<1x8x1xf32>
    %885 = vector.shape_cast %883 : vector<8x1xf32> to vector<1x8x1xf32>
    %886 = tpu.concatenate %884, %885 in 0 : vector<1x8x1xf32>, vector<1x8x1xf32> -> vector<2x8x1xf32>
    %887 = arith.truncf %864 : vector<2x8x16xf32> to vector<2x8x16xbf16>
    "tpu.trace_start"() <{level = 10 : i32, message = "dbh,dhg->dbg"}> : () -> ()
    %cst_341 = arith.constant dense<0.000000e+00> : vector<2x8x64xf32>
    %888 = tpu.matmul %887, %487, %cst_341 {dimension_numbers = #tpu.dot_dimension_numbers<[2], [1], [1], [2], [0, 0, 0, 1, 1, 2], [0], [0]>} : vector<2x8x16xbf16>, vector<2x16x64xbf16>, vector<2x8x64xf32> -> vector<2x8x64xf32>
    "tpu.trace_stop"() : () -> ()
    %889 = arith.addf %879, %888 : vector<2x8x64xf32>
    %890 = vector.extract_strided_slice %889 {offsets = [0, 0, 0], sizes = [2, 8, 48], strides = [1, 1, 1]} : vector<2x8x64xf32> to vector<2x8x48xf32>
    %891 = arith.negf %890 : vector<2x8x48xf32>
    %892 = math.exp %891 : vector<2x8x48xf32>
    %cst_342 = arith.constant 1.000000e+00 : f32
    %893 = vector.broadcast %cst_342 : f32 to vector<2x8x48xf32>
    %894 = arith.addf %893, %892 : vector<2x8x48xf32>
    %895 = arith.divf %893, %894 : vector<2x8x48xf32>
    %896 = vector.extract_strided_slice %889 {offsets = [0, 0, 48], sizes = [2, 8, 16], strides = [1, 1, 1]} : vector<2x8x64xf32> to vector<2x8x16xf32>
    %897 = math.tanh %896 : vector<2x8x16xf32>
    %898 = vector.extract_strided_slice %895 {offsets = [0, 0, 16], sizes = [2, 8, 16], strides = [1, 1, 1]} : vector<2x8x48xf32> to vector<2x8x16xf32>
    %899 = arith.mulf %898, %859 : vector<2x8x16xf32>
    %900 = vector.extract_strided_slice %895 {offsets = [0, 0, 0], sizes = [2, 8, 16], strides = [1, 1, 1]} : vector<2x8x48xf32> to vector<2x8x16xf32>
    %901 = arith.mulf %900, %897 : vector<2x8x16xf32>
    %902 = arith.addf %899, %901 : vector<2x8x16xf32>
    %903 = vector.extract_strided_slice %895 {offsets = [0, 0, 32], sizes = [2, 8, 16], strides = [1, 1, 1]} : vector<2x8x48xf32> to vector<2x8x16xf32>
    %904 = math.tanh %902 : vector<2x8x16xf32>
    %905 = arith.mulf %903, %904 : vector<2x8x16xf32>
    %906 = vector.broadcast %886 : vector<2x8x1xf32> to vector<2x8x16xf32>
    %907 = arith.mulf %906, %905 : vector<2x8x16xf32>
    %908 = vector.broadcast %886 : vector<2x8x1xf32> to vector<2x8x16xf32>
    %909 = arith.mulf %908, %902 : vector<2x8x16xf32>
    %cst_343 = arith.constant 1.000000e+00 : f32
    %910 = vector.broadcast %cst_343 : f32 to vector<2x8x1xf32>
    %911 = arith.subf %910, %886 : vector<2x8x1xf32>
    %912 = vector.broadcast %911 : vector<2x8x1xf32> to vector<2x8x16xf32>
    %913 = arith.mulf %912, %859 : vector<2x8x16xf32>
    %914 = arith.addf %909, %913 : vector<2x8x16xf32>
    %cst_344 = arith.constant 1.000000e+00 : f32
    %915 = vector.broadcast %cst_344 : f32 to vector<2x8x1xf32>
    %916 = arith.subf %915, %886 : vector<2x8x1xf32>
    %917 = vector.broadcast %916 : vector<2x8x1xf32> to vector<2x8x16xf32>
    %918 = arith.mulf %917, %864 : vector<2x8x16xf32>
    %919 = arith.addf %907, %918 : vector<2x8x16xf32>
    %920 = vector.extract_strided_slice %907 {offsets = [0, 0, 0], sizes = [1, 8, 16], strides = [1, 1, 1]} : vector<2x8x16xf32> to vector<1x8x16xf32>
    %921 = vector.shape_cast %920 : vector<1x8x16xf32> to vector<8x16xf32>
    %c7_345 = arith.constant 7 : index
    %c0_346 = arith.constant 0 : index
    %c0_347 = arith.constant 0 : index
    %922 = vector.load %arg5[%c7_345, %c0_346, %c0_347] : memref<8x8x32xf32, #tpu.memory_space<vmem>>, vector<1x8x16xf32>
    %923 = vector.shape_cast %922 : vector<1x8x16xf32> to vector<8x16xf32>
    %924 = vector.shape_cast %921 : vector<8x16xf32> to vector<1x8x16xf32>
    tpu.vector_store %arg5[%c7_345, %c0_346, %c0_347], %924 {strides = array<i32>} : memref<8x8x32xf32, #tpu.memory_space<vmem>>, vector<1x8x16xf32>,
    %925 = vector.extract_strided_slice %907 {offsets = [1, 0, 0], sizes = [1, 8, 16], strides = [1, 1, 1]} : vector<2x8x16xf32> to vector<1x8x16xf32>
    %926 = vector.shape_cast %925 : vector<1x8x16xf32> to vector<8x16xf32>
    %c0_348 = arith.constant 0 : index
    %c0_349 = arith.constant 0 : index
    %c16_350 = arith.constant 16 : index
    %927 = vector.load %arg5[%c0_348, %c0_349, %c16_350] : memref<8x8x32xf32, #tpu.memory_space<vmem>>, vector<1x8x16xf32>
    %928 = vector.shape_cast %927 : vector<1x8x16xf32> to vector<8x16xf32>
    %929 = vector.shape_cast %926 : vector<8x16xf32> to vector<1x8x16xf32>
    tpu.vector_store %arg5[%c0_348, %c0_349, %c16_350], %929 {strides = array<i32>} : memref<8x8x32xf32, #tpu.memory_space<vmem>>, vector<1x8x16xf32>,
    %930 = vector.extract_strided_slice %919 {offsets = [0, 0, 0], sizes = [1, 8, 16], strides = [1, 1, 1]} : vector<2x8x16xf32> to vector<1x8x16xf32>
    %931 = vector.shape_cast %930 : vector<1x8x16xf32> to vector<8x16xf32>
    %c1_351 = arith.constant 1 : index
    %c0_352 = arith.constant 0 : index
    %c0_353 = arith.constant 0 : index
    %932 = vector.load %arg6[%c1_351, %c0_352, %c0_353] : memref<3x8x32xf32, #tpu.memory_space<vmem>>, vector<1x8x16xf32>
    %933 = vector.shape_cast %932 : vector<1x8x16xf32> to vector<8x16xf32>
    %934 = vector.shape_cast %931 : vector<8x16xf32> to vector<1x8x16xf32>
    tpu.vector_store %arg6[%c1_351, %c0_352, %c0_353], %934 {strides = array<i32>} : memref<3x8x32xf32, #tpu.memory_space<vmem>>, vector<1x8x16xf32>,
    %935 = vector.extract_strided_slice %919 {offsets = [1, 0, 0], sizes = [1, 8, 16], strides = [1, 1, 1]} : vector<2x8x16xf32> to vector<1x8x16xf32>
    %936 = vector.shape_cast %935 : vector<1x8x16xf32> to vector<8x16xf32>
    %c1_354 = arith.constant 1 : index
    %c0_355 = arith.constant 0 : index
    %c16_356 = arith.constant 16 : index
    %937 = vector.load %arg6[%c1_354, %c0_355, %c16_356] : memref<3x8x32xf32, #tpu.memory_space<vmem>>, vector<1x8x16xf32>
    %938 = vector.shape_cast %937 : vector<1x8x16xf32> to vector<8x16xf32>
    %939 = vector.shape_cast %936 : vector<8x16xf32> to vector<1x8x16xf32>
    tpu.vector_store %arg6[%c1_354, %c0_355, %c16_356], %939 {strides = array<i32>} : memref<3x8x32xf32, #tpu.memory_space<vmem>>, vector<1x8x16xf32>,
    %940 = vector.extract_strided_slice %914 {offsets = [0, 0, 0], sizes = [1, 8, 16], strides = [1, 1, 1]} : vector<2x8x16xf32> to vector<1x8x16xf32>
    %941 = vector.shape_cast %940 : vector<1x8x16xf32> to vector<8x16xf32>
    %c1_357 = arith.constant 1 : index
    %c0_358 = arith.constant 0 : index
    %c0_359 = arith.constant 0 : index
    %942 = vector.load %arg7[%c1_357, %c0_358, %c0_359] : memref<3x8x32xf32, #tpu.memory_space<vmem>>, vector<1x8x16xf32>
    %943 = vector.shape_cast %942 : vector<1x8x16xf32> to vector<8x16xf32>
    %944 = vector.shape_cast %941 : vector<8x16xf32> to vector<1x8x16xf32>
    tpu.vector_store %arg7[%c1_357, %c0_358, %c0_359], %944 {strides = array<i32>} : memref<3x8x32xf32, #tpu.memory_space<vmem>>, vector<1x8x16xf32>,
    %945 = vector.extract_strided_slice %914 {offsets = [1, 0, 0], sizes = [1, 8, 16], strides = [1, 1, 1]} : vector<2x8x16xf32> to vector<1x8x16xf32>
    %946 = vector.shape_cast %945 : vector<1x8x16xf32> to vector<8x16xf32>
    %c1_360 = arith.constant 1 : index
    %c0_361 = arith.constant 0 : index
    %c16_362 = arith.constant 16 : index
    %947 = vector.load %arg7[%c1_360, %c0_361, %c16_362] : memref<3x8x32xf32, #tpu.memory_space<vmem>>, vector<1x8x16xf32>
    %948 = vector.shape_cast %947 : vector<1x8x16xf32> to vector<8x16xf32>
    %949 = vector.shape_cast %946 : vector<8x16xf32> to vector<1x8x16xf32>
    tpu.vector_store %arg7[%c1_360, %c0_361, %c16_362], %949 {strides = array<i32>} : memref<3x8x32xf32, #tpu.memory_space<vmem>>, vector<1x8x16xf32>,
    %c0_363 = arith.constant 0 : index
    %c0_364 = arith.constant 0 : index
    %c0_365 = arith.constant 0 : index
    %950 = vector.load %arg5[%c0_363, %c0_364, %c0_365] : memref<8x8x32xf32, #tpu.memory_space<vmem>>, vector<8x8x32xf32>
    %951 = vector.shape_cast %950 : vector<8x8x32xf32> to vector<64x32xf32>
    %952 = arith.truncf %951 : vector<64x32xf32> to vector<64x32xbf16>
    %c2_366 = arith.constant 2 : index
    %c0_367 = arith.constant 0 : index
    %c0_368 = arith.constant 0 : index
    %953 = vector.load %arg2[%c2_366, %c0_367, %c0_368] : memref<3x32x128xbf16, #tpu.memory_space<vmem>>, vector<1x32x128xbf16>
    %954 = vector.shape_cast %953 : vector<1x32x128xbf16> to vector<32x128xbf16>
    %cst_369 = arith.constant dense<0.000000e+00> : vector<64x128xf32>
    %955 = tpu.matmul %952, %954, %cst_369 {dimension_numbers = #tpu.dot_dimension_numbers<[1], [0], [0], [1], [0, 0, 1, 1], [], []>} : vector<64x32xbf16>, vector<32x128xbf16>, vector<64x128xf32> -> vector<64x128xf32>
    %c2_370 = arith.constant 2 : index
    %c0_371 = arith.constant 0 : index
    %c0_372 = arith.constant 0 : index
    %956 = vector.load %arg4[%c2_370, %c0_371, %c0_372] : memref<3x1x128xf32, #tpu.memory_space<vmem>>, vector<1x1x128xf32>
    %957 = vector.shape_cast %956 : vector<1x1x128xf32> to vector<1x128xf32>
    %958 = vector.broadcast %957 : vector<1x128xf32> to vector<64x128xf32>
    %959 = arith.addf %955, %958 : vector<64x128xf32>
    %c0_373 = arith.constant 0 : index
    %c0_374 = arith.constant 0 : index
    %960 = vector.load %arg8[%c0_373, %c0_374] : memref<64x128xf32, #tpu.memory_space<vmem>>, vector<64x128xf32>
    tpu.vector_store %arg8[%c0_373, %c0_374], %959 {strides = array<i32>} : memref<64x128xf32, #tpu.memory_space<vmem>>, vector<64x128xf32>,
    %c2_375 = arith.constant 2 : index
    %c0_376 = arith.constant 0 : index
    %c0_377 = arith.constant 0 : index
    %c0_378 = arith.constant 0 : index
    %961 = vector.load %arg3[%c2_375, %c0_376, %c0_377, %c0_378] : memref<3x2x16x64xbf16, #tpu.memory_space<vmem>>, vector<1x2x16x64xbf16>
    %962 = vector.shape_cast %961 : vector<1x2x16x64xbf16> to vector<2x16x64xbf16>
    %cst_379 = arith.constant 0.000000e+00 : f32
    %963 = vector.broadcast %cst_379 : f32 to vector<2x8x16xf32>
    %cst_380 = arith.constant 0.000000e+00 : f32
    %964 = vector.broadcast %cst_380 : f32 to vector<2x8x16xf32>
    %c0_381 = arith.constant 0 : index
    %c0_382 = arith.constant 0 : index
    %965 = vector.load %arg8[%c0_381, %c0_382] : memref<64x128xf32, #tpu.memory_space<vmem>>, vector<8x64xf32>
    %c56_383 = arith.constant 56 : index
    %c64_384 = arith.constant 64 : index
    %966 = vector.load %arg8[%c56_383, %c64_384] : memref<64x128xf32, #tpu.memory_space<vmem>>, vector<8x64xf32>
    %967 = vector.shape_cast %965 : vector<8x64xf32> to vector<1x8x64xf32>
    %968 = vector.shape_cast %966 : vector<8x64xf32> to vector<1x8x64xf32>
    %969 = tpu.concatenate %967, %968 in 0 : vector<1x8x64xf32>, vector<1x8x64xf32> -> vector<2x8x64xf32>
    %c0_385 = arith.constant 0 : index
    %c0_386 = arith.constant 0 : index
    %c0_387 = arith.constant 0 : index
    %970 = vector.load %arg1[%c0_385, %c0_386, %c0_387] : memref<8x8x1xf32, #tpu.memory_space<vmem>>, vector<1x8x1xf32>
    %971 = vector.shape_cast %970 : vector<1x8x1xf32> to vector<8x1xf32>
    %c7_388 = arith.constant 7 : index
    %c0_389 = arith.constant 0 : index
    %c0_390 = arith.constant 0 : index
    %972 = vector.load %arg1[%c7_388, %c0_389, %c0_390] : memref<8x8x1xf32, #tpu.memory_space<vmem>>, vector<1x8x1xf32>
    %973 = vector.shape_cast %972 : vector<1x8x1xf32> to vector<8x1xf32>
    %974 = vector.shape_cast %971 : vector<8x1xf32> to vector<1x8x1xf32>
    %975 = vector.shape_cast %973 : vector<8x1xf32> to vector<1x8x1xf32>
    %976 = tpu.concatenate %974, %975 in 0 : vector<1x8x1xf32>, vector<1x8x1xf32> -> vector<2x8x1xf32>
    %977 = arith.truncf %963 : vector<2x8x16xf32> to vector<2x8x16xbf16>
    "tpu.trace_start"() <{level = 10 : i32, message = "dbh,dhg->dbg"}> : () -> ()
    %cst_391 = arith.constant dense<0.000000e+00> : vector<2x8x64xf32>
    %978 = tpu.matmul %977, %962, %cst_391 {dimension_numbers = #tpu.dot_dimension_numbers<[2], [1], [1], [2], [0, 0, 0, 1, 1, 2], [0], [0]>} : vector<2x8x16xbf16>, vector<2x16x64xbf16>, vector<2x8x64xf32> -> vector<2x8x64xf32>
    "tpu.trace_stop"() : () -> ()
    %979 = arith.addf %969, %978 : vector<2x8x64xf32>
    %980 = vector.extract_strided_slice %979 {offsets = [0, 0, 0], sizes = [2, 8, 48], strides = [1, 1, 1]} : vector<2x8x64xf32> to vector<2x8x48xf32>
    %981 = arith.negf %980 : vector<2x8x48xf32>
    %982 = math.exp %981 : vector<2x8x48xf32>
    %cst_392 = arith.constant 1.000000e+00 : f32
    %983 = vector.broadcast %cst_392 : f32 to vector<2x8x48xf32>
    %984 = arith.addf %983, %982 : vector<2x8x48xf32>
    %985 = arith.divf %983, %984 : vector<2x8x48xf32>
    %986 = vector.extract_strided_slice %979 {offsets = [0, 0, 48], sizes = [2, 8, 16], strides = [1, 1, 1]} : vector<2x8x64xf32> to vector<2x8x16xf32>
    %987 = math.tanh %986 : vector<2x8x16xf32>
    %988 = vector.extract_strided_slice %985 {offsets = [0, 0, 16], sizes = [2, 8, 16], strides = [1, 1, 1]} : vector<2x8x48xf32> to vector<2x8x16xf32>
    %989 = arith.mulf %988, %964 : vector<2x8x16xf32>
    %990 = vector.extract_strided_slice %985 {offsets = [0, 0, 0], sizes = [2, 8, 16], strides = [1, 1, 1]} : vector<2x8x48xf32> to vector<2x8x16xf32>
    %991 = arith.mulf %990, %987 : vector<2x8x16xf32>
    %992 = arith.addf %989, %991 : vector<2x8x16xf32>
    %993 = vector.extract_strided_slice %985 {offsets = [0, 0, 32], sizes = [2, 8, 16], strides = [1, 1, 1]} : vector<2x8x48xf32> to vector<2x8x16xf32>
    %994 = math.tanh %992 : vector<2x8x16xf32>
    %995 = arith.mulf %993, %994 : vector<2x8x16xf32>
    %996 = vector.broadcast %976 : vector<2x8x1xf32> to vector<2x8x16xf32>
    %997 = arith.mulf %996, %995 : vector<2x8x16xf32>
    %998 = vector.broadcast %976 : vector<2x8x1xf32> to vector<2x8x16xf32>
    %999 = arith.mulf %998, %992 : vector<2x8x16xf32>
    %cst_393 = arith.constant 1.000000e+00 : f32
    %1000 = vector.broadcast %cst_393 : f32 to vector<2x8x1xf32>
    %1001 = arith.subf %1000, %976 : vector<2x8x1xf32>
    %1002 = vector.broadcast %1001 : vector<2x8x1xf32> to vector<2x8x16xf32>
    %1003 = arith.mulf %1002, %964 : vector<2x8x16xf32>
    %1004 = arith.addf %999, %1003 : vector<2x8x16xf32>
    %cst_394 = arith.constant 1.000000e+00 : f32
    %1005 = vector.broadcast %cst_394 : f32 to vector<2x8x1xf32>
    %1006 = arith.subf %1005, %976 : vector<2x8x1xf32>
    %1007 = vector.broadcast %1006 : vector<2x8x1xf32> to vector<2x8x16xf32>
    %1008 = arith.mulf %1007, %963 : vector<2x8x16xf32>
    %1009 = arith.addf %997, %1008 : vector<2x8x16xf32>
    %1010 = vector.extract_strided_slice %997 {offsets = [0, 0, 0], sizes = [1, 8, 16], strides = [1, 1, 1]} : vector<2x8x16xf32> to vector<1x8x16xf32>
    %1011 = vector.shape_cast %1010 : vector<1x8x16xf32> to vector<8x16xf32>
    %c0_395 = arith.constant 0 : index
    %c0_396 = arith.constant 0 : index
    %c0_397 = arith.constant 0 : index
    %1012 = vector.load %arg5[%c0_395, %c0_396, %c0_397] : memref<8x8x32xf32, #tpu.memory_space<vmem>>, vector<1x8x16xf32>
    %1013 = vector.shape_cast %1012 : vector<1x8x16xf32> to vector<8x16xf32>
    %1014 = vector.shape_cast %1011 : vector<8x16xf32> to vector<1x8x16xf32>
    tpu.vector_store %arg5[%c0_395, %c0_396, %c0_397], %1014 {strides = array<i32>} : memref<8x8x32xf32, #tpu.memory_space<vmem>>, vector<1x8x16xf32>,
    %1015 = vector.extract_strided_slice %997 {offsets = [1, 0, 0], sizes = [1, 8, 16], strides = [1, 1, 1]} : vector<2x8x16xf32> to vector<1x8x16xf32>
    %1016 = vector.shape_cast %1015 : vector<1x8x16xf32> to vector<8x16xf32>
    %c7_398 = arith.constant 7 : index
    %c0_399 = arith.constant 0 : index
    %c16_400 = arith.constant 16 : index
    %1017 = vector.load %arg5[%c7_398, %c0_399, %c16_400] : memref<8x8x32xf32, #tpu.memory_space<vmem>>, vector<1x8x16xf32>
    %1018 = vector.shape_cast %1017 : vector<1x8x16xf32> to vector<8x16xf32>
    %1019 = vector.shape_cast %1016 : vector<8x16xf32> to vector<1x8x16xf32>
    tpu.vector_store %arg5[%c7_398, %c0_399, %c16_400], %1019 {strides = array<i32>} : memref<8x8x32xf32, #tpu.memory_space<vmem>>, vector<1x8x16xf32>,
    %c8_401 = arith.constant 8 : index
    %c0_402 = arith.constant 0 : index
    %1020 = vector.load %arg8[%c8_401, %c0_402] : memref<64x128xf32, #tpu.memory_space<vmem>>, vector<8x64xf32>
    %c48_403 = arith.constant 48 : index
    %c64_404 = arith.constant 64 : index
    %1021 = vector.load %arg8[%c48_403, %c64_404] : memref<64x128xf32, #tpu.memory_space<vmem>>, vector<8x64xf32>
    %1022 = vector.shape_cast %1020 : vector<8x64xf32> to vector<1x8x64xf32>
    %1023 = vector.shape_cast %1021 : vector<8x64xf32> to vector<1x8x64xf32>
    %1024 = tpu.concatenate %1022, %1023 in 0 : vector<1x8x64xf32>, vector<1x8x64xf32> -> vector<2x8x64xf32>
    %c1_405 = arith.constant 1 : index
    %c0_406 = arith.constant 0 : index
    %c0_407 = arith.constant 0 : index
    %1025 = vector.load %arg1[%c1_405, %c0_406, %c0_407] : memref<8x8x1xf32, #tpu.memory_space<vmem>>, vector<1x8x1xf32>
    %1026 = vector.shape_cast %1025 : vector<1x8x1xf32> to vector<8x1xf32>
    %c6_408 = arith.constant 6 : index
    %c0_409 = arith.constant 0 : index
    %c0_410 = arith.constant 0 : index
    %1027 = vector.load %arg1[%c6_408, %c0_409, %c0_410] : memref<8x8x1xf32, #tpu.memory_space<vmem>>, vector<1x8x1xf32>
    %1028 = vector.shape_cast %1027 : vector<1x8x1xf32> to vector<8x1xf32>
    %1029 = vector.shape_cast %1026 : vector<8x1xf32> to vector<1x8x1xf32>
    %1030 = vector.shape_cast %1028 : vector<8x1xf32> to vector<1x8x1xf32>
    %1031 = tpu.concatenate %1029, %1030 in 0 : vector<1x8x1xf32>, vector<1x8x1xf32> -> vector<2x8x1xf32>
    %1032 = arith.truncf %1009 : vector<2x8x16xf32> to vector<2x8x16xbf16>
    "tpu.trace_start"() <{level = 10 : i32, message = "dbh,dhg->dbg"}> : () -> ()
    %cst_411 = arith.constant dense<0.000000e+00> : vector<2x8x64xf32>
    %1033 = tpu.matmul %1032, %962, %cst_411 {dimension_numbers = #tpu.dot_dimension_numbers<[2], [1], [1], [2], [0, 0, 0, 1, 1, 2], [0], [0]>} : vector<2x8x16xbf16>, vector<2x16x64xbf16>, vector<2x8x64xf32> -> vector<2x8x64xf32>
    "tpu.trace_stop"() : () -> ()
    %1034 = arith.addf %1024, %1033 : vector<2x8x64xf32>
    %1035 = vector.extract_strided_slice %1034 {offsets = [0, 0, 0], sizes = [2, 8, 48], strides = [1, 1, 1]} : vector<2x8x64xf32> to vector<2x8x48xf32>
    %1036 = arith.negf %1035 : vector<2x8x48xf32>
    %1037 = math.exp %1036 : vector<2x8x48xf32>
    %cst_412 = arith.constant 1.000000e+00 : f32
    %1038 = vector.broadcast %cst_412 : f32 to vector<2x8x48xf32>
    %1039 = arith.addf %1038, %1037 : vector<2x8x48xf32>
    %1040 = arith.divf %1038, %1039 : vector<2x8x48xf32>
    %1041 = vector.extract_strided_slice %1034 {offsets = [0, 0, 48], sizes = [2, 8, 16], strides = [1, 1, 1]} : vector<2x8x64xf32> to vector<2x8x16xf32>
    %1042 = math.tanh %1041 : vector<2x8x16xf32>
    %1043 = vector.extract_strided_slice %1040 {offsets = [0, 0, 16], sizes = [2, 8, 16], strides = [1, 1, 1]} : vector<2x8x48xf32> to vector<2x8x16xf32>
    %1044 = arith.mulf %1043, %1004 : vector<2x8x16xf32>
    %1045 = vector.extract_strided_slice %1040 {offsets = [0, 0, 0], sizes = [2, 8, 16], strides = [1, 1, 1]} : vector<2x8x48xf32> to vector<2x8x16xf32>
    %1046 = arith.mulf %1045, %1042 : vector<2x8x16xf32>
    %1047 = arith.addf %1044, %1046 : vector<2x8x16xf32>
    %1048 = vector.extract_strided_slice %1040 {offsets = [0, 0, 32], sizes = [2, 8, 16], strides = [1, 1, 1]} : vector<2x8x48xf32> to vector<2x8x16xf32>
    %1049 = math.tanh %1047 : vector<2x8x16xf32>
    %1050 = arith.mulf %1048, %1049 : vector<2x8x16xf32>
    %1051 = vector.broadcast %1031 : vector<2x8x1xf32> to vector<2x8x16xf32>
    %1052 = arith.mulf %1051, %1050 : vector<2x8x16xf32>
    %1053 = vector.broadcast %1031 : vector<2x8x1xf32> to vector<2x8x16xf32>
    %1054 = arith.mulf %1053, %1047 : vector<2x8x16xf32>
    %cst_413 = arith.constant 1.000000e+00 : f32
    %1055 = vector.broadcast %cst_413 : f32 to vector<2x8x1xf32>
    %1056 = arith.subf %1055, %1031 : vector<2x8x1xf32>
    %1057 = vector.broadcast %1056 : vector<2x8x1xf32> to vector<2x8x16xf32>
    %1058 = arith.mulf %1057, %1004 : vector<2x8x16xf32>
    %1059 = arith.addf %1054, %1058 : vector<2x8x16xf32>
    %cst_414 = arith.constant 1.000000e+00 : f32
    %1060 = vector.broadcast %cst_414 : f32 to vector<2x8x1xf32>
    %1061 = arith.subf %1060, %1031 : vector<2x8x1xf32>
    %1062 = vector.broadcast %1061 : vector<2x8x1xf32> to vector<2x8x16xf32>
    %1063 = arith.mulf %1062, %1009 : vector<2x8x16xf32>
    %1064 = arith.addf %1052, %1063 : vector<2x8x16xf32>
    %1065 = vector.extract_strided_slice %1052 {offsets = [0, 0, 0], sizes = [1, 8, 16], strides = [1, 1, 1]} : vector<2x8x16xf32> to vector<1x8x16xf32>
    %1066 = vector.shape_cast %1065 : vector<1x8x16xf32> to vector<8x16xf32>
    %c1_415 = arith.constant 1 : index
    %c0_416 = arith.constant 0 : index
    %c0_417 = arith.constant 0 : index
    %1067 = vector.load %arg5[%c1_415, %c0_416, %c0_417] : memref<8x8x32xf32, #tpu.memory_space<vmem>>, vector<1x8x16xf32>
    %1068 = vector.shape_cast %1067 : vector<1x8x16xf32> to vector<8x16xf32>
    %1069 = vector.shape_cast %1066 : vector<8x16xf32> to vector<1x8x16xf32>
    tpu.vector_store %arg5[%c1_415, %c0_416, %c0_417], %1069 {strides = array<i32>} : memref<8x8x32xf32, #tpu.memory_space<vmem>>, vector<1x8x16xf32>,
    %1070 = vector.extract_strided_slice %1052 {offsets = [1, 0, 0], sizes = [1, 8, 16], strides = [1, 1, 1]} : vector<2x8x16xf32> to vector<1x8x16xf32>
    %1071 = vector.shape_cast %1070 : vector<1x8x16xf32> to vector<8x16xf32>
    %c6_418 = arith.constant 6 : index
    %c0_419 = arith.constant 0 : index
    %c16_420 = arith.constant 16 : index
    %1072 = vector.load %arg5[%c6_418, %c0_419, %c16_420] : memref<8x8x32xf32, #tpu.memory_space<vmem>>, vector<1x8x16xf32>
    %1073 = vector.shape_cast %1072 : vector<1x8x16xf32> to vector<8x16xf32>
    %1074 = vector.shape_cast %1071 : vector<8x16xf32> to vector<1x8x16xf32>
    tpu.vector_store %arg5[%c6_418, %c0_419, %c16_420], %1074 {strides = array<i32>} : memref<8x8x32xf32, #tpu.memory_space<vmem>>, vector<1x8x16xf32>,
    %c16_421 = arith.constant 16 : index
    %c0_422 = arith.constant 0 : index
    %1075 = vector.load %arg8[%c16_421, %c0_422] : memref<64x128xf32, #tpu.memory_space<vmem>>, vector<8x64xf32>
    %c40_423 = arith.constant 40 : index
    %c64_424 = arith.constant 64 : index
    %1076 = vector.load %arg8[%c40_423, %c64_424] : memref<64x128xf32, #tpu.memory_space<vmem>>, vector<8x64xf32>
    %1077 = vector.shape_cast %1075 : vector<8x64xf32> to vector<1x8x64xf32>
    %1078 = vector.shape_cast %1076 : vector<8x64xf32> to vector<1x8x64xf32>
    %1079 = tpu.concatenate %1077, %1078 in 0 : vector<1x8x64xf32>, vector<1x8x64xf32> -> vector<2x8x64xf32>
    %c2_425 = arith.constant 2 : index
    %c0_426 = arith.constant 0 : index
    %c0_427 = arith.constant 0 : index
    %1080 = vector.load %arg1[%c2_425, %c0_426, %c0_427] : memref<8x8x1xf32, #tpu.memory_space<vmem>>, vector<1x8x1xf32>
    %1081 = vector.shape_cast %1080 : vector<1x8x1xf32> to vector<8x1xf32>
    %c5_428 = arith.constant 5 : index
    %c0_429 = arith.constant 0 : index
    %c0_430 = arith.constant 0 : index
    %1082 = vector.load %arg1[%c5_428, %c0_429, %c0_430] : memref<8x8x1xf32, #tpu.memory_space<vmem>>, vector<1x8x1xf32>
    %1083 = vector.shape_cast %1082 : vector<1x8x1xf32> to vector<8x1xf32>
    %1084 = vector.shape_cast %1081 : vector<8x1xf32> to vector<1x8x1xf32>
    %1085 = vector.shape_cast %1083 : vector<8x1xf32> to vector<1x8x1xf32>
    %1086 = tpu.concatenate %1084, %1085 in 0 : vector<1x8x1xf32>, vector<1x8x1xf32> -> vector<2x8x1xf32>
    %1087 = arith.truncf %1064 : vector<2x8x16xf32> to vector<2x8x16xbf16>
    "tpu.trace_start"() <{level = 10 : i32, message = "dbh,dhg->dbg"}> : () -> ()
    %cst_431 = arith.constant dense<0.000000e+00> : vector<2x8x64xf32>
    %1088 = tpu.matmul %1087, %962, %cst_431 {dimension_numbers = #tpu.dot_dimension_numbers<[2], [1], [1], [2], [0, 0, 0, 1, 1, 2], [0], [0]>} : vector<2x8x16xbf16>, vector<2x16x64xbf16>, vector<2x8x64xf32> -> vector<2x8x64xf32>
    "tpu.trace_stop"() : () -> ()
    %1089 = arith.addf %1079, %1088 : vector<2x8x64xf32>
    %1090 = vector.extract_strided_slice %1089 {offsets = [0, 0, 0], sizes = [2, 8, 48], strides = [1, 1, 1]} : vector<2x8x64xf32> to vector<2x8x48xf32>
    %1091 = arith.negf %1090 : vector<2x8x48xf32>
    %1092 = math.exp %1091 : vector<2x8x48xf32>
    %cst_432 = arith.constant 1.000000e+00 : f32
    %1093 = vector.broadcast %cst_432 : f32 to vector<2x8x48xf32>
    %1094 = arith.addf %1093, %1092 : vector<2x8x48xf32>
    %1095 = arith.divf %1093, %1094 : vector<2x8x48xf32>
    %1096 = vector.extract_strided_slice %1089 {offsets = [0, 0, 48], sizes = [2, 8, 16], strides = [1, 1, 1]} : vector<2x8x64xf32> to vector<2x8x16xf32>
    %1097 = math.tanh %1096 : vector<2x8x16xf32>
    %1098 = vector.extract_strided_slice %1095 {offsets = [0, 0, 16], sizes = [2, 8, 16], strides = [1, 1, 1]} : vector<2x8x48xf32> to vector<2x8x16xf32>
    %1099 = arith.mulf %1098, %1059 : vector<2x8x16xf32>
    %1100 = vector.extract_strided_slice %1095 {offsets = [0, 0, 0], sizes = [2, 8, 16], strides = [1, 1, 1]} : vector<2x8x48xf32> to vector<2x8x16xf32>
    %1101 = arith.mulf %1100, %1097 : vector<2x8x16xf32>
    %1102 = arith.addf %1099, %1101 : vector<2x8x16xf32>
    %1103 = vector.extract_strided_slice %1095 {offsets = [0, 0, 32], sizes = [2, 8, 16], strides = [1, 1, 1]} : vector<2x8x48xf32> to vector<2x8x16xf32>
    %1104 = math.tanh %1102 : vector<2x8x16xf32>
    %1105 = arith.mulf %1103, %1104 : vector<2x8x16xf32>
    %1106 = vector.broadcast %1086 : vector<2x8x1xf32> to vector<2x8x16xf32>
    %1107 = arith.mulf %1106, %1105 : vector<2x8x16xf32>
    %1108 = vector.broadcast %1086 : vector<2x8x1xf32> to vector<2x8x16xf32>
    %1109 = arith.mulf %1108, %1102 : vector<2x8x16xf32>
    %cst_433 = arith.constant 1.000000e+00 : f32
    %1110 = vector.broadcast %cst_433 : f32 to vector<2x8x1xf32>
    %1111 = arith.subf %1110, %1086 : vector<2x8x1xf32>
    %1112 = vector.broadcast %1111 : vector<2x8x1xf32> to vector<2x8x16xf32>
    %1113 = arith.mulf %1112, %1059 : vector<2x8x16xf32>
    %1114 = arith.addf %1109, %1113 : vector<2x8x16xf32>
    %cst_434 = arith.constant 1.000000e+00 : f32
    %1115 = vector.broadcast %cst_434 : f32 to vector<2x8x1xf32>
    %1116 = arith.subf %1115, %1086 : vector<2x8x1xf32>
    %1117 = vector.broadcast %1116 : vector<2x8x1xf32> to vector<2x8x16xf32>
    %1118 = arith.mulf %1117, %1064 : vector<2x8x16xf32>
    %1119 = arith.addf %1107, %1118 : vector<2x8x16xf32>
    %1120 = vector.extract_strided_slice %1107 {offsets = [0, 0, 0], sizes = [1, 8, 16], strides = [1, 1, 1]} : vector<2x8x16xf32> to vector<1x8x16xf32>
    %1121 = vector.shape_cast %1120 : vector<1x8x16xf32> to vector<8x16xf32>
    %c2_435 = arith.constant 2 : index
    %c0_436 = arith.constant 0 : index
    %c0_437 = arith.constant 0 : index
    %1122 = vector.load %arg5[%c2_435, %c0_436, %c0_437] : memref<8x8x32xf32, #tpu.memory_space<vmem>>, vector<1x8x16xf32>
    %1123 = vector.shape_cast %1122 : vector<1x8x16xf32> to vector<8x16xf32>
    %1124 = vector.shape_cast %1121 : vector<8x16xf32> to vector<1x8x16xf32>
    tpu.vector_store %arg5[%c2_435, %c0_436, %c0_437], %1124 {strides = array<i32>} : memref<8x8x32xf32, #tpu.memory_space<vmem>>, vector<1x8x16xf32>,
    %1125 = vector.extract_strided_slice %1107 {offsets = [1, 0, 0], sizes = [1, 8, 16], strides = [1, 1, 1]} : vector<2x8x16xf32> to vector<1x8x16xf32>
    %1126 = vector.shape_cast %1125 : vector<1x8x16xf32> to vector<8x16xf32>
    %c5_438 = arith.constant 5 : index
    %c0_439 = arith.constant 0 : index
    %c16_440 = arith.constant 16 : index
    %1127 = vector.load %arg5[%c5_438, %c0_439, %c16_440] : memref<8x8x32xf32, #tpu.memory_space<vmem>>, vector<1x8x16xf32>
    %1128 = vector.shape_cast %1127 : vector<1x8x16xf32> to vector<8x16xf32>
    %1129 = vector.shape_cast %1126 : vector<8x16xf32> to vector<1x8x16xf32>
    tpu.vector_store %arg5[%c5_438, %c0_439, %c16_440], %1129 {strides = array<i32>} : memref<8x8x32xf32, #tpu.memory_space<vmem>>, vector<1x8x16xf32>,
    %c24_441 = arith.constant 24 : index
    %c0_442 = arith.constant 0 : index
    %1130 = vector.load %arg8[%c24_441, %c0_442] : memref<64x128xf32, #tpu.memory_space<vmem>>, vector<8x64xf32>
    %c32_443 = arith.constant 32 : index
    %c64_444 = arith.constant 64 : index
    %1131 = vector.load %arg8[%c32_443, %c64_444] : memref<64x128xf32, #tpu.memory_space<vmem>>, vector<8x64xf32>
    %1132 = vector.shape_cast %1130 : vector<8x64xf32> to vector<1x8x64xf32>
    %1133 = vector.shape_cast %1131 : vector<8x64xf32> to vector<1x8x64xf32>
    %1134 = tpu.concatenate %1132, %1133 in 0 : vector<1x8x64xf32>, vector<1x8x64xf32> -> vector<2x8x64xf32>
    %c3_445 = arith.constant 3 : index
    %c0_446 = arith.constant 0 : index
    %c0_447 = arith.constant 0 : index
    %1135 = vector.load %arg1[%c3_445, %c0_446, %c0_447] : memref<8x8x1xf32, #tpu.memory_space<vmem>>, vector<1x8x1xf32>
    %1136 = vector.shape_cast %1135 : vector<1x8x1xf32> to vector<8x1xf32>
    %c4_448 = arith.constant 4 : index
    %c0_449 = arith.constant 0 : index
    %c0_450 = arith.constant 0 : index
    %1137 = vector.load %arg1[%c4_448, %c0_449, %c0_450] : memref<8x8x1xf32, #tpu.memory_space<vmem>>, vector<1x8x1xf32>
    %1138 = vector.shape_cast %1137 : vector<1x8x1xf32> to vector<8x1xf32>
    %1139 = vector.shape_cast %1136 : vector<8x1xf32> to vector<1x8x1xf32>
    %1140 = vector.shape_cast %1138 : vector<8x1xf32> to vector<1x8x1xf32>
    %1141 = tpu.concatenate %1139, %1140 in 0 : vector<1x8x1xf32>, vector<1x8x1xf32> -> vector<2x8x1xf32>
    %1142 = arith.truncf %1119 : vector<2x8x16xf32> to vector<2x8x16xbf16>
    "tpu.trace_start"() <{level = 10 : i32, message = "dbh,dhg->dbg"}> : () -> ()
    %cst_451 = arith.constant dense<0.000000e+00> : vector<2x8x64xf32>
    %1143 = tpu.matmul %1142, %962, %cst_451 {dimension_numbers = #tpu.dot_dimension_numbers<[2], [1], [1], [2], [0, 0, 0, 1, 1, 2], [0], [0]>} : vector<2x8x16xbf16>, vector<2x16x64xbf16>, vector<2x8x64xf32> -> vector<2x8x64xf32>
    "tpu.trace_stop"() : () -> ()
    %1144 = arith.addf %1134, %1143 : vector<2x8x64xf32>
    %1145 = vector.extract_strided_slice %1144 {offsets = [0, 0, 0], sizes = [2, 8, 48], strides = [1, 1, 1]} : vector<2x8x64xf32> to vector<2x8x48xf32>
    %1146 = arith.negf %1145 : vector<2x8x48xf32>
    %1147 = math.exp %1146 : vector<2x8x48xf32>
    %cst_452 = arith.constant 1.000000e+00 : f32
    %1148 = vector.broadcast %cst_452 : f32 to vector<2x8x48xf32>
    %1149 = arith.addf %1148, %1147 : vector<2x8x48xf32>
    %1150 = arith.divf %1148, %1149 : vector<2x8x48xf32>
    %1151 = vector.extract_strided_slice %1144 {offsets = [0, 0, 48], sizes = [2, 8, 16], strides = [1, 1, 1]} : vector<2x8x64xf32> to vector<2x8x16xf32>
    %1152 = math.tanh %1151 : vector<2x8x16xf32>
    %1153 = vector.extract_strided_slice %1150 {offsets = [0, 0, 16], sizes = [2, 8, 16], strides = [1, 1, 1]} : vector<2x8x48xf32> to vector<2x8x16xf32>
    %1154 = arith.mulf %1153, %1114 : vector<2x8x16xf32>
    %1155 = vector.extract_strided_slice %1150 {offsets = [0, 0, 0], sizes = [2, 8, 16], strides = [1, 1, 1]} : vector<2x8x48xf32> to vector<2x8x16xf32>
    %1156 = arith.mulf %1155, %1152 : vector<2x8x16xf32>
    %1157 = arith.addf %1154, %1156 : vector<2x8x16xf32>
    %1158 = vector.extract_strided_slice %1150 {offsets = [0, 0, 32], sizes = [2, 8, 16], strides = [1, 1, 1]} : vector<2x8x48xf32> to vector<2x8x16xf32>
    %1159 = math.tanh %1157 : vector<2x8x16xf32>
    %1160 = arith.mulf %1158, %1159 : vector<2x8x16xf32>
    %1161 = vector.broadcast %1141 : vector<2x8x1xf32> to vector<2x8x16xf32>
    %1162 = arith.mulf %1161, %1160 : vector<2x8x16xf32>
    %1163 = vector.broadcast %1141 : vector<2x8x1xf32> to vector<2x8x16xf32>
    %1164 = arith.mulf %1163, %1157 : vector<2x8x16xf32>
    %cst_453 = arith.constant 1.000000e+00 : f32
    %1165 = vector.broadcast %cst_453 : f32 to vector<2x8x1xf32>
    %1166 = arith.subf %1165, %1141 : vector<2x8x1xf32>
    %1167 = vector.broadcast %1166 : vector<2x8x1xf32> to vector<2x8x16xf32>
    %1168 = arith.mulf %1167, %1114 : vector<2x8x16xf32>
    %1169 = arith.addf %1164, %1168 : vector<2x8x16xf32>
    %cst_454 = arith.constant 1.000000e+00 : f32
    %1170 = vector.broadcast %cst_454 : f32 to vector<2x8x1xf32>
    %1171 = arith.subf %1170, %1141 : vector<2x8x1xf32>
    %1172 = vector.broadcast %1171 : vector<2x8x1xf32> to vector<2x8x16xf32>
    %1173 = arith.mulf %1172, %1119 : vector<2x8x16xf32>
    %1174 = arith.addf %1162, %1173 : vector<2x8x16xf32>
    %1175 = vector.extract_strided_slice %1162 {offsets = [0, 0, 0], sizes = [1, 8, 16], strides = [1, 1, 1]} : vector<2x8x16xf32> to vector<1x8x16xf32>
    %1176 = vector.shape_cast %1175 : vector<1x8x16xf32> to vector<8x16xf32>
    %c3_455 = arith.constant 3 : index
    %c0_456 = arith.constant 0 : index
    %c0_457 = arith.constant 0 : index
    %1177 = vector.load %arg5[%c3_455, %c0_456, %c0_457] : memref<8x8x32xf32, #tpu.memory_space<vmem>>, vector<1x8x16xf32>
    %1178 = vector.shape_cast %1177 : vector<1x8x16xf32> to vector<8x16xf32>
    %1179 = vector.shape_cast %1176 : vector<8x16xf32> to vector<1x8x16xf32>
    tpu.vector_store %arg5[%c3_455, %c0_456, %c0_457], %1179 {strides = array<i32>} : memref<8x8x32xf32, #tpu.memory_space<vmem>>, vector<1x8x16xf32>,
    %1180 = vector.extract_strided_slice %1162 {offsets = [1, 0, 0], sizes = [1, 8, 16], strides = [1, 1, 1]} : vector<2x8x16xf32> to vector<1x8x16xf32>
    %1181 = vector.shape_cast %1180 : vector<1x8x16xf32> to vector<8x16xf32>
    %c4_458 = arith.constant 4 : index
    %c0_459 = arith.constant 0 : index
    %c16_460 = arith.constant 16 : index
    %1182 = vector.load %arg5[%c4_458, %c0_459, %c16_460] : memref<8x8x32xf32, #tpu.memory_space<vmem>>, vector<1x8x16xf32>
    %1183 = vector.shape_cast %1182 : vector<1x8x16xf32> to vector<8x16xf32>
    %1184 = vector.shape_cast %1181 : vector<8x16xf32> to vector<1x8x16xf32>
    tpu.vector_store %arg5[%c4_458, %c0_459, %c16_460], %1184 {strides = array<i32>} : memref<8x8x32xf32, #tpu.memory_space<vmem>>, vector<1x8x16xf32>,
    %c32_461 = arith.constant 32 : index
    %c0_462 = arith.constant 0 : index
    %1185 = vector.load %arg8[%c32_461, %c0_462] : memref<64x128xf32, #tpu.memory_space<vmem>>, vector<8x64xf32>
    %c24_463 = arith.constant 24 : index
    %c64_464 = arith.constant 64 : index
    %1186 = vector.load %arg8[%c24_463, %c64_464] : memref<64x128xf32, #tpu.memory_space<vmem>>, vector<8x64xf32>
    %1187 = vector.shape_cast %1185 : vector<8x64xf32> to vector<1x8x64xf32>
    %1188 = vector.shape_cast %1186 : vector<8x64xf32> to vector<1x8x64xf32>
    %1189 = tpu.concatenate %1187, %1188 in 0 : vector<1x8x64xf32>, vector<1x8x64xf32> -> vector<2x8x64xf32>
    %c4_465 = arith.constant 4 : index
    %c0_466 = arith.constant 0 : index
    %c0_467 = arith.constant 0 : index
    %1190 = vector.load %arg1[%c4_465, %c0_466, %c0_467] : memref<8x8x1xf32, #tpu.memory_space<vmem>>, vector<1x8x1xf32>
    %1191 = vector.shape_cast %1190 : vector<1x8x1xf32> to vector<8x1xf32>
    %c3_468 = arith.constant 3 : index
    %c0_469 = arith.constant 0 : index
    %c0_470 = arith.constant 0 : index
    %1192 = vector.load %arg1[%c3_468, %c0_469, %c0_470] : memref<8x8x1xf32, #tpu.memory_space<vmem>>, vector<1x8x1xf32>
    %1193 = vector.shape_cast %1192 : vector<1x8x1xf32> to vector<8x1xf32>
    %1194 = vector.shape_cast %1191 : vector<8x1xf32> to vector<1x8x1xf32>
    %1195 = vector.shape_cast %1193 : vector<8x1xf32> to vector<1x8x1xf32>
    %1196 = tpu.concatenate %1194, %1195 in 0 : vector<1x8x1xf32>, vector<1x8x1xf32> -> vector<2x8x1xf32>
    %1197 = arith.truncf %1174 : vector<2x8x16xf32> to vector<2x8x16xbf16>
    "tpu.trace_start"() <{level = 10 : i32, message = "dbh,dhg->dbg"}> : () -> ()
    %cst_471 = arith.constant dense<0.000000e+00> : vector<2x8x64xf32>
    %1198 = tpu.matmul %1197, %962, %cst_471 {dimension_numbers = #tpu.dot_dimension_numbers<[2], [1], [1], [2], [0, 0, 0, 1, 1, 2], [0], [0]>} : vector<2x8x16xbf16>, vector<2x16x64xbf16>, vector<2x8x64xf32> -> vector<2x8x64xf32>
    "tpu.trace_stop"() : () -> ()
    %1199 = arith.addf %1189, %1198 : vector<2x8x64xf32>
    %1200 = vector.extract_strided_slice %1199 {offsets = [0, 0, 0], sizes = [2, 8, 48], strides = [1, 1, 1]} : vector<2x8x64xf32> to vector<2x8x48xf32>
    %1201 = arith.negf %1200 : vector<2x8x48xf32>
    %1202 = math.exp %1201 : vector<2x8x48xf32>
    %cst_472 = arith.constant 1.000000e+00 : f32
    %1203 = vector.broadcast %cst_472 : f32 to vector<2x8x48xf32>
    %1204 = arith.addf %1203, %1202 : vector<2x8x48xf32>
    %1205 = arith.divf %1203, %1204 : vector<2x8x48xf32>
    %1206 = vector.extract_strided_slice %1199 {offsets = [0, 0, 48], sizes = [2, 8, 16], strides = [1, 1, 1]} : vector<2x8x64xf32> to vector<2x8x16xf32>
    %1207 = math.tanh %1206 : vector<2x8x16xf32>
    %1208 = vector.extract_strided_slice %1205 {offsets = [0, 0, 16], sizes = [2, 8, 16], strides = [1, 1, 1]} : vector<2x8x48xf32> to vector<2x8x16xf32>
    %1209 = arith.mulf %1208, %1169 : vector<2x8x16xf32>
    %1210 = vector.extract_strided_slice %1205 {offsets = [0, 0, 0], sizes = [2, 8, 16], strides = [1, 1, 1]} : vector<2x8x48xf32> to vector<2x8x16xf32>
    %1211 = arith.mulf %1210, %1207 : vector<2x8x16xf32>
    %1212 = arith.addf %1209, %1211 : vector<2x8x16xf32>
    %1213 = vector.extract_strided_slice %1205 {offsets = [0, 0, 32], sizes = [2, 8, 16], strides = [1, 1, 1]} : vector<2x8x48xf32> to vector<2x8x16xf32>
    %1214 = math.tanh %1212 : vector<2x8x16xf32>
    %1215 = arith.mulf %1213, %1214 : vector<2x8x16xf32>
    %1216 = vector.broadcast %1196 : vector<2x8x1xf32> to vector<2x8x16xf32>
    %1217 = arith.mulf %1216, %1215 : vector<2x8x16xf32>
    %1218 = vector.broadcast %1196 : vector<2x8x1xf32> to vector<2x8x16xf32>
    %1219 = arith.mulf %1218, %1212 : vector<2x8x16xf32>
    %cst_473 = arith.constant 1.000000e+00 : f32
    %1220 = vector.broadcast %cst_473 : f32 to vector<2x8x1xf32>
    %1221 = arith.subf %1220, %1196 : vector<2x8x1xf32>
    %1222 = vector.broadcast %1221 : vector<2x8x1xf32> to vector<2x8x16xf32>
    %1223 = arith.mulf %1222, %1169 : vector<2x8x16xf32>
    %1224 = arith.addf %1219, %1223 : vector<2x8x16xf32>
    %cst_474 = arith.constant 1.000000e+00 : f32
    %1225 = vector.broadcast %cst_474 : f32 to vector<2x8x1xf32>
    %1226 = arith.subf %1225, %1196 : vector<2x8x1xf32>
    %1227 = vector.broadcast %1226 : vector<2x8x1xf32> to vector<2x8x16xf32>
    %1228 = arith.mulf %1227, %1174 : vector<2x8x16xf32>
    %1229 = arith.addf %1217, %1228 : vector<2x8x16xf32>
    %1230 = vector.extract_strided_slice %1217 {offsets = [0, 0, 0], sizes = [1, 8, 16], strides = [1, 1, 1]} : vector<2x8x16xf32> to vector<1x8x16xf32>
    %1231 = vector.shape_cast %1230 : vector<1x8x16xf32> to vector<8x16xf32>
    %c4_475 = arith.constant 4 : index
    %c0_476 = arith.constant 0 : index
    %c0_477 = arith.constant 0 : index
    %1232 = vector.load %arg5[%c4_475, %c0_476, %c0_477] : memref<8x8x32xf32, #tpu.memory_space<vmem>>, vector<1x8x16xf32>
    %1233 = vector.shape_cast %1232 : vector<1x8x16xf32> to vector<8x16xf32>
    %1234 = vector.shape_cast %1231 : vector<8x16xf32> to vector<1x8x16xf32>
    tpu.vector_store %arg5[%c4_475, %c0_476, %c0_477], %1234 {strides = array<i32>} : memref<8x8x32xf32, #tpu.memory_space<vmem>>, vector<1x8x16xf32>,
    %1235 = vector.extract_strided_slice %1217 {offsets = [1, 0, 0], sizes = [1, 8, 16], strides = [1, 1, 1]} : vector<2x8x16xf32> to vector<1x8x16xf32>
    %1236 = vector.shape_cast %1235 : vector<1x8x16xf32> to vector<8x16xf32>
    %c3_478 = arith.constant 3 : index
    %c0_479 = arith.constant 0 : index
    %c16_480 = arith.constant 16 : index
    %1237 = vector.load %arg5[%c3_478, %c0_479, %c16_480] : memref<8x8x32xf32, #tpu.memory_space<vmem>>, vector<1x8x16xf32>
    %1238 = vector.shape_cast %1237 : vector<1x8x16xf32> to vector<8x16xf32>
    %1239 = vector.shape_cast %1236 : vector<8x16xf32> to vector<1x8x16xf32>
    tpu.vector_store %arg5[%c3_478, %c0_479, %c16_480], %1239 {strides = array<i32>} : memref<8x8x32xf32, #tpu.memory_space<vmem>>, vector<1x8x16xf32>,
    %c40_481 = arith.constant 40 : index
    %c0_482 = arith.constant 0 : index
    %1240 = vector.load %arg8[%c40_481, %c0_482] : memref<64x128xf32, #tpu.memory_space<vmem>>, vector<8x64xf32>
    %c16_483 = arith.constant 16 : index
    %c64_484 = arith.constant 64 : index
    %1241 = vector.load %arg8[%c16_483, %c64_484] : memref<64x128xf32, #tpu.memory_space<vmem>>, vector<8x64xf32>
    %1242 = vector.shape_cast %1240 : vector<8x64xf32> to vector<1x8x64xf32>
    %1243 = vector.shape_cast %1241 : vector<8x64xf32> to vector<1x8x64xf32>
    %1244 = tpu.concatenate %1242, %1243 in 0 : vector<1x8x64xf32>, vector<1x8x64xf32> -> vector<2x8x64xf32>
    %c5_485 = arith.constant 5 : index
    %c0_486 = arith.constant 0 : index
    %c0_487 = arith.constant 0 : index
    %1245 = vector.load %arg1[%c5_485, %c0_486, %c0_487] : memref<8x8x1xf32, #tpu.memory_space<vmem>>, vector<1x8x1xf32>
    %1246 = vector.shape_cast %1245 : vector<1x8x1xf32> to vector<8x1xf32>
    %c2_488 = arith.constant 2 : index
    %c0_489 = arith.constant 0 : index
    %c0_490 = arith.constant 0 : index
    %1247 = vector.load %arg1[%c2_488, %c0_489, %c0_490] : memref<8x8x1xf32, #tpu.memory_space<vmem>>, vector<1x8x1xf32>
    %1248 = vector.shape_cast %1247 : vector<1x8x1xf32> to vector<8x1xf32>
    %1249 = vector.shape_cast %1246 : vector<8x1xf32> to vector<1x8x1xf32>
    %1250 = vector.shape_cast %1248 : vector<8x1xf32> to vector<1x8x1xf32>
    %1251 = tpu.concatenate %1249, %1250 in 0 : vector<1x8x1xf32>, vector<1x8x1xf32> -> vector<2x8x1xf32>
    %1252 = arith.truncf %1229 : vector<2x8x16xf32> to vector<2x8x16xbf16>
    "tpu.trace_start"() <{level = 10 : i32, message = "dbh,dhg->dbg"}> : () -> ()
    %cst_491 = arith.constant dense<0.000000e+00> : vector<2x8x64xf32>
    %1253 = tpu.matmul %1252, %962, %cst_491 {dimension_numbers = #tpu.dot_dimension_numbers<[2], [1], [1], [2], [0, 0, 0, 1, 1, 2], [0], [0]>} : vector<2x8x16xbf16>, vector<2x16x64xbf16>, vector<2x8x64xf32> -> vector<2x8x64xf32>
    "tpu.trace_stop"() : () -> ()
    %1254 = arith.addf %1244, %1253 : vector<2x8x64xf32>
    %1255 = vector.extract_strided_slice %1254 {offsets = [0, 0, 0], sizes = [2, 8, 48], strides = [1, 1, 1]} : vector<2x8x64xf32> to vector<2x8x48xf32>
    %1256 = arith.negf %1255 : vector<2x8x48xf32>
    %1257 = math.exp %1256 : vector<2x8x48xf32>
    %cst_492 = arith.constant 1.000000e+00 : f32
    %1258 = vector.broadcast %cst_492 : f32 to vector<2x8x48xf32>
    %1259 = arith.addf %1258, %1257 : vector<2x8x48xf32>
    %1260 = arith.divf %1258, %1259 : vector<2x8x48xf32>
    %1261 = vector.extract_strided_slice %1254 {offsets = [0, 0, 48], sizes = [2, 8, 16], strides = [1, 1, 1]} : vector<2x8x64xf32> to vector<2x8x16xf32>
    %1262 = math.tanh %1261 : vector<2x8x16xf32>
    %1263 = vector.extract_strided_slice %1260 {offsets = [0, 0, 16], sizes = [2, 8, 16], strides = [1, 1, 1]} : vector<2x8x48xf32> to vector<2x8x16xf32>
    %1264 = arith.mulf %1263, %1224 : vector<2x8x16xf32>
    %1265 = vector.extract_strided_slice %1260 {offsets = [0, 0, 0], sizes = [2, 8, 16], strides = [1, 1, 1]} : vector<2x8x48xf32> to vector<2x8x16xf32>
    %1266 = arith.mulf %1265, %1262 : vector<2x8x16xf32>
    %1267 = arith.addf %1264, %1266 : vector<2x8x16xf32>
    %1268 = vector.extract_strided_slice %1260 {offsets = [0, 0, 32], sizes = [2, 8, 16], strides = [1, 1, 1]} : vector<2x8x48xf32> to vector<2x8x16xf32>
    %1269 = math.tanh %1267 : vector<2x8x16xf32>
    %1270 = arith.mulf %1268, %1269 : vector<2x8x16xf32>
    %1271 = vector.broadcast %1251 : vector<2x8x1xf32> to vector<2x8x16xf32>
    %1272 = arith.mulf %1271, %1270 : vector<2x8x16xf32>
    %1273 = vector.broadcast %1251 : vector<2x8x1xf32> to vector<2x8x16xf32>
    %1274 = arith.mulf %1273, %1267 : vector<2x8x16xf32>
    %cst_493 = arith.constant 1.000000e+00 : f32
    %1275 = vector.broadcast %cst_493 : f32 to vector<2x8x1xf32>
    %1276 = arith.subf %1275, %1251 : vector<2x8x1xf32>
    %1277 = vector.broadcast %1276 : vector<2x8x1xf32> to vector<2x8x16xf32>
    %1278 = arith.mulf %1277, %1224 : vector<2x8x16xf32>
    %1279 = arith.addf %1274, %1278 : vector<2x8x16xf32>
    %cst_494 = arith.constant 1.000000e+00 : f32
    %1280 = vector.broadcast %cst_494 : f32 to vector<2x8x1xf32>
    %1281 = arith.subf %1280, %1251 : vector<2x8x1xf32>
    %1282 = vector.broadcast %1281 : vector<2x8x1xf32> to vector<2x8x16xf32>
    %1283 = arith.mulf %1282, %1229 : vector<2x8x16xf32>
    %1284 = arith.addf %1272, %1283 : vector<2x8x16xf32>
    %1285 = vector.extract_strided_slice %1272 {offsets = [0, 0, 0], sizes = [1, 8, 16], strides = [1, 1, 1]} : vector<2x8x16xf32> to vector<1x8x16xf32>
    %1286 = vector.shape_cast %1285 : vector<1x8x16xf32> to vector<8x16xf32>
    %c5_495 = arith.constant 5 : index
    %c0_496 = arith.constant 0 : index
    %c0_497 = arith.constant 0 : index
    %1287 = vector.load %arg5[%c5_495, %c0_496, %c0_497] : memref<8x8x32xf32, #tpu.memory_space<vmem>>, vector<1x8x16xf32>
    %1288 = vector.shape_cast %1287 : vector<1x8x16xf32> to vector<8x16xf32>
    %1289 = vector.shape_cast %1286 : vector<8x16xf32> to vector<1x8x16xf32>
    tpu.vector_store %arg5[%c5_495, %c0_496, %c0_497], %1289 {strides = array<i32>} : memref<8x8x32xf32, #tpu.memory_space<vmem>>, vector<1x8x16xf32>,
    %1290 = vector.extract_strided_slice %1272 {offsets = [1, 0, 0], sizes = [1, 8, 16], strides = [1, 1, 1]} : vector<2x8x16xf32> to vector<1x8x16xf32>
    %1291 = vector.shape_cast %1290 : vector<1x8x16xf32> to vector<8x16xf32>
    %c2_498 = arith.constant 2 : index
    %c0_499 = arith.constant 0 : index
    %c16_500 = arith.constant 16 : index
    %1292 = vector.load %arg5[%c2_498, %c0_499, %c16_500] : memref<8x8x32xf32, #tpu.memory_space<vmem>>, vector<1x8x16xf32>
    %1293 = vector.shape_cast %1292 : vector<1x8x16xf32> to vector<8x16xf32>
    %1294 = vector.shape_cast %1291 : vector<8x16xf32> to vector<1x8x16xf32>
    tpu.vector_store %arg5[%c2_498, %c0_499, %c16_500], %1294 {strides = array<i32>} : memref<8x8x32xf32, #tpu.memory_space<vmem>>, vector<1x8x16xf32>,
    %c48_501 = arith.constant 48 : index
    %c0_502 = arith.constant 0 : index
    %1295 = vector.load %arg8[%c48_501, %c0_502] : memref<64x128xf32, #tpu.memory_space<vmem>>, vector<8x64xf32>
    %c8_503 = arith.constant 8 : index
    %c64_504 = arith.constant 64 : index
    %1296 = vector.load %arg8[%c8_503, %c64_504] : memref<64x128xf32, #tpu.memory_space<vmem>>, vector<8x64xf32>
    %1297 = vector.shape_cast %1295 : vector<8x64xf32> to vector<1x8x64xf32>
    %1298 = vector.shape_cast %1296 : vector<8x64xf32> to vector<1x8x64xf32>
    %1299 = tpu.concatenate %1297, %1298 in 0 : vector<1x8x64xf32>, vector<1x8x64xf32> -> vector<2x8x64xf32>
    %c6_505 = arith.constant 6 : index
    %c0_506 = arith.constant 0 : index
    %c0_507 = arith.constant 0 : index
    %1300 = vector.load %arg1[%c6_505, %c0_506, %c0_507] : memref<8x8x1xf32, #tpu.memory_space<vmem>>, vector<1x8x1xf32>
    %1301 = vector.shape_cast %1300 : vector<1x8x1xf32> to vector<8x1xf32>
    %c1_508 = arith.constant 1 : index
    %c0_509 = arith.constant 0 : index
    %c0_510 = arith.constant 0 : index
    %1302 = vector.load %arg1[%c1_508, %c0_509, %c0_510] : memref<8x8x1xf32, #tpu.memory_space<vmem>>, vector<1x8x1xf32>
    %1303 = vector.shape_cast %1302 : vector<1x8x1xf32> to vector<8x1xf32>
    %1304 = vector.shape_cast %1301 : vector<8x1xf32> to vector<1x8x1xf32>
    %1305 = vector.shape_cast %1303 : vector<8x1xf32> to vector<1x8x1xf32>
    %1306 = tpu.concatenate %1304, %1305 in 0 : vector<1x8x1xf32>, vector<1x8x1xf32> -> vector<2x8x1xf32>
    %1307 = arith.truncf %1284 : vector<2x8x16xf32> to vector<2x8x16xbf16>
    "tpu.trace_start"() <{level = 10 : i32, message = "dbh,dhg->dbg"}> : () -> ()
    %cst_511 = arith.constant dense<0.000000e+00> : vector<2x8x64xf32>
    %1308 = tpu.matmul %1307, %962, %cst_511 {dimension_numbers = #tpu.dot_dimension_numbers<[2], [1], [1], [2], [0, 0, 0, 1, 1, 2], [0], [0]>} : vector<2x8x16xbf16>, vector<2x16x64xbf16>, vector<2x8x64xf32> -> vector<2x8x64xf32>
    "tpu.trace_stop"() : () -> ()
    %1309 = arith.addf %1299, %1308 : vector<2x8x64xf32>
    %1310 = vector.extract_strided_slice %1309 {offsets = [0, 0, 0], sizes = [2, 8, 48], strides = [1, 1, 1]} : vector<2x8x64xf32> to vector<2x8x48xf32>
    %1311 = arith.negf %1310 : vector<2x8x48xf32>
    %1312 = math.exp %1311 : vector<2x8x48xf32>
    %cst_512 = arith.constant 1.000000e+00 : f32
    %1313 = vector.broadcast %cst_512 : f32 to vector<2x8x48xf32>
    %1314 = arith.addf %1313, %1312 : vector<2x8x48xf32>
    %1315 = arith.divf %1313, %1314 : vector<2x8x48xf32>
    %1316 = vector.extract_strided_slice %1309 {offsets = [0, 0, 48], sizes = [2, 8, 16], strides = [1, 1, 1]} : vector<2x8x64xf32> to vector<2x8x16xf32>
    %1317 = math.tanh %1316 : vector<2x8x16xf32>
    %1318 = vector.extract_strided_slice %1315 {offsets = [0, 0, 16], sizes = [2, 8, 16], strides = [1, 1, 1]} : vector<2x8x48xf32> to vector<2x8x16xf32>
    %1319 = arith.mulf %1318, %1279 : vector<2x8x16xf32>
    %1320 = vector.extract_strided_slice %1315 {offsets = [0, 0, 0], sizes = [2, 8, 16], strides = [1, 1, 1]} : vector<2x8x48xf32> to vector<2x8x16xf32>
    %1321 = arith.mulf %1320, %1317 : vector<2x8x16xf32>
    %1322 = arith.addf %1319, %1321 : vector<2x8x16xf32>
    %1323 = vector.extract_strided_slice %1315 {offsets = [0, 0, 32], sizes = [2, 8, 16], strides = [1, 1, 1]} : vector<2x8x48xf32> to vector<2x8x16xf32>
    %1324 = math.tanh %1322 : vector<2x8x16xf32>
    %1325 = arith.mulf %1323, %1324 : vector<2x8x16xf32>
    %1326 = vector.broadcast %1306 : vector<2x8x1xf32> to vector<2x8x16xf32>
    %1327 = arith.mulf %1326, %1325 : vector<2x8x16xf32>
    %1328 = vector.broadcast %1306 : vector<2x8x1xf32> to vector<2x8x16xf32>
    %1329 = arith.mulf %1328, %1322 : vector<2x8x16xf32>
    %cst_513 = arith.constant 1.000000e+00 : f32
    %1330 = vector.broadcast %cst_513 : f32 to vector<2x8x1xf32>
    %1331 = arith.subf %1330, %1306 : vector<2x8x1xf32>
    %1332 = vector.broadcast %1331 : vector<2x8x1xf32> to vector<2x8x16xf32>
    %1333 = arith.mulf %1332, %1279 : vector<2x8x16xf32>
    %1334 = arith.addf %1329, %1333 : vector<2x8x16xf32>
    %cst_514 = arith.constant 1.000000e+00 : f32
    %1335 = vector.broadcast %cst_514 : f32 to vector<2x8x1xf32>
    %1336 = arith.subf %1335, %1306 : vector<2x8x1xf32>
    %1337 = vector.broadcast %1336 : vector<2x8x1xf32> to vector<2x8x16xf32>
    %1338 = arith.mulf %1337, %1284 : vector<2x8x16xf32>
    %1339 = arith.addf %1327, %1338 : vector<2x8x16xf32>
    %1340 = vector.extract_strided_slice %1327 {offsets = [0, 0, 0], sizes = [1, 8, 16], strides = [1, 1, 1]} : vector<2x8x16xf32> to vector<1x8x16xf32>
    %1341 = vector.shape_cast %1340 : vector<1x8x16xf32> to vector<8x16xf32>
    %c6_515 = arith.constant 6 : index
    %c0_516 = arith.constant 0 : index
    %c0_517 = arith.constant 0 : index
    %1342 = vector.load %arg5[%c6_515, %c0_516, %c0_517] : memref<8x8x32xf32, #tpu.memory_space<vmem>>, vector<1x8x16xf32>
    %1343 = vector.shape_cast %1342 : vector<1x8x16xf32> to vector<8x16xf32>
    %1344 = vector.shape_cast %1341 : vector<8x16xf32> to vector<1x8x16xf32>
    tpu.vector_store %arg5[%c6_515, %c0_516, %c0_517], %1344 {strides = array<i32>} : memref<8x8x32xf32, #tpu.memory_space<vmem>>, vector<1x8x16xf32>,
    %1345 = vector.extract_strided_slice %1327 {offsets = [1, 0, 0], sizes = [1, 8, 16], strides = [1, 1, 1]} : vector<2x8x16xf32> to vector<1x8x16xf32>
    %1346 = vector.shape_cast %1345 : vector<1x8x16xf32> to vector<8x16xf32>
    %c1_518 = arith.constant 1 : index
    %c0_519 = arith.constant 0 : index
    %c16_520 = arith.constant 16 : index
    %1347 = vector.load %arg5[%c1_518, %c0_519, %c16_520] : memref<8x8x32xf32, #tpu.memory_space<vmem>>, vector<1x8x16xf32>
    %1348 = vector.shape_cast %1347 : vector<1x8x16xf32> to vector<8x16xf32>
    %1349 = vector.shape_cast %1346 : vector<8x16xf32> to vector<1x8x16xf32>
    tpu.vector_store %arg5[%c1_518, %c0_519, %c16_520], %1349 {strides = array<i32>} : memref<8x8x32xf32, #tpu.memory_space<vmem>>, vector<1x8x16xf32>,
    %c56_521 = arith.constant 56 : index
    %c0_522 = arith.constant 0 : index
    %1350 = vector.load %arg8[%c56_521, %c0_522] : memref<64x128xf32, #tpu.memory_space<vmem>>, vector<8x64xf32>
    %c0_523 = arith.constant 0 : index
    %c64_524 = arith.constant 64 : index
    %1351 = vector.load %arg8[%c0_523, %c64_524] : memref<64x128xf32, #tpu.memory_space<vmem>>, vector<8x64xf32>
    %1352 = vector.shape_cast %1350 : vector<8x64xf32> to vector<1x8x64xf32>
    %1353 = vector.shape_cast %1351 : vector<8x64xf32> to vector<1x8x64xf32>
    %1354 = tpu.concatenate %1352, %1353 in 0 : vector<1x8x64xf32>, vector<1x8x64xf32> -> vector<2x8x64xf32>
    %c7_525 = arith.constant 7 : index
    %c0_526 = arith.constant 0 : index
    %c0_527 = arith.constant 0 : index
    %1355 = vector.load %arg1[%c7_525, %c0_526, %c0_527] : memref<8x8x1xf32, #tpu.memory_space<vmem>>, vector<1x8x1xf32>
    %1356 = vector.shape_cast %1355 : vector<1x8x1xf32> to vector<8x1xf32>
    %c0_528 = arith.constant 0 : index
    %c0_529 = arith.constant 0 : index
    %c0_530 = arith.constant 0 : index
    %1357 = vector.load %arg1[%c0_528, %c0_529, %c0_530] : memref<8x8x1xf32, #tpu.memory_space<vmem>>, vector<1x8x1xf32>
    %1358 = vector.shape_cast %1357 : vector<1x8x1xf32> to vector<8x1xf32>
    %1359 = vector.shape_cast %1356 : vector<8x1xf32> to vector<1x8x1xf32>
    %1360 = vector.shape_cast %1358 : vector<8x1xf32> to vector<1x8x1xf32>
    %1361 = tpu.concatenate %1359, %1360 in 0 : vector<1x8x1xf32>, vector<1x8x1xf32> -> vector<2x8x1xf32>
    %1362 = arith.truncf %1339 : vector<2x8x16xf32> to vector<2x8x16xbf16>
    "tpu.trace_start"() <{level = 10 : i32, message = "dbh,dhg->dbg"}> : () -> ()
    %cst_531 = arith.constant dense<0.000000e+00> : vector<2x8x64xf32>
    %1363 = tpu.matmul %1362, %962, %cst_531 {dimension_numbers = #tpu.dot_dimension_numbers<[2], [1], [1], [2], [0, 0, 0, 1, 1, 2], [0], [0]>} : vector<2x8x16xbf16>, vector<2x16x64xbf16>, vector<2x8x64xf32> -> vector<2x8x64xf32>
    "tpu.trace_stop"() : () -> ()
    %1364 = arith.addf %1354, %1363 : vector<2x8x64xf32>
    %1365 = vector.extract_strided_slice %1364 {offsets = [0, 0, 0], sizes = [2, 8, 48], strides = [1, 1, 1]} : vector<2x8x64xf32> to vector<2x8x48xf32>
    %1366 = arith.negf %1365 : vector<2x8x48xf32>
    %1367 = math.exp %1366 : vector<2x8x48xf32>
    %cst_532 = arith.constant 1.000000e+00 : f32
    %1368 = vector.broadcast %cst_532 : f32 to vector<2x8x48xf32>
    %1369 = arith.addf %1368, %1367 : vector<2x8x48xf32>
    %1370 = arith.divf %1368, %1369 : vector<2x8x48xf32>
    %1371 = vector.extract_strided_slice %1364 {offsets = [0, 0, 48], sizes = [2, 8, 16], strides = [1, 1, 1]} : vector<2x8x64xf32> to vector<2x8x16xf32>
    %1372 = math.tanh %1371 : vector<2x8x16xf32>
    %1373 = vector.extract_strided_slice %1370 {offsets = [0, 0, 16], sizes = [2, 8, 16], strides = [1, 1, 1]} : vector<2x8x48xf32> to vector<2x8x16xf32>
    %1374 = arith.mulf %1373, %1334 : vector<2x8x16xf32>
    %1375 = vector.extract_strided_slice %1370 {offsets = [0, 0, 0], sizes = [2, 8, 16], strides = [1, 1, 1]} : vector<2x8x48xf32> to vector<2x8x16xf32>
    %1376 = arith.mulf %1375, %1372 : vector<2x8x16xf32>
    %1377 = arith.addf %1374, %1376 : vector<2x8x16xf32>
    %1378 = vector.extract_strided_slice %1370 {offsets = [0, 0, 32], sizes = [2, 8, 16], strides = [1, 1, 1]} : vector<2x8x48xf32> to vector<2x8x16xf32>
    %1379 = math.tanh %1377 : vector<2x8x16xf32>
    %1380 = arith.mulf %1378, %1379 : vector<2x8x16xf32>
    %1381 = vector.broadcast %1361 : vector<2x8x1xf32> to vector<2x8x16xf32>
    %1382 = arith.mulf %1381, %1380 : vector<2x8x16xf32>
    %1383 = vector.broadcast %1361 : vector<2x8x1xf32> to vector<2x8x16xf32>
    %1384 = arith.mulf %1383, %1377 : vector<2x8x16xf32>
    %cst_533 = arith.constant 1.000000e+00 : f32
    %1385 = vector.broadcast %cst_533 : f32 to vector<2x8x1xf32>
    %1386 = arith.subf %1385, %1361 : vector<2x8x1xf32>
    %1387 = vector.broadcast %1386 : vector<2x8x1xf32> to vector<2x8x16xf32>
    %1388 = arith.mulf %1387, %1334 : vector<2x8x16xf32>
    %1389 = arith.addf %1384, %1388 : vector<2x8x16xf32>
    %cst_534 = arith.constant 1.000000e+00 : f32
    %1390 = vector.broadcast %cst_534 : f32 to vector<2x8x1xf32>
    %1391 = arith.subf %1390, %1361 : vector<2x8x1xf32>
    %1392 = vector.broadcast %1391 : vector<2x8x1xf32> to vector<2x8x16xf32>
    %1393 = arith.mulf %1392, %1339 : vector<2x8x16xf32>
    %1394 = arith.addf %1382, %1393 : vector<2x8x16xf32>
    %1395 = vector.extract_strided_slice %1382 {offsets = [0, 0, 0], sizes = [1, 8, 16], strides = [1, 1, 1]} : vector<2x8x16xf32> to vector<1x8x16xf32>
    %1396 = vector.shape_cast %1395 : vector<1x8x16xf32> to vector<8x16xf32>
    %c7_535 = arith.constant 7 : index
    %c0_536 = arith.constant 0 : index
    %c0_537 = arith.constant 0 : index
    %1397 = vector.load %arg5[%c7_535, %c0_536, %c0_537] : memref<8x8x32xf32, #tpu.memory_space<vmem>>, vector<1x8x16xf32>
    %1398 = vector.shape_cast %1397 : vector<1x8x16xf32> to vector<8x16xf32>
    %1399 = vector.shape_cast %1396 : vector<8x16xf32> to vector<1x8x16xf32>
    tpu.vector_store %arg5[%c7_535, %c0_536, %c0_537], %1399 {strides = array<i32>} : memref<8x8x32xf32, #tpu.memory_space<vmem>>, vector<1x8x16xf32>,
    %1400 = vector.extract_strided_slice %1382 {offsets = [1, 0, 0], sizes = [1, 8, 16], strides = [1, 1, 1]} : vector<2x8x16xf32> to vector<1x8x16xf32>
    %1401 = vector.shape_cast %1400 : vector<1x8x16xf32> to vector<8x16xf32>
    %c0_538 = arith.constant 0 : index
    %c0_539 = arith.constant 0 : index
    %c16_540 = arith.constant 16 : index
    %1402 = vector.load %arg5[%c0_538, %c0_539, %c16_540] : memref<8x8x32xf32, #tpu.memory_space<vmem>>, vector<1x8x16xf32>
    %1403 = vector.shape_cast %1402 : vector<1x8x16xf32> to vector<8x16xf32>
    %1404 = vector.shape_cast %1401 : vector<8x16xf32> to vector<1x8x16xf32>
    tpu.vector_store %arg5[%c0_538, %c0_539, %c16_540], %1404 {strides = array<i32>} : memref<8x8x32xf32, #tpu.memory_space<vmem>>, vector<1x8x16xf32>,
    %1405 = vector.extract_strided_slice %1394 {offsets = [0, 0, 0], sizes = [1, 8, 16], strides = [1, 1, 1]} : vector<2x8x16xf32> to vector<1x8x16xf32>
    %1406 = vector.shape_cast %1405 : vector<1x8x16xf32> to vector<8x16xf32>
    %c2_541 = arith.constant 2 : index
    %c0_542 = arith.constant 0 : index
    %c0_543 = arith.constant 0 : index
    %1407 = vector.load %arg6[%c2_541, %c0_542, %c0_543] : memref<3x8x32xf32, #tpu.memory_space<vmem>>, vector<1x8x16xf32>
    %1408 = vector.shape_cast %1407 : vector<1x8x16xf32> to vector<8x16xf32>
    %1409 = vector.shape_cast %1406 : vector<8x16xf32> to vector<1x8x16xf32>
    tpu.vector_store %arg6[%c2_541, %c0_542, %c0_543], %1409 {strides = array<i32>} : memref<3x8x32xf32, #tpu.memory_space<vmem>>, vector<1x8x16xf32>,
    %1410 = vector.extract_strided_slice %1394 {offsets = [1, 0, 0], sizes = [1, 8, 16], strides = [1, 1, 1]} : vector<2x8x16xf32> to vector<1x8x16xf32>
    %1411 = vector.shape_cast %1410 : vector<1x8x16xf32> to vector<8x16xf32>
    %c2_544 = arith.constant 2 : index
    %c0_545 = arith.constant 0 : index
    %c16_546 = arith.constant 16 : index
    %1412 = vector.load %arg6[%c2_544, %c0_545, %c16_546] : memref<3x8x32xf32, #tpu.memory_space<vmem>>, vector<1x8x16xf32>
    %1413 = vector.shape_cast %1412 : vector<1x8x16xf32> to vector<8x16xf32>
    %1414 = vector.shape_cast %1411 : vector<8x16xf32> to vector<1x8x16xf32>
    tpu.vector_store %arg6[%c2_544, %c0_545, %c16_546], %1414 {strides = array<i32>} : memref<3x8x32xf32, #tpu.memory_space<vmem>>, vector<1x8x16xf32>,
    %1415 = vector.extract_strided_slice %1389 {offsets = [0, 0, 0], sizes = [1, 8, 16], strides = [1, 1, 1]} : vector<2x8x16xf32> to vector<1x8x16xf32>
    %1416 = vector.shape_cast %1415 : vector<1x8x16xf32> to vector<8x16xf32>
    %c2_547 = arith.constant 2 : index
    %c0_548 = arith.constant 0 : index
    %c0_549 = arith.constant 0 : index
    %1417 = vector.load %arg7[%c2_547, %c0_548, %c0_549] : memref<3x8x32xf32, #tpu.memory_space<vmem>>, vector<1x8x16xf32>
    %1418 = vector.shape_cast %1417 : vector<1x8x16xf32> to vector<8x16xf32>
    %1419 = vector.shape_cast %1416 : vector<8x16xf32> to vector<1x8x16xf32>
    tpu.vector_store %arg7[%c2_547, %c0_548, %c0_549], %1419 {strides = array<i32>} : memref<3x8x32xf32, #tpu.memory_space<vmem>>, vector<1x8x16xf32>,
    %1420 = vector.extract_strided_slice %1389 {offsets = [1, 0, 0], sizes = [1, 8, 16], strides = [1, 1, 1]} : vector<2x8x16xf32> to vector<1x8x16xf32>
    %1421 = vector.shape_cast %1420 : vector<1x8x16xf32> to vector<8x16xf32>
    %c2_550 = arith.constant 2 : index
    %c0_551 = arith.constant 0 : index
    %c16_552 = arith.constant 16 : index
    %1422 = vector.load %arg7[%c2_550, %c0_551, %c16_552] : memref<3x8x32xf32, #tpu.memory_space<vmem>>, vector<1x8x16xf32>
    %1423 = vector.shape_cast %1422 : vector<1x8x16xf32> to vector<8x16xf32>
    %1424 = vector.shape_cast %1421 : vector<8x16xf32> to vector<1x8x16xf32>
    tpu.vector_store %arg7[%c2_550, %c0_551, %c16_552], %1424 {strides = array<i32>} : memref<3x8x32xf32, #tpu.memory_space<vmem>>, vector<1x8x16xf32>,
    return
  }
}

</mosaic_0001>

<llo_original>
// kernel: tpu_custom_call.1
$region0: #{tpu_custom_call.1}
  #allocation0 [shape = 'u32[]', space=smem, size = 0x4, offset = 0x4, fixed_abs, tag = 'smem constant byte address 0x4 - core index']
  #allocation1 [shape = 'u32[144,128]{1,0:T(1,128)}', space=vmem, size = 0x12000, scoped, tag = 'internal scratch']
  #allocation2 [shape = 'f32[64,128]{1,0:T(8,128)}', space=vmem, size = 0x8000, scoped, tag = 'scratch operand']
  %s0 = inlined_call_operand.hbm [shape: f32[8,8,32], index: 0, kind: input, shape index: {}, may-alias: {0,5}]
  %s1 = inlined_call_operand.hbm [shape: f32[8,8,1], index: 1, kind: input, shape index: {}]
  %s2 = inlined_call_operand.hbm [shape: bf16[3,32,128], index: 2, kind: input, shape index: {}]
  %s3 = inlined_call_operand.hbm [shape: bf16[3,2,16,64], index: 3, kind: input, shape index: {}]
  %s4 = inlined_call_operand.hbm [shape: f32[3,1,128], index: 4, kind: input, shape index: {}]
  %s5 = inlined_call_operand.hbm [shape: f32[8,8,32], index: 5, kind: output, shape index: {0}, may-alias: {0,5}]
  %s6 = inlined_call_operand.hbm [shape: f32[3,8,32], index: 6, kind: output, shape index: {1}]
  %s7 = inlined_call_operand.hbm [shape: f32[3,8,32], index: 7, kind: output, shape index: {2}]
  %8 = xla_tuple %s5, %s6, %s7
  %s9 = sld [smem:[#allocation0]]
  $region66: #{tpu_custom_call.1} parent=0
    _
  %s11 = ssub.s32 1, %s9
  %s12 = scalar_select 0, %s11, %s9
  $region1: #{tpu_custom_call.1} parent=0
    #allocation3 [shape = 'u8[32768]{0}', space=vmem, size = 0x8000, scoped, tag = 'input window, operand 0, single buffered']
    #allocation4 [shape = 's32[1]{0}', space=sflag, size = 0x4, scoped, tag = 'scoped memory for tpu_custom_call.1']
    #allocation5 [shape = 's32[1]{0}', space=sflag, size = 0x4, scoped, tag = 'scoped memory for tpu_custom_call.1']
    #allocation6 [shape = 'u8[32768]{0}', space=vmem, size = 0x8000, scoped, tag = 'input window, operand 1, single buffered']
    #allocation7 [shape = 's32[1]{0}', space=sflag, size = 0x4, scoped, tag = 'scoped memory for tpu_custom_call.1']
    #allocation8 [shape = 'u8[24576]{0}', space=vmem, size = 0x6000, scoped, tag = 'input window, operand 2, single buffered']
    #allocation9 [shape = 'u8[24576]{0}', space=vmem, size = 0x6000, scoped, tag = 'input window, operand 3, single buffered']
    #allocation10 [shape = 's32[1]{0}', space=sflag, size = 0x4, scoped, tag = 'scoped memory for tpu_custom_call.1']
    #allocation11 [shape = 'u8[1536]{0}', space=vmem, size = 0x800, scoped, tag = 'input window, operand 4, single buffered']
    #allocation12 [shape = 'u8[32768]{0}', space=vmem, size = 0x8000, scoped, tag = 'output window, operand 0, single buffered']
    #allocation13 [shape = 'u8[12288]{0}', space=vmem, size = 0x3000, scoped, tag = 'output window, operand 1, single buffered']
    #allocation14 [shape = 's32[1]{0}', space=sflag, size = 0x4, scoped, tag = 'scoped memory for tpu_custom_call.1']
    #allocation15 [shape = 'u8[12288]{0}', space=vmem, size = 0x3000, scoped, tag = 'output window, operand 2, single buffered']
    %13 = vsyncpa [#allocation4], 0
    %14 = vsyncpa [#allocation7], 0
    %15 = vsyncpa [#allocation10], 0
    %16 = vsyncpa [#allocation5], 0
    %17 = vsyncpa [#allocation14], 0
    // Predicated region
    $region2: #{tpu_custom_call.1} parent=1 // pred_check
      _
    $region3: #{tpu_custom_call.1} parent=1 // pred_check_branch
      %19 = sbr.rel (0) target = $region5
    $region4: #{tpu_custom_call.1} parent=1 // pred_region
      %s21 = ssub.s32 1024, 1024
      %22 = vsyncadd [#allocation4], %s21
      %s23 = sshll.u32 [#allocation3], 4
      %s24 = int_to_ptr.vmem [resolvable:$true] %s23
      %29 = dma.hbm_to_vmem [thread:$0]  %s0, 1024, %s24, [#allocation4], 128, 128, 8
    $region5: #{tpu_custom_call.1} parent=1 // pred_fallthru
      _
    // Predicated region
    $region6: #{tpu_custom_call.1} parent=1 // pred_check
      _
    $region7: #{tpu_custom_call.1} parent=1 // pred_check_branch
      %31 = sbr.rel (0) target = $region9
    $region8: #{tpu_custom_call.1} parent=1 // pred_region
      %s33 = ssub.s32 1024, 1024
      %34 = vsyncadd [#allocation7], %s33
      %s35 = sshll.u32 [#allocation6], 4
      %s36 = int_to_ptr.vmem [resolvable:$true] %s35
      %41 = dma.hbm_to_vmem [thread:$0]  %s1, 1024, %s36, [#allocation7], 128, 128, 8
    $region9: #{tpu_custom_call.1} parent=1 // pred_fallthru
      _
    // Predicated region
    $region10: #{tpu_custom_call.1} parent=1 // pred_check
      _
    $region11: #{tpu_custom_call.1} parent=1 // pred_check_branch
      %43 = sbr.rel (0) target = $region13
    $region12: #{tpu_custom_call.1} parent=1 // pred_region
      %s45 = ssub.s32 768, 768
      %46 = vsyncadd [#allocation7], %s45
      %s47 = sshll.u32 [#allocation8], 4
      %s48 = int_to_ptr.vmem [resolvable:$true] %s47
      %53 = dma.hbm_to_vmem [thread:$0]  %s2, 768, %s48, [#allocation7], 64, 64, 4
    $region13: #{tpu_custom_call.1} parent=1 // pred_fallthru
      _
    // Predicated region
    $region14: #{tpu_custom_call.1} parent=1 // pred_check
      _
    $region15: #{tpu_custom_call.1} parent=1 // pred_check_branch
      %55 = sbr.rel (0) target = $region17
    $region16: #{tpu_custom_call.1} parent=1 // pred_region
      %s57 = ssub.s32 768, 768
      %58 = vsyncadd [#allocation10], %s57
      %s59 = sshll.u32 [#allocation9], 4
      %s60 = int_to_ptr.vmem [resolvable:$true] %s59
      %65 = dma.hbm_to_vmem [thread:$0]  %s3, 768, %s60, [#allocation10], 64, 64, 4
    $region17: #{tpu_custom_call.1} parent=1 // pred_fallthru
      _
    // Predicated region
    $region18: #{tpu_custom_call.1} parent=1 // pred_check
      _
    $region19: #{tpu_custom_call.1} parent=1 // pred_check_branch
      %67 = sbr.rel (0) target = $region21
    $region20: #{tpu_custom_call.1} parent=1 // pred_region
      %s69 = ssub.s32 48, 48
      %70 = vsyncadd [#allocation10], %s69
      %s71 = sshll.u32 [#allocation11], 4
      %s72 = int_to_ptr.vmem [resolvable:$true] %s71
      %77 = dma.hbm_to_vmem [thread:$0]  %s4, 48, %s72, [#allocation10], 16, 16, 1
    $region21: #{tpu_custom_call.1} parent=1 // pred_fallthru
      _
    // Predicated region
    $region22: #{tpu_custom_call.1} parent=1 // pred_check
      _
    $region23: #{tpu_custom_call.1} parent=1 // pred_check_branch
      %79 = sbr.rel (0) target = $region25
    $region24: #{tpu_custom_call.1} parent=1 // pred_region
      %80 = dma.done [#allocation4], 1024
    $region25: #{tpu_custom_call.1} parent=1 // pred_fallthru
      _
    // Predicated region
    $region26: #{tpu_custom_call.1} parent=1 // pred_check
      _
    $region27: #{tpu_custom_call.1} parent=1 // pred_check_branch
      %82 = sbr.rel (0) target = $region29
    $region28: #{tpu_custom_call.1} parent=1 // pred_region
      %83 = dma.done [#allocation7], 1024
    $region29: #{tpu_custom_call.1} parent=1 // pred_fallthru
      _
    // Predicated region
    $region30: #{tpu_custom_call.1} parent=1 // pred_check
      _
    $region31: #{tpu_custom_call.1} parent=1 // pred_check_branch
      %85 = sbr.rel (0) target = $region33
    $region32: #{tpu_custom_call.1} parent=1 // pred_region
      %86 = dma.done [#allocation7], 768
    $region33: #{tpu_custom_call.1} parent=1 // pred_fallthru
      _
    // Predicated region
    $region34: #{tpu_custom_call.1} parent=1 // pred_check
      _
    $region35: #{tpu_custom_call.1} parent=1 // pred_check_branch
      %88 = sbr.rel (0) target = $region37
    $region36: #{tpu_custom_call.1} parent=1 // pred_region
      %89 = dma.done [#allocation10], 768
    $region37: #{tpu_custom_call.1} parent=1 // pred_fallthru
      _
    // Predicated region
    $region38: #{tpu_custom_call.1} parent=1 // pred_check
      _
    $region39: #{tpu_custom_call.1} parent=1 // pred_check_branch
      %91 = sbr.rel (0) target = $region41
    $region40: #{tpu_custom_call.1} parent=1 // pred_region
      %92 = dma.done [#allocation10], 48
    $region41: #{tpu_custom_call.1} parent=1 // pred_fallthru
      _
    %v94 = vld [vmem:[#allocation3] sm:$0xff]
    %v95 = vld [vmem:[#allocation3 + $0x8] sm:$0xff]
    %v96 = vld [vmem:[#allocation3 + $0x10] sm:$0xff]
    %v97 = vld [vmem:[#allocation3 + $0x18] sm:$0xff]
    %v98 = vld [vmem:[#allocation3 + $0x20] sm:$0xff]
    %v99 = vld [vmem:[#allocation3 + $0x28] sm:$0xff]
    %v100 = vld [vmem:[#allocation3 + $0x30] sm:$0xff]
    %v101 = vld [vmem:[#allocation3 + $0x38] sm:$0xff]
    %v102 = vpack.c.bf16 %v95, %v94
    %v103 = vpack.c.bf16 %v97, %v96
    %v104 = vpack.c.bf16 %v99, %v98
    %v105 = vpack.c.bf16 %v101, %v100
    %v106 = vld [vmem:[#allocation8] sm:$0xf]
    %v107 = vld [vmem:[#allocation8 + $0x4] sm:$0xf]
    %v108 = vld [vmem:[#allocation8 + $0x8] sm:$0xf]
    %v109 = vld [vmem:[#allocation8 + $0xc] sm:$0xf]
    %v110 = vld [vmem:[#allocation11] sm:$0x1]
    %v112 = vlaneseq
    %v113 = vshrl.u32 %v112, 7
    %v114 = vsub.s32 0, %v113
    %v115 = vrot.slane %v110, %v114
    %v121 = vunpack.c.l.b16 %v106
    %v122 = vunpack.c.l.b16 %v107
    %v123 = vunpack.c.l.b16 %v108
    %v124 = vunpack.c.l.b16 %v109
    %v125 = vpack.c.b16 %v122, %v121
    %v126 = vpack.c.b16 %v124, %v123
    %vm129 = vcmask 261120
    %v131 = vsel %vm129, %v102, 0
    %v134 = vsel %vm129, %v103, 0
    %v137 = vsel %vm129, %v104, 0
    %v140 = vsel %vm129, %v105, 0
    %142 = vmatprep.subr.bf16.mxu0 0
    %143 = vmatpush1.bf16.msra.mxu0 %v125
    %144 = vmatprep.subr.bf16.mxu0 0
    %145 = vmatpush1.bf16.msra.mxu0 %v126
    %146 = vmatprep.subr.bf16.mxu0 0
    %147 = vmatpush1.bf16.msra.mxu0 0
    %148 = vmatprep.subr.bf16.mxu0 0
    %149 = vmatpush1.bf16.msra.mxu0 0
    %150 = vmatprep.subr.bf16.mxu0 0
    %151 = vmatpush1.bf16.msra.mxu0 0
    %152 = vmatprep.subr.bf16.mxu0 0
    %153 = vmatpush1.bf16.msra.mxu0 0
    %154 = vmatprep.subr.bf16.mxu0 0
    %155 = vmatpush1.bf16.msra.mxu0 0
    %156 = vmatprep.subr.bf16.mxu0 0
    %157 = vmatpush1.bf16.msra.mxu0 0
    %158 = vmatprep.subr.bf16.mxu0 0
    %159 = vmatpush1.bf16.msra.mxu0 0
    %160 = vmatprep.subr.bf16.mxu0 0
    %161 = vmatpush1.bf16.msra.mxu0 0
    %162 = vmatprep.subr.bf16.mxu0 0
    %163 = vmatpush1.bf16.msra.mxu0 0
    %164 = vmatprep.subr.bf16.mxu0 0
    %165 = vmatpush1.bf16.msra.mxu0 0
    %166 = vmatprep.subr.bf16.mxu0 0
    %167 = vmatpush1.bf16.msra.mxu0 0
    %168 = vmatprep.subr.bf16.mxu0 0
    %169 = vmatpush1.bf16.msra.mxu0 0
    %170 = vmatprep.subr.bf16.mxu0 0
    %171 = vmatpush1.bf16.msra.mxu0 0
    %172 = vmatprep.subr.bf16.mxu0 0
    %173 = vmatpush1.bf16.msra.mxu0 0
    %174 = vmatprep.mubr.bf16.mxu0 0
    %175 = vmatmul.mubr.bf16.gmra.mrb[0].mxu0 %v131
    %v176 = vpop.f32.mrb[0].mxu0
    %v177 = vadd.f32 %v115, %v176
    %v178 = vpop.f32.mrb[0].mxu0
    %v179 = vpop.f32.mrb[0].mxu0
    %v180 = vadd.f32 %v115, %v179
    %v181 = vpop.f32.mrb[0].mxu0
    %182 = vmatprep.mubr.bf16.mxu0 0
    %183 = vmatmul.mubr.bf16.gmra.mrb[0].mxu0 %v134
    %v184 = vpop.f32.mrb[0].mxu0
    %v185 = vadd.f32 %v115, %v184
    %v186 = vpop.f32.mrb[0].mxu0
    %v187 = vpop.f32.mrb[0].mxu0
    %v188 = vadd.f32 %v115, %v187
    %v189 = vpop.f32.mrb[0].mxu0
    %190 = vmatprep.mubr.bf16.mxu0 0
    %191 = vmatmul.mubr.bf16.gmra.mrb[0].mxu0 %v137
    %v192 = vpop.f32.mrb[0].mxu0
    %v193 = vadd.f32 %v115, %v192
    %v194 = vpop.f32.mrb[0].mxu0
    %v195 = vpop.f32.mrb[0].mxu0
    %v196 = vadd.f32 %v115, %v195
    %v197 = vpop.f32.mrb[0].mxu0
    %198 = vmatprep.mubr.bf16.mxu0 0
    %199 = vmatmul.mubr.bf16.gmra.mrb[0].mxu0 %v140
    %v200 = vpop.f32.mrb[0].mxu0
    %v201 = vadd.f32 %v115, %v200
    %v202 = vpop.f32.mrb[0].mxu0
    %v203 = vpop.f32.mrb[0].mxu0
    %v204 = vadd.f32 %v115, %v203
    %v205 = vpop.f32.mrb[0].mxu0
    %206 = vdwg.mxu0
    %207 = vst [vmem:[#allocation2] sm:$0xff] %v177
    %208 = vst [vmem:[#allocation2 + $0x8] sm:$0xff] %v180
    %209 = vst [vmem:[#allocation2 + $0x10] sm:$0xff] %v185
    %210 = vst [vmem:[#allocation2 + $0x18] sm:$0xff] %v188
    %211 = vst [vmem:[#allocation2 + $0x20] sm:$0xff] %v193
    %212 = vst [vmem:[#allocation2 + $0x28] sm:$0xff] %v196
    %213 = vst [vmem:[#allocation2 + $0x30] sm:$0xff] %v201
    %214 = vst [vmem:[#allocation2 + $0x38] sm:$0xff] %v204
    %v215 = vld [vmem:[#allocation9] sm:$0xf]
    %v216 = vld [vmem:[#allocation9 + $0x4] sm:$0xf]
    %v217 = vld [vmem:[#allocation9 + $0x8] sm:$0xf]
    %v218 = vld [vmem:[#allocation9 + $0xc] sm:$0xf]
    %v219 = vld [vmem:[#allocation2] sm:$0xff]
    %v220 = vld [vmem:[#allocation2 + $0x38] sm:$0xff]
    %222 = vrot.lane.b32.xlu0 %v220, 64
    %v223 = vpop.permute.xlu0 %222
    %v225 = vld [vmem:[#allocation6] sm:$0xff]
    %s226 = scalar_lea.vmem [#allocation6], 56
    %v227 = vld [vmem:[%s226] sm:$0xff]
    %v230 = vunpack.c.l.b16 %v215
    %v231 = vunpack.c.l.b16 %v216
    %v232 = vpack.c.b16 %v231, %v230
    %vm234 = vcmask 130048
    %v236 = vsel %vm234, 0, 0
    %238 = vmatprep.subr.bf16.mxu0 0
    %239 = vmatpush1.bf16.msra.mxu0 %v232
    %240 = vmatprep.subr.bf16.mxu0 0
    %241 = vmatpush1.bf16.msra.mxu0 0
    %242 = vmatprep.subr.bf16.mxu0 0
    %243 = vmatpush1.bf16.msra.mxu0 0
    %244 = vmatprep.subr.bf16.mxu0 0
    %245 = vmatpush1.bf16.msra.mxu0 0
    %246 = vmatprep.subr.bf16.mxu0 0
    %247 = vmatpush1.bf16.msra.mxu0 0
    %248 = vmatprep.subr.bf16.mxu0 0
    %249 = vmatpush1.bf16.msra.mxu0 0
    %250 = vmatprep.subr.bf16.mxu0 0
    %251 = vmatpush1.bf16.msra.mxu0 0
    %252 = vmatprep.subr.bf16.mxu0 0
    %253 = vmatpush1.bf16.msra.mxu0 0
    %254 = vmatprep.subr.bf16.mxu0 0
    %255 = vmatpush1.bf16.msra.mxu0 0
    %256 = vmatprep.subr.bf16.mxu0 0
    %257 = vmatpush1.bf16.msra.mxu0 0
    %258 = vmatprep.subr.bf16.mxu0 0
    %259 = vmatpush1.bf16.msra.mxu0 0
    %260 = vmatprep.subr.bf16.mxu0 0
    %261 = vmatpush1.bf16.msra.mxu0 0
    %262 = vmatprep.subr.bf16.mxu0 0
    %263 = vmatpush1.bf16.msra.mxu0 0
    %264 = vmatprep.subr.bf16.mxu0 0
    %265 = vmatpush1.bf16.msra.mxu0 0
    %266 = vmatprep.subr.bf16.mxu0 0
    %267 = vmatpush1.bf16.msra.mxu0 0
    %268 = vmatprep.subr.bf16.mxu0 0
    %269 = vmatpush1.bf16.msra.mxu0 0
    %270 = vmatprep.mubr.bf16.mxu0 0
    %271 = vmatmul.mubr.bf16.gmra.mrb[0].mxu0 %v236
    %v272 = vpop.f32.mrb[0].mxu0
    %v273 = vadd.f32 0.0, %v272
    %v274 = vpop.f32.mrb[0].mxu0
    %v275 = vpop.f32.mrb[0].mxu0
    %v276 = vpop.f32.mrb[0].mxu0
    %277 = vdwg.mxu0
    %v280 = vunpack.c.l.b16 %v217
    %v281 = vunpack.c.l.b16 %v218
    %v282 = vpack.c.b16 %v281, %v280
    %284 = vmatprep.subr.bf16.mxu0 0
    %285 = vmatpush1.bf16.msra.mxu0 %v282
    %286 = vmatprep.subr.bf16.mxu0 0
    %287 = vmatpush1.bf16.msra.mxu0 0
    %288 = vmatprep.subr.bf16.mxu0 0
    %289 = vmatpush1.bf16.msra.mxu0 0
    %290 = vmatprep.subr.bf16.mxu0 0
    %291 = vmatpush1.bf16.msra.mxu0 0
    %292 = vmatprep.subr.bf16.mxu0 0
    %293 = vmatpush1.bf16.msra.mxu0 0
    %294 = vmatprep.subr.bf16.mxu0 0
    %295 = vmatpush1.bf16.msra.mxu0 0
    %296 = vmatprep.subr.bf16.mxu0 0
    %297 = vmatpush1.bf16.msra.mxu0 0
    %298 = vmatprep.subr.bf16.mxu0 0
    %299 = vmatpush1.bf16.msra.mxu0 0
    %300 = vmatprep.subr.bf16.mxu0 0
    %301 = vmatpush1.bf16.msra.mxu0 0
    %302 = vmatprep.subr.bf16.mxu0 0
    %303 = vmatpush1.bf16.msra.mxu0 0
    %304 = vmatprep.subr.bf16.mxu0 0
    %305 = vmatpush1.bf16.msra.mxu0 0
    %306 = vmatprep.subr.bf16.mxu0 0
    %307 = vmatpush1.bf16.msra.mxu0 0
    %308 = vmatprep.subr.bf16.mxu0 0
    %309 = vmatpush1.bf16.msra.mxu0 0
    %310 = vmatprep.subr.bf16.mxu0 0
    %311 = vmatpush1.bf16.msra.mxu0 0
    %312 = vmatprep.subr.bf16.mxu0 0
    %313 = vmatpush1.bf16.msra.mxu0 0
    %314 = vmatprep.subr.bf16.mxu0 0
    %315 = vmatpush1.bf16.msra.mxu0 0
    %316 = vmatprep.mubr.bf16.mxu0 0
    %317 = vmatmul.mubr.bf16.gmra.mrb[0].mxu0 %v236
    %v318 = vpop.f32.mrb[0].mxu0
    %v319 = vadd.f32 0.0, %v318
    %v320 = vpop.f32.mrb[0].mxu0
    %v321 = vpop.f32.mrb[0].mxu0
    %v322 = vpop.f32.mrb[0].mxu0
    %323 = vdwg.mxu0
    %v324 = vadd.f32 %v219, %v273
    %v325 = vadd.f32 %v223, %v319
    %v326 = vxor.u32 %v324, 2147483648
    %v327 = vxor.u32 %v325, 2147483648
    %v328 = vmul.f32 %v326, 1.442695
    %v329 = vpow.pop %v328
    %v330 = vmul.f32 %v327, 1.442695
    %v331 = vpow.pop %v330
    %v332 = vadd.f32 %v329, 1.0
    %v333 = vadd.f32 %v331, 1.0
    %v334 = vrcp.pop %v332
    %v335 = vmul.f32 1.0, %v334
    %v336 = vrcp.pop %v333
    %v337 = vmul.f32 1.0, %v336
    %v338 = vtanh.pop %v324
    %v339 = vtanh.pop %v325
    %v340 = vmul.f32 %v335, 0.0
    %v341 = vmul.f32 %v337, 0.0
    %344 = vrot.lane.b32.xlu0 %v338, 80
    %v345 = vpop.permute.xlu0 %344
    %346 = vrot.lane.b32.xlu0 %v339, 80
    %v347 = vpop.permute.xlu0 %346
    %v350 = vmul.f32 %v335, %v345
    %v351 = vmul.f32 %v337, %v347
    %354 = vrot.lane.b32.xlu0 %v350, 16
    %v355 = vpop.permute.xlu0 %354
    %356 = vrot.lane.b32.xlu0 %v351, 16
    %v357 = vpop.permute.xlu0 %356
    %v360 = vadd.f32 %v340, %v355
    %v361 = vadd.f32 %v341, %v357
    %v362 = vtanh.pop %v360
    %v363 = vtanh.pop %v361
    %366 = vrot.lane.b32.xlu0 %v362, 16
    %v367 = vpop.permute.xlu0 %366
    %368 = vrot.lane.b32.xlu0 %v363, 16
    %v369 = vpop.permute.xlu0 %368
    %v372 = vmul.f32 %v335, %v367
    %v373 = vmul.f32 %v337, %v369
    %375 = vset.pattern.permute.xlu0 0
    %376 = vperm.xlu0 %375, %v225
    %v377 = vpop.permute.xlu0 %376
    %380 = vset.pattern.permute.xlu0 0
    %381 = vperm.xlu0 %380, %v227
    %v382 = vpop.permute.xlu0 %381
    %v384 = vmul.f32 %v377, %v372
    %v385 = vmul.f32 %v382, %v373
    %v386 = vmul.f32 %v377, %v360
    %v387 = vmul.f32 %v382, %v361
    %v388 = vsub.f32 1.0, %v225
    %v389 = vsub.f32 1.0, %v227
    %391 = vset.pattern.permute.xlu0 0
    %392 = vperm.xlu0 %391, %v388
    %v393 = vpop.permute.xlu0 %392
    %396 = vset.pattern.permute.xlu0 0
    %397 = vperm.xlu0 %396, %v389
    %v398 = vpop.permute.xlu0 %397
    %v400 = vmul.f32 %v393, 0.0
    %v401 = vmul.f32 %v398, 0.0
    %v402 = vadd.f32 %v386, %v400
    %v403 = vadd.f32 %v387, %v401
    %v404 = vadd.f32 %v384, %v400
    %v405 = vadd.f32 %v385, %v401
    %407 = vrot.lane.b32.xlu0 %v384, 96
    %v408 = vpop.permute.xlu0 %407
    %410 = vst.msk [vmem:[#allocation12] sm:$0xff] %vm234, %v408
    %412 = vrot.lane.b32.xlu0 %v385, 112
    %v413 = vpop.permute.xlu0 %412
    %s415 = scalar_lea.vmem [#allocation12], 56
    %vm416 = vcmask 261248
    %417 = vst.msk [vmem:[%s415] sm:$0xff] %vm416, %v413
    %v418 = vld [vmem:[#allocation2 + $0x8] sm:$0xff]
    %v419 = vld [vmem:[#allocation2 + $0x30] sm:$0xff]
    %421 = vrot.lane.b32.xlu0 %v419, 64
    %v422 = vpop.permute.xlu0 %421
    %s424 = scalar_lea.vmem [#allocation6], 8
    %v425 = vld [vmem:[%s424] sm:$0xff]
    %s426 = scalar_lea.vmem [#allocation6], 48
    %v427 = vld [vmem:[%s426] sm:$0xff]
    %v428 = vpack.c.bf16 %v404, %v404
    %v429 = vpack.c.bf16 %v405, %v405
    %431 = vrot.lane.b32.xlu0 %v428, 96
    %v432 = vpop.permute.xlu0 %431
    %v434 = vsel %vm234, %v432, 0
    %436 = vmatprep.subr.bf16.mxu0 0
    %437 = vmatpush1.bf16.msra.mxu0 %v232
    %438 = vmatprep.subr.bf16.mxu0 0
    %439 = vmatpush1.bf16.msra.mxu0 0
    %440 = vmatprep.subr.bf16.mxu0 0
    %441 = vmatpush1.bf16.msra.mxu0 0
    %442 = vmatprep.subr.bf16.mxu0 0
    %443 = vmatpush1.bf16.msra.mxu0 0
    %444 = vmatprep.subr.bf16.mxu0 0
    %445 = vmatpush1.bf16.msra.mxu0 0
    %446 = vmatprep.subr.bf16.mxu0 0
    %447 = vmatpush1.bf16.msra.mxu0 0
    %448 = vmatprep.subr.bf16.mxu0 0
    %449 = vmatpush1.bf16.msra.mxu0 0
    %450 = vmatprep.subr.bf16.mxu0 0
    %451 = vmatpush1.bf16.msra.mxu0 0
    %452 = vmatprep.subr.bf16.mxu0 0
    %453 = vmatpush1.bf16.msra.mxu0 0
    %454 = vmatprep.subr.bf16.mxu0 0
    %455 = vmatpush1.bf16.msra.mxu0 0
    %456 = vmatprep.subr.bf16.mxu0 0
    %457 = vmatpush1.bf16.msra.mxu0 0
    %458 = vmatprep.subr.bf16.mxu0 0
    %459 = vmatpush1.bf16.msra.mxu0 0
    %460 = vmatprep.subr.bf16.mxu0 0
    %461 = vmatpush1.bf16.msra.mxu0 0
    %462 = vmatprep.subr.bf16.mxu0 0
    %463 = vmatpush1.bf16.msra.mxu0 0
    %464 = vmatprep.subr.bf16.mxu0 0
    %465 = vmatpush1.bf16.msra.mxu0 0
    %466 = vmatprep.subr.bf16.mxu0 0
    %467 = vmatpush1.bf16.msra.mxu0 0
    %468 = vmatprep.mubr.bf16.mxu0 0
    %469 = vmatmul.mubr.bf16.gmra.mrb[0].mxu0 %v434
    %v470 = vpop.f32.mrb[0].mxu0
    %v471 = vadd.f32 0.0, %v470
    %v472 = vpop.f32.mrb[0].mxu0
    %v473 = vpop.f32.mrb[0].mxu0
    %v474 = vpop.f32.mrb[0].mxu0
    %475 = vdwg.mxu0
    %477 = vrot.lane.b32.xlu0 %v429, 96
    %v478 = vpop.permute.xlu0 %477
    %v480 = vsel %vm234, %v478, 0
    %482 = vmatprep.subr.bf16.mxu0 0
    %483 = vmatpush1.bf16.msra.mxu0 %v282
    %484 = vmatprep.subr.bf16.mxu0 0
    %485 = vmatpush1.bf16.msra.mxu0 0
    %486 = vmatprep.subr.bf16.mxu0 0
    %487 = vmatpush1.bf16.msra.mxu0 0
    %488 = vmatprep.subr.bf16.mxu0 0
    %489 = vmatpush1.bf16.msra.mxu0 0
    %490 = vmatprep.subr.bf16.mxu0 0
    %491 = vmatpush1.bf16.msra.mxu0 0
    %492 = vmatprep.subr.bf16.mxu0 0
    %493 = vmatpush1.bf16.msra.mxu0 0
    %494 = vmatprep.subr.bf16.mxu0 0
    %495 = vmatpush1.bf16.msra.mxu0 0
    %496 = vmatprep.subr.bf16.mxu0 0
    %497 = vmatpush1.bf16.msra.mxu0 0
    %498 = vmatprep.subr.bf16.mxu0 0
    %499 = vmatpush1.bf16.msra.mxu0 0
    %500 = vmatprep.subr.bf16.mxu0 0
    %501 = vmatpush1.bf16.msra.mxu0 0
    %502 = vmatprep.subr.bf16.mxu0 0
    %503 = vmatpush1.bf16.msra.mxu0 0
    %504 = vmatprep.subr.bf16.mxu0 0
    %505 = vmatpush1.bf16.msra.mxu0 0
    %506 = vmatprep.subr.bf16.mxu0 0
    %507 = vmatpush1.bf16.msra.mxu0 0
    %508 = vmatprep.subr.bf16.mxu0 0
    %509 = vmatpush1.bf16.msra.mxu0 0
    %510 = vmatprep.subr.bf16.mxu0 0
    %511 = vmatpush1.bf16.msra.mxu0 0
    %512 = vmatprep.subr.bf16.mxu0 0
    %513 = vmatpush1.bf16.msra.mxu0 0
    %514 = vmatprep.mubr.bf16.mxu0 0
    %515 = vmatmul.mubr.bf16.gmra.mrb[0].mxu0 %v480
    %v516 = vpop.f32.mrb[0].mxu0
    %v517 = vadd.f32 0.0, %v516
    %v518 = vpop.f32.mrb[0].mxu0
    %v519 = vpop.f32.mrb[0].mxu0
    %v520 = vpop.f32.mrb[0].mxu0
    %521 = vdwg.mxu0
    %v522 = vadd.f32 %v418, %v471
    %v523 = vadd.f32 %v422, %v517
    %v524 = vxor.u32 %v522, 2147483648
    %v525 = vxor.u32 %v523, 2147483648
    %v526 = vmul.f32 %v524, 1.442695
    %v527 = vpow.pop %v526
    %v528 = vmul.f32 %v525, 1.442695
    %v529 = vpow.pop %v528
    %v530 = vadd.f32 %v527, 1.0
    %v531 = vadd.f32 %v529, 1.0
    %v532 = vrcp.pop %v530
    %v533 = vmul.f32 1.0, %v532
    %v534 = vrcp.pop %v531
    %v535 = vmul.f32 1.0, %v534
    %v536 = vtanh.pop %v522
    %v537 = vtanh.pop %v523
    %v538 = vmul.f32 %v533, %v402
    %v539 = vmul.f32 %v535, %v403
    %542 = vrot.lane.b32.xlu0 %v536, 80
    %v543 = vpop.permute.xlu0 %542
    %544 = vrot.lane.b32.xlu0 %v537, 80
    %v545 = vpop.permute.xlu0 %544
    %v548 = vmul.f32 %v533, %v543
    %v549 = vmul.f32 %v535, %v545
    %552 = vrot.lane.b32.xlu0 %v548, 16
    %v553 = vpop.permute.xlu0 %552
    %554 = vrot.lane.b32.xlu0 %v549, 16
    %v555 = vpop.permute.xlu0 %554
    %v558 = vadd.f32 %v538, %v553
    %v559 = vadd.f32 %v539, %v555
    %v560 = vtanh.pop %v558
    %v561 = vtanh.pop %v559
    %564 = vrot.lane.b32.xlu0 %v560, 16
    %v565 = vpop.permute.xlu0 %564
    %566 = vrot.lane.b32.xlu0 %v561, 16
    %v567 = vpop.permute.xlu0 %566
    %v570 = vmul.f32 %v533, %v565
    %v571 = vmul.f32 %v535, %v567
    %573 = vset.pattern.permute.xlu0 0
    %574 = vperm.xlu0 %573, %v425
    %v575 = vpop.permute.xlu0 %574
    %578 = vset.pattern.permute.xlu0 0
    %579 = vperm.xlu0 %578, %v427
    %v580 = vpop.permute.xlu0 %579
    %v582 = vmul.f32 %v575, %v570
    %v583 = vmul.f32 %v580, %v571
    %v584 = vmul.f32 %v575, %v558
    %v585 = vmul.f32 %v580, %v559
    %v586 = vsub.f32 1.0, %v425
    %v587 = vsub.f32 1.0, %v427
    %589 = vset.pattern.permute.xlu0 0
    %590 = vperm.xlu0 %589, %v586
    %v591 = vpop.permute.xlu0 %590
    %594 = vset.pattern.permute.xlu0 0
    %595 = vperm.xlu0 %594, %v587
    %v596 = vpop.permute.xlu0 %595
    %v598 = vmul.f32 %v591, %v402
    %v599 = vmul.f32 %v596, %v403
    %v600 = vadd.f32 %v584, %v598
    %v601 = vadd.f32 %v585, %v599
    %v602 = vmul.f32 %v591, %v404
    %v603 = vmul.f32 %v596, %v405
    %v604 = vadd.f32 %v582, %v602
    %v605 = vadd.f32 %v583, %v603
    %607 = vrot.lane.b32.xlu0 %v582, 96
    %v608 = vpop.permute.xlu0 %607
    %s610 = scalar_lea.vmem [#allocation12], 8
    %611 = vst.msk [vmem:[%s610] sm:$0xff] %vm234, %v608
    %613 = vrot.lane.b32.xlu0 %v583, 112
    %v614 = vpop.permute.xlu0 %613
    %s616 = scalar_lea.vmem [#allocation12], 48
    %617 = vst.msk [vmem:[%s616] sm:$0xff] %vm416, %v614
    %v618 = vld [vmem:[#allocation2 + $0x10] sm:$0xff]
    %v619 = vld [vmem:[#allocation2 + $0x28] sm:$0xff]
    %621 = vrot.lane.b32.xlu0 %v619, 64
    %v622 = vpop.permute.xlu0 %621
    %s624 = scalar_lea.vmem [#allocation6], 16
    %v625 = vld [vmem:[%s624] sm:$0xff]
    %s626 = scalar_lea.vmem [#allocation6], 40
    %v627 = vld [vmem:[%s626] sm:$0xff]
    %v628 = vpack.c.bf16 %v604, %v604
    %v629 = vpack.c.bf16 %v605, %v605
    %631 = vrot.lane.b32.xlu0 %v628, 96
    %v632 = vpop.permute.xlu0 %631
    %v634 = vsel %vm234, %v632, 0
    %636 = vmatprep.subr.bf16.mxu0 0
    %637 = vmatpush1.bf16.msra.mxu0 %v232
    %638 = vmatprep.subr.bf16.mxu0 0
    %639 = vmatpush1.bf16.msra.mxu0 0
    %640 = vmatprep.subr.bf16.mxu0 0
    %641 = vmatpush1.bf16.msra.mxu0 0
    %642 = vmatprep.subr.bf16.mxu0 0
    %643 = vmatpush1.bf16.msra.mxu0 0
    %644 = vmatprep.subr.bf16.mxu0 0
    %645 = vmatpush1.bf16.msra.mxu0 0
    %646 = vmatprep.subr.bf16.mxu0 0
    %647 = vmatpush1.bf16.msra.mxu0 0
    %648 = vmatprep.subr.bf16.mxu0 0
    %649 = vmatpush1.bf16.msra.mxu0 0
    %650 = vmatprep.subr.bf16.mxu0 0
    %651 = vmatpush1.bf16.msra.mxu0 0
    %652 = vmatprep.subr.bf16.mxu0 0
    %653 = vmatpush1.bf16.msra.mxu0 0
    %654 = vmatprep.subr.bf16.mxu0 0
    %655 = vmatpush1.bf16.msra.mxu0 0
    %656 = vmatprep.subr.bf16.mxu0 0
    %657 = vmatpush1.bf16.msra.mxu0 0
    %658 = vmatprep.subr.bf16.mxu0 0
    %659 = vmatpush1.bf16.msra.mxu0 0
    %660 = vmatprep.subr.bf16.mxu0 0
    %661 = vmatpush1.bf16.msra.mxu0 0
    %662 = vmatprep.subr.bf16.mxu0 0
    %663 = vmatpush1.bf16.msra.mxu0 0
    %664 = vmatprep.subr.bf16.mxu0 0
    %665 = vmatpush1.bf16.msra.mxu0 0
    %666 = vmatprep.subr.bf16.mxu0 0
    %667 = vmatpush1.bf16.msra.mxu0 0
    %668 = vmatprep.mubr.bf16.mxu0 0
    %669 = vmatmul.mubr.bf16.gmra.mrb[0].mxu0 %v634
    %v670 = vpop.f32.mrb[0].mxu0
    %v671 = vadd.f32 0.0, %v670
    %v672 = vpop.f32.mrb[0].mxu0
    %v673 = vpop.f32.mrb[0].mxu0
    %v674 = vpop.f32.mrb[0].mxu0
    %675 = vdwg.mxu0
    %677 = vrot.lane.b32.xlu0 %v629, 96
    %v678 = vpop.permute.xlu0 %677
    %v680 = vsel %vm234, %v678, 0
    %682 = vmatprep.subr.bf16.mxu0 0
    %683 = vmatpush1.bf16.msra.mxu0 %v282
    %684 = vmatprep.subr.bf16.mxu0 0
    %685 = vmatpush1.bf16.msra.mxu0 0
    %686 = vmatprep.subr.bf16.mxu0 0
    %687 = vmatpush1.bf16.msra.mxu0 0
    %688 = vmatprep.subr.bf16.mxu0 0
    %689 = vmatpush1.bf16.msra.mxu0 0
    %690 = vmatprep.subr.bf16.mxu0 0
    %691 = vmatpush1.bf16.msra.mxu0 0
    %692 = vmatprep.subr.bf16.mxu0 0
    %693 = vmatpush1.bf16.msra.mxu0 0
    %694 = vmatprep.subr.bf16.mxu0 0
    %695 = vmatpush1.bf16.msra.mxu0 0
    %696 = vmatprep.subr.bf16.mxu0 0
    %697 = vmatpush1.bf16.msra.mxu0 0
    %698 = vmatprep.subr.bf16.mxu0 0
    %699 = vmatpush1.bf16.msra.mxu0 0
    %700 = vmatprep.subr.bf16.mxu0 0
    %701 = vmatpush1.bf16.msra.mxu0 0
    %702 = vmatprep.subr.bf16.mxu0 0
    %703 = vmatpush1.bf16.msra.mxu0 0
    %704 = vmatprep.subr.bf16.mxu0 0
    %705 = vmatpush1.bf16.msra.mxu0 0
    %706 = vmatprep.subr.bf16.mxu0 0
    %707 = vmatpush1.bf16.msra.mxu0 0
    %708 = vmatprep.subr.bf16.mxu0 0
    %709 = vmatpush1.bf16.msra.mxu0 0
    %710 = vmatprep.subr.bf16.mxu0 0
    %711 = vmatpush1.bf16.msra.mxu0 0
    %712 = vmatprep.subr.bf16.mxu0 0
    %713 = vmatpush1.bf16.msra.mxu0 0
    %714 = vmatprep.mubr.bf16.mxu0 0
    %715 = vmatmul.mubr.bf16.gmra.mrb[0].mxu0 %v680
    %v716 = vpop.f32.mrb[0].mxu0
    %v717 = vadd.f32 0.0, %v716
    %v718 = vpop.f32.mrb[0].mxu0
    %v719 = vpop.f32.mrb[0].mxu0
    %v720 = vpop.f32.mrb[0].mxu0
    %721 = vdwg.mxu0
    %v722 = vadd.f32 %v618, %v671
    %v723 = vadd.f32 %v622, %v717
    %v724 = vxor.u32 %v722, 2147483648
    %v725 = vxor.u32 %v723, 2147483648
    %v726 = vmul.f32 %v724, 1.442695
    %v727 = vpow.pop %v726
    %v728 = vmul.f32 %v725, 1.442695
    %v729 = vpow.pop %v728
    %v730 = vadd.f32 %v727, 1.0
    %v731 = vadd.f32 %v729, 1.0
    %v732 = vrcp.pop %v730
    %v733 = vmul.f32 1.0, %v732
    %v734 = vrcp.pop %v731
    %v735 = vmul.f32 1.0, %v734
    %v736 = vtanh.pop %v722
    %v737 = vtanh.pop %v723
    %v738 = vmul.f32 %v733, %v600
    %v739 = vmul.f32 %v735, %v601
    %742 = vrot.lane.b32.xlu0 %v736, 80
    %v743 = vpop.permute.xlu0 %742
    %744 = vrot.lane.b32.xlu0 %v737, 80
    %v745 = vpop.permute.xlu0 %744
    %v748 = vmul.f32 %v733, %v743
    %v749 = vmul.f32 %v735, %v745
    %752 = vrot.lane.b32.xlu0 %v748, 16
    %v753 = vpop.permute.xlu0 %752
    %754 = vrot.lane.b32.xlu0 %v749, 16
    %v755 = vpop.permute.xlu0 %754
    %v758 = vadd.f32 %v738, %v753
    %v759 = vadd.f32 %v739, %v755
    %v760 = vtanh.pop %v758
    %v761 = vtanh.pop %v759
    %764 = vrot.lane.b32.xlu0 %v760, 16
    %v765 = vpop.permute.xlu0 %764
    %766 = vrot.lane.b32.xlu0 %v761, 16
    %v767 = vpop.permute.xlu0 %766
    %v770 = vmul.f32 %v733, %v765
    %v771 = vmul.f32 %v735, %v767
    %773 = vset.pattern.permute.xlu0 0
    %774 = vperm.xlu0 %773, %v625
    %v775 = vpop.permute.xlu0 %774
    %778 = vset.pattern.permute.xlu0 0
    %779 = vperm.xlu0 %778, %v627
    %v780 = vpop.permute.xlu0 %779
    %v782 = vmul.f32 %v775, %v770
    %v783 = vmul.f32 %v780, %v771
    %v784 = vmul.f32 %v775, %v758
    %v785 = vmul.f32 %v780, %v759
    %v786 = vsub.f32 1.0, %v625
    %v787 = vsub.f32 1.0, %v627
    %789 = vset.pattern.permute.xlu0 0
    %790 = vperm.xlu0 %789, %v786
    %v791 = vpop.permute.xlu0 %790
    %794 = vset.pattern.permute.xlu0 0
    %795 = vperm.xlu0 %794, %v787
    %v796 = vpop.permute.xlu0 %795
    %v798 = vmul.f32 %v791, %v600
    %v799 = vmul.f32 %v796, %v601
    %v800 = vadd.f32 %v784, %v798
    %v801 = vadd.f32 %v785, %v799
    %v802 = vmul.f32 %v791, %v604
    %v803 = vmul.f32 %v796, %v605
    %v804 = vadd.f32 %v782, %v802
    %v805 = vadd.f32 %v783, %v803
    %807 = vrot.lane.b32.xlu0 %v782, 96
    %v808 = vpop.permute.xlu0 %807
    %s810 = scalar_lea.vmem [#allocation12], 16
    %811 = vst.msk [vmem:[%s810] sm:$0xff] %vm234, %v808
    %813 = vrot.lane.b32.xlu0 %v783, 112
    %v814 = vpop.permute.xlu0 %813
    %s816 = scalar_lea.vmem [#allocation12], 40
    %817 = vst.msk [vmem:[%s816] sm:$0xff] %vm416, %v814
    %v818 = vld [vmem:[#allocation2 + $0x18] sm:$0xff]
    %v819 = vld [vmem:[#allocation2 + $0x20] sm:$0xff]
    %821 = vrot.lane.b32.xlu0 %v819, 64
    %v822 = vpop.permute.xlu0 %821
    %s824 = scalar_lea.vmem [#allocation6], 24
    %v825 = vld [vmem:[%s824] sm:$0xff]
    %s826 = scalar_lea.vmem [#allocation6], 32
    %v827 = vld [vmem:[%s826] sm:$0xff]
    %v828 = vpack.c.bf16 %v804, %v804
    %v829 = vpack.c.bf16 %v805, %v805
    %831 = vrot.lane.b32.xlu0 %v828, 96
    %v832 = vpop.permute.xlu0 %831
    %v834 = vsel %vm234, %v832, 0
    %836 = vmatprep.subr.bf16.mxu0 0
    %837 = vmatpush1.bf16.msra.mxu0 %v232
    %838 = vmatprep.subr.bf16.mxu0 0
    %839 = vmatpush1.bf16.msra.mxu0 0
    %840 = vmatprep.subr.bf16.mxu0 0
    %841 = vmatpush1.bf16.msra.mxu0 0
    %842 = vmatprep.subr.bf16.mxu0 0
    %843 = vmatpush1.bf16.msra.mxu0 0
    %844 = vmatprep.subr.bf16.mxu0 0
    %845 = vmatpush1.bf16.msra.mxu0 0
    %846 = vmatprep.subr.bf16.mxu0 0
    %847 = vmatpush1.bf16.msra.mxu0 0
    %848 = vmatprep.subr.bf16.mxu0 0
    %849 = vmatpush1.bf16.msra.mxu0 0
    %850 = vmatprep.subr.bf16.mxu0 0
    %851 = vmatpush1.bf16.msra.mxu0 0
    %852 = vmatprep.subr.bf16.mxu0 0
    %853 = vmatpush1.bf16.msra.mxu0 0
    %854 = vmatprep.subr.bf16.mxu0 0
    %855 = vmatpush1.bf16.msra.mxu0 0
    %856 = vmatprep.subr.bf16.mxu0 0
    %857 = vmatpush1.bf16.msra.mxu0 0
    %858 = vmatprep.subr.bf16.mxu0 0
    %859 = vmatpush1.bf16.msra.mxu0 0
    %860 = vmatprep.subr.bf16.mxu0 0
    %861 = vmatpush1.bf16.msra.mxu0 0
    %862 = vmatprep.subr.bf16.mxu0 0
    %863 = vmatpush1.bf16.msra.mxu0 0
    %864 = vmatprep.subr.bf16.mxu0 0
    %865 = vmatpush1.bf16.msra.mxu0 0
    %866 = vmatprep.subr.bf16.mxu0 0
    %867 = vmatpush1.bf16.msra.mxu0 0
    %868 = vmatprep.mubr.bf16.mxu0 0
    %869 = vmatmul.mubr.bf16.gmra.mrb[0].mxu0 %v834
    %v870 = vpop.f32.mrb[0].mxu0
    %v871 = vadd.f32 0.0, %v870
    %v872 = vpop.f32.mrb[0].mxu0
    %v873 = vpop.f32.mrb[0].mxu0
    %v874 = vpop.f32.mrb[0].mxu0
    %875 = vdwg.mxu0
    %877 = vrot.lane.b32.xlu0 %v829, 96
    %v878 = vpop.permute.xlu0 %877
    %v880 = vsel %vm234, %v878, 0
    %882 = vmatprep.subr.bf16.mxu0 0
    %883 = vmatpush1.bf16.msra.mxu0 %v282
    %884 = vmatprep.subr.bf16.mxu0 0
    %885 = vmatpush1.bf16.msra.mxu0 0
    %886 = vmatprep.subr.bf16.mxu0 0
    %887 = vmatpush1.bf16.msra.mxu0 0
    %888 = vmatprep.subr.bf16.mxu0 0
    %889 = vmatpush1.bf16.msra.mxu0 0
    %890 = vmatprep.subr.bf16.mxu0 0
    %891 = vmatpush1.bf16.msra.mxu0 0
    %892 = vmatprep.subr.bf16.mxu0 0
    %893 = vmatpush1.bf16.msra.mxu0 0
    %894 = vmatprep.subr.bf16.mxu0 0
    %895 = vmatpush1.bf16.msra.mxu0 0
    %896 = vmatprep.subr.bf16.mxu0 0
    %897 = vmatpush1.bf16.msra.mxu0 0
    %898 = vmatprep.subr.bf16.mxu0 0
    %899 = vmatpush1.bf16.msra.mxu0 0
    %900 = vmatprep.subr.bf16.mxu0 0
    %901 = vmatpush1.bf16.msra.mxu0 0
    %902 = vmatprep.subr.bf16.mxu0 0
    %903 = vmatpush1.bf16.msra.mxu0 0
    %904 = vmatprep.subr.bf16.mxu0 0
    %905 = vmatpush1.bf16.msra.mxu0 0
    %906 = vmatprep.subr.bf16.mxu0 0
    %907 = vmatpush1.bf16.msra.mxu0 0
    %908 = vmatprep.subr.bf16.mxu0 0
    %909 = vmatpush1.bf16.msra.mxu0 0
    %910 = vmatprep.subr.bf16.mxu0 0
    %911 = vmatpush1.bf16.msra.mxu0 0
    %912 = vmatprep.subr.bf16.mxu0 0
    %913 = vmatpush1.bf16.msra.mxu0 0
    %914 = vmatprep.mubr.bf16.mxu0 0
    %915 = vmatmul.mubr.bf16.gmra.mrb[0].mxu0 %v880
    %v916 = vpop.f32.mrb[0].mxu0
    %v917 = vadd.f32 0.0, %v916
    %v918 = vpop.f32.mrb[0].mxu0
    %v919 = vpop.f32.mrb[0].mxu0
    %v920 = vpop.f32.mrb[0].mxu0
    %921 = vdwg.mxu0
    %v922 = vadd.f32 %v818, %v871
    %v923 = vadd.f32 %v822, %v917
    %v924 = vxor.u32 %v922, 2147483648
    %v925 = vxor.u32 %v923, 2147483648
    %v926 = vmul.f32 %v924, 1.442695
    %v927 = vpow.pop %v926
    %v928 = vmul.f32 %v925, 1.442695
    %v929 = vpow.pop %v928
    %v930 = vadd.f32 %v927, 1.0
    %v931 = vadd.f32 %v929, 1.0
    %v932 = vrcp.pop %v930
    %v933 = vmul.f32 1.0, %v932
    %v934 = vrcp.pop %v931
    %v935 = vmul.f32 1.0, %v934
    %v936 = vtanh.pop %v922
    %v937 = vtanh.pop %v923
    %v938 = vmul.f32 %v933, %v800
    %v939 = vmul.f32 %v935, %v801
    %942 = vrot.lane.b32.xlu0 %v936, 80
    %v943 = vpop.permute.xlu0 %942
    %944 = vrot.lane.b32.xlu0 %v937, 80
    %v945 = vpop.permute.xlu0 %944
    %v948 = vmul.f32 %v933, %v943
    %v949 = vmul.f32 %v935, %v945
    %952 = vrot.lane.b32.xlu0 %v948, 16
    %v953 = vpop.permute.xlu0 %952
    %954 = vrot.lane.b32.xlu0 %v949, 16
    %v955 = vpop.permute.xlu0 %954
    %v958 = vadd.f32 %v938, %v953
    %v959 = vadd.f32 %v939, %v955
    %v960 = vtanh.pop %v958
    %v961 = vtanh.pop %v959
    %964 = vrot.lane.b32.xlu0 %v960, 16
    %v965 = vpop.permute.xlu0 %964
    %966 = vrot.lane.b32.xlu0 %v961, 16
    %v967 = vpop.permute.xlu0 %966
    %v970 = vmul.f32 %v933, %v965
    %v971 = vmul.f32 %v935, %v967
    %973 = vset.pattern.permute.xlu0 0
    %974 = vperm.xlu0 %973, %v825
    %v975 = vpop.permute.xlu0 %974
    %978 = vset.pattern.permute.xlu0 0
    %979 = vperm.xlu0 %978, %v827
    %v980 = vpop.permute.xlu0 %979
    %v982 = vmul.f32 %v975, %v970
    %v983 = vmul.f32 %v980, %v971
    %v984 = vmul.f32 %v975, %v958
    %v985 = vmul.f32 %v980, %v959
    %v986 = vsub.f32 1.0, %v825
    %v987 = vsub.f32 1.0, %v827
    %989 = vset.pattern.permute.xlu0 0
    %990 = vperm.xlu0 %989, %v986
    %v991 = vpop.permute.xlu0 %990
    %994 = vset.pattern.permute.xlu0 0
    %995 = vperm.xlu0 %994, %v987
    %v996 = vpop.permute.xlu0 %995
    %v998 = vmul.f32 %v991, %v800
    %v999 = vmul.f32 %v996, %v801
    %v1000 = vadd.f32 %v984, %v998
    %v1001 = vadd.f32 %v985, %v999
    %v1002 = vmul.f32 %v991, %v804
    %v1003 = vmul.f32 %v996, %v805
    %v1004 = vadd.f32 %v982, %v1002
    %v1005 = vadd.f32 %v983, %v1003
    %1007 = vrot.lane.b32.xlu0 %v982, 96
    %v1008 = vpop.permute.xlu0 %1007
    %s1010 = scalar_lea.vmem [#allocation12], 24
    %1011 = vst.msk [vmem:[%s1010] sm:$0xff] %vm234, %v1008
    %1013 = vrot.lane.b32.xlu0 %v983, 112
    %v1014 = vpop.permute.xlu0 %1013
    %s1016 = scalar_lea.vmem [#allocation12], 32
    %1017 = vst.msk [vmem:[%s1016] sm:$0xff] %vm416, %v1014
    %v1018 = vld [vmem:[#allocation2 + $0x20] sm:$0xff]
    %v1019 = vld [vmem:[#allocation2 + $0x18] sm:$0xff]
    %1021 = vrot.lane.b32.xlu0 %v1019, 64
    %v1022 = vpop.permute.xlu0 %1021
    %v1024 = vld [vmem:[%s826] sm:$0xff]
    %v1025 = vld [vmem:[%s824] sm:$0xff]
    %v1026 = vpack.c.bf16 %v1004, %v1004
    %v1027 = vpack.c.bf16 %v1005, %v1005
    %1029 = vrot.lane.b32.xlu0 %v1026, 96
    %v1030 = vpop.permute.xlu0 %1029
    %v1032 = vsel %vm234, %v1030, 0
    %1034 = vmatprep.subr.bf16.mxu0 0
    %1035 = vmatpush1.bf16.msra.mxu0 %v232
    %1036 = vmatprep.subr.bf16.mxu0 0
    %1037 = vmatpush1.bf16.msra.mxu0 0
    %1038 = vmatprep.subr.bf16.mxu0 0
    %1039 = vmatpush1.bf16.msra.mxu0 0
    %1040 = vmatprep.subr.bf16.mxu0 0
    %1041 = vmatpush1.bf16.msra.mxu0 0
    %1042 = vmatprep.subr.bf16.mxu0 0
    %1043 = vmatpush1.bf16.msra.mxu0 0
    %1044 = vmatprep.subr.bf16.mxu0 0
    %1045 = vmatpush1.bf16.msra.mxu0 0
    %1046 = vmatprep.subr.bf16.mxu0 0
    %1047 = vmatpush1.bf16.msra.mxu0 0
    %1048 = vmatprep.subr.bf16.mxu0 0
    %1049 = vmatpush1.bf16.msra.mxu0 0
    %1050 = vmatprep.subr.bf16.mxu0 0
    %1051 = vmatpush1.bf16.msra.mxu0 0
    %1052 = vmatprep.subr.bf16.mxu0 0
    %1053 = vmatpush1.bf16.msra.mxu0 0
    %1054 = vmatprep.subr.bf16.mxu0 0
    %1055 = vmatpush1.bf16.msra.mxu0 0
    %1056 = vmatprep.subr.bf16.mxu0 0
    %1057 = vmatpush1.bf16.msra.mxu0 0
    %1058 = vmatprep.subr.bf16.mxu0 0
    %1059 = vmatpush1.bf16.msra.mxu0 0
    %1060 = vmatprep.subr.bf16.mxu0 0
    %1061 = vmatpush1.bf16.msra.mxu0 0
    %1062 = vmatprep.subr.bf16.mxu0 0
    %1063 = vmatpush1.bf16.msra.mxu0 0
    %1064 = vmatprep.subr.bf16.mxu0 0
    %1065 = vmatpush1.bf16.msra.mxu0 0
    %1066 = vmatprep.mubr.bf16.mxu0 0
    %1067 = vmatmul.mubr.bf16.gmra.mrb[0].mxu0 %v1032
    %v1068 = vpop.f32.mrb[0].mxu0
    %v1069 = vadd.f32 0.0, %v1068
    %v1070 = vpop.f32.mrb[0].mxu0
    %v1071 = vpop.f32.mrb[0].mxu0
    %v1072 = vpop.f32.mrb[0].mxu0
    %1073 = vdwg.mxu0
    %1075 = vrot.lane.b32.xlu0 %v1027, 96
    %v1076 = vpop.permute.xlu0 %1075
    %v1078 = vsel %vm234, %v1076, 0
    %1080 = vmatprep.subr.bf16.mxu0 0
    %1081 = vmatpush1.bf16.msra.mxu0 %v282
    %1082 = vmatprep.subr.bf16.mxu0 0
    %1083 = vmatpush1.bf16.msra.mxu0 0
    %1084 = vmatprep.subr.bf16.mxu0 0
    %1085 = vmatpush1.bf16.msra.mxu0 0
    %1086 = vmatprep.subr.bf16.mxu0 0
    %1087 = vmatpush1.bf16.msra.mxu0 0
    %1088 = vmatprep.subr.bf16.mxu0 0
    %1089 = vmatpush1.bf16.msra.mxu0 0
    %1090 = vmatprep.subr.bf16.mxu0 0
    %1091 = vmatpush1.bf16.msra.mxu0 0
    %1092 = vmatprep.subr.bf16.mxu0 0
    %1093 = vmatpush1.bf16.msra.mxu0 0
    %1094 = vmatprep.subr.bf16.mxu0 0
    %1095 = vmatpush1.bf16.msra.mxu0 0
    %1096 = vmatprep.subr.bf16.mxu0 0
    %1097 = vmatpush1.bf16.msra.mxu0 0
    %1098 = vmatprep.subr.bf16.mxu0 0
    %1099 = vmatpush1.bf16.msra.mxu0 0
    %1100 = vmatprep.subr.bf16.mxu0 0
    %1101 = vmatpush1.bf16.msra.mxu0 0
    %1102 = vmatprep.subr.bf16.mxu0 0
    %1103 = vmatpush1.bf16.msra.mxu0 0
    %1104 = vmatprep.subr.bf16.mxu0 0
    %1105 = vmatpush1.bf16.msra.mxu0 0
    %1106 = vmatprep.subr.bf16.mxu0 0
    %1107 = vmatpush1.bf16.msra.mxu0 0
    %1108 = vmatprep.subr.bf16.mxu0 0
    %1109 = vmatpush1.bf16.msra.mxu0 0
    %1110 = vmatprep.subr.bf16.mxu0 0
    %1111 = vmatpush1.bf16.msra.mxu0 0
    %1112 = vmatprep.mubr.bf16.mxu0 0
    %1113 = vmatmul.mubr.bf16.gmra.mrb[0].mxu0 %v1078
    %v1114 = vpop.f32.mrb[0].mxu0
    %v1115 = vadd.f32 0.0, %v1114
    %v1116 = vpop.f32.mrb[0].mxu0
    %v1117 = vpop.f32.mrb[0].mxu0
    %v1118 = vpop.f32.mrb[0].mxu0
    %1119 = vdwg.mxu0
    %v1120 = vadd.f32 %v1018, %v1069
    %v1121 = vadd.f32 %v1022, %v1115
    %v1122 = vxor.u32 %v1120, 2147483648
    %v1123 = vxor.u32 %v1121, 2147483648
    %v1124 = vmul.f32 %v1122, 1.442695
    %v1125 = vpow.pop %v1124
    %v1126 = vmul.f32 %v1123, 1.442695
    %v1127 = vpow.pop %v1126
    %v1128 = vadd.f32 %v1125, 1.0
    %v1129 = vadd.f32 %v1127, 1.0
    %v1130 = vrcp.pop %v1128
    %v1131 = vmul.f32 1.0, %v1130
    %v1132 = vrcp.pop %v1129
    %v1133 = vmul.f32 1.0, %v1132
    %v1134 = vtanh.pop %v1120
    %v1135 = vtanh.pop %v1121
    %v1136 = vmul.f32 %v1131, %v1000
    %v1137 = vmul.f32 %v1133, %v1001
    %1140 = vrot.lane.b32.xlu0 %v1134, 80
    %v1141 = vpop.permute.xlu0 %1140
    %1142 = vrot.lane.b32.xlu0 %v1135, 80
    %v1143 = vpop.permute.xlu0 %1142
    %v1146 = vmul.f32 %v1131, %v1141
    %v1147 = vmul.f32 %v1133, %v1143
    %1150 = vrot.lane.b32.xlu0 %v1146, 16
    %v1151 = vpop.permute.xlu0 %1150
    %1152 = vrot.lane.b32.xlu0 %v1147, 16
    %v1153 = vpop.permute.xlu0 %1152
    %v1156 = vadd.f32 %v1136, %v1151
    %v1157 = vadd.f32 %v1137, %v1153
    %v1158 = vtanh.pop %v1156
    %v1159 = vtanh.pop %v1157
    %1162 = vrot.lane.b32.xlu0 %v1158, 16
    %v1163 = vpop.permute.xlu0 %1162
    %1164 = vrot.lane.b32.xlu0 %v1159, 16
    %v1165 = vpop.permute.xlu0 %1164
    %v1168 = vmul.f32 %v1131, %v1163
    %v1169 = vmul.f32 %v1133, %v1165
    %1171 = vset.pattern.permute.xlu0 0
    %1172 = vperm.xlu0 %1171, %v1024
    %v1173 = vpop.permute.xlu0 %1172
    %1176 = vset.pattern.permute.xlu0 0
    %1177 = vperm.xlu0 %1176, %v1025
    %v1178 = vpop.permute.xlu0 %1177
    %v1180 = vmul.f32 %v1173, %v1168
    %v1181 = vmul.f32 %v1178, %v1169
    %v1182 = vmul.f32 %v1173, %v1156
    %v1183 = vmul.f32 %v1178, %v1157
    %v1184 = vsub.f32 1.0, %v1024
    %v1185 = vsub.f32 1.0, %v1025
    %1187 = vset.pattern.permute.xlu0 0
    %1188 = vperm.xlu0 %1187, %v1184
    %v1189 = vpop.permute.xlu0 %1188
    %1192 = vset.pattern.permute.xlu0 0
    %1193 = vperm.xlu0 %1192, %v1185
    %v1194 = vpop.permute.xlu0 %1193
    %v1196 = vmul.f32 %v1189, %v1000
    %v1197 = vmul.f32 %v1194, %v1001
    %v1198 = vadd.f32 %v1182, %v1196
    %v1199 = vadd.f32 %v1183, %v1197
    %v1200 = vmul.f32 %v1189, %v1004
    %v1201 = vmul.f32 %v1194, %v1005
    %v1202 = vadd.f32 %v1180, %v1200
    %v1203 = vadd.f32 %v1181, %v1201
    %1205 = vrot.lane.b32.xlu0 %v1180, 96
    %v1206 = vpop.permute.xlu0 %1205
    %1208 = vst.msk [vmem:[%s1016] sm:$0xff] %vm234, %v1206
    %1210 = vrot.lane.b32.xlu0 %v1181, 112
    %v1211 = vpop.permute.xlu0 %1210
    %1213 = vst.msk [vmem:[%s1010] sm:$0xff] %vm416, %v1211
    %v1214 = vld [vmem:[#allocation2 + $0x28] sm:$0xff]
    %v1215 = vld [vmem:[#allocation2 + $0x10] sm:$0xff]
    %1217 = vrot.lane.b32.xlu0 %v1215, 64
    %v1218 = vpop.permute.xlu0 %1217
    %v1220 = vld [vmem:[%s626] sm:$0xff]
    %v1221 = vld [vmem:[%s624] sm:$0xff]
    %v1222 = vpack.c.bf16 %v1202, %v1202
    %v1223 = vpack.c.bf16 %v1203, %v1203
    %1225 = vrot.lane.b32.xlu0 %v1222, 96
    %v1226 = vpop.permute.xlu0 %1225
    %v1228 = vsel %vm234, %v1226, 0
    %1230 = vmatprep.subr.bf16.mxu0 0
    %1231 = vmatpush1.bf16.msra.mxu0 %v232
    %1232 = vmatprep.subr.bf16.mxu0 0
    %1233 = vmatpush1.bf16.msra.mxu0 0
    %1234 = vmatprep.subr.bf16.mxu0 0
    %1235 = vmatpush1.bf16.msra.mxu0 0
    %1236 = vmatprep.subr.bf16.mxu0 0
    %1237 = vmatpush1.bf16.msra.mxu0 0
    %1238 = vmatprep.subr.bf16.mxu0 0
    %1239 = vmatpush1.bf16.msra.mxu0 0
    %1240 = vmatprep.subr.bf16.mxu0 0
    %1241 = vmatpush1.bf16.msra.mxu0 0
    %1242 = vmatprep.subr.bf16.mxu0 0
    %1243 = vmatpush1.bf16.msra.mxu0 0
    %1244 = vmatprep.subr.bf16.mxu0 0
    %1245 = vmatpush1.bf16.msra.mxu0 0
    %1246 = vmatprep.subr.bf16.mxu0 0
    %1247 = vmatpush1.bf16.msra.mxu0 0
    %1248 = vmatprep.subr.bf16.mxu0 0
    %1249 = vmatpush1.bf16.msra.mxu0 0
    %1250 = vmatprep.subr.bf16.mxu0 0
    %1251 = vmatpush1.bf16.msra.mxu0 0
    %1252 = vmatprep.subr.bf16.mxu0 0
    %1253 = vmatpush1.bf16.msra.mxu0 0
    %1254 = vmatprep.subr.bf16.mxu0 0
    %1255 = vmatpush1.bf16.msra.mxu0 0
    %1256 = vmatprep.subr.bf16.mxu0 0
    %1257 = vmatpush1.bf16.msra.mxu0 0
    %1258 = vmatprep.subr.bf16.mxu0 0
    %1259 = vmatpush1.bf16.msra.mxu0 0
    %1260 = vmatprep.subr.bf16.mxu0 0
    %1261 = vmatpush1.bf16.msra.mxu0 0
    %1262 = vmatprep.mubr.bf16.mxu0 0
    %1263 = vmatmul.mubr.bf16.gmra.mrb[0].mxu0 %v1228
    %v1264 = vpop.f32.mrb[0].mxu0
    %v1265 = vadd.f32 0.0, %v1264
    %v1266 = vpop.f32.mrb[0].mxu0
    %v1267 = vpop.f32.mrb[0].mxu0
    %v1268 = vpop.f32.mrb[0].mxu0
    %1269 = vdwg.mxu0
    %1271 = vrot.lane.b32.xlu0 %v1223, 96
    %v1272 = vpop.permute.xlu0 %1271
    %v1274 = vsel %vm234, %v1272, 0
    %1276 = vmatprep.subr.bf16.mxu0 0
    %1277 = vmatpush1.bf16.msra.mxu0 %v282
    %1278 = vmatprep.subr.bf16.mxu0 0
    %1279 = vmatpush1.bf16.msra.mxu0 0
    %1280 = vmatprep.subr.bf16.mxu0 0
    %1281 = vmatpush1.bf16.msra.mxu0 0
    %1282 = vmatprep.subr.bf16.mxu0 0
    %1283 = vmatpush1.bf16.msra.mxu0 0
    %1284 = vmatprep.subr.bf16.mxu0 0
    %1285 = vmatpush1.bf16.msra.mxu0 0
    %1286 = vmatprep.subr.bf16.mxu0 0
    %1287 = vmatpush1.bf16.msra.mxu0 0
    %1288 = vmatprep.subr.bf16.mxu0 0
    %1289 = vmatpush1.bf16.msra.mxu0 0
    %1290 = vmatprep.subr.bf16.mxu0 0
    %1291 = vmatpush1.bf16.msra.mxu0 0
    %1292 = vmatprep.subr.bf16.mxu0 0
    %1293 = vmatpush1.bf16.msra.mxu0 0
    %1294 = vmatprep.subr.bf16.mxu0 0
    %1295 = vmatpush1.bf16.msra.mxu0 0
    %1296 = vmatprep.subr.bf16.mxu0 0
    %1297 = vmatpush1.bf16.msra.mxu0 0
    %1298 = vmatprep.subr.bf16.mxu0 0
    %1299 = vmatpush1.bf16.msra.mxu0 0
    %1300 = vmatprep.subr.bf16.mxu0 0
    %1301 = vmatpush1.bf16.msra.mxu0 0
    %1302 = vmatprep.subr.bf16.mxu0 0
    %1303 = vmatpush1.bf16.msra.mxu0 0
    %1304 = vmatprep.subr.bf16.mxu0 0
    %1305 = vmatpush1.bf16.msra.mxu0 0
    %1306 = vmatprep.subr.bf16.mxu0 0
    %1307 = vmatpush1.bf16.msra.mxu0 0
    %1308 = vmatprep.mubr.bf16.mxu0 0
    %1309 = vmatmul.mubr.bf16.gmra.mrb[0].mxu0 %v1274
    %v1310 = vpop.f32.mrb[0].mxu0
    %v1311 = vadd.f32 0.0, %v1310
    %v1312 = vpop.f32.mrb[0].mxu0
    %v1313 = vpop.f32.mrb[0].mxu0
    %v1314 = vpop.f32.mrb[0].mxu0
    %1315 = vdwg.mxu0
    %v1316 = vadd.f32 %v1214, %v1265
    %v1317 = vadd.f32 %v1218, %v1311
    %v1318 = vxor.u32 %v1316, 2147483648
    %v1319 = vxor.u32 %v1317, 2147483648
    %v1320 = vmul.f32 %v1318, 1.442695
    %v1321 = vpow.pop %v1320
    %v1322 = vmul.f32 %v1319, 1.442695
    %v1323 = vpow.pop %v1322
    %v1324 = vadd.f32 %v1321, 1.0
    %v1325 = vadd.f32 %v1323, 1.0
    %v1326 = vrcp.pop %v1324
    %v1327 = vmul.f32 1.0, %v1326
    %v1328 = vrcp.pop %v1325
    %v1329 = vmul.f32 1.0, %v1328
    %v1330 = vtanh.pop %v1316
    %v1331 = vtanh.pop %v1317
    %v1332 = vmul.f32 %v1327, %v1198
    %v1333 = vmul.f32 %v1329, %v1199
    %1336 = vrot.lane.b32.xlu0 %v1330, 80
    %v1337 = vpop.permute.xlu0 %1336
    %1338 = vrot.lane.b32.xlu0 %v1331, 80
    %v1339 = vpop.permute.xlu0 %1338
    %v1342 = vmul.f32 %v1327, %v1337
    %v1343 = vmul.f32 %v1329, %v1339
    %1346 = vrot.lane.b32.xlu0 %v1342, 16
    %v1347 = vpop.permute.xlu0 %1346
    %1348 = vrot.lane.b32.xlu0 %v1343, 16
    %v1349 = vpop.permute.xlu0 %1348
    %v1352 = vadd.f32 %v1332, %v1347
    %v1353 = vadd.f32 %v1333, %v1349
    %v1354 = vtanh.pop %v1352
    %v1355 = vtanh.pop %v1353
    %1358 = vrot.lane.b32.xlu0 %v1354, 16
    %v1359 = vpop.permute.xlu0 %1358
    %1360 = vrot.lane.b32.xlu0 %v1355, 16
    %v1361 = vpop.permute.xlu0 %1360
    %v1364 = vmul.f32 %v1327, %v1359
    %v1365 = vmul.f32 %v1329, %v1361
    %1367 = vset.pattern.permute.xlu0 0
    %1368 = vperm.xlu0 %1367, %v1220
    %v1369 = vpop.permute.xlu0 %1368
    %1372 = vset.pattern.permute.xlu0 0
    %1373 = vperm.xlu0 %1372, %v1221
    %v1374 = vpop.permute.xlu0 %1373
    %v1376 = vmul.f32 %v1369, %v1364
    %v1377 = vmul.f32 %v1374, %v1365
    %v1378 = vmul.f32 %v1369, %v1352
    %v1379 = vmul.f32 %v1374, %v1353
    %v1380 = vsub.f32 1.0, %v1220
    %v1381 = vsub.f32 1.0, %v1221
    %1383 = vset.pattern.permute.xlu0 0
    %1384 = vperm.xlu0 %1383, %v1380
    %v1385 = vpop.permute.xlu0 %1384
    %1388 = vset.pattern.permute.xlu0 0
    %1389 = vperm.xlu0 %1388, %v1381
    %v1390 = vpop.permute.xlu0 %1389
    %v1392 = vmul.f32 %v1385, %v1198
    %v1393 = vmul.f32 %v1390, %v1199
    %v1394 = vadd.f32 %v1378, %v1392
    %v1395 = vadd.f32 %v1379, %v1393
    %v1396 = vmul.f32 %v1385, %v1202
    %v1397 = vmul.f32 %v1390, %v1203
    %v1398 = vadd.f32 %v1376, %v1396
    %v1399 = vadd.f32 %v1377, %v1397
    %1401 = vrot.lane.b32.xlu0 %v1376, 96
    %v1402 = vpop.permute.xlu0 %1401
    %1404 = vst.msk [vmem:[%s816] sm:$0xff] %vm234, %v1402
    %1406 = vrot.lane.b32.xlu0 %v1377, 112
    %v1407 = vpop.permute.xlu0 %1406
    %1409 = vst.msk [vmem:[%s810] sm:$0xff] %vm416, %v1407
    %v1410 = vld [vmem:[#allocation2 + $0x30] sm:$0xff]
    %v1411 = vld [vmem:[#allocation2 + $0x8] sm:$0xff]
    %1413 = vrot.lane.b32.xlu0 %v1411, 64
    %v1414 = vpop.permute.xlu0 %1413
    %v1416 = vld [vmem:[%s426] sm:$0xff]
    %v1417 = vld [vmem:[%s424] sm:$0xff]
    %v1418 = vpack.c.bf16 %v1398, %v1398
    %v1419 = vpack.c.bf16 %v1399, %v1399
    %1421 = vrot.lane.b32.xlu0 %v1418, 96
    %v1422 = vpop.permute.xlu0 %1421
    %v1424 = vsel %vm234, %v1422, 0
    %1426 = vmatprep.subr.bf16.mxu0 0
    %1427 = vmatpush1.bf16.msra.mxu0 %v232
    %1428 = vmatprep.subr.bf16.mxu0 0
    %1429 = vmatpush1.bf16.msra.mxu0 0
    %1430 = vmatprep.subr.bf16.mxu0 0
    %1431 = vmatpush1.bf16.msra.mxu0 0
    %1432 = vmatprep.subr.bf16.mxu0 0
    %1433 = vmatpush1.bf16.msra.mxu0 0
    %1434 = vmatprep.subr.bf16.mxu0 0
    %1435 = vmatpush1.bf16.msra.mxu0 0
    %1436 = vmatprep.subr.bf16.mxu0 0
    %1437 = vmatpush1.bf16.msra.mxu0 0
    %1438 = vmatprep.subr.bf16.mxu0 0
    %1439 = vmatpush1.bf16.msra.mxu0 0
    %1440 = vmatprep.subr.bf16.mxu0 0
    %1441 = vmatpush1.bf16.msra.mxu0 0
    %1442 = vmatprep.subr.bf16.mxu0 0
    %1443 = vmatpush1.bf16.msra.mxu0 0
    %1444 = vmatprep.subr.bf16.mxu0 0
    %1445 = vmatpush1.bf16.msra.mxu0 0
    %1446 = vmatprep.subr.bf16.mxu0 0
    %1447 = vmatpush1.bf16.msra.mxu0 0
    %1448 = vmatprep.subr.bf16.mxu0 0
    %1449 = vmatpush1.bf16.msra.mxu0 0
    %1450 = vmatprep.subr.bf16.mxu0 0
    %1451 = vmatpush1.bf16.msra.mxu0 0
    %1452 = vmatprep.subr.bf16.mxu0 0
    %1453 = vmatpush1.bf16.msra.mxu0 0
    %1454 = vmatprep.subr.bf16.mxu0 0
    %1455 = vmatpush1.bf16.msra.mxu0 0
    %1456 = vmatprep.subr.bf16.mxu0 0
    %1457 = vmatpush1.bf16.msra.mxu0 0
    %1458 = vmatprep.mubr.bf16.mxu0 0
    %1459 = vmatmul.mubr.bf16.gmra.mrb[0].mxu0 %v1424
    %v1460 = vpop.f32.mrb[0].mxu0
    %v1461 = vadd.f32 0.0, %v1460
    %v1462 = vpop.f32.mrb[0].mxu0
    %v1463 = vpop.f32.mrb[0].mxu0
    %v1464 = vpop.f32.mrb[0].mxu0
    %1465 = vdwg.mxu0
    %1467 = vrot.lane.b32.xlu0 %v1419, 96
    %v1468 = vpop.permute.xlu0 %1467
    %v1470 = vsel %vm234, %v1468, 0
    %1472 = vmatprep.subr.bf16.mxu0 0
    %1473 = vmatpush1.bf16.msra.mxu0 %v282
    %1474 = vmatprep.subr.bf16.mxu0 0
    %1475 = vmatpush1.bf16.msra.mxu0 0
    %1476 = vmatprep.subr.bf16.mxu0 0
    %1477 = vmatpush1.bf16.msra.mxu0 0
    %1478 = vmatprep.subr.bf16.mxu0 0
    %1479 = vmatpush1.bf16.msra.mxu0 0
    %1480 = vmatprep.subr.bf16.mxu0 0
    %1481 = vmatpush1.bf16.msra.mxu0 0
    %1482 = vmatprep.subr.bf16.mxu0 0
    %1483 = vmatpush1.bf16.msra.mxu0 0
    %1484 = vmatprep.subr.bf16.mxu0 0
    %1485 = vmatpush1.bf16.msra.mxu0 0
    %1486 = vmatprep.subr.bf16.mxu0 0
    %1487 = vmatpush1.bf16.msra.mxu0 0
    %1488 = vmatprep.subr.bf16.mxu0 0
    %1489 = vmatpush1.bf16.msra.mxu0 0
    %1490 = vmatprep.subr.bf16.mxu0 0
    %1491 = vmatpush1.bf16.msra.mxu0 0
    %1492 = vmatprep.subr.bf16.mxu0 0
    %1493 = vmatpush1.bf16.msra.mxu0 0
    %1494 = vmatprep.subr.bf16.mxu0 0
    %1495 = vmatpush1.bf16.msra.mxu0 0
    %1496 = vmatprep.subr.bf16.mxu0 0
    %1497 = vmatpush1.bf16.msra.mxu0 0
    %1498 = vmatprep.subr.bf16.mxu0 0
    %1499 = vmatpush1.bf16.msra.mxu0 0
    %1500 = vmatprep.subr.bf16.mxu0 0
    %1501 = vmatpush1.bf16.msra.mxu0 0
    %1502 = vmatprep.subr.bf16.mxu0 0
    %1503 = vmatpush1.bf16.msra.mxu0 0
    %1504 = vmatprep.mubr.bf16.mxu0 0
    %1505 = vmatmul.mubr.bf16.gmra.mrb[0].mxu0 %v1470
    %v1506 = vpop.f32.mrb[0].mxu0
    %v1507 = vadd.f32 0.0, %v1506
    %v1508 = vpop.f32.mrb[0].mxu0
    %v1509 = vpop.f32.mrb[0].mxu0
    %v1510 = vpop.f32.mrb[0].mxu0
    %1511 = vdwg.mxu0
    %v1512 = vadd.f32 %v1410, %v1461
    %v1513 = vadd.f32 %v1414, %v1507
    %v1514 = vxor.u32 %v1512, 2147483648
    %v1515 = vxor.u32 %v1513, 2147483648
    %v1516 = vmul.f32 %v1514, 1.442695
    %v1517 = vpow.pop %v1516
    %v1518 = vmul.f32 %v1515, 1.442695
    %v1519 = vpow.pop %v1518
    %v1520 = vadd.f32 %v1517, 1.0
    %v1521 = vadd.f32 %v1519, 1.0
    %v1522 = vrcp.pop %v1520
    %v1523 = vmul.f32 1.0, %v1522
    %v1524 = vrcp.pop %v1521
    %v1525 = vmul.f32 1.0, %v1524
    %v1526 = vtanh.pop %v1512
    %v1527 = vtanh.pop %v1513
    %v1528 = vmul.f32 %v1523, %v1394
    %v1529 = vmul.f32 %v1525, %v1395
    %1532 = vrot.lane.b32.xlu0 %v1526, 80
    %v1533 = vpop.permute.xlu0 %1532
    %1534 = vrot.lane.b32.xlu0 %v1527, 80
    %v1535 = vpop.permute.xlu0 %1534
    %v1538 = vmul.f32 %v1523, %v1533
    %v1539 = vmul.f32 %v1525, %v1535
    %1542 = vrot.lane.b32.xlu0 %v1538, 16
    %v1543 = vpop.permute.xlu0 %1542
    %1544 = vrot.lane.b32.xlu0 %v1539, 16
    %v1545 = vpop.permute.xlu0 %1544
    %v1548 = vadd.f32 %v1528, %v1543
    %v1549 = vadd.f32 %v1529, %v1545
    %v1550 = vtanh.pop %v1548
    %v1551 = vtanh.pop %v1549
    %1554 = vrot.lane.b32.xlu0 %v1550, 16
    %v1555 = vpop.permute.xlu0 %1554
    %1556 = vrot.lane.b32.xlu0 %v1551, 16
    %v1557 = vpop.permute.xlu0 %1556
    %v1560 = vmul.f32 %v1523, %v1555
    %v1561 = vmul.f32 %v1525, %v1557
    %1563 = vset.pattern.permute.xlu0 0
    %1564 = vperm.xlu0 %1563, %v1416
    %v1565 = vpop.permute.xlu0 %1564
    %1568 = vset.pattern.permute.xlu0 0
    %1569 = vperm.xlu0 %1568, %v1417
    %v1570 = vpop.permute.xlu0 %1569
    %v1572 = vmul.f32 %v1565, %v1560
    %v1573 = vmul.f32 %v1570, %v1561
    %v1574 = vmul.f32 %v1565, %v1548
    %v1575 = vmul.f32 %v1570, %v1549
    %v1576 = vsub.f32 1.0, %v1416
    %v1577 = vsub.f32 1.0, %v1417
    %1579 = vset.pattern.permute.xlu0 0
    %1580 = vperm.xlu0 %1579, %v1576
    %v1581 = vpop.permute.xlu0 %1580
    %1584 = vset.pattern.permute.xlu0 0
    %1585 = vperm.xlu0 %1584, %v1577
    %v1586 = vpop.permute.xlu0 %1585
    %v1588 = vmul.f32 %v1581, %v1394
    %v1589 = vmul.f32 %v1586, %v1395
    %v1590 = vadd.f32 %v1574, %v1588
    %v1591 = vadd.f32 %v1575, %v1589
    %v1592 = vmul.f32 %v1581, %v1398
    %v1593 = vmul.f32 %v1586, %v1399
    %v1594 = vadd.f32 %v1572, %v1592
    %v1595 = vadd.f32 %v1573, %v1593
    %1597 = vrot.lane.b32.xlu0 %v1572, 96
    %v1598 = vpop.permute.xlu0 %1597
    %1600 = vst.msk [vmem:[%s616] sm:$0xff] %vm234, %v1598
    %1602 = vrot.lane.b32.xlu0 %v1573, 112
    %v1603 = vpop.permute.xlu0 %1602
    %1605 = vst.msk [vmem:[%s610] sm:$0xff] %vm416, %v1603
    %v1606 = vld [vmem:[#allocation2 + $0x38] sm:$0xff]
    %v1607 = vld [vmem:[#allocation2] sm:$0xff]
    %1609 = vrot.lane.b32.xlu0 %v1607, 64
    %v1610 = vpop.permute.xlu0 %1609
    %v1612 = vld [vmem:[%s226] sm:$0xff]
    %v1613 = vld [vmem:[#allocation6] sm:$0xff]
    %v1614 = vpack.c.bf16 %v1594, %v1594
    %v1615 = vpack.c.bf16 %v1595, %v1595
    %1617 = vrot.lane.b32.xlu0 %v1614, 96
    %v1618 = vpop.permute.xlu0 %1617
    %v1620 = vsel %vm234, %v1618, 0
    %1622 = vmatprep.subr.bf16.mxu0 0
    %1623 = vmatpush1.bf16.msra.mxu0 %v232
    %1624 = vmatprep.subr.bf16.mxu0 0
    %1625 = vmatpush1.bf16.msra.mxu0 0
    %1626 = vmatprep.subr.bf16.mxu0 0
    %1627 = vmatpush1.bf16.msra.mxu0 0
    %1628 = vmatprep.subr.bf16.mxu0 0
    %1629 = vmatpush1.bf16.msra.mxu0 0
    %1630 = vmatprep.subr.bf16.mxu0 0
    %1631 = vmatpush1.bf16.msra.mxu0 0
    %1632 = vmatprep.subr.bf16.mxu0 0
    %1633 = vmatpush1.bf16.msra.mxu0 0
    %1634 = vmatprep.subr.bf16.mxu0 0
    %1635 = vmatpush1.bf16.msra.mxu0 0
    %1636 = vmatprep.subr.bf16.mxu0 0
    %1637 = vmatpush1.bf16.msra.mxu0 0
    %1638 = vmatprep.subr.bf16.mxu0 0
    %1639 = vmatpush1.bf16.msra.mxu0 0
    %1640 = vmatprep.subr.bf16.mxu0 0
    %1641 = vmatpush1.bf16.msra.mxu0 0
    %1642 = vmatprep.subr.bf16.mxu0 0
    %1643 = vmatpush1.bf16.msra.mxu0 0
    %1644 = vmatprep.subr.bf16.mxu0 0
    %1645 = vmatpush1.bf16.msra.mxu0 0
    %1646 = vmatprep.subr.bf16.mxu0 0
    %1647 = vmatpush1.bf16.msra.mxu0 0
    %1648 = vmatprep.subr.bf16.mxu0 0
    %1649 = vmatpush1.bf16.msra.mxu0 0
    %1650 = vmatprep.subr.bf16.mxu0 0
    %1651 = vmatpush1.bf16.msra.mxu0 0
    %1652 = vmatprep.subr.bf16.mxu0 0
    %1653 = vmatpush1.bf16.msra.mxu0 0
    %1654 = vmatprep.mubr.bf16.mxu0 0
    %1655 = vmatmul.mubr.bf16.gmra.mrb[0].mxu0 %v1620
    %v1656 = vpop.f32.mrb[0].mxu0
    %v1657 = vadd.f32 0.0, %v1656
    %v1658 = vpop.f32.mrb[0].mxu0
    %v1659 = vpop.f32.mrb[0].mxu0
    %v1660 = vpop.f32.mrb[0].mxu0
    %1661 = vdwg.mxu0
    %1663 = vrot.lane.b32.xlu0 %v1615, 96
    %v1664 = vpop.permute.xlu0 %1663
    %v1666 = vsel %vm234, %v1664, 0
    %1668 = vmatprep.subr.bf16.mxu0 0
    %1669 = vmatpush1.bf16.msra.mxu0 %v282
    %1670 = vmatprep.subr.bf16.mxu0 0
    %1671 = vmatpush1.bf16.msra.mxu0 0
    %1672 = vmatprep.subr.bf16.mxu0 0
    %1673 = vmatpush1.bf16.msra.mxu0 0
    %1674 = vmatprep.subr.bf16.mxu0 0
    %1675 = vmatpush1.bf16.msra.mxu0 0
    %1676 = vmatprep.subr.bf16.mxu0 0
    %1677 = vmatpush1.bf16.msra.mxu0 0
    %1678 = vmatprep.subr.bf16.mxu0 0
    %1679 = vmatpush1.bf16.msra.mxu0 0
    %1680 = vmatprep.subr.bf16.mxu0 0
    %1681 = vmatpush1.bf16.msra.mxu0 0
    %1682 = vmatprep.subr.bf16.mxu0 0
    %1683 = vmatpush1.bf16.msra.mxu0 0
    %1684 = vmatprep.subr.bf16.mxu0 0
    %1685 = vmatpush1.bf16.msra.mxu0 0
    %1686 = vmatprep.subr.bf16.mxu0 0
    %1687 = vmatpush1.bf16.msra.mxu0 0
    %1688 = vmatprep.subr.bf16.mxu0 0
    %1689 = vmatpush1.bf16.msra.mxu0 0
    %1690 = vmatprep.subr.bf16.mxu0 0
    %1691 = vmatpush1.bf16.msra.mxu0 0
    %1692 = vmatprep.subr.bf16.mxu0 0
    %1693 = vmatpush1.bf16.msra.mxu0 0
    %1694 = vmatprep.subr.bf16.mxu0 0
    %1695 = vmatpush1.bf16.msra.mxu0 0
    %1696 = vmatprep.subr.bf16.mxu0 0
    %1697 = vmatpush1.bf16.msra.mxu0 0
    %1698 = vmatprep.subr.bf16.mxu0 0
    %1699 = vmatpush1.bf16.msra.mxu0 0
    %1700 = vmatprep.mubr.bf16.mxu0 0
    %1701 = vmatmul.mubr.bf16.gmra.mrb[0].mxu0 %v1666
    %v1702 = vpop.f32.mrb[0].mxu0
    %v1703 = vadd.f32 0.0, %v1702
    %v1704 = vpop.f32.mrb[0].mxu0
    %v1705 = vpop.f32.mrb[0].mxu0
    %v1706 = vpop.f32.mrb[0].mxu0
    %1707 = vdwg.mxu0
    %v1708 = vadd.f32 %v1606, %v1657
    %v1709 = vadd.f32 %v1610, %v1703
    %v1710 = vxor.u32 %v1708, 2147483648
    %v1711 = vxor.u32 %v1709, 2147483648
    %v1712 = vmul.f32 %v1710, 1.442695
    %v1713 = vpow.pop %v1712
    %v1714 = vmul.f32 %v1711, 1.442695
    %v1715 = vpow.pop %v1714
    %v1716 = vadd.f32 %v1713, 1.0
    %v1717 = vadd.f32 %v1715, 1.0
    %v1718 = vrcp.pop %v1716
    %v1719 = vmul.f32 1.0, %v1718
    %v1720 = vrcp.pop %v1717
    %v1721 = vmul.f32 1.0, %v1720
    %v1722 = vtanh.pop %v1708
    %v1723 = vtanh.pop %v1709
    %v1724 = vmul.f32 %v1719, %v1590
    %v1725 = vmul.f32 %v1721, %v1591
    %1728 = vrot.lane.b32.xlu0 %v1722, 80
    %v1729 = vpop.permute.xlu0 %1728
    %1730 = vrot.lane.b32.xlu0 %v1723, 80
    %v1731 = vpop.permute.xlu0 %1730
    %v1734 = vmul.f32 %v1719, %v1729
    %v1735 = vmul.f32 %v1721, %v1731
    %1738 = vrot.lane.b32.xlu0 %v1734, 16
    %v1739 = vpop.permute.xlu0 %1738
    %1740 = vrot.lane.b32.xlu0 %v1735, 16
    %v1741 = vpop.permute.xlu0 %1740
    %v1744 = vadd.f32 %v1724, %v1739
    %v1745 = vadd.f32 %v1725, %v1741
    %v1746 = vtanh.pop %v1744
    %v1747 = vtanh.pop %v1745
    %1750 = vrot.lane.b32.xlu0 %v1746, 16
    %v1751 = vpop.permute.xlu0 %1750
    %1752 = vrot.lane.b32.xlu0 %v1747, 16
    %v1753 = vpop.permute.xlu0 %1752
    %v1756 = vmul.f32 %v1719, %v1751
    %v1757 = vmul.f32 %v1721, %v1753
    %1759 = vset.pattern.permute.xlu0 0
    %1760 = vperm.xlu0 %1759, %v1612
    %v1761 = vpop.permute.xlu0 %1760
    %1764 = vset.pattern.permute.xlu0 0
    %1765 = vperm.xlu0 %1764, %v1613
    %v1766 = vpop.permute.xlu0 %1765
    %v1768 = vmul.f32 %v1761, %v1756
    %v1769 = vmul.f32 %v1766, %v1757
    %v1770 = vmul.f32 %v1761, %v1744
    %v1771 = vmul.f32 %v1766, %v1745
    %v1772 = vsub.f32 1.0, %v1612
    %v1773 = vsub.f32 1.0, %v1613
    %1775 = vset.pattern.permute.xlu0 0
    %1776 = vperm.xlu0 %1775, %v1772
    %v1777 = vpop.permute.xlu0 %1776
    %1780 = vset.pattern.permute.xlu0 0
    %1781 = vperm.xlu0 %1780, %v1773
    %v1782 = vpop.permute.xlu0 %1781
    %v1784 = vmul.f32 %v1777, %v1590
    %v1785 = vmul.f32 %v1782, %v1591
    %v1786 = vadd.f32 %v1770, %v1784
    %v1787 = vadd.f32 %v1771, %v1785
    %v1788 = vmul.f32 %v1777, %v1594
    %v1789 = vmul.f32 %v1782, %v1595
    %v1790 = vadd.f32 %v1768, %v1788
    %v1791 = vadd.f32 %v1769, %v1789
    %1793 = vrot.lane.b32.xlu0 %v1768, 96
    %v1794 = vpop.permute.xlu0 %1793
    %1796 = vst.msk [vmem:[%s415] sm:$0xff] %vm234, %v1794
    %1798 = vrot.lane.b32.xlu0 %v1769, 112
    %v1799 = vpop.permute.xlu0 %1798
    %1801 = vst.msk [vmem:[#allocation12] sm:$0xff] %vm416, %v1799
    %1803 = vrot.lane.b32.xlu0 %v1790, 96
    %v1804 = vpop.permute.xlu0 %1803
    %1806 = vst.msk [vmem:[#allocation13] sm:$0xff] %vm234, %v1804
    %1808 = vrot.lane.b32.xlu0 %v1791, 112
    %v1809 = vpop.permute.xlu0 %1808
    %1811 = vst.msk [vmem:[#allocation13] sm:$0xff] %vm416, %v1809
    %1813 = vrot.lane.b32.xlu0 %v1786, 112
    %v1814 = vpop.permute.xlu0 %1813
    %1816 = vst.msk [vmem:[#allocation15] sm:$0xff] %vm234, %v1814
    %1817 = vst.msk [vmem:[#allocation15] sm:$0xff] %vm416, %v1787
    %v1818 = vld [vmem:[#allocation12] sm:$0xff]
    %v1819 = vld [vmem:[#allocation12 + $0x8] sm:$0xff]
    %v1820 = vld [vmem:[#allocation12 + $0x10] sm:$0xff]
    %v1821 = vld [vmem:[#allocation12 + $0x18] sm:$0xff]
    %v1822 = vld [vmem:[#allocation12 + $0x20] sm:$0xff]
    %v1823 = vld [vmem:[#allocation12 + $0x28] sm:$0xff]
    %v1824 = vld [vmem:[#allocation12 + $0x30] sm:$0xff]
    %v1825 = vld [vmem:[#allocation12 + $0x38] sm:$0xff]
    %v1826 = vpack.c.bf16 %v1819, %v1818
    %v1827 = vpack.c.bf16 %v1821, %v1820
    %v1828 = vpack.c.bf16 %v1823, %v1822
    %v1829 = vpack.c.bf16 %v1825, %v1824
    %s1830 = scalar_lea.vmem [#allocation8], 16
    %v1831 = vld [vmem:[%s1830] sm:$0xf]
    %v1832 = vld [vmem:[%s1830 + $0x4] sm:$0xf]
    %v1833 = vld [vmem:[%s1830 + $0x8] sm:$0xf]
    %v1834 = vld [vmem:[%s1830 + $0xc] sm:$0xf]
    %s1835 = scalar_lea.vmem [#allocation11], 1
    %v1836 = vld [vmem:[%s1835] sm:$0x1]
    %v1838 = vlaneseq
    %v1839 = vshrl.u32 %v1838, 7
    %v1840 = vsub.s32 0, %v1839
    %v1841 = vrot.slane %v1836, %v1840
    %v1847 = vunpack.c.l.b16 %v1831
    %v1848 = vunpack.c.l.b16 %v1832
    %v1849 = vunpack.c.l.b16 %v1833
    %v1850 = vunpack.c.l.b16 %v1834
    %v1851 = vpack.c.b16 %v1848, %v1847
    %v1852 = vpack.c.b16 %v1850, %v1849
    %v1856 = vsel %vm129, %v1826, 0
    %v1859 = vsel %vm129, %v1827, 0
    %v1862 = vsel %vm129, %v1828, 0
    %v1865 = vsel %vm129, %v1829, 0
    %1867 = vmatprep.subr.bf16.mxu0 0
    %1868 = vmatpush1.bf16.msra.mxu0 %v1851
    %1869 = vmatprep.subr.bf16.mxu0 0
    %1870 = vmatpush1.bf16.msra.mxu0 %v1852
    %1871 = vmatprep.subr.bf16.mxu0 0
    %1872 = vmatpush1.bf16.msra.mxu0 0
    %1873 = vmatprep.subr.bf16.mxu0 0
    %1874 = vmatpush1.bf16.msra.mxu0 0
    %1875 = vmatprep.subr.bf16.mxu0 0
    %1876 = vmatpush1.bf16.msra.mxu0 0
    %1877 = vmatprep.subr.bf16.mxu0 0
    %1878 = vmatpush1.bf16.msra.mxu0 0
    %1879 = vmatprep.subr.bf16.mxu0 0
    %1880 = vmatpush1.bf16.msra.mxu0 0
    %1881 = vmatprep.subr.bf16.mxu0 0
    %1882 = vmatpush1.bf16.msra.mxu0 0
    %1883 = vmatprep.subr.bf16.mxu0 0
    %1884 = vmatpush1.bf16.msra.mxu0 0
    %1885 = vmatprep.subr.bf16.mxu0 0
    %1886 = vmatpush1.bf16.msra.mxu0 0
    %1887 = vmatprep.subr.bf16.mxu0 0
    %1888 = vmatpush1.bf16.msra.mxu0 0
    %1889 = vmatprep.subr.bf16.mxu0 0
    %1890 = vmatpush1.bf16.msra.mxu0 0
    %1891 = vmatprep.subr.bf16.mxu0 0
    %1892 = vmatpush1.bf16.msra.mxu0 0
    %1893 = vmatprep.subr.bf16.mxu0 0
    %1894 = vmatpush1.bf16.msra.mxu0 0
    %1895 = vmatprep.subr.bf16.mxu0 0
    %1896 = vmatpush1.bf16.msra.mxu0 0
    %1897 = vmatprep.subr.bf16.mxu0 0
    %1898 = vmatpush1.bf16.msra.mxu0 0
    %1899 = vmatprep.mubr.bf16.mxu0 0
    %1900 = vmatmul.mubr.bf16.gmra.mrb[0].mxu0 %v1856
    %v1901 = vpop.f32.mrb[0].mxu0
    %v1902 = vadd.f32 %v1841, %v1901
    %v1903 = vpop.f32.mrb[0].mxu0
    %v1904 = vpop.f32.mrb[0].mxu0
    %v1905 = vadd.f32 %v1841, %v1904
    %v1906 = vpop.f32.mrb[0].mxu0
    %1907 = vmatprep.mubr.bf16.mxu0 0
    %1908 = vmatmul.mubr.bf16.gmra.mrb[0].mxu0 %v1859
    %v1909 = vpop.f32.mrb[0].mxu0
    %v1910 = vadd.f32 %v1841, %v1909
    %v1911 = vpop.f32.mrb[0].mxu0
    %v1912 = vpop.f32.mrb[0].mxu0
    %v1913 = vadd.f32 %v1841, %v1912
    %v1914 = vpop.f32.mrb[0].mxu0
    %1915 = vmatprep.mubr.bf16.mxu0 0
    %1916 = vmatmul.mubr.bf16.gmra.mrb[0].mxu0 %v1862
    %v1917 = vpop.f32.mrb[0].mxu0
    %v1918 = vadd.f32 %v1841, %v1917
    %v1919 = vpop.f32.mrb[0].mxu0
    %v1920 = vpop.f32.mrb[0].mxu0
    %v1921 = vadd.f32 %v1841, %v1920
    %v1922 = vpop.f32.mrb[0].mxu0
    %1923 = vmatprep.mubr.bf16.mxu0 0
    %1924 = vmatmul.mubr.bf16.gmra.mrb[0].mxu0 %v1865
    %v1925 = vpop.f32.mrb[0].mxu0
    %v1926 = vadd.f32 %v1841, %v1925
    %v1927 = vpop.f32.mrb[0].mxu0
    %v1928 = vpop.f32.mrb[0].mxu0
    %v1929 = vadd.f32 %v1841, %v1928
    %v1930 = vpop.f32.mrb[0].mxu0
    %1931 = vdwg.mxu0
    %1932 = vst [vmem:[#allocation2] sm:$0xff] %v1902
    %1933 = vst [vmem:[#allocation2 + $0x8] sm:$0xff] %v1905
    %1934 = vst [vmem:[#allocation2 + $0x10] sm:$0xff] %v1910
    %1935 = vst [vmem:[#allocation2 + $0x18] sm:$0xff] %v1913
    %1936 = vst [vmem:[#allocation2 + $0x20] sm:$0xff] %v1918
    %1937 = vst [vmem:[#allocation2 + $0x28] sm:$0xff] %v1921
    %1938 = vst [vmem:[#allocation2 + $0x30] sm:$0xff] %v1926
    %1939 = vst [vmem:[#allocation2 + $0x38] sm:$0xff] %v1929
    %s1940 = scalar_lea.vmem [#allocation9], 16
    %v1941 = vld [vmem:[%s1940] sm:$0xf]
    %v1942 = vld [vmem:[%s1940 + $0x4] sm:$0xf]
    %v1943 = vld [vmem:[%s1940 + $0x8] sm:$0xf]
    %v1944 = vld [vmem:[%s1940 + $0xc] sm:$0xf]
    %v1945 = vld [vmem:[#allocation2] sm:$0xff]
    %v1946 = vld [vmem:[#allocation2 + $0x38] sm:$0xff]
    %1948 = vrot.lane.b32.xlu0 %v1946, 64
    %v1949 = vpop.permute.xlu0 %1948
    %v1951 = vld [vmem:[#allocation6] sm:$0xff]
    %v1952 = vld [vmem:[%s226] sm:$0xff]
    %v1955 = vunpack.c.l.b16 %v1941
    %v1956 = vunpack.c.l.b16 %v1942
    %v1957 = vpack.c.b16 %v1956, %v1955
    %1959 = vmatprep.subr.bf16.mxu0 0
    %1960 = vmatpush1.bf16.msra.mxu0 %v1957
    %1961 = vmatprep.subr.bf16.mxu0 0
    %1962 = vmatpush1.bf16.msra.mxu0 0
    %1963 = vmatprep.subr.bf16.mxu0 0
    %1964 = vmatpush1.bf16.msra.mxu0 0
    %1965 = vmatprep.subr.bf16.mxu0 0
    %1966 = vmatpush1.bf16.msra.mxu0 0
    %1967 = vmatprep.subr.bf16.mxu0 0
    %1968 = vmatpush1.bf16.msra.mxu0 0
    %1969 = vmatprep.subr.bf16.mxu0 0
    %1970 = vmatpush1.bf16.msra.mxu0 0
    %1971 = vmatprep.subr.bf16.mxu0 0
    %1972 = vmatpush1.bf16.msra.mxu0 0
    %1973 = vmatprep.subr.bf16.mxu0 0
    %1974 = vmatpush1.bf16.msra.mxu0 0
    %1975 = vmatprep.subr.bf16.mxu0 0
    %1976 = vmatpush1.bf16.msra.mxu0 0
    %1977 = vmatprep.subr.bf16.mxu0 0
    %1978 = vmatpush1.bf16.msra.mxu0 0
    %1979 = vmatprep.subr.bf16.mxu0 0
    %1980 = vmatpush1.bf16.msra.mxu0 0
    %1981 = vmatprep.subr.bf16.mxu0 0
    %1982 = vmatpush1.bf16.msra.mxu0 0
    %1983 = vmatprep.subr.bf16.mxu0 0
    %1984 = vmatpush1.bf16.msra.mxu0 0
    %1985 = vmatprep.subr.bf16.mxu0 0
    %1986 = vmatpush1.bf16.msra.mxu0 0
    %1987 = vmatprep.subr.bf16.mxu0 0
    %1988 = vmatpush1.bf16.msra.mxu0 0
    %1989 = vmatprep.subr.bf16.mxu0 0
    %1990 = vmatpush1.bf16.msra.mxu0 0
    %1991 = vmatprep.mubr.bf16.mxu0 0
    %1992 = vmatmul.mubr.bf16.gmra.mrb[0].mxu0 %v236
    %v1993 = vpop.f32.mrb[0].mxu0
    %v1994 = vadd.f32 0.0, %v1993
    %v1995 = vpop.f32.mrb[0].mxu0
    %v1996 = vpop.f32.mrb[0].mxu0
    %v1997 = vpop.f32.mrb[0].mxu0
    %1998 = vdwg.mxu0
    %v2001 = vunpack.c.l.b16 %v1943
    %v2002 = vunpack.c.l.b16 %v1944
    %v2003 = vpack.c.b16 %v2002, %v2001
    %2005 = vmatprep.subr.bf16.mxu0 0
    %2006 = vmatpush1.bf16.msra.mxu0 %v2003
    %2007 = vmatprep.subr.bf16.mxu0 0
    %2008 = vmatpush1.bf16.msra.mxu0 0
    %2009 = vmatprep.subr.bf16.mxu0 0
    %2010 = vmatpush1.bf16.msra.mxu0 0
    %2011 = vmatprep.subr.bf16.mxu0 0
    %2012 = vmatpush1.bf16.msra.mxu0 0
    %2013 = vmatprep.subr.bf16.mxu0 0
    %2014 = vmatpush1.bf16.msra.mxu0 0
    %2015 = vmatprep.subr.bf16.mxu0 0
    %2016 = vmatpush1.bf16.msra.mxu0 0
    %2017 = vmatprep.subr.bf16.mxu0 0
    %2018 = vmatpush1.bf16.msra.mxu0 0
    %2019 = vmatprep.subr.bf16.mxu0 0
    %2020 = vmatpush1.bf16.msra.mxu0 0
    %2021 = vmatprep.subr.bf16.mxu0 0
    %2022 = vmatpush1.bf16.msra.mxu0 0
    %2023 = vmatprep.subr.bf16.mxu0 0
    %2024 = vmatpush1.bf16.msra.mxu0 0
    %2025 = vmatprep.subr.bf16.mxu0 0
    %2026 = vmatpush1.bf16.msra.mxu0 0
    %2027 = vmatprep.subr.bf16.mxu0 0
    %2028 = vmatpush1.bf16.msra.mxu0 0
    %2029 = vmatprep.subr.bf16.mxu0 0
    %2030 = vmatpush1.bf16.msra.mxu0 0
    %2031 = vmatprep.subr.bf16.mxu0 0
    %2032 = vmatpush1.bf16.msra.mxu0 0
    %2033 = vmatprep.subr.bf16.mxu0 0
    %2034 = vmatpush1.bf16.msra.mxu0 0
    %2035 = vmatprep.subr.bf16.mxu0 0
    %2036 = vmatpush1.bf16.msra.mxu0 0
    %2037 = vmatprep.mubr.bf16.mxu0 0
    %2038 = vmatmul.mubr.bf16.gmra.mrb[0].mxu0 %v236
    %v2039 = vpop.f32.mrb[0].mxu0
    %v2040 = vadd.f32 0.0, %v2039
    %v2041 = vpop.f32.mrb[0].mxu0
    %v2042 = vpop.f32.mrb[0].mxu0
    %v2043 = vpop.f32.mrb[0].mxu0
    %2044 = vdwg.mxu0
    %v2045 = vadd.f32 %v1945, %v1994
    %v2046 = vadd.f32 %v1949, %v2040
    %v2047 = vxor.u32 %v2045, 2147483648
    %v2048 = vxor.u32 %v2046, 2147483648
    %v2049 = vmul.f32 %v2047, 1.442695
    %v2050 = vpow.pop %v2049
    %v2051 = vmul.f32 %v2048, 1.442695
    %v2052 = vpow.pop %v2051
    %v2053 = vadd.f32 %v2050, 1.0
    %v2054 = vadd.f32 %v2052, 1.0
    %v2055 = vrcp.pop %v2053
    %v2056 = vmul.f32 1.0, %v2055
    %v2057 = vrcp.pop %v2054
    %v2058 = vmul.f32 1.0, %v2057
    %v2059 = vtanh.pop %v2045
    %v2060 = vtanh.pop %v2046
    %v2061 = vmul.f32 %v2056, 0.0
    %v2062 = vmul.f32 %v2058, 0.0
    %2065 = vrot.lane.b32.xlu0 %v2059, 80
    %v2066 = vpop.permute.xlu0 %2065
    %2067 = vrot.lane.b32.xlu0 %v2060, 80
    %v2068 = vpop.permute.xlu0 %2067
    %v2071 = vmul.f32 %v2056, %v2066
    %v2072 = vmul.f32 %v2058, %v2068
    %2075 = vrot.lane.b32.xlu0 %v2071, 16
    %v2076 = vpop.permute.xlu0 %2075
    %2077 = vrot.lane.b32.xlu0 %v2072, 16
    %v2078 = vpop.permute.xlu0 %2077
    %v2081 = vadd.f32 %v2061, %v2076
    %v2082 = vadd.f32 %v2062, %v2078
    %v2083 = vtanh.pop %v2081
    %v2084 = vtanh.pop %v2082
    %2087 = vrot.lane.b32.xlu0 %v2083, 16
    %v2088 = vpop.permute.xlu0 %2087
    %2089 = vrot.lane.b32.xlu0 %v2084, 16
    %v2090 = vpop.permute.xlu0 %2089
    %v2093 = vmul.f32 %v2056, %v2088
    %v2094 = vmul.f32 %v2058, %v2090
    %2096 = vset.pattern.permute.xlu0 0
    %2097 = vperm.xlu0 %2096, %v1951
    %v2098 = vpop.permute.xlu0 %2097
    %2101 = vset.pattern.permute.xlu0 0
    %2102 = vperm.xlu0 %2101, %v1952
    %v2103 = vpop.permute.xlu0 %2102
    %v2105 = vmul.f32 %v2098, %v2093
    %v2106 = vmul.f32 %v2103, %v2094
    %v2107 = vmul.f32 %v2098, %v2081
    %v2108 = vmul.f32 %v2103, %v2082
    %v2109 = vsub.f32 1.0, %v1951
    %v2110 = vsub.f32 1.0, %v1952
    %2112 = vset.pattern.permute.xlu0 0
    %2113 = vperm.xlu0 %2112, %v2109
    %v2114 = vpop.permute.xlu0 %2113
    %2117 = vset.pattern.permute.xlu0 0
    %2118 = vperm.xlu0 %2117, %v2110
    %v2119 = vpop.permute.xlu0 %2118
    %v2121 = vmul.f32 %v2114, 0.0
    %v2122 = vmul.f32 %v2119, 0.0
    %v2123 = vadd.f32 %v2107, %v2121
    %v2124 = vadd.f32 %v2108, %v2122
    %v2125 = vadd.f32 %v2105, %v2121
    %v2126 = vadd.f32 %v2106, %v2122
    %2128 = vrot.lane.b32.xlu0 %v2105, 96
    %v2129 = vpop.permute.xlu0 %2128
    %2131 = vst.msk [vmem:[#allocation12] sm:$0xff] %vm234, %v2129
    %2133 = vrot.lane.b32.xlu0 %v2106, 112
    %v2134 = vpop.permute.xlu0 %2133
    %2136 = vst.msk [vmem:[%s415] sm:$0xff] %vm416, %v2134
    %v2137 = vld [vmem:[#allocation2 + $0x8] sm:$0xff]
    %v2138 = vld [vmem:[#allocation2 + $0x30] sm:$0xff]
    %2140 = vrot.lane.b32.xlu0 %v2138, 64
    %v2141 = vpop.permute.xlu0 %2140
    %v2143 = vld [vmem:[%s424] sm:$0xff]
    %v2144 = vld [vmem:[%s426] sm:$0xff]
    %v2145 = vpack.c.bf16 %v2125, %v2125
    %v2146 = vpack.c.bf16 %v2126, %v2126
    %2148 = vrot.lane.b32.xlu0 %v2145, 96
    %v2149 = vpop.permute.xlu0 %2148
    %v2151 = vsel %vm234, %v2149, 0
    %2153 = vmatprep.subr.bf16.mxu0 0
    %2154 = vmatpush1.bf16.msra.mxu0 %v1957
    %2155 = vmatprep.subr.bf16.mxu0 0
    %2156 = vmatpush1.bf16.msra.mxu0 0
    %2157 = vmatprep.subr.bf16.mxu0 0
    %2158 = vmatpush1.bf16.msra.mxu0 0
    %2159 = vmatprep.subr.bf16.mxu0 0
    %2160 = vmatpush1.bf16.msra.mxu0 0
    %2161 = vmatprep.subr.bf16.mxu0 0
    %2162 = vmatpush1.bf16.msra.mxu0 0
    %2163 = vmatprep.subr.bf16.mxu0 0
    %2164 = vmatpush1.bf16.msra.mxu0 0
    %2165 = vmatprep.subr.bf16.mxu0 0
    %2166 = vmatpush1.bf16.msra.mxu0 0
    %2167 = vmatprep.subr.bf16.mxu0 0
    %2168 = vmatpush1.bf16.msra.mxu0 0
    %2169 = vmatprep.subr.bf16.mxu0 0
    %2170 = vmatpush1.bf16.msra.mxu0 0
    %2171 = vmatprep.subr.bf16.mxu0 0
    %2172 = vmatpush1.bf16.msra.mxu0 0
    %2173 = vmatprep.subr.bf16.mxu0 0
    %2174 = vmatpush1.bf16.msra.mxu0 0
    %2175 = vmatprep.subr.bf16.mxu0 0
    %2176 = vmatpush1.bf16.msra.mxu0 0
    %2177 = vmatprep.subr.bf16.mxu0 0
    %2178 = vmatpush1.bf16.msra.mxu0 0
    %2179 = vmatprep.subr.bf16.mxu0 0
    %2180 = vmatpush1.bf16.msra.mxu0 0
    %2181 = vmatprep.subr.bf16.mxu0 0
    %2182 = vmatpush1.bf16.msra.mxu0 0
    %2183 = vmatprep.subr.bf16.mxu0 0
    %2184 = vmatpush1.bf16.msra.mxu0 0
    %2185 = vmatprep.mubr.bf16.mxu0 0
    %2186 = vmatmul.mubr.bf16.gmra.mrb[0].mxu0 %v2151
    %v2187 = vpop.f32.mrb[0].mxu0
    %v2188 = vadd.f32 0.0, %v2187
    %v2189 = vpop.f32.mrb[0].mxu0
    %v2190 = vpop.f32.mrb[0].mxu0
    %v2191 = vpop.f32.mrb[0].mxu0
    %2192 = vdwg.mxu0
    %2194 = vrot.lane.b32.xlu0 %v2146, 96
    %v2195 = vpop.permute.xlu0 %2194
    %v2197 = vsel %vm234, %v2195, 0
    %2199 = vmatprep.subr.bf16.mxu0 0
    %2200 = vmatpush1.bf16.msra.mxu0 %v2003
    %2201 = vmatprep.subr.bf16.mxu0 0
    %2202 = vmatpush1.bf16.msra.mxu0 0
    %2203 = vmatprep.subr.bf16.mxu0 0
    %2204 = vmatpush1.bf16.msra.mxu0 0
    %2205 = vmatprep.subr.bf16.mxu0 0
    %2206 = vmatpush1.bf16.msra.mxu0 0
    %2207 = vmatprep.subr.bf16.mxu0 0
    %2208 = vmatpush1.bf16.msra.mxu0 0
    %2209 = vmatprep.subr.bf16.mxu0 0
    %2210 = vmatpush1.bf16.msra.mxu0 0
    %2211 = vmatprep.subr.bf16.mxu0 0
    %2212 = vmatpush1.bf16.msra.mxu0 0
    %2213 = vmatprep.subr.bf16.mxu0 0
    %2214 = vmatpush1.bf16.msra.mxu0 0
    %2215 = vmatprep.subr.bf16.mxu0 0
    %2216 = vmatpush1.bf16.msra.mxu0 0
    %2217 = vmatprep.subr.bf16.mxu0 0
    %2218 = vmatpush1.bf16.msra.mxu0 0
    %2219 = vmatprep.subr.bf16.mxu0 0
    %2220 = vmatpush1.bf16.msra.mxu0 0
    %2221 = vmatprep.subr.bf16.mxu0 0
    %2222 = vmatpush1.bf16.msra.mxu0 0
    %2223 = vmatprep.subr.bf16.mxu0 0
    %2224 = vmatpush1.bf16.msra.mxu0 0
    %2225 = vmatprep.subr.bf16.mxu0 0
    %2226 = vmatpush1.bf16.msra.mxu0 0
    %2227 = vmatprep.subr.bf16.mxu0 0
    %2228 = vmatpush1.bf16.msra.mxu0 0
    %2229 = vmatprep.subr.bf16.mxu0 0
    %2230 = vmatpush1.bf16.msra.mxu0 0
    %2231 = vmatprep.mubr.bf16.mxu0 0
    %2232 = vmatmul.mubr.bf16.gmra.mrb[0].mxu0 %v2197
    %v2233 = vpop.f32.mrb[0].mxu0
    %v2234 = vadd.f32 0.0, %v2233
    %v2235 = vpop.f32.mrb[0].mxu0
    %v2236 = vpop.f32.mrb[0].mxu0
    %v2237 = vpop.f32.mrb[0].mxu0
    %2238 = vdwg.mxu0
    %v2239 = vadd.f32 %v2137, %v2188
    %v2240 = vadd.f32 %v2141, %v2234
    %v2241 = vxor.u32 %v2239, 2147483648
    %v2242 = vxor.u32 %v2240, 2147483648
    %v2243 = vmul.f32 %v2241, 1.442695
    %v2244 = vpow.pop %v2243
    %v2245 = vmul.f32 %v2242, 1.442695
    %v2246 = vpow.pop %v2245
    %v2247 = vadd.f32 %v2244, 1.0
    %v2248 = vadd.f32 %v2246, 1.0
    %v2249 = vrcp.pop %v2247
    %v2250 = vmul.f32 1.0, %v2249
    %v2251 = vrcp.pop %v2248
    %v2252 = vmul.f32 1.0, %v2251
    %v2253 = vtanh.pop %v2239
    %v2254 = vtanh.pop %v2240
    %v2255 = vmul.f32 %v2250, %v2123
    %v2256 = vmul.f32 %v2252, %v2124
    %2259 = vrot.lane.b32.xlu0 %v2253, 80
    %v2260 = vpop.permute.xlu0 %2259
    %2261 = vrot.lane.b32.xlu0 %v2254, 80
    %v2262 = vpop.permute.xlu0 %2261
    %v2265 = vmul.f32 %v2250, %v2260
    %v2266 = vmul.f32 %v2252, %v2262
    %2269 = vrot.lane.b32.xlu0 %v2265, 16
    %v2270 = vpop.permute.xlu0 %2269
    %2271 = vrot.lane.b32.xlu0 %v2266, 16
    %v2272 = vpop.permute.xlu0 %2271
    %v2275 = vadd.f32 %v2255, %v2270
    %v2276 = vadd.f32 %v2256, %v2272
    %v2277 = vtanh.pop %v2275
    %v2278 = vtanh.pop %v2276
    %2281 = vrot.lane.b32.xlu0 %v2277, 16
    %v2282 = vpop.permute.xlu0 %2281
    %2283 = vrot.lane.b32.xlu0 %v2278, 16
    %v2284 = vpop.permute.xlu0 %2283
    %v2287 = vmul.f32 %v2250, %v2282
    %v2288 = vmul.f32 %v2252, %v2284
    %2290 = vset.pattern.permute.xlu0 0
    %2291 = vperm.xlu0 %2290, %v2143
    %v2292 = vpop.permute.xlu0 %2291
    %2295 = vset.pattern.permute.xlu0 0
    %2296 = vperm.xlu0 %2295, %v2144
    %v2297 = vpop.permute.xlu0 %2296
    %v2299 = vmul.f32 %v2292, %v2287
    %v2300 = vmul.f32 %v2297, %v2288
    %v2301 = vmul.f32 %v2292, %v2275
    %v2302 = vmul.f32 %v2297, %v2276
    %v2303 = vsub.f32 1.0, %v2143
    %v2304 = vsub.f32 1.0, %v2144
    %2306 = vset.pattern.permute.xlu0 0
    %2307 = vperm.xlu0 %2306, %v2303
    %v2308 = vpop.permute.xlu0 %2307
    %2311 = vset.pattern.permute.xlu0 0
    %2312 = vperm.xlu0 %2311, %v2304
    %v2313 = vpop.permute.xlu0 %2312
    %v2315 = vmul.f32 %v2308, %v2123
    %v2316 = vmul.f32 %v2313, %v2124
    %v2317 = vadd.f32 %v2301, %v2315
    %v2318 = vadd.f32 %v2302, %v2316
    %v2319 = vmul.f32 %v2308, %v2125
    %v2320 = vmul.f32 %v2313, %v2126
    %v2321 = vadd.f32 %v2299, %v2319
    %v2322 = vadd.f32 %v2300, %v2320
    %2324 = vrot.lane.b32.xlu0 %v2299, 96
    %v2325 = vpop.permute.xlu0 %2324
    %2327 = vst.msk [vmem:[%s610] sm:$0xff] %vm234, %v2325
    %2329 = vrot.lane.b32.xlu0 %v2300, 112
    %v2330 = vpop.permute.xlu0 %2329
    %2332 = vst.msk [vmem:[%s616] sm:$0xff] %vm416, %v2330
    %v2333 = vld [vmem:[#allocation2 + $0x10] sm:$0xff]
    %v2334 = vld [vmem:[#allocation2 + $0x28] sm:$0xff]
    %2336 = vrot.lane.b32.xlu0 %v2334, 64
    %v2337 = vpop.permute.xlu0 %2336
    %v2339 = vld [vmem:[%s624] sm:$0xff]
    %v2340 = vld [vmem:[%s626] sm:$0xff]
    %v2341 = vpack.c.bf16 %v2321, %v2321
    %v2342 = vpack.c.bf16 %v2322, %v2322
    %2344 = vrot.lane.b32.xlu0 %v2341, 96
    %v2345 = vpop.permute.xlu0 %2344
    %v2347 = vsel %vm234, %v2345, 0
    %2349 = vmatprep.subr.bf16.mxu0 0
    %2350 = vmatpush1.bf16.msra.mxu0 %v1957
    %2351 = vmatprep.subr.bf16.mxu0 0
    %2352 = vmatpush1.bf16.msra.mxu0 0
    %2353 = vmatprep.subr.bf16.mxu0 0
    %2354 = vmatpush1.bf16.msra.mxu0 0
    %2355 = vmatprep.subr.bf16.mxu0 0
    %2356 = vmatpush1.bf16.msra.mxu0 0
    %2357 = vmatprep.subr.bf16.mxu0 0
    %2358 = vmatpush1.bf16.msra.mxu0 0
    %2359 = vmatprep.subr.bf16.mxu0 0
    %2360 = vmatpush1.bf16.msra.mxu0 0
    %2361 = vmatprep.subr.bf16.mxu0 0
    %2362 = vmatpush1.bf16.msra.mxu0 0
    %2363 = vmatprep.subr.bf16.mxu0 0
    %2364 = vmatpush1.bf16.msra.mxu0 0
    %2365 = vmatprep.subr.bf16.mxu0 0
    %2366 = vmatpush1.bf16.msra.mxu0 0
    %2367 = vmatprep.subr.bf16.mxu0 0
    %2368 = vmatpush1.bf16.msra.mxu0 0
    %2369 = vmatprep.subr.bf16.mxu0 0
    %2370 = vmatpush1.bf16.msra.mxu0 0
    %2371 = vmatprep.subr.bf16.mxu0 0
    %2372 = vmatpush1.bf16.msra.mxu0 0
    %2373 = vmatprep.subr.bf16.mxu0 0
    %2374 = vmatpush1.bf16.msra.mxu0 0
    %2375 = vmatprep.subr.bf16.mxu0 0
    %2376 = vmatpush1.bf16.msra.mxu0 0
    %2377 = vmatprep.subr.bf16.mxu0 0
    %2378 = vmatpush1.bf16.msra.mxu0 0
    %2379 = vmatprep.subr.bf16.mxu0 0
    %2380 = vmatpush1.bf16.msra.mxu0 0
    %2381 = vmatprep.mubr.bf16.mxu0 0
    %2382 = vmatmul.mubr.bf16.gmra.mrb[0].mxu0 %v2347
    %v2383 = vpop.f32.mrb[0].mxu0
    %v2384 = vadd.f32 0.0, %v2383
    %v2385 = vpop.f32.mrb[0].mxu0
    %v2386 = vpop.f32.mrb[0].mxu0
    %v2387 = vpop.f32.mrb[0].mxu0
    %2388 = vdwg.mxu0
    %2390 = vrot.lane.b32.xlu0 %v2342, 96
    %v2391 = vpop.permute.xlu0 %2390
    %v2393 = vsel %vm234, %v2391, 0
    %2395 = vmatprep.subr.bf16.mxu0 0
    %2396 = vmatpush1.bf16.msra.mxu0 %v2003
    %2397 = vmatprep.subr.bf16.mxu0 0
    %2398 = vmatpush1.bf16.msra.mxu0 0
    %2399 = vmatprep.subr.bf16.mxu0 0
    %2400 = vmatpush1.bf16.msra.mxu0 0
    %2401 = vmatprep.subr.bf16.mxu0 0
    %2402 = vmatpush1.bf16.msra.mxu0 0
    %2403 = vmatprep.subr.bf16.mxu0 0
    %2404 = vmatpush1.bf16.msra.mxu0 0
    %2405 = vmatprep.subr.bf16.mxu0 0
    %2406 = vmatpush1.bf16.msra.mxu0 0
    %2407 = vmatprep.subr.bf16.mxu0 0
    %2408 = vmatpush1.bf16.msra.mxu0 0
    %2409 = vmatprep.subr.bf16.mxu0 0
    %2410 = vmatpush1.bf16.msra.mxu0 0
    %2411 = vmatprep.subr.bf16.mxu0 0
    %2412 = vmatpush1.bf16.msra.mxu0 0
    %2413 = vmatprep.subr.bf16.mxu0 0
    %2414 = vmatpush1.bf16.msra.mxu0 0
    %2415 = vmatprep.subr.bf16.mxu0 0
    %2416 = vmatpush1.bf16.msra.mxu0 0
    %2417 = vmatprep.subr.bf16.mxu0 0
    %2418 = vmatpush1.bf16.msra.mxu0 0
    %2419 = vmatprep.subr.bf16.mxu0 0
    %2420 = vmatpush1.bf16.msra.mxu0 0
    %2421 = vmatprep.subr.bf16.mxu0 0
    %2422 = vmatpush1.bf16.msra.mxu0 0
    %2423 = vmatprep.subr.bf16.mxu0 0
    %2424 = vmatpush1.bf16.msra.mxu0 0
    %2425 = vmatprep.subr.bf16.mxu0 0
    %2426 = vmatpush1.bf16.msra.mxu0 0
    %2427 = vmatprep.mubr.bf16.mxu0 0
    %2428 = vmatmul.mubr.bf16.gmra.mrb[0].mxu0 %v2393
    %v2429 = vpop.f32.mrb[0].mxu0
    %v2430 = vadd.f32 0.0, %v2429
    %v2431 = vpop.f32.mrb[0].mxu0
    %v2432 = vpop.f32.mrb[0].mxu0
    %v2433 = vpop.f32.mrb[0].mxu0
    %2434 = vdwg.mxu0
    %v2435 = vadd.f32 %v2333, %v2384
    %v2436 = vadd.f32 %v2337, %v2430
    %v2437 = vxor.u32 %v2435, 2147483648
    %v2438 = vxor.u32 %v2436, 2147483648
    %v2439 = vmul.f32 %v2437, 1.442695
    %v2440 = vpow.pop %v2439
    %v2441 = vmul.f32 %v2438, 1.442695
    %v2442 = vpow.pop %v2441
    %v2443 = vadd.f32 %v2440, 1.0
    %v2444 = vadd.f32 %v2442, 1.0
    %v2445 = vrcp.pop %v2443
    %v2446 = vmul.f32 1.0, %v2445
    %v2447 = vrcp.pop %v2444
    %v2448 = vmul.f32 1.0, %v2447
    %v2449 = vtanh.pop %v2435
    %v2450 = vtanh.pop %v2436
    %v2451 = vmul.f32 %v2446, %v2317
    %v2452 = vmul.f32 %v2448, %v2318
    %2455 = vrot.lane.b32.xlu0 %v2449, 80
    %v2456 = vpop.permute.xlu0 %2455
    %2457 = vrot.lane.b32.xlu0 %v2450, 80
    %v2458 = vpop.permute.xlu0 %2457
    %v2461 = vmul.f32 %v2446, %v2456
    %v2462 = vmul.f32 %v2448, %v2458
    %2465 = vrot.lane.b32.xlu0 %v2461, 16
    %v2466 = vpop.permute.xlu0 %2465
    %2467 = vrot.lane.b32.xlu0 %v2462, 16
    %v2468 = vpop.permute.xlu0 %2467
    %v2471 = vadd.f32 %v2451, %v2466
    %v2472 = vadd.f32 %v2452, %v2468
    %v2473 = vtanh.pop %v2471
    %v2474 = vtanh.pop %v2472
    %2477 = vrot.lane.b32.xlu0 %v2473, 16
    %v2478 = vpop.permute.xlu0 %2477
    %2479 = vrot.lane.b32.xlu0 %v2474, 16
    %v2480 = vpop.permute.xlu0 %2479
    %v2483 = vmul.f32 %v2446, %v2478
    %v2484 = vmul.f32 %v2448, %v2480
    %2486 = vset.pattern.permute.xlu0 0
    %2487 = vperm.xlu0 %2486, %v2339
    %v2488 = vpop.permute.xlu0 %2487
    %2491 = vset.pattern.permute.xlu0 0
    %2492 = vperm.xlu0 %2491, %v2340
    %v2493 = vpop.permute.xlu0 %2492
    %v2495 = vmul.f32 %v2488, %v2483
    %v2496 = vmul.f32 %v2493, %v2484
    %v2497 = vmul.f32 %v2488, %v2471
    %v2498 = vmul.f32 %v2493, %v2472
    %v2499 = vsub.f32 1.0, %v2339
    %v2500 = vsub.f32 1.0, %v2340
    %2502 = vset.pattern.permute.xlu0 0
    %2503 = vperm.xlu0 %2502, %v2499
    %v2504 = vpop.permute.xlu0 %2503
    %2507 = vset.pattern.permute.xlu0 0
    %2508 = vperm.xlu0 %2507, %v2500
    %v2509 = vpop.permute.xlu0 %2508
    %v2511 = vmul.f32 %v2504, %v2317
    %v2512 = vmul.f32 %v2509, %v2318
    %v2513 = vadd.f32 %v2497, %v2511
    %v2514 = vadd.f32 %v2498, %v2512
    %v2515 = vmul.f32 %v2504, %v2321
    %v2516 = vmul.f32 %v2509, %v2322
    %v2517 = vadd.f32 %v2495, %v2515
    %v2518 = vadd.f32 %v2496, %v2516
    %2520 = vrot.lane.b32.xlu0 %v2495, 96
    %v2521 = vpop.permute.xlu0 %2520
    %2523 = vst.msk [vmem:[%s810] sm:$0xff] %vm234, %v2521
    %2525 = vrot.lane.b32.xlu0 %v2496, 112
    %v2526 = vpop.permute.xlu0 %2525
    %2528 = vst.msk [vmem:[%s816] sm:$0xff] %vm416, %v2526
    %v2529 = vld [vmem:[#allocation2 + $0x18] sm:$0xff]
    %v2530 = vld [vmem:[#allocation2 + $0x20] sm:$0xff]
    %2532 = vrot.lane.b32.xlu0 %v2530, 64
    %v2533 = vpop.permute.xlu0 %2532
    %v2535 = vld [vmem:[%s824] sm:$0xff]
    %v2536 = vld [vmem:[%s826] sm:$0xff]
    %v2537 = vpack.c.bf16 %v2517, %v2517
    %v2538 = vpack.c.bf16 %v2518, %v2518
    %2540 = vrot.lane.b32.xlu0 %v2537, 96
    %v2541 = vpop.permute.xlu0 %2540
    %v2543 = vsel %vm234, %v2541, 0
    %2545 = vmatprep.subr.bf16.mxu0 0
    %2546 = vmatpush1.bf16.msra.mxu0 %v1957
    %2547 = vmatprep.subr.bf16.mxu0 0
    %2548 = vmatpush1.bf16.msra.mxu0 0
    %2549 = vmatprep.subr.bf16.mxu0 0
    %2550 = vmatpush1.bf16.msra.mxu0 0
    %2551 = vmatprep.subr.bf16.mxu0 0
    %2552 = vmatpush1.bf16.msra.mxu0 0
    %2553 = vmatprep.subr.bf16.mxu0 0
    %2554 = vmatpush1.bf16.msra.mxu0 0
    %2555 = vmatprep.subr.bf16.mxu0 0
    %2556 = vmatpush1.bf16.msra.mxu0 0
    %2557 = vmatprep.subr.bf16.mxu0 0
    %2558 = vmatpush1.bf16.msra.mxu0 0
    %2559 = vmatprep.subr.bf16.mxu0 0
    %2560 = vmatpush1.bf16.msra.mxu0 0
    %2561 = vmatprep.subr.bf16.mxu0 0
    %2562 = vmatpush1.bf16.msra.mxu0 0
    %2563 = vmatprep.subr.bf16.mxu0 0
    %2564 = vmatpush1.bf16.msra.mxu0 0
    %2565 = vmatprep.subr.bf16.mxu0 0
    %2566 = vmatpush1.bf16.msra.mxu0 0
    %2567 = vmatprep.subr.bf16.mxu0 0
    %2568 = vmatpush1.bf16.msra.mxu0 0
    %2569 = vmatprep.subr.bf16.mxu0 0
    %2570 = vmatpush1.bf16.msra.mxu0 0
    %2571 = vmatprep.subr.bf16.mxu0 0
    %2572 = vmatpush1.bf16.msra.mxu0 0
    %2573 = vmatprep.subr.bf16.mxu0 0
    %2574 = vmatpush1.bf16.msra.mxu0 0
    %2575 = vmatprep.subr.bf16.mxu0 0
    %2576 = vmatpush1.bf16.msra.mxu0 0
    %2577 = vmatprep.mubr.bf16.mxu0 0
    %2578 = vmatmul.mubr.bf16.gmra.mrb[0].mxu0 %v2543
    %v2579 = vpop.f32.mrb[0].mxu0
    %v2580 = vadd.f32 0.0, %v2579
    %v2581 = vpop.f32.mrb[0].mxu0
    %v2582 = vpop.f32.mrb[0].mxu0
    %v2583 = vpop.f32.mrb[0].mxu0
    %2584 = vdwg.mxu0
    %2586 = vrot.lane.b32.xlu0 %v2538, 96
    %v2587 = vpop.permute.xlu0 %2586
    %v2589 = vsel %vm234, %v2587, 0
    %2591 = vmatprep.subr.bf16.mxu0 0
    %2592 = vmatpush1.bf16.msra.mxu0 %v2003
    %2593 = vmatprep.subr.bf16.mxu0 0
    %2594 = vmatpush1.bf16.msra.mxu0 0
    %2595 = vmatprep.subr.bf16.mxu0 0
    %2596 = vmatpush1.bf16.msra.mxu0 0
    %2597 = vmatprep.subr.bf16.mxu0 0
    %2598 = vmatpush1.bf16.msra.mxu0 0
    %2599 = vmatprep.subr.bf16.mxu0 0
    %2600 = vmatpush1.bf16.msra.mxu0 0
    %2601 = vmatprep.subr.bf16.mxu0 0
    %2602 = vmatpush1.bf16.msra.mxu0 0
    %2603 = vmatprep.subr.bf16.mxu0 0
    %2604 = vmatpush1.bf16.msra.mxu0 0
    %2605 = vmatprep.subr.bf16.mxu0 0
    %2606 = vmatpush1.bf16.msra.mxu0 0
    %2607 = vmatprep.subr.bf16.mxu0 0
    %2608 = vmatpush1.bf16.msra.mxu0 0
    %2609 = vmatprep.subr.bf16.mxu0 0
    %2610 = vmatpush1.bf16.msra.mxu0 0
    %2611 = vmatprep.subr.bf16.mxu0 0
    %2612 = vmatpush1.bf16.msra.mxu0 0
    %2613 = vmatprep.subr.bf16.mxu0 0
    %2614 = vmatpush1.bf16.msra.mxu0 0
    %2615 = vmatprep.subr.bf16.mxu0 0
    %2616 = vmatpush1.bf16.msra.mxu0 0
    %2617 = vmatprep.subr.bf16.mxu0 0
    %2618 = vmatpush1.bf16.msra.mxu0 0
    %2619 = vmatprep.subr.bf16.mxu0 0
    %2620 = vmatpush1.bf16.msra.mxu0 0
    %2621 = vmatprep.subr.bf16.mxu0 0
    %2622 = vmatpush1.bf16.msra.mxu0 0
    %2623 = vmatprep.mubr.bf16.mxu0 0
    %2624 = vmatmul.mubr.bf16.gmra.mrb[0].mxu0 %v2589
    %v2625 = vpop.f32.mrb[0].mxu0
    %v2626 = vadd.f32 0.0, %v2625
    %v2627 = vpop.f32.mrb[0].mxu0
    %v2628 = vpop.f32.mrb[0].mxu0
    %v2629 = vpop.f32.mrb[0].mxu0
    %2630 = vdwg.mxu0
    %v2631 = vadd.f32 %v2529, %v2580
    %v2632 = vadd.f32 %v2533, %v2626
    %v2633 = vxor.u32 %v2631, 2147483648
    %v2634 = vxor.u32 %v2632, 2147483648
    %v2635 = vmul.f32 %v2633, 1.442695
    %v2636 = vpow.pop %v2635
    %v2637 = vmul.f32 %v2634, 1.442695
    %v2638 = vpow.pop %v2637
    %v2639 = vadd.f32 %v2636, 1.0
    %v2640 = vadd.f32 %v2638, 1.0
    %v2641 = vrcp.pop %v2639
    %v2642 = vmul.f32 1.0, %v2641
    %v2643 = vrcp.pop %v2640
    %v2644 = vmul.f32 1.0, %v2643
    %v2645 = vtanh.pop %v2631
    %v2646 = vtanh.pop %v2632
    %v2647 = vmul.f32 %v2642, %v2513
    %v2648 = vmul.f32 %v2644, %v2514
    %2651 = vrot.lane.b32.xlu0 %v2645, 80
    %v2652 = vpop.permute.xlu0 %2651
    %2653 = vrot.lane.b32.xlu0 %v2646, 80
    %v2654 = vpop.permute.xlu0 %2653
    %v2657 = vmul.f32 %v2642, %v2652
    %v2658 = vmul.f32 %v2644, %v2654
    %2661 = vrot.lane.b32.xlu0 %v2657, 16
    %v2662 = vpop.permute.xlu0 %2661
    %2663 = vrot.lane.b32.xlu0 %v2658, 16
    %v2664 = vpop.permute.xlu0 %2663
    %v2667 = vadd.f32 %v2647, %v2662
    %v2668 = vadd.f32 %v2648, %v2664
    %v2669 = vtanh.pop %v2667
    %v2670 = vtanh.pop %v2668
    %2673 = vrot.lane.b32.xlu0 %v2669, 16
    %v2674 = vpop.permute.xlu0 %2673
    %2675 = vrot.lane.b32.xlu0 %v2670, 16
    %v2676 = vpop.permute.xlu0 %2675
    %v2679 = vmul.f32 %v2642, %v2674
    %v2680 = vmul.f32 %v2644, %v2676
    %2682 = vset.pattern.permute.xlu0 0
    %2683 = vperm.xlu0 %2682, %v2535
    %v2684 = vpop.permute.xlu0 %2683
    %2687 = vset.pattern.permute.xlu0 0
    %2688 = vperm.xlu0 %2687, %v2536
    %v2689 = vpop.permute.xlu0 %2688
    %v2691 = vmul.f32 %v2684, %v2679
    %v2692 = vmul.f32 %v2689, %v2680
    %v2693 = vmul.f32 %v2684, %v2667
    %v2694 = vmul.f32 %v2689, %v2668
    %v2695 = vsub.f32 1.0, %v2535
    %v2696 = vsub.f32 1.0, %v2536
    %2698 = vset.pattern.permute.xlu0 0
    %2699 = vperm.xlu0 %2698, %v2695
    %v2700 = vpop.permute.xlu0 %2699
    %2703 = vset.pattern.permute.xlu0 0
    %2704 = vperm.xlu0 %2703, %v2696
    %v2705 = vpop.permute.xlu0 %2704
    %v2707 = vmul.f32 %v2700, %v2513
    %v2708 = vmul.f32 %v2705, %v2514
    %v2709 = vadd.f32 %v2693, %v2707
    %v2710 = vadd.f32 %v2694, %v2708
    %v2711 = vmul.f32 %v2700, %v2517
    %v2712 = vmul.f32 %v2705, %v2518
    %v2713 = vadd.f32 %v2691, %v2711
    %v2714 = vadd.f32 %v2692, %v2712
    %2716 = vrot.lane.b32.xlu0 %v2691, 96
    %v2717 = vpop.permute.xlu0 %2716
    %2719 = vst.msk [vmem:[%s1010] sm:$0xff] %vm234, %v2717
    %2721 = vrot.lane.b32.xlu0 %v2692, 112
    %v2722 = vpop.permute.xlu0 %2721
    %2724 = vst.msk [vmem:[%s1016] sm:$0xff] %vm416, %v2722
    %v2725 = vld [vmem:[#allocation2 + $0x20] sm:$0xff]
    %v2726 = vld [vmem:[#allocation2 + $0x18] sm:$0xff]
    %2728 = vrot.lane.b32.xlu0 %v2726, 64
    %v2729 = vpop.permute.xlu0 %2728
    %v2731 = vld [vmem:[%s826] sm:$0xff]
    %v2732 = vld [vmem:[%s824] sm:$0xff]
    %v2733 = vpack.c.bf16 %v2713, %v2713
    %v2734 = vpack.c.bf16 %v2714, %v2714
    %2736 = vrot.lane.b32.xlu0 %v2733, 96
    %v2737 = vpop.permute.xlu0 %2736
    %v2739 = vsel %vm234, %v2737, 0
    %2741 = vmatprep.subr.bf16.mxu0 0
    %2742 = vmatpush1.bf16.msra.mxu0 %v1957
    %2743 = vmatprep.subr.bf16.mxu0 0
    %2744 = vmatpush1.bf16.msra.mxu0 0
    %2745 = vmatprep.subr.bf16.mxu0 0
    %2746 = vmatpush1.bf16.msra.mxu0 0
    %2747 = vmatprep.subr.bf16.mxu0 0
    %2748 = vmatpush1.bf16.msra.mxu0 0
    %2749 = vmatprep.subr.bf16.mxu0 0
    %2750 = vmatpush1.bf16.msra.mxu0 0
    %2751 = vmatprep.subr.bf16.mxu0 0
    %2752 = vmatpush1.bf16.msra.mxu0 0
    %2753 = vmatprep.subr.bf16.mxu0 0
    %2754 = vmatpush1.bf16.msra.mxu0 0
    %2755 = vmatprep.subr.bf16.mxu0 0
    %2756 = vmatpush1.bf16.msra.mxu0 0
    %2757 = vmatprep.subr.bf16.mxu0 0
    %2758 = vmatpush1.bf16.msra.mxu0 0
    %2759 = vmatprep.subr.bf16.mxu0 0
    %2760 = vmatpush1.bf16.msra.mxu0 0
    %2761 = vmatprep.subr.bf16.mxu0 0
    %2762 = vmatpush1.bf16.msra.mxu0 0
    %2763 = vmatprep.subr.bf16.mxu0 0
    %2764 = vmatpush1.bf16.msra.mxu0 0
    %2765 = vmatprep.subr.bf16.mxu0 0
    %2766 = vmatpush1.bf16.msra.mxu0 0
    %2767 = vmatprep.subr.bf16.mxu0 0
    %2768 = vmatpush1.bf16.msra.mxu0 0
    %2769 = vmatprep.subr.bf16.mxu0 0
    %2770 = vmatpush1.bf16.msra.mxu0 0
    %2771 = vmatprep.subr.bf16.mxu0 0
    %2772 = vmatpush1.bf16.msra.mxu0 0
    %2773 = vmatprep.mubr.bf16.mxu0 0
    %2774 = vmatmul.mubr.bf16.gmra.mrb[0].mxu0 %v2739
    %v2775 = vpop.f32.mrb[0].mxu0
    %v2776 = vadd.f32 0.0, %v2775
    %v2777 = vpop.f32.mrb[0].mxu0
    %v2778 = vpop.f32.mrb[0].mxu0
    %v2779 = vpop.f32.mrb[0].mxu0
    %2780 = vdwg.mxu0
    %2782 = vrot.lane.b32.xlu0 %v2734, 96
    %v2783 = vpop.permute.xlu0 %2782
    %v2785 = vsel %vm234, %v2783, 0
    %2787 = vmatprep.subr.bf16.mxu0 0
    %2788 = vmatpush1.bf16.msra.mxu0 %v2003
    %2789 = vmatprep.subr.bf16.mxu0 0
    %2790 = vmatpush1.bf16.msra.mxu0 0
    %2791 = vmatprep.subr.bf16.mxu0 0
    %2792 = vmatpush1.bf16.msra.mxu0 0
    %2793 = vmatprep.subr.bf16.mxu0 0
    %2794 = vmatpush1.bf16.msra.mxu0 0
    %2795 = vmatprep.subr.bf16.mxu0 0
    %2796 = vmatpush1.bf16.msra.mxu0 0
    %2797 = vmatprep.subr.bf16.mxu0 0
    %2798 = vmatpush1.bf16.msra.mxu0 0
    %2799 = vmatprep.subr.bf16.mxu0 0
    %2800 = vmatpush1.bf16.msra.mxu0 0
    %2801 = vmatprep.subr.bf16.mxu0 0
    %2802 = vmatpush1.bf16.msra.mxu0 0
    %2803 = vmatprep.subr.bf16.mxu0 0
    %2804 = vmatpush1.bf16.msra.mxu0 0
    %2805 = vmatprep.subr.bf16.mxu0 0
    %2806 = vmatpush1.bf16.msra.mxu0 0
    %2807 = vmatprep.subr.bf16.mxu0 0
    %2808 = vmatpush1.bf16.msra.mxu0 0
    %2809 = vmatprep.subr.bf16.mxu0 0
    %2810 = vmatpush1.bf16.msra.mxu0 0
    %2811 = vmatprep.subr.bf16.mxu0 0
    %2812 = vmatpush1.bf16.msra.mxu0 0
    %2813 = vmatprep.subr.bf16.mxu0 0
    %2814 = vmatpush1.bf16.msra.mxu0 0
    %2815 = vmatprep.subr.bf16.mxu0 0
    %2816 = vmatpush1.bf16.msra.mxu0 0
    %2817 = vmatprep.subr.bf16.mxu0 0
    %2818 = vmatpush1.bf16.msra.mxu0 0
    %2819 = vmatprep.mubr.bf16.mxu0 0
    %2820 = vmatmul.mubr.bf16.gmra.mrb[0].mxu0 %v2785
    %v2821 = vpop.f32.mrb[0].mxu0
    %v2822 = vadd.f32 0.0, %v2821
    %v2823 = vpop.f32.mrb[0].mxu0
    %v2824 = vpop.f32.mrb[0].mxu0
    %v2825 = vpop.f32.mrb[0].mxu0
    %2826 = vdwg.mxu0
    %v2827 = vadd.f32 %v2725, %v2776
    %v2828 = vadd.f32 %v2729, %v2822
    %v2829 = vxor.u32 %v2827, 2147483648
    %v2830 = vxor.u32 %v2828, 2147483648
    %v2831 = vmul.f32 %v2829, 1.442695
    %v2832 = vpow.pop %v2831
    %v2833 = vmul.f32 %v2830, 1.442695
    %v2834 = vpow.pop %v2833
    %v2835 = vadd.f32 %v2832, 1.0
    %v2836 = vadd.f32 %v2834, 1.0
    %v2837 = vrcp.pop %v2835
    %v2838 = vmul.f32 1.0, %v2837
    %v2839 = vrcp.pop %v2836
    %v2840 = vmul.f32 1.0, %v2839
    %v2841 = vtanh.pop %v2827
    %v2842 = vtanh.pop %v2828
    %v2843 = vmul.f32 %v2838, %v2709
    %v2844 = vmul.f32 %v2840, %v2710
    %2847 = vrot.lane.b32.xlu0 %v2841, 80
    %v2848 = vpop.permute.xlu0 %2847
    %2849 = vrot.lane.b32.xlu0 %v2842, 80
    %v2850 = vpop.permute.xlu0 %2849
    %v2853 = vmul.f32 %v2838, %v2848
    %v2854 = vmul.f32 %v2840, %v2850
    %2857 = vrot.lane.b32.xlu0 %v2853, 16
    %v2858 = vpop.permute.xlu0 %2857
    %2859 = vrot.lane.b32.xlu0 %v2854, 16
    %v2860 = vpop.permute.xlu0 %2859
    %v2863 = vadd.f32 %v2843, %v2858
    %v2864 = vadd.f32 %v2844, %v2860
    %v2865 = vtanh.pop %v2863
    %v2866 = vtanh.pop %v2864
    %2869 = vrot.lane.b32.xlu0 %v2865, 16
    %v2870 = vpop.permute.xlu0 %2869
    %2871 = vrot.lane.b32.xlu0 %v2866, 16
    %v2872 = vpop.permute.xlu0 %2871
    %v2875 = vmul.f32 %v2838, %v2870
    %v2876 = vmul.f32 %v2840, %v2872
    %2878 = vset.pattern.permute.xlu0 0
    %2879 = vperm.xlu0 %2878, %v2731
    %v2880 = vpop.permute.xlu0 %2879
    %2883 = vset.pattern.permute.xlu0 0
    %2884 = vperm.xlu0 %2883, %v2732
    %v2885 = vpop.permute.xlu0 %2884
    %v2887 = vmul.f32 %v2880, %v2875
    %v2888 = vmul.f32 %v2885, %v2876
    %v2889 = vmul.f32 %v2880, %v2863
    %v2890 = vmul.f32 %v2885, %v2864
    %v2891 = vsub.f32 1.0, %v2731
    %v2892 = vsub.f32 1.0, %v2732
    %2894 = vset.pattern.permute.xlu0 0
    %2895 = vperm.xlu0 %2894, %v2891
    %v2896 = vpop.permute.xlu0 %2895
    %2899 = vset.pattern.permute.xlu0 0
    %2900 = vperm.xlu0 %2899, %v2892
    %v2901 = vpop.permute.xlu0 %2900
    %v2903 = vmul.f32 %v2896, %v2709
    %v2904 = vmul.f32 %v2901, %v2710
    %v2905 = vadd.f32 %v2889, %v2903
    %v2906 = vadd.f32 %v2890, %v2904
    %v2907 = vmul.f32 %v2896, %v2713
    %v2908 = vmul.f32 %v2901, %v2714
    %v2909 = vadd.f32 %v2887, %v2907
    %v2910 = vadd.f32 %v2888, %v2908
    %2912 = vrot.lane.b32.xlu0 %v2887, 96
    %v2913 = vpop.permute.xlu0 %2912
    %2915 = vst.msk [vmem:[%s1016] sm:$0xff] %vm234, %v2913
    %2917 = vrot.lane.b32.xlu0 %v2888, 112
    %v2918 = vpop.permute.xlu0 %2917
    %2920 = vst.msk [vmem:[%s1010] sm:$0xff] %vm416, %v2918
    %v2921 = vld [vmem:[#allocation2 + $0x28] sm:$0xff]
    %v2922 = vld [vmem:[#allocation2 + $0x10] sm:$0xff]
    %2924 = vrot.lane.b32.xlu0 %v2922, 64
    %v2925 = vpop.permute.xlu0 %2924
    %v2927 = vld [vmem:[%s626] sm:$0xff]
    %v2928 = vld [vmem:[%s624] sm:$0xff]
    %v2929 = vpack.c.bf16 %v2909, %v2909
    %v2930 = vpack.c.bf16 %v2910, %v2910
    %2932 = vrot.lane.b32.xlu0 %v2929, 96
    %v2933 = vpop.permute.xlu0 %2932
    %v2935 = vsel %vm234, %v2933, 0
    %2937 = vmatprep.subr.bf16.mxu0 0
    %2938 = vmatpush1.bf16.msra.mxu0 %v1957
    %2939 = vmatprep.subr.bf16.mxu0 0
    %2940 = vmatpush1.bf16.msra.mxu0 0
    %2941 = vmatprep.subr.bf16.mxu0 0
    %2942 = vmatpush1.bf16.msra.mxu0 0
    %2943 = vmatprep.subr.bf16.mxu0 0
    %2944 = vmatpush1.bf16.msra.mxu0 0
    %2945 = vmatprep.subr.bf16.mxu0 0
    %2946 = vmatpush1.bf16.msra.mxu0 0
    %2947 = vmatprep.subr.bf16.mxu0 0
    %2948 = vmatpush1.bf16.msra.mxu0 0
    %2949 = vmatprep.subr.bf16.mxu0 0
    %2950 = vmatpush1.bf16.msra.mxu0 0
    %2951 = vmatprep.subr.bf16.mxu0 0
    %2952 = vmatpush1.bf16.msra.mxu0 0
    %2953 = vmatprep.subr.bf16.mxu0 0
    %2954 = vmatpush1.bf16.msra.mxu0 0
    %2955 = vmatprep.subr.bf16.mxu0 0
    %2956 = vmatpush1.bf16.msra.mxu0 0
    %2957 = vmatprep.subr.bf16.mxu0 0
    %2958 = vmatpush1.bf16.msra.mxu0 0
    %2959 = vmatprep.subr.bf16.mxu0 0
    %2960 = vmatpush1.bf16.msra.mxu0 0
    %2961 = vmatprep.subr.bf16.mxu0 0
    %2962 = vmatpush1.bf16.msra.mxu0 0
    %2963 = vmatprep.subr.bf16.mxu0 0
    %2964 = vmatpush1.bf16.msra.mxu0 0
    %2965 = vmatprep.subr.bf16.mxu0 0
    %2966 = vmatpush1.bf16.msra.mxu0 0
    %2967 = vmatprep.subr.bf16.mxu0 0
    %2968 = vmatpush1.bf16.msra.mxu0 0
    %2969 = vmatprep.mubr.bf16.mxu0 0
    %2970 = vmatmul.mubr.bf16.gmra.mrb[0].mxu0 %v2935
    %v2971 = vpop.f32.mrb[0].mxu0
    %v2972 = vadd.f32 0.0, %v2971
    %v2973 = vpop.f32.mrb[0].mxu0
    %v2974 = vpop.f32.mrb[0].mxu0
    %v2975 = vpop.f32.mrb[0].mxu0
    %2976 = vdwg.mxu0
    %2978 = vrot.lane.b32.xlu0 %v2930, 96
    %v2979 = vpop.permute.xlu0 %2978
    %v2981 = vsel %vm234, %v2979, 0
    %2983 = vmatprep.subr.bf16.mxu0 0
    %2984 = vmatpush1.bf16.msra.mxu0 %v2003
    %2985 = vmatprep.subr.bf16.mxu0 0
    %2986 = vmatpush1.bf16.msra.mxu0 0
    %2987 = vmatprep.subr.bf16.mxu0 0
    %2988 = vmatpush1.bf16.msra.mxu0 0
    %2989 = vmatprep.subr.bf16.mxu0 0
    %2990 = vmatpush1.bf16.msra.mxu0 0
    %2991 = vmatprep.subr.bf16.mxu0 0
    %2992 = vmatpush1.bf16.msra.mxu0 0
    %2993 = vmatprep.subr.bf16.mxu0 0
    %2994 = vmatpush1.bf16.msra.mxu0 0
    %2995 = vmatprep.subr.bf16.mxu0 0
    %2996 = vmatpush1.bf16.msra.mxu0 0
    %2997 = vmatprep.subr.bf16.mxu0 0
    %2998 = vmatpush1.bf16.msra.mxu0 0
    %2999 = vmatprep.subr.bf16.mxu0 0
    %3000 = vmatpush1.bf16.msra.mxu0 0
    %3001 = vmatprep.subr.bf16.mxu0 0
    %3002 = vmatpush1.bf16.msra.mxu0 0
    %3003 = vmatprep.subr.bf16.mxu0 0
    %3004 = vmatpush1.bf16.msra.mxu0 0
    %3005 = vmatprep.subr.bf16.mxu0 0
    %3006 = vmatpush1.bf16.msra.mxu0 0
    %3007 = vmatprep.subr.bf16.mxu0 0
    %3008 = vmatpush1.bf16.msra.mxu0 0
    %3009 = vmatprep.subr.bf16.mxu0 0
    %3010 = vmatpush1.bf16.msra.mxu0 0
    %3011 = vmatprep.subr.bf16.mxu0 0
    %3012 = vmatpush1.bf16.msra.mxu0 0
    %3013 = vmatprep.subr.bf16.mxu0 0
    %3014 = vmatpush1.bf16.msra.mxu0 0
    %3015 = vmatprep.mubr.bf16.mxu0 0
    %3016 = vmatmul.mubr.bf16.gmra.mrb[0].mxu0 %v2981
    %v3017 = vpop.f32.mrb[0].mxu0
    %v3018 = vadd.f32 0.0, %v3017
    %v3019 = vpop.f32.mrb[0].mxu0
    %v3020 = vpop.f32.mrb[0].mxu0
    %v3021 = vpop.f32.mrb[0].mxu0
    %3022 = vdwg.mxu0
    %v3023 = vadd.f32 %v2921, %v2972
    %v3024 = vadd.f32 %v2925, %v3018
    %v3025 = vxor.u32 %v3023, 2147483648
    %v3026 = vxor.u32 %v3024, 2147483648
    %v3027 = vmul.f32 %v3025, 1.442695
    %v3028 = vpow.pop %v3027
    %v3029 = vmul.f32 %v3026, 1.442695
    %v3030 = vpow.pop %v3029
    %v3031 = vadd.f32 %v3028, 1.0
    %v3032 = vadd.f32 %v3030, 1.0
    %v3033 = vrcp.pop %v3031
    %v3034 = vmul.f32 1.0, %v3033
    %v3035 = vrcp.pop %v3032
    %v3036 = vmul.f32 1.0, %v3035
    %v3037 = vtanh.pop %v3023
    %v3038 = vtanh.pop %v3024
    %v3039 = vmul.f32 %v3034, %v2905
    %v3040 = vmul.f32 %v3036, %v2906
    %3043 = vrot.lane.b32.xlu0 %v3037, 80
    %v3044 = vpop.permute.xlu0 %3043
    %3045 = vrot.lane.b32.xlu0 %v3038, 80
    %v3046 = vpop.permute.xlu0 %3045
    %v3049 = vmul.f32 %v3034, %v3044
    %v3050 = vmul.f32 %v3036, %v3046
    %3053 = vrot.lane.b32.xlu0 %v3049, 16
    %v3054 = vpop.permute.xlu0 %3053
    %3055 = vrot.lane.b32.xlu0 %v3050, 16
    %v3056 = vpop.permute.xlu0 %3055
    %v3059 = vadd.f32 %v3039, %v3054
    %v3060 = vadd.f32 %v3040, %v3056
    %v3061 = vtanh.pop %v3059
    %v3062 = vtanh.pop %v3060
    %3065 = vrot.lane.b32.xlu0 %v3061, 16
    %v3066 = vpop.permute.xlu0 %3065
    %3067 = vrot.lane.b32.xlu0 %v3062, 16
    %v3068 = vpop.permute.xlu0 %3067
    %v3071 = vmul.f32 %v3034, %v3066
    %v3072 = vmul.f32 %v3036, %v3068
    %3074 = vset.pattern.permute.xlu0 0
    %3075 = vperm.xlu0 %3074, %v2927
    %v3076 = vpop.permute.xlu0 %3075
    %3079 = vset.pattern.permute.xlu0 0
    %3080 = vperm.xlu0 %3079, %v2928
    %v3081 = vpop.permute.xlu0 %3080
    %v3083 = vmul.f32 %v3076, %v3071
    %v3084 = vmul.f32 %v3081, %v3072
    %v3085 = vmul.f32 %v3076, %v3059
    %v3086 = vmul.f32 %v3081, %v3060
    %v3087 = vsub.f32 1.0, %v2927
    %v3088 = vsub.f32 1.0, %v2928
    %3090 = vset.pattern.permute.xlu0 0
    %3091 = vperm.xlu0 %3090, %v3087
    %v3092 = vpop.permute.xlu0 %3091
    %3095 = vset.pattern.permute.xlu0 0
    %3096 = vperm.xlu0 %3095, %v3088
    %v3097 = vpop.permute.xlu0 %3096
    %v3099 = vmul.f32 %v3092, %v2905
    %v3100 = vmul.f32 %v3097, %v2906
    %v3101 = vadd.f32 %v3085, %v3099
    %v3102 = vadd.f32 %v3086, %v3100
    %v3103 = vmul.f32 %v3092, %v2909
    %v3104 = vmul.f32 %v3097, %v2910
    %v3105 = vadd.f32 %v3083, %v3103
    %v3106 = vadd.f32 %v3084, %v3104
    %3108 = vrot.lane.b32.xlu0 %v3083, 96
    %v3109 = vpop.permute.xlu0 %3108
    %3111 = vst.msk [vmem:[%s816] sm:$0xff] %vm234, %v3109
    %3113 = vrot.lane.b32.xlu0 %v3084, 112
    %v3114 = vpop.permute.xlu0 %3113
    %3116 = vst.msk [vmem:[%s810] sm:$0xff] %vm416, %v3114
    %v3117 = vld [vmem:[#allocation2 + $0x30] sm:$0xff]
    %v3118 = vld [vmem:[#allocation2 + $0x8] sm:$0xff]
    %3120 = vrot.lane.b32.xlu0 %v3118, 64
    %v3121 = vpop.permute.xlu0 %3120
    %v3123 = vld [vmem:[%s426] sm:$0xff]
    %v3124 = vld [vmem:[%s424] sm:$0xff]
    %v3125 = vpack.c.bf16 %v3105, %v3105
    %v3126 = vpack.c.bf16 %v3106, %v3106
    %3128 = vrot.lane.b32.xlu0 %v3125, 96
    %v3129 = vpop.permute.xlu0 %3128
    %v3131 = vsel %vm234, %v3129, 0
    %3133 = vmatprep.subr.bf16.mxu0 0
    %3134 = vmatpush1.bf16.msra.mxu0 %v1957
    %3135 = vmatprep.subr.bf16.mxu0 0
    %3136 = vmatpush1.bf16.msra.mxu0 0
    %3137 = vmatprep.subr.bf16.mxu0 0
    %3138 = vmatpush1.bf16.msra.mxu0 0
    %3139 = vmatprep.subr.bf16.mxu0 0
    %3140 = vmatpush1.bf16.msra.mxu0 0
    %3141 = vmatprep.subr.bf16.mxu0 0
    %3142 = vmatpush1.bf16.msra.mxu0 0
    %3143 = vmatprep.subr.bf16.mxu0 0
    %3144 = vmatpush1.bf16.msra.mxu0 0
    %3145 = vmatprep.subr.bf16.mxu0 0
    %3146 = vmatpush1.bf16.msra.mxu0 0
    %3147 = vmatprep.subr.bf16.mxu0 0
    %3148 = vmatpush1.bf16.msra.mxu0 0
    %3149 = vmatprep.subr.bf16.mxu0 0
    %3150 = vmatpush1.bf16.msra.mxu0 0
    %3151 = vmatprep.subr.bf16.mxu0 0
    %3152 = vmatpush1.bf16.msra.mxu0 0
    %3153 = vmatprep.subr.bf16.mxu0 0
    %3154 = vmatpush1.bf16.msra.mxu0 0
    %3155 = vmatprep.subr.bf16.mxu0 0
    %3156 = vmatpush1.bf16.msra.mxu0 0
    %3157 = vmatprep.subr.bf16.mxu0 0
    %3158 = vmatpush1.bf16.msra.mxu0 0
    %3159 = vmatprep.subr.bf16.mxu0 0
    %3160 = vmatpush1.bf16.msra.mxu0 0
    %3161 = vmatprep.subr.bf16.mxu0 0
    %3162 = vmatpush1.bf16.msra.mxu0 0
    %3163 = vmatprep.subr.bf16.mxu0 0
    %3164 = vmatpush1.bf16.msra.mxu0 0
    %3165 = vmatprep.mubr.bf16.mxu0 0
    %3166 = vmatmul.mubr.bf16.gmra.mrb[0].mxu0 %v3131
    %v3167 = vpop.f32.mrb[0].mxu0
    %v3168 = vadd.f32 0.0, %v3167
    %v3169 = vpop.f32.mrb[0].mxu0
    %v3170 = vpop.f32.mrb[0].mxu0
    %v3171 = vpop.f32.mrb[0].mxu0
    %3172 = vdwg.mxu0
    %3174 = vrot.lane.b32.xlu0 %v3126, 96
    %v3175 = vpop.permute.xlu0 %3174
    %v3177 = vsel %vm234, %v3175, 0
    %3179 = vmatprep.subr.bf16.mxu0 0
    %3180 = vmatpush1.bf16.msra.mxu0 %v2003
    %3181 = vmatprep.subr.bf16.mxu0 0
    %3182 = vmatpush1.bf16.msra.mxu0 0
    %3183 = vmatprep.subr.bf16.mxu0 0
    %3184 = vmatpush1.bf16.msra.mxu0 0
    %3185 = vmatprep.subr.bf16.mxu0 0
    %3186 = vmatpush1.bf16.msra.mxu0 0
    %3187 = vmatprep.subr.bf16.mxu0 0
    %3188 = vmatpush1.bf16.msra.mxu0 0
    %3189 = vmatprep.subr.bf16.mxu0 0
    %3190 = vmatpush1.bf16.msra.mxu0 0
    %3191 = vmatprep.subr.bf16.mxu0 0
    %3192 = vmatpush1.bf16.msra.mxu0 0
    %3193 = vmatprep.subr.bf16.mxu0 0
    %3194 = vmatpush1.bf16.msra.mxu0 0
    %3195 = vmatprep.subr.bf16.mxu0 0
    %3196 = vmatpush1.bf16.msra.mxu0 0
    %3197 = vmatprep.subr.bf16.mxu0 0
    %3198 = vmatpush1.bf16.msra.mxu0 0
    %3199 = vmatprep.subr.bf16.mxu0 0
    %3200 = vmatpush1.bf16.msra.mxu0 0
    %3201 = vmatprep.subr.bf16.mxu0 0
    %3202 = vmatpush1.bf16.msra.mxu0 0
    %3203 = vmatprep.subr.bf16.mxu0 0
    %3204 = vmatpush1.bf16.msra.mxu0 0
    %3205 = vmatprep.subr.bf16.mxu0 0
    %3206 = vmatpush1.bf16.msra.mxu0 0
    %3207 = vmatprep.subr.bf16.mxu0 0
    %3208 = vmatpush1.bf16.msra.mxu0 0
    %3209 = vmatprep.subr.bf16.mxu0 0
    %3210 = vmatpush1.bf16.msra.mxu0 0
    %3211 = vmatprep.mubr.bf16.mxu0 0
    %3212 = vmatmul.mubr.bf16.gmra.mrb[0].mxu0 %v3177
    %v3213 = vpop.f32.mrb[0].mxu0
    %v3214 = vadd.f32 0.0, %v3213
    %v3215 = vpop.f32.mrb[0].mxu0
    %v3216 = vpop.f32.mrb[0].mxu0
    %v3217 = vpop.f32.mrb[0].mxu0
    %3218 = vdwg.mxu0
    %v3219 = vadd.f32 %v3117, %v3168
    %v3220 = vadd.f32 %v3121, %v3214
    %v3221 = vxor.u32 %v3219, 2147483648
    %v3222 = vxor.u32 %v3220, 2147483648
    %v3223 = vmul.f32 %v3221, 1.442695
    %v3224 = vpow.pop %v3223
    %v3225 = vmul.f32 %v3222, 1.442695
    %v3226 = vpow.pop %v3225
    %v3227 = vadd.f32 %v3224, 1.0
    %v3228 = vadd.f32 %v3226, 1.0
    %v3229 = vrcp.pop %v3227
    %v3230 = vmul.f32 1.0, %v3229
    %v3231 = vrcp.pop %v3228
    %v3232 = vmul.f32 1.0, %v3231
    %v3233 = vtanh.pop %v3219
    %v3234 = vtanh.pop %v3220
    %v3235 = vmul.f32 %v3230, %v3101
    %v3236 = vmul.f32 %v3232, %v3102
    %3239 = vrot.lane.b32.xlu0 %v3233, 80
    %v3240 = vpop.permute.xlu0 %3239
    %3241 = vrot.lane.b32.xlu0 %v3234, 80
    %v3242 = vpop.permute.xlu0 %3241
    %v3245 = vmul.f32 %v3230, %v3240
    %v3246 = vmul.f32 %v3232, %v3242
    %3249 = vrot.lane.b32.xlu0 %v3245, 16
    %v3250 = vpop.permute.xlu0 %3249
    %3251 = vrot.lane.b32.xlu0 %v3246, 16
    %v3252 = vpop.permute.xlu0 %3251
    %v3255 = vadd.f32 %v3235, %v3250
    %v3256 = vadd.f32 %v3236, %v3252
    %v3257 = vtanh.pop %v3255
    %v3258 = vtanh.pop %v3256
    %3261 = vrot.lane.b32.xlu0 %v3257, 16
    %v3262 = vpop.permute.xlu0 %3261
    %3263 = vrot.lane.b32.xlu0 %v3258, 16
    %v3264 = vpop.permute.xlu0 %3263
    %v3267 = vmul.f32 %v3230, %v3262
    %v3268 = vmul.f32 %v3232, %v3264
    %3270 = vset.pattern.permute.xlu0 0
    %3271 = vperm.xlu0 %3270, %v3123
    %v3272 = vpop.permute.xlu0 %3271
    %3275 = vset.pattern.permute.xlu0 0
    %3276 = vperm.xlu0 %3275, %v3124
    %v3277 = vpop.permute.xlu0 %3276
    %v3279 = vmul.f32 %v3272, %v3267
    %v3280 = vmul.f32 %v3277, %v3268
    %v3281 = vmul.f32 %v3272, %v3255
    %v3282 = vmul.f32 %v3277, %v3256
    %v3283 = vsub.f32 1.0, %v3123
    %v3284 = vsub.f32 1.0, %v3124
    %3286 = vset.pattern.permute.xlu0 0
    %3287 = vperm.xlu0 %3286, %v3283
    %v3288 = vpop.permute.xlu0 %3287
    %3291 = vset.pattern.permute.xlu0 0
    %3292 = vperm.xlu0 %3291, %v3284
    %v3293 = vpop.permute.xlu0 %3292
    %v3295 = vmul.f32 %v3288, %v3101
    %v3296 = vmul.f32 %v3293, %v3102
    %v3297 = vadd.f32 %v3281, %v3295
    %v3298 = vadd.f32 %v3282, %v3296
    %v3299 = vmul.f32 %v3288, %v3105
    %v3300 = vmul.f32 %v3293, %v3106
    %v3301 = vadd.f32 %v3279, %v3299
    %v3302 = vadd.f32 %v3280, %v3300
    %3304 = vrot.lane.b32.xlu0 %v3279, 96
    %v3305 = vpop.permute.xlu0 %3304
    %3307 = vst.msk [vmem:[%s616] sm:$0xff] %vm234, %v3305
    %3309 = vrot.lane.b32.xlu0 %v3280, 112
    %v3310 = vpop.permute.xlu0 %3309
    %3312 = vst.msk [vmem:[%s610] sm:$0xff] %vm416, %v3310
    %v3313 = vld [vmem:[#allocation2 + $0x38] sm:$0xff]
    %v3314 = vld [vmem:[#allocation2] sm:$0xff]
    %3316 = vrot.lane.b32.xlu0 %v3314, 64
    %v3317 = vpop.permute.xlu0 %3316
    %v3319 = vld [vmem:[%s226] sm:$0xff]
    %v3320 = vld [vmem:[#allocation6] sm:$0xff]
    %v3321 = vpack.c.bf16 %v3301, %v3301
    %v3322 = vpack.c.bf16 %v3302, %v3302
    %3324 = vrot.lane.b32.xlu0 %v3321, 96
    %v3325 = vpop.permute.xlu0 %3324
    %v3327 = vsel %vm234, %v3325, 0
    %3329 = vmatprep.subr.bf16.mxu0 0
    %3330 = vmatpush1.bf16.msra.mxu0 %v1957
    %3331 = vmatprep.subr.bf16.mxu0 0
    %3332 = vmatpush1.bf16.msra.mxu0 0
    %3333 = vmatprep.subr.bf16.mxu0 0
    %3334 = vmatpush1.bf16.msra.mxu0 0
    %3335 = vmatprep.subr.bf16.mxu0 0
    %3336 = vmatpush1.bf16.msra.mxu0 0
    %3337 = vmatprep.subr.bf16.mxu0 0
    %3338 = vmatpush1.bf16.msra.mxu0 0
    %3339 = vmatprep.subr.bf16.mxu0 0
    %3340 = vmatpush1.bf16.msra.mxu0 0
    %3341 = vmatprep.subr.bf16.mxu0 0
    %3342 = vmatpush1.bf16.msra.mxu0 0
    %3343 = vmatprep.subr.bf16.mxu0 0
    %3344 = vmatpush1.bf16.msra.mxu0 0
    %3345 = vmatprep.subr.bf16.mxu0 0
    %3346 = vmatpush1.bf16.msra.mxu0 0
    %3347 = vmatprep.subr.bf16.mxu0 0
    %3348 = vmatpush1.bf16.msra.mxu0 0
    %3349 = vmatprep.subr.bf16.mxu0 0
    %3350 = vmatpush1.bf16.msra.mxu0 0
    %3351 = vmatprep.subr.bf16.mxu0 0
    %3352 = vmatpush1.bf16.msra.mxu0 0
    %3353 = vmatprep.subr.bf16.mxu0 0
    %3354 = vmatpush1.bf16.msra.mxu0 0
    %3355 = vmatprep.subr.bf16.mxu0 0
    %3356 = vmatpush1.bf16.msra.mxu0 0
    %3357 = vmatprep.subr.bf16.mxu0 0
    %3358 = vmatpush1.bf16.msra.mxu0 0
    %3359 = vmatprep.subr.bf16.mxu0 0
    %3360 = vmatpush1.bf16.msra.mxu0 0
    %3361 = vmatprep.mubr.bf16.mxu0 0
    %3362 = vmatmul.mubr.bf16.gmra.mrb[0].mxu0 %v3327
    %v3363 = vpop.f32.mrb[0].mxu0
    %v3364 = vadd.f32 0.0, %v3363
    %v3365 = vpop.f32.mrb[0].mxu0
    %v3366 = vpop.f32.mrb[0].mxu0
    %v3367 = vpop.f32.mrb[0].mxu0
    %3368 = vdwg.mxu0
    %3370 = vrot.lane.b32.xlu0 %v3322, 96
    %v3371 = vpop.permute.xlu0 %3370
    %v3373 = vsel %vm234, %v3371, 0
    %3375 = vmatprep.subr.bf16.mxu0 0
    %3376 = vmatpush1.bf16.msra.mxu0 %v2003
    %3377 = vmatprep.subr.bf16.mxu0 0
    %3378 = vmatpush1.bf16.msra.mxu0 0
    %3379 = vmatprep.subr.bf16.mxu0 0
    %3380 = vmatpush1.bf16.msra.mxu0 0
    %3381 = vmatprep.subr.bf16.mxu0 0
    %3382 = vmatpush1.bf16.msra.mxu0 0
    %3383 = vmatprep.subr.bf16.mxu0 0
    %3384 = vmatpush1.bf16.msra.mxu0 0
    %3385 = vmatprep.subr.bf16.mxu0 0
    %3386 = vmatpush1.bf16.msra.mxu0 0
    %3387 = vmatprep.subr.bf16.mxu0 0
    %3388 = vmatpush1.bf16.msra.mxu0 0
    %3389 = vmatprep.subr.bf16.mxu0 0
    %3390 = vmatpush1.bf16.msra.mxu0 0
    %3391 = vmatprep.subr.bf16.mxu0 0
    %3392 = vmatpush1.bf16.msra.mxu0 0
    %3393 = vmatprep.subr.bf16.mxu0 0
    %3394 = vmatpush1.bf16.msra.mxu0 0
    %3395 = vmatprep.subr.bf16.mxu0 0
    %3396 = vmatpush1.bf16.msra.mxu0 0
    %3397 = vmatprep.subr.bf16.mxu0 0
    %3398 = vmatpush1.bf16.msra.mxu0 0
    %3399 = vmatprep.subr.bf16.mxu0 0
    %3400 = vmatpush1.bf16.msra.mxu0 0
    %3401 = vmatprep.subr.bf16.mxu0 0
    %3402 = vmatpush1.bf16.msra.mxu0 0
    %3403 = vmatprep.subr.bf16.mxu0 0
    %3404 = vmatpush1.bf16.msra.mxu0 0
    %3405 = vmatprep.subr.bf16.mxu0 0
    %3406 = vmatpush1.bf16.msra.mxu0 0
    %3407 = vmatprep.mubr.bf16.mxu0 0
    %3408 = vmatmul.mubr.bf16.gmra.mrb[0].mxu0 %v3373
    %v3409 = vpop.f32.mrb[0].mxu0
    %v3410 = vadd.f32 0.0, %v3409
    %v3411 = vpop.f32.mrb[0].mxu0
    %v3412 = vpop.f32.mrb[0].mxu0
    %v3413 = vpop.f32.mrb[0].mxu0
    %3414 = vdwg.mxu0
    %v3415 = vadd.f32 %v3313, %v3364
    %v3416 = vadd.f32 %v3317, %v3410
    %v3417 = vxor.u32 %v3415, 2147483648
    %v3418 = vxor.u32 %v3416, 2147483648
    %v3419 = vmul.f32 %v3417, 1.442695
    %v3420 = vpow.pop %v3419
    %v3421 = vmul.f32 %v3418, 1.442695
    %v3422 = vpow.pop %v3421
    %v3423 = vadd.f32 %v3420, 1.0
    %v3424 = vadd.f32 %v3422, 1.0
    %v3425 = vrcp.pop %v3423
    %v3426 = vmul.f32 1.0, %v3425
    %v3427 = vrcp.pop %v3424
    %v3428 = vmul.f32 1.0, %v3427
    %v3429 = vtanh.pop %v3415
    %v3430 = vtanh.pop %v3416
    %v3431 = vmul.f32 %v3426, %v3297
    %v3432 = vmul.f32 %v3428, %v3298
    %3435 = vrot.lane.b32.xlu0 %v3429, 80
    %v3436 = vpop.permute.xlu0 %3435
    %3437 = vrot.lane.b32.xlu0 %v3430, 80
    %v3438 = vpop.permute.xlu0 %3437
    %v3441 = vmul.f32 %v3426, %v3436
    %v3442 = vmul.f32 %v3428, %v3438
    %3445 = vrot.lane.b32.xlu0 %v3441, 16
    %v3446 = vpop.permute.xlu0 %3445
    %3447 = vrot.lane.b32.xlu0 %v3442, 16
    %v3448 = vpop.permute.xlu0 %3447
    %v3451 = vadd.f32 %v3431, %v3446
    %v3452 = vadd.f32 %v3432, %v3448
    %v3453 = vtanh.pop %v3451
    %v3454 = vtanh.pop %v3452
    %3457 = vrot.lane.b32.xlu0 %v3453, 16
    %v3458 = vpop.permute.xlu0 %3457
    %3459 = vrot.lane.b32.xlu0 %v3454, 16
    %v3460 = vpop.permute.xlu0 %3459
    %v3463 = vmul.f32 %v3426, %v3458
    %v3464 = vmul.f32 %v3428, %v3460
    %3466 = vset.pattern.permute.xlu0 0
    %3467 = vperm.xlu0 %3466, %v3319
    %v3468 = vpop.permute.xlu0 %3467
    %3471 = vset.pattern.permute.xlu0 0
    %3472 = vperm.xlu0 %3471, %v3320
    %v3473 = vpop.permute.xlu0 %3472
    %v3475 = vmul.f32 %v3468, %v3463
    %v3476 = vmul.f32 %v3473, %v3464
    %v3477 = vmul.f32 %v3468, %v3451
    %v3478 = vmul.f32 %v3473, %v3452
    %v3479 = vsub.f32 1.0, %v3319
    %v3480 = vsub.f32 1.0, %v3320
    %3482 = vset.pattern.permute.xlu0 0
    %3483 = vperm.xlu0 %3482, %v3479
    %v3484 = vpop.permute.xlu0 %3483
    %3487 = vset.pattern.permute.xlu0 0
    %3488 = vperm.xlu0 %3487, %v3480
    %v3489 = vpop.permute.xlu0 %3488
    %v3491 = vmul.f32 %v3484, %v3297
    %v3492 = vmul.f32 %v3489, %v3298
    %v3493 = vadd.f32 %v3477, %v3491
    %v3494 = vadd.f32 %v3478, %v3492
    %v3495 = vmul.f32 %v3484, %v3301
    %v3496 = vmul.f32 %v3489, %v3302
    %v3497 = vadd.f32 %v3475, %v3495
    %v3498 = vadd.f32 %v3476, %v3496
    %3500 = vrot.lane.b32.xlu0 %v3475, 96
    %v3501 = vpop.permute.xlu0 %3500
    %3503 = vst.msk [vmem:[%s415] sm:$0xff] %vm234, %v3501
    %3505 = vrot.lane.b32.xlu0 %v3476, 112
    %v3506 = vpop.permute.xlu0 %3505
    %3508 = vst.msk [vmem:[#allocation12] sm:$0xff] %vm416, %v3506
    %3510 = vrot.lane.b32.xlu0 %v3497, 96
    %v3511 = vpop.permute.xlu0 %3510
    %s3513 = scalar_lea.vmem [#allocation13], 8
    %3514 = vst.msk [vmem:[%s3513] sm:$0xff] %vm234, %v3511
    %3516 = vrot.lane.b32.xlu0 %v3498, 112
    %v3517 = vpop.permute.xlu0 %3516
    %3519 = vst.msk [vmem:[%s3513] sm:$0xff] %vm416, %v3517
    %3521 = vrot.lane.b32.xlu0 %v3493, 112
    %v3522 = vpop.permute.xlu0 %3521
    %s3524 = scalar_lea.vmem [#allocation15], 8
    %3525 = vst.msk [vmem:[%s3524] sm:$0xff] %vm234, %v3522
    %3526 = vst.msk [vmem:[%s3524] sm:$0xff] %vm416, %v3494
    %v3527 = vld [vmem:[#allocation12] sm:$0xff]
    %v3528 = vld [vmem:[#allocation12 + $0x8] sm:$0xff]
    %v3529 = vld [vmem:[#allocation12 + $0x10] sm:$0xff]
    %v3530 = vld [vmem:[#allocation12 + $0x18] sm:$0xff]
    %v3531 = vld [vmem:[#allocation12 + $0x20] sm:$0xff]
    %v3532 = vld [vmem:[#allocation12 + $0x28] sm:$0xff]
    %v3533 = vld [vmem:[#allocation12 + $0x30] sm:$0xff]
    %v3534 = vld [vmem:[#allocation12 + $0x38] sm:$0xff]
    %v3535 = vpack.c.bf16 %v3528, %v3527
    %v3536 = vpack.c.bf16 %v3530, %v3529
    %v3537 = vpack.c.bf16 %v3532, %v3531
    %v3538 = vpack.c.bf16 %v3534, %v3533
    %s3539 = scalar_lea.vmem [#allocation8], 32
    %v3540 = vld [vmem:[%s3539] sm:$0xf]
    %v3541 = vld [vmem:[%s3539 + $0x4] sm:$0xf]
    %v3542 = vld [vmem:[%s3539 + $0x8] sm:$0xf]
    %v3543 = vld [vmem:[%s3539 + $0xc] sm:$0xf]
    %s3544 = scalar_lea.vmem [#allocation11], 2
    %v3545 = vld [vmem:[%s3544] sm:$0x1]
    %v3547 = vlaneseq
    %v3548 = vshrl.u32 %v3547, 7
    %v3549 = vsub.s32 0, %v3548
    %v3550 = vrot.slane %v3545, %v3549
    %v3556 = vunpack.c.l.b16 %v3540
    %v3557 = vunpack.c.l.b16 %v3541
    %v3558 = vunpack.c.l.b16 %v3542
    %v3559 = vunpack.c.l.b16 %v3543
    %v3560 = vpack.c.b16 %v3557, %v3556
    %v3561 = vpack.c.b16 %v3559, %v3558
    %v3565 = vsel %vm129, %v3535, 0
    %v3568 = vsel %vm129, %v3536, 0
    %v3571 = vsel %vm129, %v3537, 0
    %v3574 = vsel %vm129, %v3538, 0
    %3576 = vmatprep.subr.bf16.mxu0 0
    %3577 = vmatpush1.bf16.msra.mxu0 %v3560
    %3578 = vmatprep.subr.bf16.mxu0 0
    %3579 = vmatpush1.bf16.msra.mxu0 %v3561
    %3580 = vmatprep.subr.bf16.mxu0 0
    %3581 = vmatpush1.bf16.msra.mxu0 0
    %3582 = vmatprep.subr.bf16.mxu0 0
    %3583 = vmatpush1.bf16.msra.mxu0 0
    %3584 = vmatprep.subr.bf16.mxu0 0
    %3585 = vmatpush1.bf16.msra.mxu0 0
    %3586 = vmatprep.subr.bf16.mxu0 0
    %3587 = vmatpush1.bf16.msra.mxu0 0
    %3588 = vmatprep.subr.bf16.mxu0 0
    %3589 = vmatpush1.bf16.msra.mxu0 0
    %3590 = vmatprep.subr.bf16.mxu0 0
    %3591 = vmatpush1.bf16.msra.mxu0 0
    %3592 = vmatprep.subr.bf16.mxu0 0
    %3593 = vmatpush1.bf16.msra.mxu0 0
    %3594 = vmatprep.subr.bf16.mxu0 0
    %3595 = vmatpush1.bf16.msra.mxu0 0
    %3596 = vmatprep.subr.bf16.mxu0 0
    %3597 = vmatpush1.bf16.msra.mxu0 0
    %3598 = vmatprep.subr.bf16.mxu0 0
    %3599 = vmatpush1.bf16.msra.mxu0 0
    %3600 = vmatprep.subr.bf16.mxu0 0
    %3601 = vmatpush1.bf16.msra.mxu0 0
    %3602 = vmatprep.subr.bf16.mxu0 0
    %3603 = vmatpush1.bf16.msra.mxu0 0
    %3604 = vmatprep.subr.bf16.mxu0 0
    %3605 = vmatpush1.bf16.msra.mxu0 0
    %3606 = vmatprep.subr.bf16.mxu0 0
    %3607 = vmatpush1.bf16.msra.mxu0 0
    %3608 = vmatprep.mubr.bf16.mxu0 0
    %3609 = vmatmul.mubr.bf16.gmra.mrb[0].mxu0 %v3565
    %v3610 = vpop.f32.mrb[0].mxu0
    %v3611 = vadd.f32 %v3550, %v3610
    %v3612 = vpop.f32.mrb[0].mxu0
    %v3613 = vpop.f32.mrb[0].mxu0
    %v3614 = vadd.f32 %v3550, %v3613
    %v3615 = vpop.f32.mrb[0].mxu0
    %3616 = vmatprep.mubr.bf16.mxu0 0
    %3617 = vmatmul.mubr.bf16.gmra.mrb[0].mxu0 %v3568
    %v3618 = vpop.f32.mrb[0].mxu0
    %v3619 = vadd.f32 %v3550, %v3618
    %v3620 = vpop.f32.mrb[0].mxu0
    %v3621 = vpop.f32.mrb[0].mxu0
    %v3622 = vadd.f32 %v3550, %v3621
    %v3623 = vpop.f32.mrb[0].mxu0
    %3624 = vmatprep.mubr.bf16.mxu0 0
    %3625 = vmatmul.mubr.bf16.gmra.mrb[0].mxu0 %v3571
    %v3626 = vpop.f32.mrb[0].mxu0
    %v3627 = vadd.f32 %v3550, %v3626
    %v3628 = vpop.f32.mrb[0].mxu0
    %v3629 = vpop.f32.mrb[0].mxu0
    %v3630 = vadd.f32 %v3550, %v3629
    %v3631 = vpop.f32.mrb[0].mxu0
    %3632 = vmatprep.mubr.bf16.mxu0 0
    %3633 = vmatmul.mubr.bf16.gmra.mrb[0].mxu0 %v3574
    %v3634 = vpop.f32.mrb[0].mxu0
    %v3635 = vadd.f32 %v3550, %v3634
    %v3636 = vpop.f32.mrb[0].mxu0
    %v3637 = vpop.f32.mrb[0].mxu0
    %v3638 = vadd.f32 %v3550, %v3637
    %v3639 = vpop.f32.mrb[0].mxu0
    %3640 = vdwg.mxu0
    %3641 = vst [vmem:[#allocation2] sm:$0xff] %v3611
    %3642 = vst [vmem:[#allocation2 + $0x8] sm:$0xff] %v3614
    %3643 = vst [vmem:[#allocation2 + $0x10] sm:$0xff] %v3619
    %3644 = vst [vmem:[#allocation2 + $0x18] sm:$0xff] %v3622
    %3645 = vst [vmem:[#allocation2 + $0x20] sm:$0xff] %v3627
    %3646 = vst [vmem:[#allocation2 + $0x28] sm:$0xff] %v3630
    %3647 = vst [vmem:[#allocation2 + $0x30] sm:$0xff] %v3635
    %3648 = vst [vmem:[#allocation2 + $0x38] sm:$0xff] %v3638
    %s3649 = scalar_lea.vmem [#allocation9], 32
    %v3650 = vld [vmem:[%s3649] sm:$0xf]
    %v3651 = vld [vmem:[%s3649 + $0x4] sm:$0xf]
    %v3652 = vld [vmem:[%s3649 + $0x8] sm:$0xf]
    %v3653 = vld [vmem:[%s3649 + $0xc] sm:$0xf]
    %v3654 = vld [vmem:[#allocation2] sm:$0xff]
    %v3655 = vld [vmem:[#allocation2 + $0x38] sm:$0xff]
    %3657 = vrot.lane.b32.xlu0 %v3655, 64
    %v3658 = vpop.permute.xlu0 %3657
    %v3660 = vld [vmem:[#allocation6] sm:$0xff]
    %v3661 = vld [vmem:[%s226] sm:$0xff]
    %v3664 = vunpack.c.l.b16 %v3650
    %v3665 = vunpack.c.l.b16 %v3651
    %v3666 = vpack.c.b16 %v3665, %v3664
    %3668 = vmatprep.subr.bf16.mxu0 0
    %3669 = vmatpush1.bf16.msra.mxu0 %v3666
    %3670 = vmatprep.subr.bf16.mxu0 0
    %3671 = vmatpush1.bf16.msra.mxu0 0
    %3672 = vmatprep.subr.bf16.mxu0 0
    %3673 = vmatpush1.bf16.msra.mxu0 0
    %3674 = vmatprep.subr.bf16.mxu0 0
    %3675 = vmatpush1.bf16.msra.mxu0 0
    %3676 = vmatprep.subr.bf16.mxu0 0
    %3677 = vmatpush1.bf16.msra.mxu0 0
    %3678 = vmatprep.subr.bf16.mxu0 0
    %3679 = vmatpush1.bf16.msra.mxu0 0
    %3680 = vmatprep.subr.bf16.mxu0 0
    %3681 = vmatpush1.bf16.msra.mxu0 0
    %3682 = vmatprep.subr.bf16.mxu0 0
    %3683 = vmatpush1.bf16.msra.mxu0 0
    %3684 = vmatprep.subr.bf16.mxu0 0
    %3685 = vmatpush1.bf16.msra.mxu0 0
    %3686 = vmatprep.subr.bf16.mxu0 0
    %3687 = vmatpush1.bf16.msra.mxu0 0
    %3688 = vmatprep.subr.bf16.mxu0 0
    %3689 = vmatpush1.bf16.msra.mxu0 0
    %3690 = vmatprep.subr.bf16.mxu0 0
    %3691 = vmatpush1.bf16.msra.mxu0 0
    %3692 = vmatprep.subr.bf16.mxu0 0
    %3693 = vmatpush1.bf16.msra.mxu0 0
    %3694 = vmatprep.subr.bf16.mxu0 0
    %3695 = vmatpush1.bf16.msra.mxu0 0
    %3696 = vmatprep.subr.bf16.mxu0 0
    %3697 = vmatpush1.bf16.msra.mxu0 0
    %3698 = vmatprep.subr.bf16.mxu0 0
    %3699 = vmatpush1.bf16.msra.mxu0 0
    %3700 = vmatprep.mubr.bf16.mxu0 0
    %3701 = vmatmul.mubr.bf16.gmra.mrb[0].mxu0 %v236
    %v3702 = vpop.f32.mrb[0].mxu0
    %v3703 = vadd.f32 0.0, %v3702
    %v3704 = vpop.f32.mrb[0].mxu0
    %v3705 = vpop.f32.mrb[0].mxu0
    %v3706 = vpop.f32.mrb[0].mxu0
    %3707 = vdwg.mxu0
    %v3710 = vunpack.c.l.b16 %v3652
    %v3711 = vunpack.c.l.b16 %v3653
    %v3712 = vpack.c.b16 %v3711, %v3710
    %3714 = vmatprep.subr.bf16.mxu0 0
    %3715 = vmatpush1.bf16.msra.mxu0 %v3712
    %3716 = vmatprep.subr.bf16.mxu0 0
    %3717 = vmatpush1.bf16.msra.mxu0 0
    %3718 = vmatprep.subr.bf16.mxu0 0
    %3719 = vmatpush1.bf16.msra.mxu0 0
    %3720 = vmatprep.subr.bf16.mxu0 0
    %3721 = vmatpush1.bf16.msra.mxu0 0
    %3722 = vmatprep.subr.bf16.mxu0 0
    %3723 = vmatpush1.bf16.msra.mxu0 0
    %3724 = vmatprep.subr.bf16.mxu0 0
    %3725 = vmatpush1.bf16.msra.mxu0 0
    %3726 = vmatprep.subr.bf16.mxu0 0
    %3727 = vmatpush1.bf16.msra.mxu0 0
    %3728 = vmatprep.subr.bf16.mxu0 0
    %3729 = vmatpush1.bf16.msra.mxu0 0
    %3730 = vmatprep.subr.bf16.mxu0 0
    %3731 = vmatpush1.bf16.msra.mxu0 0
    %3732 = vmatprep.subr.bf16.mxu0 0
    %3733 = vmatpush1.bf16.msra.mxu0 0
    %3734 = vmatprep.subr.bf16.mxu0 0
    %3735 = vmatpush1.bf16.msra.mxu0 0
    %3736 = vmatprep.subr.bf16.mxu0 0
    %3737 = vmatpush1.bf16.msra.mxu0 0
    %3738 = vmatprep.subr.bf16.mxu0 0
    %3739 = vmatpush1.bf16.msra.mxu0 0
    %3740 = vmatprep.subr.bf16.mxu0 0
    %3741 = vmatpush1.bf16.msra.mxu0 0
    %3742 = vmatprep.subr.bf16.mxu0 0
    %3743 = vmatpush1.bf16.msra.mxu0 0
    %3744 = vmatprep.subr.bf16.mxu0 0
    %3745 = vmatpush1.bf16.msra.mxu0 0
    %3746 = vmatprep.mubr.bf16.mxu0 0
    %3747 = vmatmul.mubr.bf16.gmra.mrb[0].mxu0 %v236
    %v3748 = vpop.f32.mrb[0].mxu0
    %v3749 = vadd.f32 0.0, %v3748
    %v3750 = vpop.f32.mrb[0].mxu0
    %v3751 = vpop.f32.mrb[0].mxu0
    %v3752 = vpop.f32.mrb[0].mxu0
    %3753 = vdwg.mxu0
    %v3754 = vadd.f32 %v3654, %v3703
    %v3755 = vadd.f32 %v3658, %v3749
    %v3756 = vxor.u32 %v3754, 2147483648
    %v3757 = vxor.u32 %v3755, 2147483648
    %v3758 = vmul.f32 %v3756, 1.442695
    %v3759 = vpow.pop %v3758
    %v3760 = vmul.f32 %v3757, 1.442695
    %v3761 = vpow.pop %v3760
    %v3762 = vadd.f32 %v3759, 1.0
    %v3763 = vadd.f32 %v3761, 1.0
    %v3764 = vrcp.pop %v3762
    %v3765 = vmul.f32 1.0, %v3764
    %v3766 = vrcp.pop %v3763
    %v3767 = vmul.f32 1.0, %v3766
    %v3768 = vtanh.pop %v3754
    %v3769 = vtanh.pop %v3755
    %v3770 = vmul.f32 %v3765, 0.0
    %v3771 = vmul.f32 %v3767, 0.0
    %3774 = vrot.lane.b32.xlu0 %v3768, 80
    %v3775 = vpop.permute.xlu0 %3774
    %3776 = vrot.lane.b32.xlu0 %v3769, 80
    %v3777 = vpop.permute.xlu0 %3776
    %v3780 = vmul.f32 %v3765, %v3775
    %v3781 = vmul.f32 %v3767, %v3777
    %3784 = vrot.lane.b32.xlu0 %v3780, 16
    %v3785 = vpop.permute.xlu0 %3784
    %3786 = vrot.lane.b32.xlu0 %v3781, 16
    %v3787 = vpop.permute.xlu0 %3786
    %v3790 = vadd.f32 %v3770, %v3785
    %v3791 = vadd.f32 %v3771, %v3787
    %v3792 = vtanh.pop %v3790
    %v3793 = vtanh.pop %v3791
    %3796 = vrot.lane.b32.xlu0 %v3792, 16
    %v3797 = vpop.permute.xlu0 %3796
    %3798 = vrot.lane.b32.xlu0 %v3793, 16
    %v3799 = vpop.permute.xlu0 %3798
    %v3802 = vmul.f32 %v3765, %v3797
    %v3803 = vmul.f32 %v3767, %v3799
    %3805 = vset.pattern.permute.xlu0 0
    %3806 = vperm.xlu0 %3805, %v3660
    %v3807 = vpop.permute.xlu0 %3806
    %3810 = vset.pattern.permute.xlu0 0
    %3811 = vperm.xlu0 %3810, %v3661
    %v3812 = vpop.permute.xlu0 %3811
    %v3814 = vmul.f32 %v3807, %v3802
    %v3815 = vmul.f32 %v3812, %v3803
    %v3816 = vmul.f32 %v3807, %v3790
    %v3817 = vmul.f32 %v3812, %v3791
    %v3818 = vsub.f32 1.0, %v3660
    %v3819 = vsub.f32 1.0, %v3661
    %3821 = vset.pattern.permute.xlu0 0
    %3822 = vperm.xlu0 %3821, %v3818
    %v3823 = vpop.permute.xlu0 %3822
    %3826 = vset.pattern.permute.xlu0 0
    %3827 = vperm.xlu0 %3826, %v3819
    %v3828 = vpop.permute.xlu0 %3827
    %v3830 = vmul.f32 %v3823, 0.0
    %v3831 = vmul.f32 %v3828, 0.0
    %v3832 = vadd.f32 %v3816, %v3830
    %v3833 = vadd.f32 %v3817, %v3831
    %v3834 = vadd.f32 %v3814, %v3830
    %v3835 = vadd.f32 %v3815, %v3831
    %3837 = vrot.lane.b32.xlu0 %v3814, 96
    %v3838 = vpop.permute.xlu0 %3837
    %3840 = vst.msk [vmem:[#allocation12] sm:$0xff] %vm234, %v3838
    %3842 = vrot.lane.b32.xlu0 %v3815, 112
    %v3843 = vpop.permute.xlu0 %3842
    %3845 = vst.msk [vmem:[%s415] sm:$0xff] %vm416, %v3843
    %v3846 = vld [vmem:[#allocation2 + $0x8] sm:$0xff]
    %v3847 = vld [vmem:[#allocation2 + $0x30] sm:$0xff]
    %3849 = vrot.lane.b32.xlu0 %v3847, 64
    %v3850 = vpop.permute.xlu0 %3849
    %v3852 = vld [vmem:[%s424] sm:$0xff]
    %v3853 = vld [vmem:[%s426] sm:$0xff]
    %v3854 = vpack.c.bf16 %v3834, %v3834
    %v3855 = vpack.c.bf16 %v3835, %v3835
    %3857 = vrot.lane.b32.xlu0 %v3854, 96
    %v3858 = vpop.permute.xlu0 %3857
    %v3860 = vsel %vm234, %v3858, 0
    %3862 = vmatprep.subr.bf16.mxu0 0
    %3863 = vmatpush1.bf16.msra.mxu0 %v3666
    %3864 = vmatprep.subr.bf16.mxu0 0
    %3865 = vmatpush1.bf16.msra.mxu0 0
    %3866 = vmatprep.subr.bf16.mxu0 0
    %3867 = vmatpush1.bf16.msra.mxu0 0
    %3868 = vmatprep.subr.bf16.mxu0 0
    %3869 = vmatpush1.bf16.msra.mxu0 0
    %3870 = vmatprep.subr.bf16.mxu0 0
    %3871 = vmatpush1.bf16.msra.mxu0 0
    %3872 = vmatprep.subr.bf16.mxu0 0
    %3873 = vmatpush1.bf16.msra.mxu0 0
    %3874 = vmatprep.subr.bf16.mxu0 0
    %3875 = vmatpush1.bf16.msra.mxu0 0
    %3876 = vmatprep.subr.bf16.mxu0 0
    %3877 = vmatpush1.bf16.msra.mxu0 0
    %3878 = vmatprep.subr.bf16.mxu0 0
    %3879 = vmatpush1.bf16.msra.mxu0 0
    %3880 = vmatprep.subr.bf16.mxu0 0
    %3881 = vmatpush1.bf16.msra.mxu0 0
    %3882 = vmatprep.subr.bf16.mxu0 0
    %3883 = vmatpush1.bf16.msra.mxu0 0
    %3884 = vmatprep.subr.bf16.mxu0 0
    %3885 = vmatpush1.bf16.msra.mxu0 0
    %3886 = vmatprep.subr.bf16.mxu0 0
    %3887 = vmatpush1.bf16.msra.mxu0 0
    %3888 = vmatprep.subr.bf16.mxu0 0
    %3889 = vmatpush1.bf16.msra.mxu0 0
    %3890 = vmatprep.subr.bf16.mxu0 0
    %3891 = vmatpush1.bf16.msra.mxu0 0
    %3892 = vmatprep.subr.bf16.mxu0 0
    %3893 = vmatpush1.bf16.msra.mxu0 0
    %3894 = vmatprep.mubr.bf16.mxu0 0
    %3895 = vmatmul.mubr.bf16.gmra.mrb[0].mxu0 %v3860
    %v3896 = vpop.f32.mrb[0].mxu0
    %v3897 = vadd.f32 0.0, %v3896
    %v3898 = vpop.f32.mrb[0].mxu0
    %v3899 = vpop.f32.mrb[0].mxu0
    %v3900 = vpop.f32.mrb[0].mxu0
    %3901 = vdwg.mxu0
    %3903 = vrot.lane.b32.xlu0 %v3855, 96
    %v3904 = vpop.permute.xlu0 %3903
    %v3906 = vsel %vm234, %v3904, 0
    %3908 = vmatprep.subr.bf16.mxu0 0
    %3909 = vmatpush1.bf16.msra.mxu0 %v3712
    %3910 = vmatprep.subr.bf16.mxu0 0
    %3911 = vmatpush1.bf16.msra.mxu0 0
    %3912 = vmatprep.subr.bf16.mxu0 0
    %3913 = vmatpush1.bf16.msra.mxu0 0
    %3914 = vmatprep.subr.bf16.mxu0 0
    %3915 = vmatpush1.bf16.msra.mxu0 0
    %3916 = vmatprep.subr.bf16.mxu0 0
    %3917 = vmatpush1.bf16.msra.mxu0 0
    %3918 = vmatprep.subr.bf16.mxu0 0
    %3919 = vmatpush1.bf16.msra.mxu0 0
    %3920 = vmatprep.subr.bf16.mxu0 0
    %3921 = vmatpush1.bf16.msra.mxu0 0
    %3922 = vmatprep.subr.bf16.mxu0 0
    %3923 = vmatpush1.bf16.msra.mxu0 0
    %3924 = vmatprep.subr.bf16.mxu0 0
    %3925 = vmatpush1.bf16.msra.mxu0 0
    %3926 = vmatprep.subr.bf16.mxu0 0
    %3927 = vmatpush1.bf16.msra.mxu0 0
    %3928 = vmatprep.subr.bf16.mxu0 0
    %3929 = vmatpush1.bf16.msra.mxu0 0
    %3930 = vmatprep.subr.bf16.mxu0 0
    %3931 = vmatpush1.bf16.msra.mxu0 0
    %3932 = vmatprep.subr.bf16.mxu0 0
    %3933 = vmatpush1.bf16.msra.mxu0 0
    %3934 = vmatprep.subr.bf16.mxu0 0
    %3935 = vmatpush1.bf16.msra.mxu0 0
    %3936 = vmatprep.subr.bf16.mxu0 0
    %3937 = vmatpush1.bf16.msra.mxu0 0
    %3938 = vmatprep.subr.bf16.mxu0 0
    %3939 = vmatpush1.bf16.msra.mxu0 0
    %3940 = vmatprep.mubr.bf16.mxu0 0
    %3941 = vmatmul.mubr.bf16.gmra.mrb[0].mxu0 %v3906
    %v3942 = vpop.f32.mrb[0].mxu0
    %v3943 = vadd.f32 0.0, %v3942
    %v3944 = vpop.f32.mrb[0].mxu0
    %v3945 = vpop.f32.mrb[0].mxu0
    %v3946 = vpop.f32.mrb[0].mxu0
    %3947 = vdwg.mxu0
    %v3948 = vadd.f32 %v3846, %v3897
    %v3949 = vadd.f32 %v3850, %v3943
    %v3950 = vxor.u32 %v3948, 2147483648
    %v3951 = vxor.u32 %v3949, 2147483648
    %v3952 = vmul.f32 %v3950, 1.442695
    %v3953 = vpow.pop %v3952
    %v3954 = vmul.f32 %v3951, 1.442695
    %v3955 = vpow.pop %v3954
    %v3956 = vadd.f32 %v3953, 1.0
    %v3957 = vadd.f32 %v3955, 1.0
    %v3958 = vrcp.pop %v3956
    %v3959 = vmul.f32 1.0, %v3958
    %v3960 = vrcp.pop %v3957
    %v3961 = vmul.f32 1.0, %v3960
    %v3962 = vtanh.pop %v3948
    %v3963 = vtanh.pop %v3949
    %v3964 = vmul.f32 %v3959, %v3832
    %v3965 = vmul.f32 %v3961, %v3833
    %3968 = vrot.lane.b32.xlu0 %v3962, 80
    %v3969 = vpop.permute.xlu0 %3968
    %3970 = vrot.lane.b32.xlu0 %v3963, 80
    %v3971 = vpop.permute.xlu0 %3970
    %v3974 = vmul.f32 %v3959, %v3969
    %v3975 = vmul.f32 %v3961, %v3971
    %3978 = vrot.lane.b32.xlu0 %v3974, 16
    %v3979 = vpop.permute.xlu0 %3978
    %3980 = vrot.lane.b32.xlu0 %v3975, 16
    %v3981 = vpop.permute.xlu0 %3980
    %v3984 = vadd.f32 %v3964, %v3979
    %v3985 = vadd.f32 %v3965, %v3981
    %v3986 = vtanh.pop %v3984
    %v3987 = vtanh.pop %v3985
    %3990 = vrot.lane.b32.xlu0 %v3986, 16
    %v3991 = vpop.permute.xlu0 %3990
    %3992 = vrot.lane.b32.xlu0 %v3987, 16
    %v3993 = vpop.permute.xlu0 %3992
    %v3996 = vmul.f32 %v3959, %v3991
    %v3997 = vmul.f32 %v3961, %v3993
    %3999 = vset.pattern.permute.xlu0 0
    %4000 = vperm.xlu0 %3999, %v3852
    %v4001 = vpop.permute.xlu0 %4000
    %4004 = vset.pattern.permute.xlu0 0
    %4005 = vperm.xlu0 %4004, %v3853
    %v4006 = vpop.permute.xlu0 %4005
    %v4008 = vmul.f32 %v4001, %v3996
    %v4009 = vmul.f32 %v4006, %v3997
    %v4010 = vmul.f32 %v4001, %v3984
    %v4011 = vmul.f32 %v4006, %v3985
    %v4012 = vsub.f32 1.0, %v3852
    %v4013 = vsub.f32 1.0, %v3853
    %4015 = vset.pattern.permute.xlu0 0
    %4016 = vperm.xlu0 %4015, %v4012
    %v4017 = vpop.permute.xlu0 %4016
    %4020 = vset.pattern.permute.xlu0 0
    %4021 = vperm.xlu0 %4020, %v4013
    %v4022 = vpop.permute.xlu0 %4021
    %v4024 = vmul.f32 %v4017, %v3832
    %v4025 = vmul.f32 %v4022, %v3833
    %v4026 = vadd.f32 %v4010, %v4024
    %v4027 = vadd.f32 %v4011, %v4025
    %v4028 = vmul.f32 %v4017, %v3834
    %v4029 = vmul.f32 %v4022, %v3835
    %v4030 = vadd.f32 %v4008, %v4028
    %v4031 = vadd.f32 %v4009, %v4029
    %4033 = vrot.lane.b32.xlu0 %v4008, 96
    %v4034 = vpop.permute.xlu0 %4033
    %4036 = vst.msk [vmem:[%s610] sm:$0xff] %vm234, %v4034
    %4038 = vrot.lane.b32.xlu0 %v4009, 112
    %v4039 = vpop.permute.xlu0 %4038
    %4041 = vst.msk [vmem:[%s616] sm:$0xff] %vm416, %v4039
    %v4042 = vld [vmem:[#allocation2 + $0x10] sm:$0xff]
    %v4043 = vld [vmem:[#allocation2 + $0x28] sm:$0xff]
    %4045 = vrot.lane.b32.xlu0 %v4043, 64
    %v4046 = vpop.permute.xlu0 %4045
    %v4048 = vld [vmem:[%s624] sm:$0xff]
    %v4049 = vld [vmem:[%s626] sm:$0xff]
    %v4050 = vpack.c.bf16 %v4030, %v4030
    %v4051 = vpack.c.bf16 %v4031, %v4031
    %4053 = vrot.lane.b32.xlu0 %v4050, 96
    %v4054 = vpop.permute.xlu0 %4053
    %v4056 = vsel %vm234, %v4054, 0
    %4058 = vmatprep.subr.bf16.mxu0 0
    %4059 = vmatpush1.bf16.msra.mxu0 %v3666
    %4060 = vmatprep.subr.bf16.mxu0 0
    %4061 = vmatpush1.bf16.msra.mxu0 0
    %4062 = vmatprep.subr.bf16.mxu0 0
    %4063 = vmatpush1.bf16.msra.mxu0 0
    %4064 = vmatprep.subr.bf16.mxu0 0
    %4065 = vmatpush1.bf16.msra.mxu0 0
    %4066 = vmatprep.subr.bf16.mxu0 0
    %4067 = vmatpush1.bf16.msra.mxu0 0
    %4068 = vmatprep.subr.bf16.mxu0 0
    %4069 = vmatpush1.bf16.msra.mxu0 0
    %4070 = vmatprep.subr.bf16.mxu0 0
    %4071 = vmatpush1.bf16.msra.mxu0 0
    %4072 = vmatprep.subr.bf16.mxu0 0
    %4073 = vmatpush1.bf16.msra.mxu0 0
    %4074 = vmatprep.subr.bf16.mxu0 0
    %4075 = vmatpush1.bf16.msra.mxu0 0
    %4076 = vmatprep.subr.bf16.mxu0 0
    %4077 = vmatpush1.bf16.msra.mxu0 0
    %4078 = vmatprep.subr.bf16.mxu0 0
    %4079 = vmatpush1.bf16.msra.mxu0 0
    %4080 = vmatprep.subr.bf16.mxu0 0
    %4081 = vmatpush1.bf16.msra.mxu0 0
    %4082 = vmatprep.subr.bf16.mxu0 0
    %4083 = vmatpush1.bf16.msra.mxu0 0
    %4084 = vmatprep.subr.bf16.mxu0 0
    %4085 = vmatpush1.bf16.msra.mxu0 0
    %4086 = vmatprep.subr.bf16.mxu0 0
    %4087 = vmatpush1.bf16.msra.mxu0 0
    %4088 = vmatprep.subr.bf16.mxu0 0
    %4089 = vmatpush1.bf16.msra.mxu0 0
    %4090 = vmatprep.mubr.bf16.mxu0 0
    %4091 = vmatmul.mubr.bf16.gmra.mrb[0].mxu0 %v4056
    %v4092 = vpop.f32.mrb[0].mxu0
    %v4093 = vadd.f32 0.0, %v4092
    %v4094 = vpop.f32.mrb[0].mxu0
    %v4095 = vpop.f32.mrb[0].mxu0
    %v4096 = vpop.f32.mrb[0].mxu0
    %4097 = vdwg.mxu0
    %4099 = vrot.lane.b32.xlu0 %v4051, 96
    %v4100 = vpop.permute.xlu0 %4099
    %v4102 = vsel %vm234, %v4100, 0
    %4104 = vmatprep.subr.bf16.mxu0 0
    %4105 = vmatpush1.bf16.msra.mxu0 %v3712
    %4106 = vmatprep.subr.bf16.mxu0 0
    %4107 = vmatpush1.bf16.msra.mxu0 0
    %4108 = vmatprep.subr.bf16.mxu0 0
    %4109 = vmatpush1.bf16.msra.mxu0 0
    %4110 = vmatprep.subr.bf16.mxu0 0
    %4111 = vmatpush1.bf16.msra.mxu0 0
    %4112 = vmatprep.subr.bf16.mxu0 0
    %4113 = vmatpush1.bf16.msra.mxu0 0
    %4114 = vmatprep.subr.bf16.mxu0 0
    %4115 = vmatpush1.bf16.msra.mxu0 0
    %4116 = vmatprep.subr.bf16.mxu0 0
    %4117 = vmatpush1.bf16.msra.mxu0 0
    %4118 = vmatprep.subr.bf16.mxu0 0
    %4119 = vmatpush1.bf16.msra.mxu0 0
    %4120 = vmatprep.subr.bf16.mxu0 0
    %4121 = vmatpush1.bf16.msra.mxu0 0
    %4122 = vmatprep.subr.bf16.mxu0 0
    %4123 = vmatpush1.bf16.msra.mxu0 0
    %4124 = vmatprep.subr.bf16.mxu0 0
    %4125 = vmatpush1.bf16.msra.mxu0 0
    %4126 = vmatprep.subr.bf16.mxu0 0
    %4127 = vmatpush1.bf16.msra.mxu0 0
    %4128 = vmatprep.subr.bf16.mxu0 0
    %4129 = vmatpush1.bf16.msra.mxu0 0
    %4130 = vmatprep.subr.bf16.mxu0 0
    %4131 = vmatpush1.bf16.msra.mxu0 0
    %4132 = vmatprep.subr.bf16.mxu0 0
    %4133 = vmatpush1.bf16.msra.mxu0 0
    %4134 = vmatprep.subr.bf16.mxu0 0
    %4135 = vmatpush1.bf16.msra.mxu0 0
    %4136 = vmatprep.mubr.bf16.mxu0 0
    %4137 = vmatmul.mubr.bf16.gmra.mrb[0].mxu0 %v4102
    %v4138 = vpop.f32.mrb[0].mxu0
    %v4139 = vadd.f32 0.0, %v4138
    %v4140 = vpop.f32.mrb[0].mxu0
    %v4141 = vpop.f32.mrb[0].mxu0
    %v4142 = vpop.f32.mrb[0].mxu0
    %4143 = vdwg.mxu0
    %v4144 = vadd.f32 %v4042, %v4093
    %v4145 = vadd.f32 %v4046, %v4139
    %v4146 = vxor.u32 %v4144, 2147483648
    %v4147 = vxor.u32 %v4145, 2147483648
    %v4148 = vmul.f32 %v4146, 1.442695
    %v4149 = vpow.pop %v4148
    %v4150 = vmul.f32 %v4147, 1.442695
    %v4151 = vpow.pop %v4150
    %v4152 = vadd.f32 %v4149, 1.0
    %v4153 = vadd.f32 %v4151, 1.0
    %v4154 = vrcp.pop %v4152
    %v4155 = vmul.f32 1.0, %v4154
    %v4156 = vrcp.pop %v4153
    %v4157 = vmul.f32 1.0, %v4156
    %v4158 = vtanh.pop %v4144
    %v4159 = vtanh.pop %v4145
    %v4160 = vmul.f32 %v4155, %v4026
    %v4161 = vmul.f32 %v4157, %v4027
    %4164 = vrot.lane.b32.xlu0 %v4158, 80
    %v4165 = vpop.permute.xlu0 %4164
    %4166 = vrot.lane.b32.xlu0 %v4159, 80
    %v4167 = vpop.permute.xlu0 %4166
    %v4170 = vmul.f32 %v4155, %v4165
    %v4171 = vmul.f32 %v4157, %v4167
    %4174 = vrot.lane.b32.xlu0 %v4170, 16
    %v4175 = vpop.permute.xlu0 %4174
    %4176 = vrot.lane.b32.xlu0 %v4171, 16
    %v4177 = vpop.permute.xlu0 %4176
    %v4180 = vadd.f32 %v4160, %v4175
    %v4181 = vadd.f32 %v4161, %v4177
    %v4182 = vtanh.pop %v4180
    %v4183 = vtanh.pop %v4181
    %4186 = vrot.lane.b32.xlu0 %v4182, 16
    %v4187 = vpop.permute.xlu0 %4186
    %4188 = vrot.lane.b32.xlu0 %v4183, 16
    %v4189 = vpop.permute.xlu0 %4188
    %v4192 = vmul.f32 %v4155, %v4187
    %v4193 = vmul.f32 %v4157, %v4189
    %4195 = vset.pattern.permute.xlu0 0
    %4196 = vperm.xlu0 %4195, %v4048
    %v4197 = vpop.permute.xlu0 %4196
    %4200 = vset.pattern.permute.xlu0 0
    %4201 = vperm.xlu0 %4200, %v4049
    %v4202 = vpop.permute.xlu0 %4201
    %v4204 = vmul.f32 %v4197, %v4192
    %v4205 = vmul.f32 %v4202, %v4193
    %v4206 = vmul.f32 %v4197, %v4180
    %v4207 = vmul.f32 %v4202, %v4181
    %v4208 = vsub.f32 1.0, %v4048
    %v4209 = vsub.f32 1.0, %v4049
    %4211 = vset.pattern.permute.xlu0 0
    %4212 = vperm.xlu0 %4211, %v4208
    %v4213 = vpop.permute.xlu0 %4212
    %4216 = vset.pattern.permute.xlu0 0
    %4217 = vperm.xlu0 %4216, %v4209
    %v4218 = vpop.permute.xlu0 %4217
    %v4220 = vmul.f32 %v4213, %v4026
    %v4221 = vmul.f32 %v4218, %v4027
    %v4222 = vadd.f32 %v4206, %v4220
    %v4223 = vadd.f32 %v4207, %v4221
    %v4224 = vmul.f32 %v4213, %v4030
    %v4225 = vmul.f32 %v4218, %v4031
    %v4226 = vadd.f32 %v4204, %v4224
    %v4227 = vadd.f32 %v4205, %v4225
    %4229 = vrot.lane.b32.xlu0 %v4204, 96
    %v4230 = vpop.permute.xlu0 %4229
    %4232 = vst.msk [vmem:[%s810] sm:$0xff] %vm234, %v4230
    %4234 = vrot.lane.b32.xlu0 %v4205, 112
    %v4235 = vpop.permute.xlu0 %4234
    %4237 = vst.msk [vmem:[%s816] sm:$0xff] %vm416, %v4235
    %v4238 = vld [vmem:[#allocation2 + $0x18] sm:$0xff]
    %v4239 = vld [vmem:[#allocation2 + $0x20] sm:$0xff]
    %4241 = vrot.lane.b32.xlu0 %v4239, 64
    %v4242 = vpop.permute.xlu0 %4241
    %v4244 = vld [vmem:[%s824] sm:$0xff]
    %v4245 = vld [vmem:[%s826] sm:$0xff]
    %v4246 = vpack.c.bf16 %v4226, %v4226
    %v4247 = vpack.c.bf16 %v4227, %v4227
    %4249 = vrot.lane.b32.xlu0 %v4246, 96
    %v4250 = vpop.permute.xlu0 %4249
    %v4252 = vsel %vm234, %v4250, 0
    %4254 = vmatprep.subr.bf16.mxu0 0
    %4255 = vmatpush1.bf16.msra.mxu0 %v3666
    %4256 = vmatprep.subr.bf16.mxu0 0
    %4257 = vmatpush1.bf16.msra.mxu0 0
    %4258 = vmatprep.subr.bf16.mxu0 0
    %4259 = vmatpush1.bf16.msra.mxu0 0
    %4260 = vmatprep.subr.bf16.mxu0 0
    %4261 = vmatpush1.bf16.msra.mxu0 0
    %4262 = vmatprep.subr.bf16.mxu0 0
    %4263 = vmatpush1.bf16.msra.mxu0 0
    %4264 = vmatprep.subr.bf16.mxu0 0
    %4265 = vmatpush1.bf16.msra.mxu0 0
    %4266 = vmatprep.subr.bf16.mxu0 0
    %4267 = vmatpush1.bf16.msra.mxu0 0
    %4268 = vmatprep.subr.bf16.mxu0 0
    %4269 = vmatpush1.bf16.msra.mxu0 0
    %4270 = vmatprep.subr.bf16.mxu0 0
    %4271 = vmatpush1.bf16.msra.mxu0 0
    %4272 = vmatprep.subr.bf16.mxu0 0
    %4273 = vmatpush1.bf16.msra.mxu0 0
    %4274 = vmatprep.subr.bf16.mxu0 0
    %4275 = vmatpush1.bf16.msra.mxu0 0
    %4276 = vmatprep.subr.bf16.mxu0 0
    %4277 = vmatpush1.bf16.msra.mxu0 0
    %4278 = vmatprep.subr.bf16.mxu0 0
    %4279 = vmatpush1.bf16.msra.mxu0 0
    %4280 = vmatprep.subr.bf16.mxu0 0
    %4281 = vmatpush1.bf16.msra.mxu0 0
    %4282 = vmatprep.subr.bf16.mxu0 0
    %4283 = vmatpush1.bf16.msra.mxu0 0
    %4284 = vmatprep.subr.bf16.mxu0 0
    %4285 = vmatpush1.bf16.msra.mxu0 0
    %4286 = vmatprep.mubr.bf16.mxu0 0
    %4287 = vmatmul.mubr.bf16.gmra.mrb[0].mxu0 %v4252
    %v4288 = vpop.f32.mrb[0].mxu0
    %v4289 = vadd.f32 0.0, %v4288
    %v4290 = vpop.f32.mrb[0].mxu0
    %v4291 = vpop.f32.mrb[0].mxu0
    %v4292 = vpop.f32.mrb[0].mxu0
    %4293 = vdwg.mxu0
    %4295 = vrot.lane.b32.xlu0 %v4247, 96
    %v4296 = vpop.permute.xlu0 %4295
    %v4298 = vsel %vm234, %v4296, 0
    %4300 = vmatprep.subr.bf16.mxu0 0
    %4301 = vmatpush1.bf16.msra.mxu0 %v3712
    %4302 = vmatprep.subr.bf16.mxu0 0
    %4303 = vmatpush1.bf16.msra.mxu0 0
    %4304 = vmatprep.subr.bf16.mxu0 0
    %4305 = vmatpush1.bf16.msra.mxu0 0
    %4306 = vmatprep.subr.bf16.mxu0 0
    %4307 = vmatpush1.bf16.msra.mxu0 0
    %4308 = vmatprep.subr.bf16.mxu0 0
    %4309 = vmatpush1.bf16.msra.mxu0 0
    %4310 = vmatprep.subr.bf16.mxu0 0
    %4311 = vmatpush1.bf16.msra.mxu0 0
    %4312 = vmatprep.subr.bf16.mxu0 0
    %4313 = vmatpush1.bf16.msra.mxu0 0
    %4314 = vmatprep.subr.bf16.mxu0 0
    %4315 = vmatpush1.bf16.msra.mxu0 0
    %4316 = vmatprep.subr.bf16.mxu0 0
    %4317 = vmatpush1.bf16.msra.mxu0 0
    %4318 = vmatprep.subr.bf16.mxu0 0
    %4319 = vmatpush1.bf16.msra.mxu0 0
    %4320 = vmatprep.subr.bf16.mxu0 0
    %4321 = vmatpush1.bf16.msra.mxu0 0
    %4322 = vmatprep.subr.bf16.mxu0 0
    %4323 = vmatpush1.bf16.msra.mxu0 0
    %4324 = vmatprep.subr.bf16.mxu0 0
    %4325 = vmatpush1.bf16.msra.mxu0 0
    %4326 = vmatprep.subr.bf16.mxu0 0
    %4327 = vmatpush1.bf16.msra.mxu0 0
    %4328 = vmatprep.subr.bf16.mxu0 0
    %4329 = vmatpush1.bf16.msra.mxu0 0
    %4330 = vmatprep.subr.bf16.mxu0 0
    %4331 = vmatpush1.bf16.msra.mxu0 0
    %4332 = vmatprep.mubr.bf16.mxu0 0
    %4333 = vmatmul.mubr.bf16.gmra.mrb[0].mxu0 %v4298
    %v4334 = vpop.f32.mrb[0].mxu0
    %v4335 = vadd.f32 0.0, %v4334
    %v4336 = vpop.f32.mrb[0].mxu0
    %v4337 = vpop.f32.mrb[0].mxu0
    %v4338 = vpop.f32.mrb[0].mxu0
    %4339 = vdwg.mxu0
    %v4340 = vadd.f32 %v4238, %v4289
    %v4341 = vadd.f32 %v4242, %v4335
    %v4342 = vxor.u32 %v4340, 2147483648
    %v4343 = vxor.u32 %v4341, 2147483648
    %v4344 = vmul.f32 %v4342, 1.442695
    %v4345 = vpow.pop %v4344
    %v4346 = vmul.f32 %v4343, 1.442695
    %v4347 = vpow.pop %v4346
    %v4348 = vadd.f32 %v4345, 1.0
    %v4349 = vadd.f32 %v4347, 1.0
    %v4350 = vrcp.pop %v4348
    %v4351 = vmul.f32 1.0, %v4350
    %v4352 = vrcp.pop %v4349
    %v4353 = vmul.f32 1.0, %v4352
    %v4354 = vtanh.pop %v4340
    %v4355 = vtanh.pop %v4341
    %v4356 = vmul.f32 %v4351, %v4222
    %v4357 = vmul.f32 %v4353, %v4223
    %4360 = vrot.lane.b32.xlu0 %v4354, 80
    %v4361 = vpop.permute.xlu0 %4360
    %4362 = vrot.lane.b32.xlu0 %v4355, 80
    %v4363 = vpop.permute.xlu0 %4362
    %v4366 = vmul.f32 %v4351, %v4361
    %v4367 = vmul.f32 %v4353, %v4363
    %4370 = vrot.lane.b32.xlu0 %v4366, 16
    %v4371 = vpop.permute.xlu0 %4370
    %4372 = vrot.lane.b32.xlu0 %v4367, 16
    %v4373 = vpop.permute.xlu0 %4372
    %v4376 = vadd.f32 %v4356, %v4371
    %v4377 = vadd.f32 %v4357, %v4373
    %v4378 = vtanh.pop %v4376
    %v4379 = vtanh.pop %v4377
    %4382 = vrot.lane.b32.xlu0 %v4378, 16
    %v4383 = vpop.permute.xlu0 %4382
    %4384 = vrot.lane.b32.xlu0 %v4379, 16
    %v4385 = vpop.permute.xlu0 %4384
    %v4388 = vmul.f32 %v4351, %v4383
    %v4389 = vmul.f32 %v4353, %v4385
    %4391 = vset.pattern.permute.xlu0 0
    %4392 = vperm.xlu0 %4391, %v4244
    %v4393 = vpop.permute.xlu0 %4392
    %4396 = vset.pattern.permute.xlu0 0
    %4397 = vperm.xlu0 %4396, %v4245
    %v4398 = vpop.permute.xlu0 %4397
    %v4400 = vmul.f32 %v4393, %v4388
    %v4401 = vmul.f32 %v4398, %v4389
    %v4402 = vmul.f32 %v4393, %v4376
    %v4403 = vmul.f32 %v4398, %v4377
    %v4404 = vsub.f32 1.0, %v4244
    %v4405 = vsub.f32 1.0, %v4245
    %4407 = vset.pattern.permute.xlu0 0
    %4408 = vperm.xlu0 %4407, %v4404
    %v4409 = vpop.permute.xlu0 %4408
    %4412 = vset.pattern.permute.xlu0 0
    %4413 = vperm.xlu0 %4412, %v4405
    %v4414 = vpop.permute.xlu0 %4413
    %v4416 = vmul.f32 %v4409, %v4222
    %v4417 = vmul.f32 %v4414, %v4223
    %v4418 = vadd.f32 %v4402, %v4416
    %v4419 = vadd.f32 %v4403, %v4417
    %v4420 = vmul.f32 %v4409, %v4226
    %v4421 = vmul.f32 %v4414, %v4227
    %v4422 = vadd.f32 %v4400, %v4420
    %v4423 = vadd.f32 %v4401, %v4421
    %4425 = vrot.lane.b32.xlu0 %v4400, 96
    %v4426 = vpop.permute.xlu0 %4425
    %4428 = vst.msk [vmem:[%s1010] sm:$0xff] %vm234, %v4426
    %4430 = vrot.lane.b32.xlu0 %v4401, 112
    %v4431 = vpop.permute.xlu0 %4430
    %4433 = vst.msk [vmem:[%s1016] sm:$0xff] %vm416, %v4431
    %v4434 = vld [vmem:[#allocation2 + $0x20] sm:$0xff]
    %v4435 = vld [vmem:[#allocation2 + $0x18] sm:$0xff]
    %4437 = vrot.lane.b32.xlu0 %v4435, 64
    %v4438 = vpop.permute.xlu0 %4437
    %v4440 = vld [vmem:[%s826] sm:$0xff]
    %v4441 = vld [vmem:[%s824] sm:$0xff]
    %v4442 = vpack.c.bf16 %v4422, %v4422
    %v4443 = vpack.c.bf16 %v4423, %v4423
    %4445 = vrot.lane.b32.xlu0 %v4442, 96
    %v4446 = vpop.permute.xlu0 %4445
    %v4448 = vsel %vm234, %v4446, 0
    %4450 = vmatprep.subr.bf16.mxu0 0
    %4451 = vmatpush1.bf16.msra.mxu0 %v3666
    %4452 = vmatprep.subr.bf16.mxu0 0
    %4453 = vmatpush1.bf16.msra.mxu0 0
    %4454 = vmatprep.subr.bf16.mxu0 0
    %4455 = vmatpush1.bf16.msra.mxu0 0
    %4456 = vmatprep.subr.bf16.mxu0 0
    %4457 = vmatpush1.bf16.msra.mxu0 0
    %4458 = vmatprep.subr.bf16.mxu0 0
    %4459 = vmatpush1.bf16.msra.mxu0 0
    %4460 = vmatprep.subr.bf16.mxu0 0
    %4461 = vmatpush1.bf16.msra.mxu0 0
    %4462 = vmatprep.subr.bf16.mxu0 0
    %4463 = vmatpush1.bf16.msra.mxu0 0
    %4464 = vmatprep.subr.bf16.mxu0 0
    %4465 = vmatpush1.bf16.msra.mxu0 0
    %4466 = vmatprep.subr.bf16.mxu0 0
    %4467 = vmatpush1.bf16.msra.mxu0 0
    %4468 = vmatprep.subr.bf16.mxu0 0
    %4469 = vmatpush1.bf16.msra.mxu0 0
    %4470 = vmatprep.subr.bf16.mxu0 0
    %4471 = vmatpush1.bf16.msra.mxu0 0
    %4472 = vmatprep.subr.bf16.mxu0 0
    %4473 = vmatpush1.bf16.msra.mxu0 0
    %4474 = vmatprep.subr.bf16.mxu0 0
    %4475 = vmatpush1.bf16.msra.mxu0 0
    %4476 = vmatprep.subr.bf16.mxu0 0
    %4477 = vmatpush1.bf16.msra.mxu0 0
    %4478 = vmatprep.subr.bf16.mxu0 0
    %4479 = vmatpush1.bf16.msra.mxu0 0
    %4480 = vmatprep.subr.bf16.mxu0 0
    %4481 = vmatpush1.bf16.msra.mxu0 0
    %4482 = vmatprep.mubr.bf16.mxu0 0
    %4483 = vmatmul.mubr.bf16.gmra.mrb[0].mxu0 %v4448
    %v4484 = vpop.f32.mrb[0].mxu0
    %v4485 = vadd.f32 0.0, %v4484
    %v4486 = vpop.f32.mrb[0].mxu0
    %v4487 = vpop.f32.mrb[0].mxu0
    %v4488 = vpop.f32.mrb[0].mxu0
    %4489 = vdwg.mxu0
    %4491 = vrot.lane.b32.xlu0 %v4443, 96
    %v4492 = vpop.permute.xlu0 %4491
    %v4494 = vsel %vm234, %v4492, 0
    %4496 = vmatprep.subr.bf16.mxu0 0
    %4497 = vmatpush1.bf16.msra.mxu0 %v3712
    %4498 = vmatprep.subr.bf16.mxu0 0
    %4499 = vmatpush1.bf16.msra.mxu0 0
    %4500 = vmatprep.subr.bf16.mxu0 0
    %4501 = vmatpush1.bf16.msra.mxu0 0
    %4502 = vmatprep.subr.bf16.mxu0 0
    %4503 = vmatpush1.bf16.msra.mxu0 0
    %4504 = vmatprep.subr.bf16.mxu0 0
    %4505 = vmatpush1.bf16.msra.mxu0 0
    %4506 = vmatprep.subr.bf16.mxu0 0
    %4507 = vmatpush1.bf16.msra.mxu0 0
    %4508 = vmatprep.subr.bf16.mxu0 0
    %4509 = vmatpush1.bf16.msra.mxu0 0
    %4510 = vmatprep.subr.bf16.mxu0 0
    %4511 = vmatpush1.bf16.msra.mxu0 0
    %4512 = vmatprep.subr.bf16.mxu0 0
    %4513 = vmatpush1.bf16.msra.mxu0 0
    %4514 = vmatprep.subr.bf16.mxu0 0
    %4515 = vmatpush1.bf16.msra.mxu0 0
    %4516 = vmatprep.subr.bf16.mxu0 0
    %4517 = vmatpush1.bf16.msra.mxu0 0
    %4518 = vmatprep.subr.bf16.mxu0 0
    %4519 = vmatpush1.bf16.msra.mxu0 0
    %4520 = vmatprep.subr.bf16.mxu0 0
    %4521 = vmatpush1.bf16.msra.mxu0 0
    %4522 = vmatprep.subr.bf16.mxu0 0
    %4523 = vmatpush1.bf16.msra.mxu0 0
    %4524 = vmatprep.subr.bf16.mxu0 0
    %4525 = vmatpush1.bf16.msra.mxu0 0
    %4526 = vmatprep.subr.bf16.mxu0 0
    %4527 = vmatpush1.bf16.msra.mxu0 0
    %4528 = vmatprep.mubr.bf16.mxu0 0
    %4529 = vmatmul.mubr.bf16.gmra.mrb[0].mxu0 %v4494
    %v4530 = vpop.f32.mrb[0].mxu0
    %v4531 = vadd.f32 0.0, %v4530
    %v4532 = vpop.f32.mrb[0].mxu0
    %v4533 = vpop.f32.mrb[0].mxu0
    %v4534 = vpop.f32.mrb[0].mxu0
    %4535 = vdwg.mxu0
    %v4536 = vadd.f32 %v4434, %v4485
    %v4537 = vadd.f32 %v4438, %v4531
    %v4538 = vxor.u32 %v4536, 2147483648
    %v4539 = vxor.u32 %v4537, 2147483648
    %v4540 = vmul.f32 %v4538, 1.442695
    %v4541 = vpow.pop %v4540
    %v4542 = vmul.f32 %v4539, 1.442695
    %v4543 = vpow.pop %v4542
    %v4544 = vadd.f32 %v4541, 1.0
    %v4545 = vadd.f32 %v4543, 1.0
    %v4546 = vrcp.pop %v4544
    %v4547 = vmul.f32 1.0, %v4546
    %v4548 = vrcp.pop %v4545
    %v4549 = vmul.f32 1.0, %v4548
    %v4550 = vtanh.pop %v4536
    %v4551 = vtanh.pop %v4537
    %v4552 = vmul.f32 %v4547, %v4418
    %v4553 = vmul.f32 %v4549, %v4419
    %4556 = vrot.lane.b32.xlu0 %v4550, 80
    %v4557 = vpop.permute.xlu0 %4556
    %4558 = vrot.lane.b32.xlu0 %v4551, 80
    %v4559 = vpop.permute.xlu0 %4558
    %v4562 = vmul.f32 %v4547, %v4557
    %v4563 = vmul.f32 %v4549, %v4559
    %4566 = vrot.lane.b32.xlu0 %v4562, 16
    %v4567 = vpop.permute.xlu0 %4566
    %4568 = vrot.lane.b32.xlu0 %v4563, 16
    %v4569 = vpop.permute.xlu0 %4568
    %v4572 = vadd.f32 %v4552, %v4567
    %v4573 = vadd.f32 %v4553, %v4569
    %v4574 = vtanh.pop %v4572
    %v4575 = vtanh.pop %v4573
    %4578 = vrot.lane.b32.xlu0 %v4574, 16
    %v4579 = vpop.permute.xlu0 %4578
    %4580 = vrot.lane.b32.xlu0 %v4575, 16
    %v4581 = vpop.permute.xlu0 %4580
    %v4584 = vmul.f32 %v4547, %v4579
    %v4585 = vmul.f32 %v4549, %v4581
    %4587 = vset.pattern.permute.xlu0 0
    %4588 = vperm.xlu0 %4587, %v4440
    %v4589 = vpop.permute.xlu0 %4588
    %4592 = vset.pattern.permute.xlu0 0
    %4593 = vperm.xlu0 %4592, %v4441
    %v4594 = vpop.permute.xlu0 %4593
    %v4596 = vmul.f32 %v4589, %v4584
    %v4597 = vmul.f32 %v4594, %v4585
    %v4598 = vmul.f32 %v4589, %v4572
    %v4599 = vmul.f32 %v4594, %v4573
    %v4600 = vsub.f32 1.0, %v4440
    %v4601 = vsub.f32 1.0, %v4441
    %4603 = vset.pattern.permute.xlu0 0
    %4604 = vperm.xlu0 %4603, %v4600
    %v4605 = vpop.permute.xlu0 %4604
    %4608 = vset.pattern.permute.xlu0 0
    %4609 = vperm.xlu0 %4608, %v4601
    %v4610 = vpop.permute.xlu0 %4609
    %v4612 = vmul.f32 %v4605, %v4418
    %v4613 = vmul.f32 %v4610, %v4419
    %v4614 = vadd.f32 %v4598, %v4612
    %v4615 = vadd.f32 %v4599, %v4613
    %v4616 = vmul.f32 %v4605, %v4422
    %v4617 = vmul.f32 %v4610, %v4423
    %v4618 = vadd.f32 %v4596, %v4616
    %v4619 = vadd.f32 %v4597, %v4617
    %4621 = vrot.lane.b32.xlu0 %v4596, 96
    %v4622 = vpop.permute.xlu0 %4621
    %4624 = vst.msk [vmem:[%s1016] sm:$0xff] %vm234, %v4622
    %4626 = vrot.lane.b32.xlu0 %v4597, 112
    %v4627 = vpop.permute.xlu0 %4626
    %4629 = vst.msk [vmem:[%s1010] sm:$0xff] %vm416, %v4627
    %v4630 = vld [vmem:[#allocation2 + $0x28] sm:$0xff]
    %v4631 = vld [vmem:[#allocation2 + $0x10] sm:$0xff]
    %4633 = vrot.lane.b32.xlu0 %v4631, 64
    %v4634 = vpop.permute.xlu0 %4633
    %v4636 = vld [vmem:[%s626] sm:$0xff]
    %v4637 = vld [vmem:[%s624] sm:$0xff]
    %v4638 = vpack.c.bf16 %v4618, %v4618
    %v4639 = vpack.c.bf16 %v4619, %v4619
    %4641 = vrot.lane.b32.xlu0 %v4638, 96
    %v4642 = vpop.permute.xlu0 %4641
    %v4644 = vsel %vm234, %v4642, 0
    %4646 = vmatprep.subr.bf16.mxu0 0
    %4647 = vmatpush1.bf16.msra.mxu0 %v3666
    %4648 = vmatprep.subr.bf16.mxu0 0
    %4649 = vmatpush1.bf16.msra.mxu0 0
    %4650 = vmatprep.subr.bf16.mxu0 0
    %4651 = vmatpush1.bf16.msra.mxu0 0
    %4652 = vmatprep.subr.bf16.mxu0 0
    %4653 = vmatpush1.bf16.msra.mxu0 0
    %4654 = vmatprep.subr.bf16.mxu0 0
    %4655 = vmatpush1.bf16.msra.mxu0 0
    %4656 = vmatprep.subr.bf16.mxu0 0
    %4657 = vmatpush1.bf16.msra.mxu0 0
    %4658 = vmatprep.subr.bf16.mxu0 0
    %4659 = vmatpush1.bf16.msra.mxu0 0
    %4660 = vmatprep.subr.bf16.mxu0 0
    %4661 = vmatpush1.bf16.msra.mxu0 0
    %4662 = vmatprep.subr.bf16.mxu0 0
    %4663 = vmatpush1.bf16.msra.mxu0 0
    %4664 = vmatprep.subr.bf16.mxu0 0
    %4665 = vmatpush1.bf16.msra.mxu0 0
    %4666 = vmatprep.subr.bf16.mxu0 0
    %4667 = vmatpush1.bf16.msra.mxu0 0
    %4668 = vmatprep.subr.bf16.mxu0 0
    %4669 = vmatpush1.bf16.msra.mxu0 0
    %4670 = vmatprep.subr.bf16.mxu0 0
    %4671 = vmatpush1.bf16.msra.mxu0 0
    %4672 = vmatprep.subr.bf16.mxu0 0
    %4673 = vmatpush1.bf16.msra.mxu0 0
    %4674 = vmatprep.subr.bf16.mxu0 0
    %4675 = vmatpush1.bf16.msra.mxu0 0
    %4676 = vmatprep.subr.bf16.mxu0 0
    %4677 = vmatpush1.bf16.msra.mxu0 0
    %4678 = vmatprep.mubr.bf16.mxu0 0
    %4679 = vmatmul.mubr.bf16.gmra.mrb[0].mxu0 %v4644
    %v4680 = vpop.f32.mrb[0].mxu0
    %v4681 = vadd.f32 0.0, %v4680
    %v4682 = vpop.f32.mrb[0].mxu0
    %v4683 = vpop.f32.mrb[0].mxu0
    %v4684 = vpop.f32.mrb[0].mxu0
    %4685 = vdwg.mxu0
    %4687 = vrot.lane.b32.xlu0 %v4639, 96
    %v4688 = vpop.permute.xlu0 %4687
    %v4690 = vsel %vm234, %v4688, 0
    %4692 = vmatprep.subr.bf16.mxu0 0
    %4693 = vmatpush1.bf16.msra.mxu0 %v3712
    %4694 = vmatprep.subr.bf16.mxu0 0
    %4695 = vmatpush1.bf16.msra.mxu0 0
    %4696 = vmatprep.subr.bf16.mxu0 0
    %4697 = vmatpush1.bf16.msra.mxu0 0
    %4698 = vmatprep.subr.bf16.mxu0 0
    %4699 = vmatpush1.bf16.msra.mxu0 0
    %4700 = vmatprep.subr.bf16.mxu0 0
    %4701 = vmatpush1.bf16.msra.mxu0 0
    %4702 = vmatprep.subr.bf16.mxu0 0
    %4703 = vmatpush1.bf16.msra.mxu0 0
    %4704 = vmatprep.subr.bf16.mxu0 0
    %4705 = vmatpush1.bf16.msra.mxu0 0
    %4706 = vmatprep.subr.bf16.mxu0 0
    %4707 = vmatpush1.bf16.msra.mxu0 0
    %4708 = vmatprep.subr.bf16.mxu0 0
    %4709 = vmatpush1.bf16.msra.mxu0 0
    %4710 = vmatprep.subr.bf16.mxu0 0
    %4711 = vmatpush1.bf16.msra.mxu0 0
    %4712 = vmatprep.subr.bf16.mxu0 0
    %4713 = vmatpush1.bf16.msra.mxu0 0
    %4714 = vmatprep.subr.bf16.mxu0 0
    %4715 = vmatpush1.bf16.msra.mxu0 0
    %4716 = vmatprep.subr.bf16.mxu0 0
    %4717 = vmatpush1.bf16.msra.mxu0 0
    %4718 = vmatprep.subr.bf16.mxu0 0
    %4719 = vmatpush1.bf16.msra.mxu0 0
    %4720 = vmatprep.subr.bf16.mxu0 0
    %4721 = vmatpush1.bf16.msra.mxu0 0
    %4722 = vmatprep.subr.bf16.mxu0 0
    %4723 = vmatpush1.bf16.msra.mxu0 0
    %4724 = vmatprep.mubr.bf16.mxu0 0
    %4725 = vmatmul.mubr.bf16.gmra.mrb[0].mxu0 %v4690
    %v4726 = vpop.f32.mrb[0].mxu0
    %v4727 = vadd.f32 0.0, %v4726
    %v4728 = vpop.f32.mrb[0].mxu0
    %v4729 = vpop.f32.mrb[0].mxu0
    %v4730 = vpop.f32.mrb[0].mxu0
    %4731 = vdwg.mxu0
    %v4732 = vadd.f32 %v4630, %v4681
    %v4733 = vadd.f32 %v4634, %v4727
    %v4734 = vxor.u32 %v4732, 2147483648
    %v4735 = vxor.u32 %v4733, 2147483648
    %v4736 = vmul.f32 %v4734, 1.442695
    %v4737 = vpow.pop %v4736
    %v4738 = vmul.f32 %v4735, 1.442695
    %v4739 = vpow.pop %v4738
    %v4740 = vadd.f32 %v4737, 1.0
    %v4741 = vadd.f32 %v4739, 1.0
    %v4742 = vrcp.pop %v4740
    %v4743 = vmul.f32 1.0, %v4742
    %v4744 = vrcp.pop %v4741
    %v4745 = vmul.f32 1.0, %v4744
    %v4746 = vtanh.pop %v4732
    %v4747 = vtanh.pop %v4733
    %v4748 = vmul.f32 %v4743, %v4614
    %v4749 = vmul.f32 %v4745, %v4615
    %4752 = vrot.lane.b32.xlu0 %v4746, 80
    %v4753 = vpop.permute.xlu0 %4752
    %4754 = vrot.lane.b32.xlu0 %v4747, 80
    %v4755 = vpop.permute.xlu0 %4754
    %v4758 = vmul.f32 %v4743, %v4753
    %v4759 = vmul.f32 %v4745, %v4755
    %4762 = vrot.lane.b32.xlu0 %v4758, 16
    %v4763 = vpop.permute.xlu0 %4762
    %4764 = vrot.lane.b32.xlu0 %v4759, 16
    %v4765 = vpop.permute.xlu0 %4764
    %v4768 = vadd.f32 %v4748, %v4763
    %v4769 = vadd.f32 %v4749, %v4765
    %v4770 = vtanh.pop %v4768
    %v4771 = vtanh.pop %v4769
    %4774 = vrot.lane.b32.xlu0 %v4770, 16
    %v4775 = vpop.permute.xlu0 %4774
    %4776 = vrot.lane.b32.xlu0 %v4771, 16
    %v4777 = vpop.permute.xlu0 %4776
    %v4780 = vmul.f32 %v4743, %v4775
    %v4781 = vmul.f32 %v4745, %v4777
    %4783 = vset.pattern.permute.xlu0 0
    %4784 = vperm.xlu0 %4783, %v4636
    %v4785 = vpop.permute.xlu0 %4784
    %4788 = vset.pattern.permute.xlu0 0
    %4789 = vperm.xlu0 %4788, %v4637
    %v4790 = vpop.permute.xlu0 %4789
    %v4792 = vmul.f32 %v4785, %v4780
    %v4793 = vmul.f32 %v4790, %v4781
    %v4794 = vmul.f32 %v4785, %v4768
    %v4795 = vmul.f32 %v4790, %v4769
    %v4796 = vsub.f32 1.0, %v4636
    %v4797 = vsub.f32 1.0, %v4637
    %4799 = vset.pattern.permute.xlu0 0
    %4800 = vperm.xlu0 %4799, %v4796
    %v4801 = vpop.permute.xlu0 %4800
    %4804 = vset.pattern.permute.xlu0 0
    %4805 = vperm.xlu0 %4804, %v4797
    %v4806 = vpop.permute.xlu0 %4805
    %v4808 = vmul.f32 %v4801, %v4614
    %v4809 = vmul.f32 %v4806, %v4615
    %v4810 = vadd.f32 %v4794, %v4808
    %v4811 = vadd.f32 %v4795, %v4809
    %v4812 = vmul.f32 %v4801, %v4618
    %v4813 = vmul.f32 %v4806, %v4619
    %v4814 = vadd.f32 %v4792, %v4812
    %v4815 = vadd.f32 %v4793, %v4813
    %4817 = vrot.lane.b32.xlu0 %v4792, 96
    %v4818 = vpop.permute.xlu0 %4817
    %4820 = vst.msk [vmem:[%s816] sm:$0xff] %vm234, %v4818
    %4822 = vrot.lane.b32.xlu0 %v4793, 112
    %v4823 = vpop.permute.xlu0 %4822
    %4825 = vst.msk [vmem:[%s810] sm:$0xff] %vm416, %v4823
    %v4826 = vld [vmem:[#allocation2 + $0x30] sm:$0xff]
    %v4827 = vld [vmem:[#allocation2 + $0x8] sm:$0xff]
    %4829 = vrot.lane.b32.xlu0 %v4827, 64
    %v4830 = vpop.permute.xlu0 %4829
    %v4832 = vld [vmem:[%s426] sm:$0xff]
    %v4833 = vld [vmem:[%s424] sm:$0xff]
    %v4834 = vpack.c.bf16 %v4814, %v4814
    %v4835 = vpack.c.bf16 %v4815, %v4815
    %4837 = vrot.lane.b32.xlu0 %v4834, 96
    %v4838 = vpop.permute.xlu0 %4837
    %v4840 = vsel %vm234, %v4838, 0
    %4842 = vmatprep.subr.bf16.mxu0 0
    %4843 = vmatpush1.bf16.msra.mxu0 %v3666
    %4844 = vmatprep.subr.bf16.mxu0 0
    %4845 = vmatpush1.bf16.msra.mxu0 0
    %4846 = vmatprep.subr.bf16.mxu0 0
    %4847 = vmatpush1.bf16.msra.mxu0 0
    %4848 = vmatprep.subr.bf16.mxu0 0
    %4849 = vmatpush1.bf16.msra.mxu0 0
    %4850 = vmatprep.subr.bf16.mxu0 0
    %4851 = vmatpush1.bf16.msra.mxu0 0
    %4852 = vmatprep.subr.bf16.mxu0 0
    %4853 = vmatpush1.bf16.msra.mxu0 0
    %4854 = vmatprep.subr.bf16.mxu0 0
    %4855 = vmatpush1.bf16.msra.mxu0 0
    %4856 = vmatprep.subr.bf16.mxu0 0
    %4857 = vmatpush1.bf16.msra.mxu0 0
    %4858 = vmatprep.subr.bf16.mxu0 0
    %4859 = vmatpush1.bf16.msra.mxu0 0
    %4860 = vmatprep.subr.bf16.mxu0 0
    %4861 = vmatpush1.bf16.msra.mxu0 0
    %4862 = vmatprep.subr.bf16.mxu0 0
    %4863 = vmatpush1.bf16.msra.mxu0 0
    %4864 = vmatprep.subr.bf16.mxu0 0
    %4865 = vmatpush1.bf16.msra.mxu0 0
    %4866 = vmatprep.subr.bf16.mxu0 0
    %4867 = vmatpush1.bf16.msra.mxu0 0
    %4868 = vmatprep.subr.bf16.mxu0 0
    %4869 = vmatpush1.bf16.msra.mxu0 0
    %4870 = vmatprep.subr.bf16.mxu0 0
    %4871 = vmatpush1.bf16.msra.mxu0 0
    %4872 = vmatprep.subr.bf16.mxu0 0
    %4873 = vmatpush1.bf16.msra.mxu0 0
    %4874 = vmatprep.mubr.bf16.mxu0 0
    %4875 = vmatmul.mubr.bf16.gmra.mrb[0].mxu0 %v4840
    %v4876 = vpop.f32.mrb[0].mxu0
    %v4877 = vadd.f32 0.0, %v4876
    %v4878 = vpop.f32.mrb[0].mxu0
    %v4879 = vpop.f32.mrb[0].mxu0
    %v4880 = vpop.f32.mrb[0].mxu0
    %4881 = vdwg.mxu0
    %4883 = vrot.lane.b32.xlu0 %v4835, 96
    %v4884 = vpop.permute.xlu0 %4883
    %v4886 = vsel %vm234, %v4884, 0
    %4888 = vmatprep.subr.bf16.mxu0 0
    %4889 = vmatpush1.bf16.msra.mxu0 %v3712
    %4890 = vmatprep.subr.bf16.mxu0 0
    %4891 = vmatpush1.bf16.msra.mxu0 0
    %4892 = vmatprep.subr.bf16.mxu0 0
    %4893 = vmatpush1.bf16.msra.mxu0 0
    %4894 = vmatprep.subr.bf16.mxu0 0
    %4895 = vmatpush1.bf16.msra.mxu0 0
    %4896 = vmatprep.subr.bf16.mxu0 0
    %4897 = vmatpush1.bf16.msra.mxu0 0
    %4898 = vmatprep.subr.bf16.mxu0 0
    %4899 = vmatpush1.bf16.msra.mxu0 0
    %4900 = vmatprep.subr.bf16.mxu0 0
    %4901 = vmatpush1.bf16.msra.mxu0 0
    %4902 = vmatprep.subr.bf16.mxu0 0
    %4903 = vmatpush1.bf16.msra.mxu0 0
    %4904 = vmatprep.subr.bf16.mxu0 0
    %4905 = vmatpush1.bf16.msra.mxu0 0
    %4906 = vmatprep.subr.bf16.mxu0 0
    %4907 = vmatpush1.bf16.msra.mxu0 0
    %4908 = vmatprep.subr.bf16.mxu0 0
    %4909 = vmatpush1.bf16.msra.mxu0 0
    %4910 = vmatprep.subr.bf16.mxu0 0
    %4911 = vmatpush1.bf16.msra.mxu0 0
    %4912 = vmatprep.subr.bf16.mxu0 0
    %4913 = vmatpush1.bf16.msra.mxu0 0
    %4914 = vmatprep.subr.bf16.mxu0 0
    %4915 = vmatpush1.bf16.msra.mxu0 0
    %4916 = vmatprep.subr.bf16.mxu0 0
    %4917 = vmatpush1.bf16.msra.mxu0 0
    %4918 = vmatprep.subr.bf16.mxu0 0
    %4919 = vmatpush1.bf16.msra.mxu0 0
    %4920 = vmatprep.mubr.bf16.mxu0 0
    %4921 = vmatmul.mubr.bf16.gmra.mrb[0].mxu0 %v4886
    %v4922 = vpop.f32.mrb[0].mxu0
    %v4923 = vadd.f32 0.0, %v4922
    %v4924 = vpop.f32.mrb[0].mxu0
    %v4925 = vpop.f32.mrb[0].mxu0
    %v4926 = vpop.f32.mrb[0].mxu0
    %4927 = vdwg.mxu0
    %v4928 = vadd.f32 %v4826, %v4877
    %v4929 = vadd.f32 %v4830, %v4923
    %v4930 = vxor.u32 %v4928, 2147483648
    %v4931 = vxor.u32 %v4929, 2147483648
    %v4932 = vmul.f32 %v4930, 1.442695
    %v4933 = vpow.pop %v4932
    %v4934 = vmul.f32 %v4931, 1.442695
    %v4935 = vpow.pop %v4934
    %v4936 = vadd.f32 %v4933, 1.0
    %v4937 = vadd.f32 %v4935, 1.0
    %v4938 = vrcp.pop %v4936
    %v4939 = vmul.f32 1.0, %v4938
    %v4940 = vrcp.pop %v4937
    %v4941 = vmul.f32 1.0, %v4940
    %v4942 = vtanh.pop %v4928
    %v4943 = vtanh.pop %v4929
    %v4944 = vmul.f32 %v4939, %v4810
    %v4945 = vmul.f32 %v4941, %v4811
    %4948 = vrot.lane.b32.xlu0 %v4942, 80
    %v4949 = vpop.permute.xlu0 %4948
    %4950 = vrot.lane.b32.xlu0 %v4943, 80
    %v4951 = vpop.permute.xlu0 %4950
    %v4954 = vmul.f32 %v4939, %v4949
    %v4955 = vmul.f32 %v4941, %v4951
    %4958 = vrot.lane.b32.xlu0 %v4954, 16
    %v4959 = vpop.permute.xlu0 %4958
    %4960 = vrot.lane.b32.xlu0 %v4955, 16
    %v4961 = vpop.permute.xlu0 %4960
    %v4964 = vadd.f32 %v4944, %v4959
    %v4965 = vadd.f32 %v4945, %v4961
    %v4966 = vtanh.pop %v4964
    %v4967 = vtanh.pop %v4965
    %4970 = vrot.lane.b32.xlu0 %v4966, 16
    %v4971 = vpop.permute.xlu0 %4970
    %4972 = vrot.lane.b32.xlu0 %v4967, 16
    %v4973 = vpop.permute.xlu0 %4972
    %v4976 = vmul.f32 %v4939, %v4971
    %v4977 = vmul.f32 %v4941, %v4973
    %4979 = vset.pattern.permute.xlu0 0
    %4980 = vperm.xlu0 %4979, %v4832
    %v4981 = vpop.permute.xlu0 %4980
    %4984 = vset.pattern.permute.xlu0 0
    %4985 = vperm.xlu0 %4984, %v4833
    %v4986 = vpop.permute.xlu0 %4985
    %v4988 = vmul.f32 %v4981, %v4976
    %v4989 = vmul.f32 %v4986, %v4977
    %v4990 = vmul.f32 %v4981, %v4964
    %v4991 = vmul.f32 %v4986, %v4965
    %v4992 = vsub.f32 1.0, %v4832
    %v4993 = vsub.f32 1.0, %v4833
    %4995 = vset.pattern.permute.xlu0 0
    %4996 = vperm.xlu0 %4995, %v4992
    %v4997 = vpop.permute.xlu0 %4996
    %5000 = vset.pattern.permute.xlu0 0
    %5001 = vperm.xlu0 %5000, %v4993
    %v5002 = vpop.permute.xlu0 %5001
    %v5004 = vmul.f32 %v4997, %v4810
    %v5005 = vmul.f32 %v5002, %v4811
    %v5006 = vadd.f32 %v4990, %v5004
    %v5007 = vadd.f32 %v4991, %v5005
    %v5008 = vmul.f32 %v4997, %v4814
    %v5009 = vmul.f32 %v5002, %v4815
    %v5010 = vadd.f32 %v4988, %v5008
    %v5011 = vadd.f32 %v4989, %v5009
    %5013 = vrot.lane.b32.xlu0 %v4988, 96
    %v5014 = vpop.permute.xlu0 %5013
    %5016 = vst.msk [vmem:[%s616] sm:$0xff] %vm234, %v5014
    %5018 = vrot.lane.b32.xlu0 %v4989, 112
    %v5019 = vpop.permute.xlu0 %5018
    %5021 = vst.msk [vmem:[%s610] sm:$0xff] %vm416, %v5019
    %v5022 = vld [vmem:[#allocation2 + $0x38] sm:$0xff]
    %v5023 = vld [vmem:[#allocation2] sm:$0xff]
    %5025 = vrot.lane.b32.xlu0 %v5023, 64
    %v5026 = vpop.permute.xlu0 %5025
    %v5028 = vld [vmem:[%s226] sm:$0xff]
    %v5029 = vld [vmem:[#allocation6] sm:$0xff]
    %v5030 = vpack.c.bf16 %v5010, %v5010
    %v5031 = vpack.c.bf16 %v5011, %v5011
    %5033 = vrot.lane.b32.xlu0 %v5030, 96
    %v5034 = vpop.permute.xlu0 %5033
    %v5036 = vsel %vm234, %v5034, 0
    %5038 = vmatprep.subr.bf16.mxu0 0
    %5039 = vmatpush1.bf16.msra.mxu0 %v3666
    %5040 = vmatprep.subr.bf16.mxu0 0
    %5041 = vmatpush1.bf16.msra.mxu0 0
    %5042 = vmatprep.subr.bf16.mxu0 0
    %5043 = vmatpush1.bf16.msra.mxu0 0
    %5044 = vmatprep.subr.bf16.mxu0 0
    %5045 = vmatpush1.bf16.msra.mxu0 0
    %5046 = vmatprep.subr.bf16.mxu0 0
    %5047 = vmatpush1.bf16.msra.mxu0 0
    %5048 = vmatprep.subr.bf16.mxu0 0
    %5049 = vmatpush1.bf16.msra.mxu0 0
    %5050 = vmatprep.subr.bf16.mxu0 0
    %5051 = vmatpush1.bf16.msra.mxu0 0
    %5052 = vmatprep.subr.bf16.mxu0 0
    %5053 = vmatpush1.bf16.msra.mxu0 0
    %5054 = vmatprep.subr.bf16.mxu0 0
    %5055 = vmatpush1.bf16.msra.mxu0 0
    %5056 = vmatprep.subr.bf16.mxu0 0
    %5057 = vmatpush1.bf16.msra.mxu0 0
    %5058 = vmatprep.subr.bf16.mxu0 0
    %5059 = vmatpush1.bf16.msra.mxu0 0
    %5060 = vmatprep.subr.bf16.mxu0 0
    %5061 = vmatpush1.bf16.msra.mxu0 0
    %5062 = vmatprep.subr.bf16.mxu0 0
    %5063 = vmatpush1.bf16.msra.mxu0 0
    %5064 = vmatprep.subr.bf16.mxu0 0
    %5065 = vmatpush1.bf16.msra.mxu0 0
    %5066 = vmatprep.subr.bf16.mxu0 0
    %5067 = vmatpush1.bf16.msra.mxu0 0
    %5068 = vmatprep.subr.bf16.mxu0 0
    %5069 = vmatpush1.bf16.msra.mxu0 0
    %5070 = vmatprep.mubr.bf16.mxu0 0
    %5071 = vmatmul.mubr.bf16.gmra.mrb[0].mxu0 %v5036
    %v5072 = vpop.f32.mrb[0].mxu0
    %v5073 = vadd.f32 0.0, %v5072
    %v5074 = vpop.f32.mrb[0].mxu0
    %v5075 = vpop.f32.mrb[0].mxu0
    %v5076 = vpop.f32.mrb[0].mxu0
    %5077 = vdwg.mxu0
    %5079 = vrot.lane.b32.xlu0 %v5031, 96
    %v5080 = vpop.permute.xlu0 %5079
    %v5082 = vsel %vm234, %v5080, 0
    %5084 = vmatprep.subr.bf16.mxu0 0
    %5085 = vmatpush1.bf16.msra.mxu0 %v3712
    %5086 = vmatprep.subr.bf16.mxu0 0
    %5087 = vmatpush1.bf16.msra.mxu0 0
    %5088 = vmatprep.subr.bf16.mxu0 0
    %5089 = vmatpush1.bf16.msra.mxu0 0
    %5090 = vmatprep.subr.bf16.mxu0 0
    %5091 = vmatpush1.bf16.msra.mxu0 0
    %5092 = vmatprep.subr.bf16.mxu0 0
    %5093 = vmatpush1.bf16.msra.mxu0 0
    %5094 = vmatprep.subr.bf16.mxu0 0
    %5095 = vmatpush1.bf16.msra.mxu0 0
    %5096 = vmatprep.subr.bf16.mxu0 0
    %5097 = vmatpush1.bf16.msra.mxu0 0
    %5098 = vmatprep.subr.bf16.mxu0 0
    %5099 = vmatpush1.bf16.msra.mxu0 0
    %5100 = vmatprep.subr.bf16.mxu0 0
    %5101 = vmatpush1.bf16.msra.mxu0 0
    %5102 = vmatprep.subr.bf16.mxu0 0
    %5103 = vmatpush1.bf16.msra.mxu0 0
    %5104 = vmatprep.subr.bf16.mxu0 0
    %5105 = vmatpush1.bf16.msra.mxu0 0
    %5106 = vmatprep.subr.bf16.mxu0 0
    %5107 = vmatpush1.bf16.msra.mxu0 0
    %5108 = vmatprep.subr.bf16.mxu0 0
    %5109 = vmatpush1.bf16.msra.mxu0 0
    %5110 = vmatprep.subr.bf16.mxu0 0
    %5111 = vmatpush1.bf16.msra.mxu0 0
    %5112 = vmatprep.subr.bf16.mxu0 0
    %5113 = vmatpush1.bf16.msra.mxu0 0
    %5114 = vmatprep.subr.bf16.mxu0 0
    %5115 = vmatpush1.bf16.msra.mxu0 0
    %5116 = vmatprep.mubr.bf16.mxu0 0
    %5117 = vmatmul.mubr.bf16.gmra.mrb[0].mxu0 %v5082
    %v5118 = vpop.f32.mrb[0].mxu0
    %v5119 = vadd.f32 0.0, %v5118
    %v5120 = vpop.f32.mrb[0].mxu0
    %v5121 = vpop.f32.mrb[0].mxu0
    %v5122 = vpop.f32.mrb[0].mxu0
    %5123 = vdwg.mxu0
    %v5124 = vadd.f32 %v5022, %v5073
    %v5125 = vadd.f32 %v5026, %v5119
    %v5126 = vxor.u32 %v5124, 2147483648
    %v5127 = vxor.u32 %v5125, 2147483648
    %v5128 = vmul.f32 %v5126, 1.442695
    %v5129 = vpow.pop %v5128
    %v5130 = vmul.f32 %v5127, 1.442695
    %v5131 = vpow.pop %v5130
    %v5132 = vadd.f32 %v5129, 1.0
    %v5133 = vadd.f32 %v5131, 1.0
    %v5134 = vrcp.pop %v5132
    %v5135 = vmul.f32 1.0, %v5134
    %v5136 = vrcp.pop %v5133
    %v5137 = vmul.f32 1.0, %v5136
    %v5138 = vtanh.pop %v5124
    %v5139 = vtanh.pop %v5125
    %v5140 = vmul.f32 %v5135, %v5006
    %v5141 = vmul.f32 %v5137, %v5007
    %5144 = vrot.lane.b32.xlu0 %v5138, 80
    %v5145 = vpop.permute.xlu0 %5144
    %5146 = vrot.lane.b32.xlu0 %v5139, 80
    %v5147 = vpop.permute.xlu0 %5146
    %v5150 = vmul.f32 %v5135, %v5145
    %v5151 = vmul.f32 %v5137, %v5147
    %5154 = vrot.lane.b32.xlu0 %v5150, 16
    %v5155 = vpop.permute.xlu0 %5154
    %5156 = vrot.lane.b32.xlu0 %v5151, 16
    %v5157 = vpop.permute.xlu0 %5156
    %v5160 = vadd.f32 %v5140, %v5155
    %v5161 = vadd.f32 %v5141, %v5157
    %v5162 = vtanh.pop %v5160
    %v5163 = vtanh.pop %v5161
    %5166 = vrot.lane.b32.xlu0 %v5162, 16
    %v5167 = vpop.permute.xlu0 %5166
    %5168 = vrot.lane.b32.xlu0 %v5163, 16
    %v5169 = vpop.permute.xlu0 %5168
    %v5172 = vmul.f32 %v5135, %v5167
    %v5173 = vmul.f32 %v5137, %v5169
    %5175 = vset.pattern.permute.xlu0 0
    %5176 = vperm.xlu0 %5175, %v5028
    %v5177 = vpop.permute.xlu0 %5176
    %5180 = vset.pattern.permute.xlu0 0
    %5181 = vperm.xlu0 %5180, %v5029
    %v5182 = vpop.permute.xlu0 %5181
    %v5184 = vmul.f32 %v5177, %v5172
    %v5185 = vmul.f32 %v5182, %v5173
    %v5186 = vmul.f32 %v5177, %v5160
    %v5187 = vmul.f32 %v5182, %v5161
    %v5188 = vsub.f32 1.0, %v5028
    %v5189 = vsub.f32 1.0, %v5029
    %5191 = vset.pattern.permute.xlu0 0
    %5192 = vperm.xlu0 %5191, %v5188
    %v5193 = vpop.permute.xlu0 %5192
    %5196 = vset.pattern.permute.xlu0 0
    %5197 = vperm.xlu0 %5196, %v5189
    %v5198 = vpop.permute.xlu0 %5197
    %v5200 = vmul.f32 %v5193, %v5006
    %v5201 = vmul.f32 %v5198, %v5007
    %v5202 = vadd.f32 %v5186, %v5200
    %v5203 = vadd.f32 %v5187, %v5201
    %v5204 = vmul.f32 %v5193, %v5010
    %v5205 = vmul.f32 %v5198, %v5011
    %v5206 = vadd.f32 %v5184, %v5204
    %v5207 = vadd.f32 %v5185, %v5205
    %5209 = vrot.lane.b32.xlu0 %v5184, 96
    %v5210 = vpop.permute.xlu0 %5209
    %5212 = vst.msk [vmem:[%s415] sm:$0xff] %vm234, %v5210
    %5214 = vrot.lane.b32.xlu0 %v5185, 112
    %v5215 = vpop.permute.xlu0 %5214
    %5217 = vst.msk [vmem:[#allocation12] sm:$0xff] %vm416, %v5215
    %5219 = vrot.lane.b32.xlu0 %v5206, 96
    %v5220 = vpop.permute.xlu0 %5219
    %s5222 = scalar_lea.vmem [#allocation13], 16
    %5223 = vst.msk [vmem:[%s5222] sm:$0xff] %vm234, %v5220
    %5225 = vrot.lane.b32.xlu0 %v5207, 112
    %v5226 = vpop.permute.xlu0 %5225
    %5228 = vst.msk [vmem:[%s5222] sm:$0xff] %vm416, %v5226
    %5230 = vrot.lane.b32.xlu0 %v5202, 112
    %v5231 = vpop.permute.xlu0 %5230
    %s5233 = scalar_lea.vmem [#allocation15], 16
    %5234 = vst.msk [vmem:[%s5233] sm:$0xff] %vm234, %v5231
    %5235 = vst.msk [vmem:[%s5233] sm:$0xff] %vm416, %v5203
    // Predicated region
    $region42: #{tpu_custom_call.1} parent=1 // pred_check
      _
    $region43: #{tpu_custom_call.1} parent=1 // pred_check_branch
      %5237 = sbr.rel (0) target = $region45
    $region44: #{tpu_custom_call.1} parent=1 // pred_region
      %s5239 = ssub.s32 1024, 1024
      %5240 = vsyncadd [#allocation5], %s5239
      %s5241 = sshll.u32 [#allocation12], 4
      %s5242 = int_to_ptr.vmem [resolvable:$true] %s5241
      %5247 = dma.vmem_to_hbm [thread:$0]  %s5242, 1024, %s5, [#allocation5], 128, 128, 8
    $region45: #{tpu_custom_call.1} parent=1 // pred_fallthru
      _
    // Predicated region
    $region46: #{tpu_custom_call.1} parent=1 // pred_check
      _
    $region47: #{tpu_custom_call.1} parent=1 // pred_check_branch
      %5249 = sbr.rel (0) target = $region49
    $region48: #{tpu_custom_call.1} parent=1 // pred_region
      %s5251 = ssub.s32 384, 384
      %5252 = vsyncadd [#allocation14], %s5251
      %s5253 = sshll.u32 [#allocation13], 4
      %s5254 = int_to_ptr.vmem [resolvable:$true] %s5253
      %5259 = dma.vmem_to_hbm [thread:$0]  %s5254, 384, %s6, [#allocation14], 128, 128, 8
    $region49: #{tpu_custom_call.1} parent=1 // pred_fallthru
      _
    // Predicated region
    $region50: #{tpu_custom_call.1} parent=1 // pred_check
      _
    $region51: #{tpu_custom_call.1} parent=1 // pred_check_branch
      %5261 = sbr.rel (0) target = $region53
    $region52: #{tpu_custom_call.1} parent=1 // pred_region
      %s5263 = ssub.s32 384, 384
      %5264 = vsyncadd [#allocation14], %s5263
      %s5265 = sshll.u32 [#allocation15], 4
      %s5266 = int_to_ptr.vmem [resolvable:$true] %s5265
      %5271 = dma.vmem_to_hbm [thread:$0]  %s5266, 384, %s7, [#allocation14], 128, 128, 8
    $region53: #{tpu_custom_call.1} parent=1 // pred_fallthru
      _
    // Predicated region
    $region54: #{tpu_custom_call.1} parent=1 // pred_check
      _
    $region55: #{tpu_custom_call.1} parent=1 // pred_check_branch
      %5273 = sbr.rel (0) target = $region57
    $region56: #{tpu_custom_call.1} parent=1 // pred_region
      %5274 = dma.done [#allocation5], 1024
    $region57: #{tpu_custom_call.1} parent=1 // pred_fallthru
      _
    // Predicated region
    $region58: #{tpu_custom_call.1} parent=1 // pred_check
      _
    $region59: #{tpu_custom_call.1} parent=1 // pred_check_branch
      %5276 = sbr.rel (0) target = $region61
    $region60: #{tpu_custom_call.1} parent=1 // pred_region
      %5277 = dma.done [#allocation14], 384
    $region61: #{tpu_custom_call.1} parent=1 // pred_fallthru
      _
    // Predicated region
    $region62: #{tpu_custom_call.1} parent=1 // pred_check
      _
    $region63: #{tpu_custom_call.1} parent=1 // pred_check_branch
      %5279 = sbr.rel (0) target = $region65
    $region64: #{tpu_custom_call.1} parent=1 // pred_region
      %5280 = dma.done [#allocation14], 384
    $region65: #{tpu_custom_call.1} parent=1 // pred_fallthru
      _
    %5281 = vsyncpa [#allocation4], 1
    %5282 = vsyncpa [#allocation7], 1
    %5283 = vsyncpa [#allocation10], 1
    %5284 = vsyncpa [#allocation5], 1
    %5285 = vsyncpa [#allocation14], 1

</llo_original>
